<compile_context>
chip_gen: v6e
topology: v6e:2x2x1
jax: 0.10.0
libtpu: 0.0.40
codegen_flags: <defaults>
</compile_context>

<pallas_src>
import functools

import jax
import jax.numpy as jnp
from jax.experimental import pallas as pl
from jax.experimental.pallas import tpu as pltpu

_EPS = 1e-5  # torch.nn.LayerNorm default


# ----------------------------------------------------------------------------
# Fused Pallas kernel: attn branch + residual + FF branch + residual
# ----------------------------------------------------------------------------
def _fused_block_kernel(xs_ref, x_ref, wqkv_ref, wo_ref, ga_ref,
                        w1_ref, w2_ref, gf_ref, o_ref, *,
                        heads, dim_head, ws, approximate_gelu):
    """One grid step = `wr` vertically stacked ws x ws windows.

    xs_ref : (1, wr*ws, ws, C) bf16  shifted input (qkv path)
    x_ref  : (1, wr*ws, ws, C) f32   original input (residual path)
    wqkv   : (C, 3*inner) bf16  [wq*scale | wk | wv]
    wo     : (inner, C)   bf16  output projection
    ga/gf  : (1, C)       f32   LayerNorm weights (no bias)
    w1     : (C, F) bf16 ;  w2 : (F, C) bf16
    o_ref  : (1, wr*ws, ws, C)  x + attn(x) + ff(x + attn(x))
    """
    _, R, _, C = x_ref.shape
    N = ws * ws
    wr = R // ws
    M = wr * N
    dh = dim_head
    inner = heads * dh

    # Vertical window strip -> (tokens, C) is a pure reshape (token order:
    # m = window*N + row_in_window*ws + col), no transpose needed.
    xs = xs_ref[...].reshape(M, C)                  # bf16
    xres = x_ref[...].reshape(M, C)                 # f32 residual

    # ---- attention branch --------------------------------------------------
    # One wide QKV GEMM (softmax scale pre-folded into wq columns) + a single
    # bf16 cast of the result.
    qkv = jnp.dot(xs, wqkv_ref[...],
                  preferred_element_type=jnp.float32).astype(jnp.bfloat16)

    def heads_major(t2d):
        # (M, inner) -> (heads*wr, N, dh): reshape while lanes are still full
        # (128 wide), then stack per-head lane slices along the batch axis.
        t3 = t2d.reshape(wr, N, inner)
        return jnp.concatenate(
            [t3[:, :, h * dh:(h + 1) * dh] for h in range(heads)], axis=0)

    q = heads_major(qkv[:, :inner])
    k = heads_major(qkv[:, inner:2 * inner])
    v = heads_major(qkv[:, 2 * inner:])

    # Batched over (heads*wr) windows: two MXU einsums, one softmax.
    s = jnp.einsum("bnd,bmd->bnm", q, k, preferred_element_type=jnp.float32)
    s = s - jnp.max(s, axis=-1, keepdims=True)
    p = jnp.exp(s)
    p = p * pl.reciprocal(jnp.sum(p, axis=-1, keepdims=True), approx=True)

    oh = jnp.einsum("bnm,bmd->bnd", p.astype(jnp.bfloat16), v,
                    preferred_element_type=jnp.float32)      # (heads*wr, N, dh)

    # Reassemble (M, inner) so the output projection is ONE K=inner GEMM.
    oh = oh.astype(jnp.bfloat16)
    o3 = jnp.concatenate([oh[h * wr:(h + 1) * wr] for h in range(heads)],
                         axis=-1)                            # (wr, N, inner)
    attn = jnp.dot(o3.reshape(M, inner), wo_ref[...],
                   preferred_element_type=jnp.float32)

    # LayerNormNoBias2d over channels (f32 stats), then residual.
    mu = jnp.mean(attn, axis=-1, keepdims=True)
    var = jnp.mean(jnp.square(attn - mu), axis=-1, keepdims=True)
    attn = (attn - mu) * jax.lax.rsqrt(var + _EPS) * ga_ref[...]
    y = xres + attn                                          # (M, C) f32

    # ---- feed-forward branch (pointwise per token) ---------------------------
    h1 = jnp.dot(y.astype(jnp.bfloat16), w1_ref[...],
                 preferred_element_type=jnp.float32)
    # tanh GELU -> transcendental runs on the EUP slot; ~1e-3 deviation from
    # torch's default erf GELU (use approximate_gelu=False for erf).
    h1 = jax.nn.gelu(h1, approximate=approximate_gelu)
    h2 = jnp.dot(h1.astype(jnp.bfloat16), w2_ref[...],
                 preferred_element_type=jnp.float32)

    mu2 = jnp.mean(h2, axis=-1, keepdims=True)
    var2 = jnp.mean(jnp.square(h2 - mu2), axis=-1, keepdims=True)
    ff = (h2 - mu2) * jax.lax.rsqrt(var2 + _EPS) * gf_ref[...]

    o_ref[...] = (y + ff).reshape(o_ref.shape).astype(o_ref.dtype)


# ----------------------------------------------------------------------------
# Tiling / VMEM policy
# ----------------------------------------------------------------------------
def _pick_rows(nh, batch, nwx, *, n_tok_per_win=64, token_target=2048):
    """Windows stacked per block: largest divisor of nh with <=~2048 tokens,
    reduced (if possible) so the grid has >=4 steps (pipelining + 2 TCs)."""
    wr_max = max(1, token_target // n_tok_per_win)
    wr = 1
    for d in range(1, nh + 1):
        if nh % d == 0 and d <= wr_max:
            wr = d
    # Keep at least 4 grid steps when the shape allows it.
    while wr > 1 and batch * (nh // wr) * nwx < 4:
        d = wr - 1
        while d > 1 and nh % d:
            d -= 1
        wr = d
    # NOTE: if nh is a prime > wr_max this degrades to wr=1 (64-token blocks);
    # acceptable fallback, pad-H upstream if such shapes matter.
    return wr


def _vmem_limit_bytes(ntok, C, F, inner, heads, N):
    """Size the VMEM request from the actual block footprint (+headroom)."""
    bf, f32 = 2, 4
    io = 2 * ntok * C * (bf + f32 + f32)            # xs/x/out blocks, double-buffered
    w = 2 * bf * (C * 3 * inner + inner * C + C * F + F * C) + 4 * C * f32
    act = ntok * (3 * inner * (f32 + 2 * bf)        # qkv f32 + bf16 + head-major copies
                  + heads * N * 2 * f32             # scores + probs
                  + inner * (f32 + 2 * bf)          # oh + reassembled projection input
                  + 4 * C * f32                     # attn / y / h2 / ff
                  + F * (f32 + bf))                 # h1 f32 + bf16
    est = int((io + w + act) * 1.7)                 # compiler scratch / spill headroom
    try:
        cap = int(pltpu.get_tpu_info().vmem_capacity_bytes) * 3 // 4
    except Exception:
        cap = 48 * 1024 * 1024                      # conservative (v7x: 64 MiB physical)
    return int(min(max(est, 32 * 1024 * 1024), cap))


# ----------------------------------------------------------------------------
# Plain-JAX glue (only: layout to NHWC and the Shift2d)
# ----------------------------------------------------------------------------
def _shift2d_nhwc(x):
    """Zero-padded 1-px spatial shift of 4 equal channel groups (NHWC)."""
    B, H, W, C = x.shape
    g = C // 4

    def shift(t, dh, dw):
        t = jnp.pad(t, ((0, 0), (1, 1), (1, 1), (0, 0)))
        return t[:, 1 - dh:1 - dh + H, 1 - dw:1 - dw + W, :]

    parts = [
        shift(x[..., 0 * g:1 * g], 0, -1),   # left
        shift(x[..., 1 * g:2 * g], 0, +1),   # right
        shift(x[..., 2 * g:3 * g], -1, 0),   # up
        shift(x[..., 3 * g:4 * g], +1, 0),   # down
    ]
    if C % 4 != 0:
        parts.append(x[..., 4 * g:])         # leftover channels unshifted
    return jnp.concatenate(parts, axis=-1)


def parallel_s2vit_block(x_nchw, params, *, dim_head=32, window_size=8,
                         approximate_gelu=True):
    """x = x + attn(x); x = x + ff(x)   (ParallelS2ViTBlock.forward)."""
    B, C, H, W = x_nchw.shape
    ws = window_size
    assert C % dim_head == 0, "dim must be a multiple of dim_head"
    assert H % ws == 0 and W % ws == 0
    heads = C // dim_head
    inner = heads * dim_head
    scale = dim_head ** -0.5

    x_nhwc = jnp.transpose(x_nchw, (0, 2, 3, 1))
    xs_nhwc = _shift2d_nhwc(x_nhwc).astype(jnp.bfloat16)

    # Weights: fold softmax scale into wq, concat qkv once, cast bf16.
    wqkv = jnp.concatenate([params["wq"] * scale, params["wk"], params["wv"]],
                           axis=1).astype(jnp.bfloat16)
    wo = params["wo"].astype(jnp.bfloat16)
    w1 = params["w1"].astype(jnp.bfloat16)
    w2 = params["w2"].astype(jnp.bfloat16)
    F = w1.shape[1]

    nh, nwx = H // ws, W // ws
    wr = _pick_rows(nh, B, nwx, n_tok_per_win=ws * ws)
    R = wr * ws
    grid = (B, nh // wr, nwx)

    kernel = functools.partial(_fused_block_kernel, heads=heads,
                               dim_head=dim_head, ws=ws,
                               approximate_gelu=approximate_gelu)

    def win_spec():
        return pl.BlockSpec((1, R, ws, C), lambda b, i, j: (b, i, j, 0))

    def const_spec(shape):
        return pl.BlockSpec(shape, lambda b, i, j: (0, 0))

    vmem_limit = _vmem_limit_bytes(wr * ws * ws, C, F, inner, heads, ws * ws)

    out_nhwc = pl.pallas_call(
        kernel,
        out_shape=jax.ShapeDtypeStruct((B, H, W, C), x_nchw.dtype),
        grid=grid,
        in_specs=[
            win_spec(),                         # xs (bf16, shifted)
            win_spec(),                         # x  (f32, residual)
            const_spec((C, 3 * inner)),         # wqkv
            const_spec((inner, C)),             # wo
            const_spec((1, C)),                 # gamma_attn
            const_spec((C, F)),                 # w1
            const_spec((F, C)),                 # w2
            const_spec((1, C)),                 # gamma_ff
        ],
        out_specs=win_spec(),
        compiler_params=pltpu.CompilerParams(
            dimension_semantics=("parallel", "parallel", "parallel"),
            vmem_limit_bytes=vmem_limit),
    )(xs_nhwc, x_nhwc, wqkv, wo, params["gamma_attn"], w1, w2,
      params["gamma_ff"])

    return jnp.transpose(out_nhwc, (0, 3, 1, 2))             # NCHW


# ----------------------------------------------------------------------------
# Deterministic parameter init + smoke test
# ----------------------------------------------------------------------------
def _init_params(key, dim, dim_head, dim_ff):
    heads = dim // dim_head
    inner = heads * dim_head
    ks = jax.random.split(key, 6)
    s = 0.05
    return {
        # 1x1-conv weights stored as (in, out) matrices (transpose of torch).
        "wq": s * jax.random.normal(ks[0], (dim, inner), jnp.float32),
        "wk": s * jax.random.normal(ks[1], (dim, inner), jnp.float32),
        "wv": s * jax.random.normal(ks[2], (dim, inner), jnp.float32),
        "wo": s * jax.random.normal(ks[3], (inner, dim), jnp.float32),
        "gamma_attn": jnp.ones((1, dim), jnp.float32),
        "w1": s * jax.random.normal(ks[4], (dim, dim_ff), jnp.float32),
        "w2": s * jax.random.normal(ks[5], (dim_ff, dim), jnp.float32),
        "gamma_ff": jnp.ones((1, dim), jnp.float32),
    }


if __name__ == "__main__":
    key = jax.random.PRNGKey(0)
    k_x, k_p = jax.random.split(key)

    # dim=128 keeps channel loads/stores lane-dense (C == 128 lanes);
    # window_size=8 is the module default.  Grid = (2, 1, 4) = 8 steps here.
    B, dim, H, W = 2, 128, 32, 32
    dim_head, window_size = 32, 8
    dim_ff = 4 * dim                        # dim_ff=None default -> 4*dim

    x = jax.random.normal(k_x, (B, dim, H, W), jnp.float32)
    params = _init_params(k_p, dim, dim_head, dim_ff)

    fwd = jax.jit(functools.partial(parallel_s2vit_block,
                                    dim_head=dim_head,
                                    window_size=window_size))
    out = fwd(x, params)
    jax.block_until_ready(out)
    assert out.shape == (B, dim, H, W) and out.dtype == jnp.float32
    assert bool(jnp.all(jnp.isfinite(out)))
    print("KERNEL_OK")
</pallas_src>

<mosaic_0001>
module attributes {stable_mosaic.version = 11 : i64} {
  func.func @_fused_block_kernel(%arg0: i32, %arg1: i32, %arg2: i32, %arg3: memref<1x32x8x128xbf16, #tpu.memory_space<vmem>>, %arg4: memref<1x32x8x128xf32, #tpu.memory_space<vmem>>, %arg5: memref<128x384xbf16, #tpu.memory_space<vmem>>, %arg6: memref<128x128xbf16, #tpu.memory_space<vmem>>, %arg7: memref<1x128xf32, #tpu.memory_space<vmem>>, %arg8: memref<128x512xbf16, #tpu.memory_space<vmem>>, %arg9: memref<512x128xbf16, #tpu.memory_space<vmem>>, %arg10: memref<1x128xf32, #tpu.memory_space<vmem>>, %arg11: memref<1x32x8x128xf32, #tpu.memory_space<vmem>>) attributes {dimension_semantics = [#tpu.dimension_semantics<parallel>, #tpu.dimension_semantics<parallel>, #tpu.dimension_semantics<parallel>], iteration_bounds = array<i64: 2, 1, 4>, scalar_prefetch = 0 : i64, scratch_operands = 0 : i64, tpu.core_type = #tpu.core_type<tc>, window_params = [{transform_indices = @transform_0, window_bounds = array<i64: 1, 32, 8, 128>}, {transform_indices = @transform_1, window_bounds = array<i64: 1, 32, 8, 128>}, {pipeline_mode = #tpu.pipeline_mode<synchronous>, transform_indices = @transform_2, window_bounds = array<i64: 128, 384>}, {pipeline_mode = #tpu.pipeline_mode<synchronous>, transform_indices = @transform_3, window_bounds = array<i64: 128, 128>}, {pipeline_mode = #tpu.pipeline_mode<synchronous>, transform_indices = @transform_4, window_bounds = array<i64: 1, 128>}, {pipeline_mode = #tpu.pipeline_mode<synchronous>, transform_indices = @transform_5, window_bounds = array<i64: 128, 512>}, {pipeline_mode = #tpu.pipeline_mode<synchronous>, transform_indices = @transform_6, window_bounds = array<i64: 512, 128>}, {pipeline_mode = #tpu.pipeline_mode<synchronous>, transform_indices = @transform_7, window_bounds = array<i64: 1, 128>}, {transform_indices = @transform_8, window_bounds = array<i64: 1, 32, 8, 128>}]} {
    %c0 = arith.constant 0 : index
    %c0_0 = arith.constant 0 : index
    %c0_1 = arith.constant 0 : index
    %c0_2 = arith.constant 0 : index
    %0 = vector.load %arg3[%c0, %c0_0, %c0_1, %c0_2] : memref<1x32x8x128xbf16, #tpu.memory_space<vmem>>, vector<1x32x8x128xbf16>
    %1 = vector.shape_cast %0 : vector<1x32x8x128xbf16> to vector<256x128xbf16>
    %c0_3 = arith.constant 0 : index
    %c0_4 = arith.constant 0 : index
    %c0_5 = arith.constant 0 : index
    %c0_6 = arith.constant 0 : index
    %2 = vector.load %arg4[%c0_3, %c0_4, %c0_5, %c0_6] : memref<1x32x8x128xf32, #tpu.memory_space<vmem>>, vector<1x32x8x128xf32>
    %3 = vector.shape_cast %2 : vector<1x32x8x128xf32> to vector<256x128xf32>
    %c0_7 = arith.constant 0 : index
    %c0_8 = arith.constant 0 : index
    %4 = vector.load %arg5[%c0_7, %c0_8] : memref<128x384xbf16, #tpu.memory_space<vmem>>, vector<128x384xbf16>
    %cst = arith.constant dense<0.000000e+00> : vector<256x384xf32>
    %5 = tpu.matmul %1, %4, %cst {dimension_numbers = #tpu.dot_dimension_numbers<[1], [0], [0], [1], [0, 0, 1, 1], [], []>} : vector<256x128xbf16>, vector<128x384xbf16>, vector<256x384xf32> -> vector<256x384xf32>
    %6 = arith.truncf %5 : vector<256x384xf32> to vector<256x384xbf16>
    %7 = vector.extract_strided_slice %6 {offsets = [0, 0], sizes = [256, 128], strides = [1, 1]} : vector<256x384xbf16> to vector<256x128xbf16>
    %8 = vector.shape_cast %7 : vector<256x128xbf16> to vector<4x64x128xbf16>
    %9 = vector.extract_strided_slice %8 {offsets = [0, 0, 0], sizes = [4, 64, 32], strides = [1, 1, 1]} : vector<4x64x128xbf16> to vector<4x64x32xbf16>
    %10 = vector.extract_strided_slice %8 {offsets = [0, 0, 32], sizes = [4, 64, 32], strides = [1, 1, 1]} : vector<4x64x128xbf16> to vector<4x64x32xbf16>
    %11 = vector.extract_strided_slice %8 {offsets = [0, 0, 64], sizes = [4, 64, 32], strides = [1, 1, 1]} : vector<4x64x128xbf16> to vector<4x64x32xbf16>
    %12 = vector.extract_strided_slice %8 {offsets = [0, 0, 96], sizes = [4, 64, 32], strides = [1, 1, 1]} : vector<4x64x128xbf16> to vector<4x64x32xbf16>
    %13 = tpu.concatenate %9, %10, %11, %12 in 0 : vector<4x64x32xbf16>, vector<4x64x32xbf16>, vector<4x64x32xbf16>, vector<4x64x32xbf16> -> vector<16x64x32xbf16>
    %14 = vector.extract_strided_slice %6 {offsets = [0, 128], sizes = [256, 128], strides = [1, 1]} : vector<256x384xbf16> to vector<256x128xbf16>
    %15 = vector.shape_cast %14 : vector<256x128xbf16> to vector<4x64x128xbf16>
    %16 = vector.extract_strided_slice %15 {offsets = [0, 0, 0], sizes = [4, 64, 32], strides = [1, 1, 1]} : vector<4x64x128xbf16> to vector<4x64x32xbf16>
    %17 = vector.extract_strided_slice %15 {offsets = [0, 0, 32], sizes = [4, 64, 32], strides = [1, 1, 1]} : vector<4x64x128xbf16> to vector<4x64x32xbf16>
    %18 = vector.extract_strided_slice %15 {offsets = [0, 0, 64], sizes = [4, 64, 32], strides = [1, 1, 1]} : vector<4x64x128xbf16> to vector<4x64x32xbf16>
    %19 = vector.extract_strided_slice %15 {offsets = [0, 0, 96], sizes = [4, 64, 32], strides = [1, 1, 1]} : vector<4x64x128xbf16> to vector<4x64x32xbf16>
    %20 = tpu.concatenate %16, %17, %18, %19 in 0 : vector<4x64x32xbf16>, vector<4x64x32xbf16>, vector<4x64x32xbf16>, vector<4x64x32xbf16> -> vector<16x64x32xbf16>
    %21 = vector.extract_strided_slice %6 {offsets = [0, 256], sizes = [256, 128], strides = [1, 1]} : vector<256x384xbf16> to vector<256x128xbf16>
    %22 = vector.shape_cast %21 : vector<256x128xbf16> to vector<4x64x128xbf16>
    %23 = vector.extract_strided_slice %22 {offsets = [0, 0, 0], sizes = [4, 64, 32], strides = [1, 1, 1]} : vector<4x64x128xbf16> to vector<4x64x32xbf16>
    %24 = vector.extract_strided_slice %22 {offsets = [0, 0, 32], sizes = [4, 64, 32], strides = [1, 1, 1]} : vector<4x64x128xbf16> to vector<4x64x32xbf16>
    %25 = vector.extract_strided_slice %22 {offsets = [0, 0, 64], sizes = [4, 64, 32], strides = [1, 1, 1]} : vector<4x64x128xbf16> to vector<4x64x32xbf16>
    %26 = vector.extract_strided_slice %22 {offsets = [0, 0, 96], sizes = [4, 64, 32], strides = [1, 1, 1]} : vector<4x64x128xbf16> to vector<4x64x32xbf16>
    %27 = tpu.concatenate %23, %24, %25, %26 in 0 : vector<4x64x32xbf16>, vector<4x64x32xbf16>, vector<4x64x32xbf16>, vector<4x64x32xbf16> -> vector<16x64x32xbf16>
    "tpu.trace_start"() <{level = 10 : i32, message = "bnd,bmd->bnm"}> : () -> ()
    %cst_9 = arith.constant dense<0.000000e+00> : vector<16x64x64xf32>
    %28 = tpu.matmul %13, %20, %cst_9 {dimension_numbers = #tpu.dot_dimension_numbers<[2], [2], [1], [1], [0, 0, 0, 1, 1, 1], [0], [0]>} : vector<16x64x32xbf16>, vector<16x64x32xbf16>, vector<16x64x64xf32> -> vector<16x64x64xf32>
    "tpu.trace_stop"() : () -> ()
    %cst_10 = arith.constant dense<0xFF800000> : vector<16x64xf32>
    %29 = vector.multi_reduction <maximumf>, %28, %cst_10 [2] : vector<16x64x64xf32> to vector<16x64xf32>
    %30 = vector.shape_cast %29 : vector<16x64xf32> to vector<16x64x1xf32>
    %31 = vector.broadcast %30 : vector<16x64x1xf32> to vector<16x64x64xf32>
    %32 = arith.subf %28, %31 : vector<16x64x64xf32>
    %33 = math.exp %32 : vector<16x64x64xf32>
    %cst_11 = arith.constant dense<0.000000e+00> : vector<16x64xf32>
    %34 = vector.multi_reduction <add>, %33, %cst_11 [2] : vector<16x64x64xf32> to vector<16x64xf32>
    %35 = vector.shape_cast %34 : vector<16x64xf32> to vector<16x64x1xf32>
    %36 = tpu.reciprocal %35 {approx = true} : vector<16x64x1xf32> -> vector<16x64x1xf32>
    %37 = vector.broadcast %36 : vector<16x64x1xf32> to vector<16x64x64xf32>
    %38 = arith.mulf %33, %37 : vector<16x64x64xf32>
    %39 = arith.truncf %38 : vector<16x64x64xf32> to vector<16x64x64xbf16>
    "tpu.trace_start"() <{level = 10 : i32, message = "bnm,bmd->bnd"}> : () -> ()
    %cst_12 = arith.constant dense<0.000000e+00> : vector<16x64x32xf32>
    %40 = tpu.matmul %39, %27, %cst_12 {dimension_numbers = #tpu.dot_dimension_numbers<[2], [1], [1], [2], [0, 0, 0, 1, 1, 2], [0], [0]>} : vector<16x64x64xbf16>, vector<16x64x32xbf16>, vector<16x64x32xf32> -> vector<16x64x32xf32>
    "tpu.trace_stop"() : () -> ()
    %41 = arith.truncf %40 : vector<16x64x32xf32> to vector<16x64x32xbf16>
    %42 = vector.extract_strided_slice %41 {offsets = [0, 0, 0], sizes = [4, 64, 32], strides = [1, 1, 1]} : vector<16x64x32xbf16> to vector<4x64x32xbf16>
    %43 = vector.extract_strided_slice %41 {offsets = [4, 0, 0], sizes = [4, 64, 32], strides = [1, 1, 1]} : vector<16x64x32xbf16> to vector<4x64x32xbf16>
    %44 = vector.extract_strided_slice %41 {offsets = [8, 0, 0], sizes = [4, 64, 32], strides = [1, 1, 1]} : vector<16x64x32xbf16> to vector<4x64x32xbf16>
    %45 = vector.extract_strided_slice %41 {offsets = [12, 0, 0], sizes = [4, 64, 32], strides = [1, 1, 1]} : vector<16x64x32xbf16> to vector<4x64x32xbf16>
    %46 = tpu.concatenate %42, %43, %44, %45 in 2 : vector<4x64x32xbf16>, vector<4x64x32xbf16>, vector<4x64x32xbf16>, vector<4x64x32xbf16> -> vector<4x64x128xbf16>
    %47 = vector.shape_cast %46 : vector<4x64x128xbf16> to vector<256x128xbf16>
    %c0_13 = arith.constant 0 : index
    %c0_14 = arith.constant 0 : index
    %48 = vector.load %arg6[%c0_13, %c0_14] : memref<128x128xbf16, #tpu.memory_space<vmem>>, vector<128x128xbf16>
    %cst_15 = arith.constant dense<0.000000e+00> : vector<256x128xf32>
    %49 = tpu.matmul %47, %48, %cst_15 {dimension_numbers = #tpu.dot_dimension_numbers<[1], [0], [0], [1], [0, 0, 1, 1], [], []>} : vector<256x128xbf16>, vector<128x128xbf16>, vector<256x128xf32> -> vector<256x128xf32>
    %cst_16 = arith.constant dense<0.000000e+00> : vector<256xf32>
    %50 = vector.multi_reduction <add>, %49, %cst_16 [1] : vector<256x128xf32> to vector<256xf32>
    %51 = vector.shape_cast %50 : vector<256xf32> to vector<256x1xf32>
    %cst_17 = arith.constant 1.280000e+02 : f32
    %52 = vector.broadcast %cst_17 : f32 to vector<256x1xf32>
    %53 = arith.divf %51, %52 : vector<256x1xf32>
    %54 = vector.broadcast %53 : vector<256x1xf32> to vector<256x128xf32>
    %55 = arith.subf %49, %54 : vector<256x128xf32>
    %56 = arith.mulf %55, %55 : vector<256x128xf32>
    %cst_18 = arith.constant dense<0.000000e+00> : vector<256xf32>
    %57 = vector.multi_reduction <add>, %56, %cst_18 [1] : vector<256x128xf32> to vector<256xf32>
    %58 = vector.shape_cast %57 : vector<256xf32> to vector<256x1xf32>
    %cst_19 = arith.constant 1.280000e+02 : f32
    %59 = vector.broadcast %cst_19 : f32 to vector<256x1xf32>
    %60 = arith.divf %58, %59 : vector<256x1xf32>
    %61 = vector.broadcast %53 : vector<256x1xf32> to vector<256x128xf32>
    %62 = arith.subf %49, %61 : vector<256x128xf32>
    %cst_20 = arith.constant 9.99999974E-6 : f32
    %63 = vector.broadcast %cst_20 : f32 to vector<256x1xf32>
    %64 = arith.addf %60, %63 : vector<256x1xf32>
    %65 = math.rsqrt %64 : vector<256x1xf32>
    %66 = vector.broadcast %65 : vector<256x1xf32> to vector<256x128xf32>
    %67 = arith.mulf %62, %66 : vector<256x128xf32>
    %c0_21 = arith.constant 0 : index
    %c0_22 = arith.constant 0 : index
    %68 = vector.load %arg7[%c0_21, %c0_22] : memref<1x128xf32, #tpu.memory_space<vmem>>, vector<1x128xf32>
    %69 = vector.broadcast %68 : vector<1x128xf32> to vector<256x128xf32>
    %70 = arith.mulf %67, %69 : vector<256x128xf32>
    %71 = arith.addf %3, %70 : vector<256x128xf32>
    %72 = arith.truncf %71 : vector<256x128xf32> to vector<256x128xbf16>
    %c0_23 = arith.constant 0 : index
    %c0_24 = arith.constant 0 : index
    %73 = vector.load %arg8[%c0_23, %c0_24] : memref<128x512xbf16, #tpu.memory_space<vmem>>, vector<128x512xbf16>
    %cst_25 = arith.constant dense<0.000000e+00> : vector<256x512xf32>
    %74 = tpu.matmul %72, %73, %cst_25 {dimension_numbers = #tpu.dot_dimension_numbers<[1], [0], [0], [1], [0, 0, 1, 1], [], []>} : vector<256x128xbf16>, vector<128x512xbf16>, vector<256x512xf32> -> vector<256x512xf32>
    %75 = arith.mulf %74, %74 : vector<256x512xf32>
    %76 = arith.mulf %74, %75 : vector<256x512xf32>
    %cst_26 = arith.constant 4.471500e-02 : f32
    %77 = vector.broadcast %cst_26 : f32 to vector<256x512xf32>
    %78 = arith.mulf %77, %76 : vector<256x512xf32>
    %79 = arith.addf %74, %78 : vector<256x512xf32>
    %cst_27 = arith.constant 0.797884583 : f32
    %80 = vector.broadcast %cst_27 : f32 to vector<256x512xf32>
    %81 = arith.mulf %80, %79 : vector<256x512xf32>
    %82 = math.tanh %81 : vector<256x512xf32>
    %cst_28 = arith.constant 1.000000e+00 : f32
    %83 = vector.broadcast %cst_28 : f32 to vector<256x512xf32>
    %84 = arith.addf %83, %82 : vector<256x512xf32>
    %cst_29 = arith.constant 5.000000e-01 : f32
    %85 = vector.broadcast %cst_29 : f32 to vector<256x512xf32>
    %86 = arith.mulf %85, %84 : vector<256x512xf32>
    %87 = arith.mulf %74, %86 : vector<256x512xf32>
    %88 = arith.truncf %87 : vector<256x512xf32> to vector<256x512xbf16>
    %c0_30 = arith.constant 0 : index
    %c0_31 = arith.constant 0 : index
    %89 = vector.load %arg9[%c0_30, %c0_31] : memref<512x128xbf16, #tpu.memory_space<vmem>>, vector<512x128xbf16>
    %cst_32 = arith.constant dense<0.000000e+00> : vector<256x128xf32>
    %90 = tpu.matmul %88, %89, %cst_32 {dimension_numbers = #tpu.dot_dimension_numbers<[1], [0], [0], [1], [0, 0, 1, 1], [], []>} : vector<256x512xbf16>, vector<512x128xbf16>, vector<256x128xf32> -> vector<256x128xf32>
    %cst_33 = arith.constant dense<0.000000e+00> : vector<256xf32>
    %91 = vector.multi_reduction <add>, %90, %cst_33 [1] : vector<256x128xf32> to vector<256xf32>
    %92 = vector.shape_cast %91 : vector<256xf32> to vector<256x1xf32>
    %cst_34 = arith.constant 1.280000e+02 : f32
    %93 = vector.broadcast %cst_34 : f32 to vector<256x1xf32>
    %94 = arith.divf %92, %93 : vector<256x1xf32>
    %95 = vector.broadcast %94 : vector<256x1xf32> to vector<256x128xf32>
    %96 = arith.subf %90, %95 : vector<256x128xf32>
    %97 = arith.mulf %96, %96 : vector<256x128xf32>
    %cst_35 = arith.constant dense<0.000000e+00> : vector<256xf32>
    %98 = vector.multi_reduction <add>, %97, %cst_35 [1] : vector<256x128xf32> to vector<256xf32>
    %99 = vector.shape_cast %98 : vector<256xf32> to vector<256x1xf32>
    %cst_36 = arith.constant 1.280000e+02 : f32
    %100 = vector.broadcast %cst_36 : f32 to vector<256x1xf32>
    %101 = arith.divf %99, %100 : vector<256x1xf32>
    %102 = vector.broadcast %94 : vector<256x1xf32> to vector<256x128xf32>
    %103 = arith.subf %90, %102 : vector<256x128xf32>
    %cst_37 = arith.constant 9.99999974E-6 : f32
    %104 = vector.broadcast %cst_37 : f32 to vector<256x1xf32>
    %105 = arith.addf %101, %104 : vector<256x1xf32>
    %106 = math.rsqrt %105 : vector<256x1xf32>
    %107 = vector.broadcast %106 : vector<256x1xf32> to vector<256x128xf32>
    %108 = arith.mulf %103, %107 : vector<256x128xf32>
    %c0_38 = arith.constant 0 : index
    %c0_39 = arith.constant 0 : index
    %109 = vector.load %arg10[%c0_38, %c0_39] : memref<1x128xf32, #tpu.memory_space<vmem>>, vector<1x128xf32>
    %110 = vector.broadcast %109 : vector<1x128xf32> to vector<256x128xf32>
    %111 = arith.mulf %108, %110 : vector<256x128xf32>
    %112 = arith.addf %71, %111 : vector<256x128xf32>
    %113 = vector.shape_cast %112 : vector<256x128xf32> to vector<1x32x8x128xf32>
    %c0_40 = arith.constant 0 : index
    %c0_41 = arith.constant 0 : index
    %c0_42 = arith.constant 0 : index
    %c0_43 = arith.constant 0 : index
    %114 = vector.load %arg11[%c0_40, %c0_41, %c0_42, %c0_43] : memref<1x32x8x128xf32, #tpu.memory_space<vmem>>, vector<1x32x8x128xf32>
    tpu.vector_store %arg11[%c0_40, %c0_41, %c0_42, %c0_43], %113 {strides = array<i32>} : memref<1x32x8x128xf32, #tpu.memory_space<vmem>>, vector<1x32x8x128xf32>,
    return
  }
  func.func @transform_0(%arg0: i32, %arg1: i32, %arg2: i32) -> (i32, i32, i32, i32) {
    %c0_i32 = arith.constant 0 : i32
    %c0_i32_0 = arith.constant 0 : i32
    return %arg0, %arg1, %arg2, %c0_i32 : i32, i32, i32, i32
  }
  func.func @transform_1(%arg0: i32, %arg1: i32, %arg2: i32) -> (i32, i32, i32, i32) {
    %c0_i32 = arith.constant 0 : i32
    %c0_i32_0 = arith.constant 0 : i32
    return %arg0, %arg1, %arg2, %c0_i32 : i32, i32, i32, i32
  }
  func.func @transform_2(%arg0: i32, %arg1: i32, %arg2: i32) -> (i32, i32) {
    %c0_i32 = arith.constant 0 : i32
    %c0_i32_0 = arith.constant 0 : i32
    %c0_i32_1 = arith.constant 0 : i32
    return %c0_i32, %c0_i32_0 : i32, i32
  }
  func.func @transform_3(%arg0: i32, %arg1: i32, %arg2: i32) -> (i32, i32) {
    %c0_i32 = arith.constant 0 : i32
    %c0_i32_0 = arith.constant 0 : i32
    %c0_i32_1 = arith.constant 0 : i32
    return %c0_i32, %c0_i32_0 : i32, i32
  }
  func.func @transform_4(%arg0: i32, %arg1: i32, %arg2: i32) -> (i32, i32) {
    %c0_i32 = arith.constant 0 : i32
    %c0_i32_0 = arith.constant 0 : i32
    %c0_i32_1 = arith.constant 0 : i32
    return %c0_i32, %c0_i32_0 : i32, i32
  }
  func.func @transform_5(%arg0: i32, %arg1: i32, %arg2: i32) -> (i32, i32) {
    %c0_i32 = arith.constant 0 : i32
    %c0_i32_0 = arith.constant 0 : i32
    %c0_i32_1 = arith.constant 0 : i32
    return %c0_i32, %c0_i32_0 : i32, i32
  }
  func.func @transform_6(%arg0: i32, %arg1: i32, %arg2: i32) -> (i32, i32) {
    %c0_i32 = arith.constant 0 : i32
    %c0_i32_0 = arith.constant 0 : i32
    %c0_i32_1 = arith.constant 0 : i32
    return %c0_i32, %c0_i32_0 : i32, i32
  }
  func.func @transform_7(%arg0: i32, %arg1: i32, %arg2: i32) -> (i32, i32) {
    %c0_i32 = arith.constant 0 : i32
    %c0_i32_0 = arith.constant 0 : i32
    %c0_i32_1 = arith.constant 0 : i32
    return %c0_i32, %c0_i32_0 : i32, i32
  }
  func.func @transform_8(%arg0: i32, %arg1: i32, %arg2: i32) -> (i32, i32, i32, i32) {
    %c0_i32 = arith.constant 0 : i32
    %c0_i32_0 = arith.constant 0 : i32
    return %arg0, %arg1, %arg2, %c0_i32 : i32, i32, i32, i32
  }
}

</mosaic_0001>

<llo_original>
// kernel: parallel_s2vit_block.1
$region0: #{parallel_s2vit_block.1}
  #allocation0 [shape = 'u32[]', space=smem, size = 0x4, offset = 0x4, fixed_abs, tag = 'smem constant byte address 0x4 - core index']
  #allocation1 [shape = 'u32[144,128]{1,0:T(1,128)}', space=vmem, size = 0x12000, scoped, tag = 'internal scratch']
  %s0 = inlined_call_operand.vmem [shape: bf16[2,32,32,128], index: 0, kind: input, shape index: {}]
  %s1 = inlined_call_operand.vmem [shape: f32[2,32,32,128], index: 1, kind: input, shape index: {}]
  %s2 = inlined_call_operand.vmem [shape: bf16[128,384], index: 2, kind: input, shape index: {}]
  %s3 = inlined_call_operand.vmem [shape: bf16[128,128], index: 3, kind: input, shape index: {}]
  %s4 = inlined_call_operand.vmem [shape: f32[1,128], index: 4, kind: input, shape index: {}]
  %s5 = inlined_call_operand.vmem [shape: bf16[128,512], index: 5, kind: input, shape index: {}]
  %s6 = inlined_call_operand.vmem [shape: bf16[512,128], index: 6, kind: input, shape index: {}]
  %s7 = inlined_call_operand.vmem [shape: f32[1,128], index: 7, kind: input, shape index: {}]
  %s8 = inlined_call_operand.hbm [shape: f32[2,32,32,128], index: 8, kind: output, shape index: {}]
  %s9 = sld [smem:[#allocation0]]
  $region144: #{parallel_s2vit_block.1} parent=0
    _
  %s11 = ssub.s32 1, %s9
  %s12 = scalar_select 0, %s11, %s9
  $region1: #{parallel_s2vit_block.1} parent=0
    #allocation2 [shape = 'u8[131072]{0}', space=vmem, size = 0x20000, scoped, tag = 'input window, operand 0']
    #allocation3 [shape = 'u8[262144]{0}', space=vmem, size = 0x40000, scoped, tag = 'input window, operand 1']
    #allocation4 [shape = 'u8[262144]{0}', space=vmem, size = 0x40000, scoped, tag = 'output window, operand 0']
    #allocation5 [shape = 's32[2]{0}', space=sflag, size = 0x8, scoped, tag = 'scoped memory for parallel_s2vit_block.1']
    %13 = vsyncpa [#allocation5], 0
    %s14 = scalar_lea.sflag [#allocation5], 1
    %15 = vsyncpa %s14, 0
    loop: start=0, step=1, limit=10
    $region2: #{parallel_s2vit_block.1} parent=1 // loop_pre_header
      _
    $region3: #{parallel_s2vit_block.1} parent=1 // loop_header
      %s17 = sphi 0, %s21
      %p18 = scmp.ge.s32.totalorder %s17, 10
      %s24 = sphi 0, %s43
      %s25 = sphi 0, %s39
      %s26 = sphi 0, %s35
      %s27 = sphi 0, %s24
      %s28 = sphi 0, %s25
      %s29 = sphi 0, %s26
      %s30 = sphi 0, %s27
      %s31 = sphi 0, %s28
      %s32 = sphi 0, %s29
      %s50 = sphi 0, %s52
      %s53 = sphi 0, %s50
      %s54 = sphi 0, %s53
      %s70 = sphi 0, %s54
      %s80 = sphi 0, %s82
      %s83 = sphi 0, %s80
      %s84 = sphi 0, %s83
      %s100 = sphi 0, %s84
      %s104 = sphi 0, %s104
      %s106 = sphi 0, %s104
      %s107 = sphi 0, %s106
      %s121 = sphi 0, %s107
      %s125 = sphi 0, %s125
      %s127 = sphi 0, %s125
      %s128 = sphi 0, %s127
      %s142 = sphi 0, %s128
      %s146 = sphi 0, %s146
      %s148 = sphi 0, %s146
      %s149 = sphi 0, %s148
      %s163 = sphi 0, %s149
      %s167 = sphi 0, %s167
      %s169 = sphi 0, %s167
      %s170 = sphi 0, %s169
      %s184 = sphi 0, %s170
      %s188 = sphi 0, %s188
      %s190 = sphi 0, %s188
      %s191 = sphi 0, %s190
      %s205 = sphi 0, %s191
      %s209 = sphi 0, %s209
      %s211 = sphi 0, %s209
      %s212 = sphi 0, %s211
      %s226 = sphi 0, %s212
      %s236 = sphi 0, %s238
      %s239 = sphi 0, %s236
      %s240 = sphi 0, %s239
      %s256 = sphi 0, %s240
    $region4: #{parallel_s2vit_block.1} parent=1 // loop_header_branch
      %20 = sbr.rel (%p18) target = $region8
    $region5: #{parallel_s2vit_block.1} parent=1 // loop_body
      %s22 = ssub.s32 %s17, 1
      %s23 = ssub.s32 %s17, 2
      %s33 = sadd.s32 1, %s26
      %p34 = scmp.ge.s32.totalorder %s33, 4
      %s35 = scalar_select %p34, 0, %s33
      %s36 = sadd.s32 1, %s25
      %s37 = scalar_select %p34, %s36, %s25
      %p38 = scmp.ge.s32.totalorder %s37, 1
      %s39 = scalar_select %p38, 0, %s37
      %s40 = sadd.s32 1, %s24
      %s41 = scalar_select %p38, %s40, %s24
      %p42 = scmp.ge.s32.totalorder %s41, 2
      %s43 = scalar_select %p42, 0, %s41
      %s44 = ssub.s32 %s24, %s43
      %s45 = ssub.s32 %s25, %s39
      %s46 = sor.u32 %s44, %s45
      %s47 = ssub.s32 %s26, %s35
      %s48 = sor.u32 %s46, %s47
      %p49 = scmp.eq.s32.totalorder %s48, 0
      %s51 = sadd.s32 %s50, 1
      %s52 = scalar_select %p49, %s50, %s51
      %p55 = pneg %p49
      %p56 = scmp.eq.s32.totalorder %s17, 7
      %p57 = por %p55, %p56
      %p58 = scmp.ne.s32.totalorder %s50, %s53
      %p59 = scmp.eq.s32.totalorder %s17, 0
      %p60 = por %p58, %p59
      %p61 = scmp.ne.s32.totalorder %s50, %s53
      %p62 = scmp.eq.s32.totalorder %s22, 7
      %p63 = por %p61, %p62
      %p64 = scmp.ne.s32.totalorder %s53, %s54
      %p65 = scmp.eq.s32.totalorder %s22, 0
      %p66 = por %p64, %p65
      %p67 = scmp.ne.s32.totalorder %s53, %s54
      %p68 = scmp.eq.s32.totalorder %s23, 7
      %p69 = por %p67, %p68
      %p71 = scmp.ne.s32.totalorder %s54, %s70
      %p72 = scmp.eq.s32.totalorder %s23, 0
      %p73 = por %p71, %p72
      %s74 = ssub.s32 %s24, %s43
      %s75 = ssub.s32 %s25, %s39
      %s76 = sor.u32 %s74, %s75
      %s77 = ssub.s32 %s26, %s35
      %s78 = sor.u32 %s76, %s77
      %p79 = scmp.eq.s32.totalorder %s78, 0
      %s81 = sadd.s32 %s80, 1
      %s82 = scalar_select %p79, %s80, %s81
      %p85 = pneg %p79
      %p86 = scmp.eq.s32.totalorder %s17, 7
      %p87 = por %p85, %p86
      %p88 = scmp.ne.s32.totalorder %s80, %s83
      %p89 = scmp.eq.s32.totalorder %s17, 0
      %p90 = por %p88, %p89
      %p91 = scmp.ne.s32.totalorder %s80, %s83
      %p92 = scmp.eq.s32.totalorder %s22, 7
      %p93 = por %p91, %p92
      %p94 = scmp.ne.s32.totalorder %s83, %s84
      %p95 = scmp.eq.s32.totalorder %s22, 0
      %p96 = por %p94, %p95
      %p97 = scmp.ne.s32.totalorder %s83, %s84
      %p98 = scmp.eq.s32.totalorder %s23, 7
      %p99 = por %p97, %p98
      %p101 = scmp.ne.s32.totalorder %s84, %s100
      %p102 = scmp.eq.s32.totalorder %s23, 0
      %p103 = por %p101, %p102
      %s105 = sadd.s32 %s104, 1
      %p108 = scmp.eq.s32.totalorder %s17, 7
      %p109 = scmp.ne.s32.totalorder %s104, %s106
      %p110 = scmp.eq.s32.totalorder %s17, 0
      %p111 = por %p109, %p110
      %p112 = scmp.ne.s32.totalorder %s104, %s106
      %p113 = scmp.eq.s32.totalorder %s22, 7
      %p114 = por %p112, %p113
      %p115 = scmp.ne.s32.totalorder %s106, %s107
      %p116 = scmp.eq.s32.totalorder %s22, 0
      %p117 = por %p115, %p116
      %p118 = scmp.ne.s32.totalorder %s106, %s107
      %p119 = scmp.eq.s32.totalorder %s23, 7
      %p120 = por %p118, %p119
      %p122 = scmp.ne.s32.totalorder %s107, %s121
      %p123 = scmp.eq.s32.totalorder %s23, 0
      %p124 = por %p122, %p123
      %s126 = sadd.s32 %s125, 1
      %p129 = scmp.eq.s32.totalorder %s17, 7
      %p130 = scmp.ne.s32.totalorder %s125, %s127
      %p131 = scmp.eq.s32.totalorder %s17, 0
      %p132 = por %p130, %p131
      %p133 = scmp.ne.s32.totalorder %s125, %s127
      %p134 = scmp.eq.s32.totalorder %s22, 7
      %p135 = por %p133, %p134
      %p136 = scmp.ne.s32.totalorder %s127, %s128
      %p137 = scmp.eq.s32.totalorder %s22, 0
      %p138 = por %p136, %p137
      %p139 = scmp.ne.s32.totalorder %s127, %s128
      %p140 = scmp.eq.s32.totalorder %s23, 7
      %p141 = por %p139, %p140
      %p143 = scmp.ne.s32.totalorder %s128, %s142
      %p144 = scmp.eq.s32.totalorder %s23, 0
      %p145 = por %p143, %p144
      %s147 = sadd.s32 %s146, 1
      %p150 = scmp.eq.s32.totalorder %s17, 7
      %p151 = scmp.ne.s32.totalorder %s146, %s148
      %p152 = scmp.eq.s32.totalorder %s17, 0
      %p153 = por %p151, %p152
      %p154 = scmp.ne.s32.totalorder %s146, %s148
      %p155 = scmp.eq.s32.totalorder %s22, 7
      %p156 = por %p154, %p155
      %p157 = scmp.ne.s32.totalorder %s148, %s149
      %p158 = scmp.eq.s32.totalorder %s22, 0
      %p159 = por %p157, %p158
      %p160 = scmp.ne.s32.totalorder %s148, %s149
      %p161 = scmp.eq.s32.totalorder %s23, 7
      %p162 = por %p160, %p161
      %p164 = scmp.ne.s32.totalorder %s149, %s163
      %p165 = scmp.eq.s32.totalorder %s23, 0
      %p166 = por %p164, %p165
      %s168 = sadd.s32 %s167, 1
      %p171 = scmp.eq.s32.totalorder %s17, 7
      %p172 = scmp.ne.s32.totalorder %s167, %s169
      %p173 = scmp.eq.s32.totalorder %s17, 0
      %p174 = por %p172, %p173
      %p175 = scmp.ne.s32.totalorder %s167, %s169
      %p176 = scmp.eq.s32.totalorder %s22, 7
      %p177 = por %p175, %p176
      %p178 = scmp.ne.s32.totalorder %s169, %s170
      %p179 = scmp.eq.s32.totalorder %s22, 0
      %p180 = por %p178, %p179
      %p181 = scmp.ne.s32.totalorder %s169, %s170
      %p182 = scmp.eq.s32.totalorder %s23, 7
      %p183 = por %p181, %p182
      %p185 = scmp.ne.s32.totalorder %s170, %s184
      %p186 = scmp.eq.s32.totalorder %s23, 0
      %p187 = por %p185, %p186
      %s189 = sadd.s32 %s188, 1
      %p192 = scmp.eq.s32.totalorder %s17, 7
      %p193 = scmp.ne.s32.totalorder %s188, %s190
      %p194 = scmp.eq.s32.totalorder %s17, 0
      %p195 = por %p193, %p194
      %p196 = scmp.ne.s32.totalorder %s188, %s190
      %p197 = scmp.eq.s32.totalorder %s22, 7
      %p198 = por %p196, %p197
      %p199 = scmp.ne.s32.totalorder %s190, %s191
      %p200 = scmp.eq.s32.totalorder %s22, 0
      %p201 = por %p199, %p200
      %p202 = scmp.ne.s32.totalorder %s190, %s191
      %p203 = scmp.eq.s32.totalorder %s23, 7
      %p204 = por %p202, %p203
      %p206 = scmp.ne.s32.totalorder %s191, %s205
      %p207 = scmp.eq.s32.totalorder %s23, 0
      %p208 = por %p206, %p207
      %s210 = sadd.s32 %s209, 1
      %p213 = scmp.eq.s32.totalorder %s17, 7
      %p214 = scmp.ne.s32.totalorder %s209, %s211
      %p215 = scmp.eq.s32.totalorder %s17, 0
      %p216 = por %p214, %p215
      %p217 = scmp.ne.s32.totalorder %s209, %s211
      %p218 = scmp.eq.s32.totalorder %s22, 7
      %p219 = por %p217, %p218
      %p220 = scmp.ne.s32.totalorder %s211, %s212
      %p221 = scmp.eq.s32.totalorder %s22, 0
      %p222 = por %p220, %p221
      %p223 = scmp.ne.s32.totalorder %s211, %s212
      %p224 = scmp.eq.s32.totalorder %s23, 7
      %p225 = por %p223, %p224
      %p227 = scmp.ne.s32.totalorder %s212, %s226
      %p228 = scmp.eq.s32.totalorder %s23, 0
      %p229 = por %p227, %p228
      %s230 = ssub.s32 %s24, %s43
      %s231 = ssub.s32 %s25, %s39
      %s232 = sor.u32 %s230, %s231
      %s233 = ssub.s32 %s26, %s35
      %s234 = sor.u32 %s232, %s233
      %p235 = scmp.eq.s32.totalorder %s234, 0
      %s237 = sadd.s32 %s236, 1
      %s238 = scalar_select %p235, %s236, %s237
      %p241 = pneg %p235
      %p242 = scmp.eq.s32.totalorder %s17, 7
      %p243 = por %p241, %p242
      %p244 = scmp.ne.s32.totalorder %s236, %s239
      %p245 = scmp.eq.s32.totalorder %s17, 0
      %p246 = por %p244, %p245
      %p247 = scmp.ne.s32.totalorder %s236, %s239
      %p248 = scmp.eq.s32.totalorder %s22, 7
      %p249 = por %p247, %p248
      %p250 = scmp.ne.s32.totalorder %s239, %s240
      %p251 = scmp.eq.s32.totalorder %s22, 0
      %p252 = por %p250, %p251
      %p253 = scmp.ne.s32.totalorder %s239, %s240
      %p254 = scmp.eq.s32.totalorder %s23, 7
      %p255 = por %p253, %p254
      %p257 = scmp.ne.s32.totalorder %s240, %s256
      %p258 = scmp.eq.s32.totalorder %s23, 0
      %p259 = por %p257, %p258
      %p260 = scmp.le.s32.totalorder 1, %s17
      %p261 = scmp.lt.s32.totalorder %s17, 9
      %p262 = pnand %p260, %p261
      %p263 = pneg %p262
      // Predicated region
      $region9: #{parallel_s2vit_block.1} parent=5 // pred_check
        _
      $region10: #{parallel_s2vit_block.1} parent=5 // pred_check_branch
        %265 = sbr.rel (%p262) target = $region12
      $region11: #{parallel_s2vit_block.1} parent=5 // pred_region
        %s266 = ssub.s32 %s17, 1
        // Predicated region
        $region13: #{parallel_s2vit_block.1} parent=11 // pred_check
          %p267 = pneg %p117
        $region14: #{parallel_s2vit_block.1} parent=11 // pred_check_branch
          %269 = sbr.rel (%p267) target = $region16
        $region15: #{parallel_s2vit_block.1} parent=11 // pred_region
          _
        $region16: #{parallel_s2vit_block.1} parent=11 // pred_fallthru
          _
        // Predicated region
        $region17: #{parallel_s2vit_block.1} parent=11 // pred_check
          %p270 = pneg %p138
        $region18: #{parallel_s2vit_block.1} parent=11 // pred_check_branch
          %272 = sbr.rel (%p270) target = $region20
        $region19: #{parallel_s2vit_block.1} parent=11 // pred_region
          _
        $region20: #{parallel_s2vit_block.1} parent=11 // pred_fallthru
          _
        // Predicated region
        $region21: #{parallel_s2vit_block.1} parent=11 // pred_check
          %p273 = pneg %p159
        $region22: #{parallel_s2vit_block.1} parent=11 // pred_check_branch
          %275 = sbr.rel (%p273) target = $region24
        $region23: #{parallel_s2vit_block.1} parent=11 // pred_region
          _
        $region24: #{parallel_s2vit_block.1} parent=11 // pred_fallthru
          _
        // Predicated region
        $region25: #{parallel_s2vit_block.1} parent=11 // pred_check
          %p276 = pneg %p180
        $region26: #{parallel_s2vit_block.1} parent=11 // pred_check_branch
          %278 = sbr.rel (%p276) target = $region28
        $region27: #{parallel_s2vit_block.1} parent=11 // pred_region
          _
        $region28: #{parallel_s2vit_block.1} parent=11 // pred_fallthru
          _
        // Predicated region
        $region29: #{parallel_s2vit_block.1} parent=11 // pred_check
          %p279 = pneg %p201
        $region30: #{parallel_s2vit_block.1} parent=11 // pred_check_branch
          %281 = sbr.rel (%p279) target = $region32
        $region31: #{parallel_s2vit_block.1} parent=11 // pred_region
          _
        $region32: #{parallel_s2vit_block.1} parent=11 // pred_fallthru
          _
        // Predicated region
        $region33: #{parallel_s2vit_block.1} parent=11 // pred_check
          %p282 = pneg %p222
        $region34: #{parallel_s2vit_block.1} parent=11 // pred_check_branch
          %284 = sbr.rel (%p282) target = $region36
        $region35: #{parallel_s2vit_block.1} parent=11 // pred_region
          _
        $region36: #{parallel_s2vit_block.1} parent=11 // pred_fallthru
          _
      $region12: #{parallel_s2vit_block.1} parent=5 // pred_fallthru
        _
      %p285 = scmp.lt.s32.totalorder %s17, 8
      // Predicated region
      $region37: #{parallel_s2vit_block.1} parent=5 // pred_check
        %p286 = pneg %p285
      $region38: #{parallel_s2vit_block.1} parent=5 // pred_check_branch
        %288 = sbr.rel (%p286) target = $region40
      $region39: #{parallel_s2vit_block.1} parent=5 // pred_region
        // Predicated region
        $region41: #{parallel_s2vit_block.1} parent=39 // pred_check
          %p289 = pneg %p60
        $region42: #{parallel_s2vit_block.1} parent=39 // pred_check_branch
          %291 = sbr.rel (%p289) target = $region44
        $region43: #{parallel_s2vit_block.1} parent=39 // pred_region
          %s292 = sand.u32 %s50, 1
          %s293 = sand.u32 %s50, 1
          %s294 = smul.addr %s293, 128
          %s295 = scalar_lea.vmem [#allocation2], %s294
          %s296 = smul.u32 32, %s25
          %s297 = smul.addr %s296, 4
          %s298 = sadd.s32 %s26, %s297
          %s299 = smul.addr %s24, 128
          %s300 = sadd.s32 %s298, %s299
          %s301 = smul.addr %s300, 4
          %s302 = scalar_lea.vmem %s0, %s301
          // Predicated region
          $region45: #{parallel_s2vit_block.1} parent=43 // pred_check
            _
          $region46: #{parallel_s2vit_block.1} parent=43 // pred_check_branch
            %304 = sbr.rel (0) target = $region48
          $region47: #{parallel_s2vit_block.1} parent=43 // pred_region
            // Predicated region
            $region49: #{parallel_s2vit_block.1} parent=47 // pred_check
              _
            $region50: #{parallel_s2vit_block.1} parent=47 // pred_check_branch
              %306 = sbr.rel target = $region52
            $region51: #{parallel_s2vit_block.1} parent=47 // pred_region
              // Predicated region
              $region64: #{parallel_s2vit_block.1} parent=51 // pred_check
                _
              $region65: #{parallel_s2vit_block.1} parent=51 // pred_check_branch
                %384 = sbr.rel (0) target = $region67
              $region66: #{parallel_s2vit_block.1} parent=51 // pred_region
                loop: start=0, step=1, limit=1
                $region68: #{parallel_s2vit_block.1} parent=66 // loop_pre_header
                  _
                $region69: #{parallel_s2vit_block.1} parent=66 // loop_header
                  %s386 = sphi 0, %s390
                  %p387 = scmp.ge.s32.totalorder %s386, 1
                  %s391 = sphi %s302, %s302
                  %s392 = sphi %s295, %s295
                $region70: #{parallel_s2vit_block.1} parent=66 // loop_header_branch
                  %389 = sbr.rel (%p387) target = $region74
                $region71: #{parallel_s2vit_block.1} parent=66 // loop_body
                  _
                $region72: #{parallel_s2vit_block.1} parent=66 // loop_footer
                  %s390 = sadd.s32 1, %s386
                $region73: #{parallel_s2vit_block.1} parent=66 // loop_footer_branch
                  %385 = sbr.rel target = $region69
                $region74: #{parallel_s2vit_block.1} parent=66 // loop_exit
                  _
                %s394 = ssub.s32 16, 1
                loop: start=0, step=1, limit=1
                $region75: #{parallel_s2vit_block.1} parent=66 // loop_pre_header
                  _
                $region76: #{parallel_s2vit_block.1} parent=66 // loop_header
                  %s396 = sphi 0, %s400
                  %p397 = scmp.ge.s32.totalorder %s396, 1
                  %s401 = sphi %s302, %s302
                  %s402 = sphi %s295, %s295
                $region77: #{parallel_s2vit_block.1} parent=66 // loop_header_branch
                  %399 = sbr.rel (%p397) target = $region81
                $region78: #{parallel_s2vit_block.1} parent=66 // loop_body
                  %v403 = vld [vmem:[%s401] sm:%s394]
                  %404 = vst [vmem:[%s402] sm:%s394] %v403
                  %v405 = vld [vmem:[%s401 + $0x10] sm:%s394]
                  %406 = vst [vmem:[%s402 + $0x4] sm:%s394] %v405
                  %v407 = vld [vmem:[%s401 + $0x20] sm:%s394]
                  %408 = vst [vmem:[%s402 + $0x8] sm:%s394] %v407
                  %v409 = vld [vmem:[%s401 + $0x30] sm:%s394]
                  %410 = vst [vmem:[%s402 + $0xc] sm:%s394] %v409
                  %v411 = vld [vmem:[%s401 + $0x40] sm:%s394]
                  %412 = vst [vmem:[%s402 + $0x10] sm:%s394] %v411
                  %v413 = vld [vmem:[%s401 + $0x50] sm:%s394]
                  %414 = vst [vmem:[%s402 + $0x14] sm:%s394] %v413
                  %v415 = vld [vmem:[%s401 + $0x60] sm:%s394]
                  %416 = vst [vmem:[%s402 + $0x18] sm:%s394] %v415
                  %v417 = vld [vmem:[%s401 + $0x70] sm:%s394]
                  %418 = vst [vmem:[%s402 + $0x1c] sm:%s394] %v417
                  %v419 = vld [vmem:[%s401 + $0x80] sm:%s394]
                  %420 = vst [vmem:[%s402 + $0x20] sm:%s394] %v419
                  %v421 = vld [vmem:[%s401 + $0x90] sm:%s394]
                  %422 = vst [vmem:[%s402 + $0x24] sm:%s394] %v421
                  %v423 = vld [vmem:[%s401 + $0xa0] sm:%s394]
                  %424 = vst [vmem:[%s402 + $0x28] sm:%s394] %v423
                  %v425 = vld [vmem:[%s401 + $0xb0] sm:%s394]
                  %426 = vst [vmem:[%s402 + $0x2c] sm:%s394] %v425
                  %v427 = vld [vmem:[%s401 + $0xc0] sm:%s394]
                  %428 = vst [vmem:[%s402 + $0x30] sm:%s394] %v427
                  %v429 = vld [vmem:[%s401 + $0xd0] sm:%s394]
                  %430 = vst [vmem:[%s402 + $0x34] sm:%s394] %v429
                  %v431 = vld [vmem:[%s401 + $0xe0] sm:%s394]
                  %432 = vst [vmem:[%s402 + $0x38] sm:%s394] %v431
                  %v433 = vld [vmem:[%s401 + $0xf0] sm:%s394]
                  %434 = vst [vmem:[%s402 + $0x3c] sm:%s394] %v433
                  %v435 = vld [vmem:[%s401 + $0x100] sm:%s394]
                  %436 = vst [vmem:[%s402 + $0x40] sm:%s394] %v435
                  %v437 = vld [vmem:[%s401 + $0x110] sm:%s394]
                  %438 = vst [vmem:[%s402 + $0x44] sm:%s394] %v437
                  %v439 = vld [vmem:[%s401 + $0x120] sm:%s394]
                  %440 = vst [vmem:[%s402 + $0x48] sm:%s394] %v439
                  %v441 = vld [vmem:[%s401 + $0x130] sm:%s394]
                  %442 = vst [vmem:[%s402 + $0x4c] sm:%s394] %v441
                  %v443 = vld [vmem:[%s401 + $0x140] sm:%s394]
                  %444 = vst [vmem:[%s402 + $0x50] sm:%s394] %v443
                  %v445 = vld [vmem:[%s401 + $0x150] sm:%s394]
                  %446 = vst [vmem:[%s402 + $0x54] sm:%s394] %v445
                  %v447 = vld [vmem:[%s401 + $0x160] sm:%s394]
                  %448 = vst [vmem:[%s402 + $0x58] sm:%s394] %v447
                  %v449 = vld [vmem:[%s401 + $0x170] sm:%s394]
                  %450 = vst [vmem:[%s402 + $0x5c] sm:%s394] %v449
                  %v451 = vld [vmem:[%s401 + $0x180] sm:%s394]
                  %452 = vst [vmem:[%s402 + $0x60] sm:%s394] %v451
                  %v453 = vld [vmem:[%s401 + $0x190] sm:%s394]
                  %454 = vst [vmem:[%s402 + $0x64] sm:%s394] %v453
                  %v455 = vld [vmem:[%s401 + $0x1a0] sm:%s394]
                  %456 = vst [vmem:[%s402 + $0x68] sm:%s394] %v455
                  %v457 = vld [vmem:[%s401 + $0x1b0] sm:%s394]
                  %458 = vst [vmem:[%s402 + $0x6c] sm:%s394] %v457
                  %v459 = vld [vmem:[%s401 + $0x1c0] sm:%s394]
                  %460 = vst [vmem:[%s402 + $0x70] sm:%s394] %v459
                  %v461 = vld [vmem:[%s401 + $0x1d0] sm:%s394]
                  %462 = vst [vmem:[%s402 + $0x74] sm:%s394] %v461
                  %v463 = vld [vmem:[%s401 + $0x1e0] sm:%s394]
                  %464 = vst [vmem:[%s402 + $0x78] sm:%s394] %v463
                  %v465 = vld [vmem:[%s401 + $0x1f0] sm:%s394]
                  %466 = vst [vmem:[%s402 + $0x7c] sm:%s394] %v465
                $region79: #{parallel_s2vit_block.1} parent=66 // loop_footer
                  %s400 = sadd.s32 1, %s396
                $region80: #{parallel_s2vit_block.1} parent=66 // loop_footer_branch
                  %395 = sbr.rel target = $region76
                $region81: #{parallel_s2vit_block.1} parent=66 // loop_exit
                  _
              $region67: #{parallel_s2vit_block.1} parent=51 // pred_fallthru
                _
            $region52: #{parallel_s2vit_block.1} parent=47 // pred_fallthru
              _
            // Predicated region
            $region53: #{parallel_s2vit_block.1} parent=47 // pred_check
              _
            $region54: #{parallel_s2vit_block.1} parent=47 // pred_check_branch
              %308 = sbr.rel (0) target = $region56
            $region55: #{parallel_s2vit_block.1} parent=47 // pred_region
              %s310 = ssub.s32 16, 1
              loop: start=0, step=1, limit=1
              $region57: #{parallel_s2vit_block.1} parent=55 // loop_pre_header
                _
              $region58: #{parallel_s2vit_block.1} parent=55 // loop_header
                %s312 = sphi 0, %s316
                %p313 = scmp.ge.s32.totalorder %s312, 1
                %s317 = sphi %s302, %s302
                %s318 = sphi %s295, %s295
              $region59: #{parallel_s2vit_block.1} parent=55 // loop_header_branch
                %315 = sbr.rel (%p313) target = $region63
              $region60: #{parallel_s2vit_block.1} parent=55 // loop_body
                %v319 = vld [vmem:[%s317] sm:%s310]
                %320 = vst [vmem:[%s318] sm:%s310] %v319
                %v321 = vld [vmem:[%s317 + $0x10] sm:%s310]
                %322 = vst [vmem:[%s318 + $0x4] sm:%s310] %v321
                %v323 = vld [vmem:[%s317 + $0x20] sm:%s310]
                %324 = vst [vmem:[%s318 + $0x8] sm:%s310] %v323
                %v325 = vld [vmem:[%s317 + $0x30] sm:%s310]
                %326 = vst [vmem:[%s318 + $0xc] sm:%s310] %v325
                %v327 = vld [vmem:[%s317 + $0x40] sm:%s310]
                %328 = vst [vmem:[%s318 + $0x10] sm:%s310] %v327
                %v329 = vld [vmem:[%s317 + $0x50] sm:%s310]
                %330 = vst [vmem:[%s318 + $0x14] sm:%s310] %v329
                %v331 = vld [vmem:[%s317 + $0x60] sm:%s310]
                %332 = vst [vmem:[%s318 + $0x18] sm:%s310] %v331
                %v333 = vld [vmem:[%s317 + $0x70] sm:%s310]
                %334 = vst [vmem:[%s318 + $0x1c] sm:%s310] %v333
                %v335 = vld [vmem:[%s317 + $0x80] sm:%s310]
                %336 = vst [vmem:[%s318 + $0x20] sm:%s310] %v335
                %v337 = vld [vmem:[%s317 + $0x90] sm:%s310]
                %338 = vst [vmem:[%s318 + $0x24] sm:%s310] %v337
                %v339 = vld [vmem:[%s317 + $0xa0] sm:%s310]
                %340 = vst [vmem:[%s318 + $0x28] sm:%s310] %v339
                %v341 = vld [vmem:[%s317 + $0xb0] sm:%s310]
                %342 = vst [vmem:[%s318 + $0x2c] sm:%s310] %v341
                %v343 = vld [vmem:[%s317 + $0xc0] sm:%s310]
                %344 = vst [vmem:[%s318 + $0x30] sm:%s310] %v343
                %v345 = vld [vmem:[%s317 + $0xd0] sm:%s310]
                %346 = vst [vmem:[%s318 + $0x34] sm:%s310] %v345
                %v347 = vld [vmem:[%s317 + $0xe0] sm:%s310]
                %348 = vst [vmem:[%s318 + $0x38] sm:%s310] %v347
                %v349 = vld [vmem:[%s317 + $0xf0] sm:%s310]
                %350 = vst [vmem:[%s318 + $0x3c] sm:%s310] %v349
                %v351 = vld [vmem:[%s317 + $0x100] sm:%s310]
                %352 = vst [vmem:[%s318 + $0x40] sm:%s310] %v351
                %v353 = vld [vmem:[%s317 + $0x110] sm:%s310]
                %354 = vst [vmem:[%s318 + $0x44] sm:%s310] %v353
                %v355 = vld [vmem:[%s317 + $0x120] sm:%s310]
                %356 = vst [vmem:[%s318 + $0x48] sm:%s310] %v355
                %v357 = vld [vmem:[%s317 + $0x130] sm:%s310]
                %358 = vst [vmem:[%s318 + $0x4c] sm:%s310] %v357
                %v359 = vld [vmem:[%s317 + $0x140] sm:%s310]
                %360 = vst [vmem:[%s318 + $0x50] sm:%s310] %v359
                %v361 = vld [vmem:[%s317 + $0x150] sm:%s310]
                %362 = vst [vmem:[%s318 + $0x54] sm:%s310] %v361
                %v363 = vld [vmem:[%s317 + $0x160] sm:%s310]
                %364 = vst [vmem:[%s318 + $0x58] sm:%s310] %v363
                %v365 = vld [vmem:[%s317 + $0x170] sm:%s310]
                %366 = vst [vmem:[%s318 + $0x5c] sm:%s310] %v365
                %v367 = vld [vmem:[%s317 + $0x180] sm:%s310]
                %368 = vst [vmem:[%s318 + $0x60] sm:%s310] %v367
                %v369 = vld [vmem:[%s317 + $0x190] sm:%s310]
                %370 = vst [vmem:[%s318 + $0x64] sm:%s310] %v369
                %v371 = vld [vmem:[%s317 + $0x1a0] sm:%s310]
                %372 = vst [vmem:[%s318 + $0x68] sm:%s310] %v371
                %v373 = vld [vmem:[%s317 + $0x1b0] sm:%s310]
                %374 = vst [vmem:[%s318 + $0x6c] sm:%s310] %v373
                %v375 = vld [vmem:[%s317 + $0x1c0] sm:%s310]
                %376 = vst [vmem:[%s318 + $0x70] sm:%s310] %v375
                %v377 = vld [vmem:[%s317 + $0x1d0] sm:%s310]
                %378 = vst [vmem:[%s318 + $0x74] sm:%s310] %v377
                %v379 = vld [vmem:[%s317 + $0x1e0] sm:%s310]
                %380 = vst [vmem:[%s318 + $0x78] sm:%s310] %v379
                %v381 = vld [vmem:[%s317 + $0x1f0] sm:%s310]
                %382 = vst [vmem:[%s318 + $0x7c] sm:%s310] %v381
              $region61: #{parallel_s2vit_block.1} parent=55 // loop_footer
                %s316 = sadd.s32 1, %s312
              $region62: #{parallel_s2vit_block.1} parent=55 // loop_footer_branch
                %311 = sbr.rel target = $region58
              $region63: #{parallel_s2vit_block.1} parent=55 // loop_exit
                _
            $region56: #{parallel_s2vit_block.1} parent=47 // pred_fallthru
              _
          $region48: #{parallel_s2vit_block.1} parent=43 // pred_fallthru
            _
          %467 = vnop
        $region44: #{parallel_s2vit_block.1} parent=39 // pred_fallthru
          _
        // Predicated region
        $region82: #{parallel_s2vit_block.1} parent=39 // pred_check
          %p468 = pneg %p90
        $region83: #{parallel_s2vit_block.1} parent=39 // pred_check_branch
          %470 = sbr.rel (%p468) target = $region85
        $region84: #{parallel_s2vit_block.1} parent=39 // pred_region
          %s471 = sand.u32 %s80, 1
          %s472 = sand.u32 %s80, 1
          %s473 = smul.addr %s472, 256
          %s474 = scalar_lea.vmem [#allocation3], %s473
          %s475 = smul.u32 32, %s25
          %s476 = smul.addr %s475, 4
          %s477 = sadd.s32 %s26, %s476
          %s478 = smul.addr %s24, 128
          %s479 = sadd.s32 %s477, %s478
          %s480 = smul.addr %s479, 8
          %s481 = scalar_lea.vmem %s1, %s480
          // Predicated region
          $region86: #{parallel_s2vit_block.1} parent=84 // pred_check
            _
          $region87: #{parallel_s2vit_block.1} parent=84 // pred_check_branch
            %483 = sbr.rel (0) target = $region89
          $region88: #{parallel_s2vit_block.1} parent=84 // pred_region
            // Predicated region
            $region90: #{parallel_s2vit_block.1} parent=88 // pred_check
              _
            $region91: #{parallel_s2vit_block.1} parent=88 // pred_check_branch
              %485 = sbr.rel (0) target = $region93
            $region92: #{parallel_s2vit_block.1} parent=88 // pred_region
              // Predicated region
              $region105: #{parallel_s2vit_block.1} parent=92 // pred_check
                _
              $region106: #{parallel_s2vit_block.1} parent=92 // pred_check_branch
                %563 = sbr.rel (0) target = $region108
              $region107: #{parallel_s2vit_block.1} parent=92 // pred_region
                loop: start=0, step=1, limit=1
                $region109: #{parallel_s2vit_block.1} parent=107 // loop_pre_header
                  _
                $region110: #{parallel_s2vit_block.1} parent=107 // loop_header
                  %s565 = sphi 0, %s569
                  %p566 = scmp.ge.s32.totalorder %s565, 1
                  %s570 = sphi %s481, %s481
                  %s571 = sphi %s474, %s474
                $region111: #{parallel_s2vit_block.1} parent=107 // loop_header_branch
                  %568 = sbr.rel (%p566) target = $region115
                $region112: #{parallel_s2vit_block.1} parent=107 // loop_body
                  %v572 = vld [vmem:[%s570] sm:$0xff]
                  %573 = vst [vmem:[%s571] sm:$0xff] %v572
                  %v574 = vld [vmem:[%s570 + $0x20] sm:$0xff]
                  %575 = vst [vmem:[%s571 + $0x8] sm:$0xff] %v574
                  %v576 = vld [vmem:[%s570 + $0x40] sm:$0xff]
                  %577 = vst [vmem:[%s571 + $0x10] sm:$0xff] %v576
                  %v578 = vld [vmem:[%s570 + $0x60] sm:$0xff]
                  %579 = vst [vmem:[%s571 + $0x18] sm:$0xff] %v578
                  %v580 = vld [vmem:[%s570 + $0x80] sm:$0xff]
                  %581 = vst [vmem:[%s571 + $0x20] sm:$0xff] %v580
                  %v582 = vld [vmem:[%s570 + $0xa0] sm:$0xff]
                  %583 = vst [vmem:[%s571 + $0x28] sm:$0xff] %v582
                  %v584 = vld [vmem:[%s570 + $0xc0] sm:$0xff]
                  %585 = vst [vmem:[%s571 + $0x30] sm:$0xff] %v584
                  %v586 = vld [vmem:[%s570 + $0xe0] sm:$0xff]
                  %587 = vst [vmem:[%s571 + $0x38] sm:$0xff] %v586
                  %v588 = vld [vmem:[%s570 + $0x100] sm:$0xff]
                  %589 = vst [vmem:[%s571 + $0x40] sm:$0xff] %v588
                  %v590 = vld [vmem:[%s570 + $0x120] sm:$0xff]
                  %591 = vst [vmem:[%s571 + $0x48] sm:$0xff] %v590
                  %v592 = vld [vmem:[%s570 + $0x140] sm:$0xff]
                  %593 = vst [vmem:[%s571 + $0x50] sm:$0xff] %v592
                  %v594 = vld [vmem:[%s570 + $0x160] sm:$0xff]
                  %595 = vst [vmem:[%s571 + $0x58] sm:$0xff] %v594
                  %v596 = vld [vmem:[%s570 + $0x180] sm:$0xff]
                  %597 = vst [vmem:[%s571 + $0x60] sm:$0xff] %v596
                  %v598 = vld [vmem:[%s570 + $0x1a0] sm:$0xff]
                  %599 = vst [vmem:[%s571 + $0x68] sm:$0xff] %v598
                  %v600 = vld [vmem:[%s570 + $0x1c0] sm:$0xff]
                  %601 = vst [vmem:[%s571 + $0x70] sm:$0xff] %v600
                  %v602 = vld [vmem:[%s570 + $0x1e0] sm:$0xff]
                  %603 = vst [vmem:[%s571 + $0x78] sm:$0xff] %v602
                  %v604 = vld [vmem:[%s570 + $0x200] sm:$0xff]
                  %605 = vst [vmem:[%s571 + $0x80] sm:$0xff] %v604
                  %v606 = vld [vmem:[%s570 + $0x220] sm:$0xff]
                  %607 = vst [vmem:[%s571 + $0x88] sm:$0xff] %v606
                  %v608 = vld [vmem:[%s570 + $0x240] sm:$0xff]
                  %609 = vst [vmem:[%s571 + $0x90] sm:$0xff] %v608
                  %v610 = vld [vmem:[%s570 + $0x260] sm:$0xff]
                  %611 = vst [vmem:[%s571 + $0x98] sm:$0xff] %v610
                  %v612 = vld [vmem:[%s570 + $0x280] sm:$0xff]
                  %613 = vst [vmem:[%s571 + $0xa0] sm:$0xff] %v612
                  %v614 = vld [vmem:[%s570 + $0x2a0] sm:$0xff]
                  %615 = vst [vmem:[%s571 + $0xa8] sm:$0xff] %v614
                  %v616 = vld [vmem:[%s570 + $0x2c0] sm:$0xff]
                  %617 = vst [vmem:[%s571 + $0xb0] sm:$0xff] %v616
                  %v618 = vld [vmem:[%s570 + $0x2e0] sm:$0xff]
                  %619 = vst [vmem:[%s571 + $0xb8] sm:$0xff] %v618
                  %v620 = vld [vmem:[%s570 + $0x300] sm:$0xff]
                  %621 = vst [vmem:[%s571 + $0xc0] sm:$0xff] %v620
                  %v622 = vld [vmem:[%s570 + $0x320] sm:$0xff]
                  %623 = vst [vmem:[%s571 + $0xc8] sm:$0xff] %v622
                  %v624 = vld [vmem:[%s570 + $0x340] sm:$0xff]
                  %625 = vst [vmem:[%s571 + $0xd0] sm:$0xff] %v624
                  %v626 = vld [vmem:[%s570 + $0x360] sm:$0xff]
                  %627 = vst [vmem:[%s571 + $0xd8] sm:$0xff] %v626
                  %v628 = vld [vmem:[%s570 + $0x380] sm:$0xff]
                  %629 = vst [vmem:[%s571 + $0xe0] sm:$0xff] %v628
                  %v630 = vld [vmem:[%s570 + $0x3a0] sm:$0xff]
                  %631 = vst [vmem:[%s571 + $0xe8] sm:$0xff] %v630
                  %v632 = vld [vmem:[%s570 + $0x3c0] sm:$0xff]
                  %633 = vst [vmem:[%s571 + $0xf0] sm:$0xff] %v632
                  %v634 = vld [vmem:[%s570 + $0x3e0] sm:$0xff]
                  %635 = vst [vmem:[%s571 + $0xf8] sm:$0xff] %v634
                $region113: #{parallel_s2vit_block.1} parent=107 // loop_footer
                  %s569 = sadd.s32 1, %s565
                $region114: #{parallel_s2vit_block.1} parent=107 // loop_footer_branch
                  %564 = sbr.rel target = $region110
                $region115: #{parallel_s2vit_block.1} parent=107 // loop_exit
                  _
              $region108: #{parallel_s2vit_block.1} parent=92 // pred_fallthru
                _
              // Predicated region
              $region116: #{parallel_s2vit_block.1} parent=92 // pred_check
                _
              $region117: #{parallel_s2vit_block.1} parent=92 // pred_check_branch
                %637 = sbr.rel target = $region119
              $region118: #{parallel_s2vit_block.1} parent=92 // pred_region
                _
              $region119: #{parallel_s2vit_block.1} parent=92 // pred_fallthru
                _
            $region93: #{parallel_s2vit_block.1} parent=88 // pred_fallthru
              _
            // Predicated region
            $region94: #{parallel_s2vit_block.1} parent=88 // pred_check
              _
            $region95: #{parallel_s2vit_block.1} parent=88 // pred_check_branch
              %487 = sbr.rel target = $region97
            $region96: #{parallel_s2vit_block.1} parent=88 // pred_region
              %s489 = ssub.s32 256, 1
              loop: start=0, step=1, limit=1
              $region98: #{parallel_s2vit_block.1} parent=96 // loop_pre_header
                _
              $region99: #{parallel_s2vit_block.1} parent=96 // loop_header
                %s491 = sphi 0, %s495
                %p492 = scmp.ge.s32.totalorder %s491, 1
                %s496 = sphi %s481, %s481
                %s497 = sphi %s474, %s474
              $region100: #{parallel_s2vit_block.1} parent=96 // loop_header_branch
                %494 = sbr.rel (%p492) target = $region104
              $region101: #{parallel_s2vit_block.1} parent=96 // loop_body
                %v498 = vld [vmem:[%s496] sm:%s489]
                %499 = vst [vmem:[%s497] sm:%s489] %v498
                %v500 = vld [vmem:[%s496 + $0x20] sm:%s489]
                %501 = vst [vmem:[%s497 + $0x8] sm:%s489] %v500
                %v502 = vld [vmem:[%s496 + $0x40] sm:%s489]
                %503 = vst [vmem:[%s497 + $0x10] sm:%s489] %v502
                %v504 = vld [vmem:[%s496 + $0x60] sm:%s489]
                %505 = vst [vmem:[%s497 + $0x18] sm:%s489] %v504
                %v506 = vld [vmem:[%s496 + $0x80] sm:%s489]
                %507 = vst [vmem:[%s497 + $0x20] sm:%s489] %v506
                %v508 = vld [vmem:[%s496 + $0xa0] sm:%s489]
                %509 = vst [vmem:[%s497 + $0x28] sm:%s489] %v508
                %v510 = vld [vmem:[%s496 + $0xc0] sm:%s489]
                %511 = vst [vmem:[%s497 + $0x30] sm:%s489] %v510
                %v512 = vld [vmem:[%s496 + $0xe0] sm:%s489]
                %513 = vst [vmem:[%s497 + $0x38] sm:%s489] %v512
                %v514 = vld [vmem:[%s496 + $0x100] sm:%s489]
                %515 = vst [vmem:[%s497 + $0x40] sm:%s489] %v514
                %v516 = vld [vmem:[%s496 + $0x120] sm:%s489]
                %517 = vst [vmem:[%s497 + $0x48] sm:%s489] %v516
                %v518 = vld [vmem:[%s496 + $0x140] sm:%s489]
                %519 = vst [vmem:[%s497 + $0x50] sm:%s489] %v518
                %v520 = vld [vmem:[%s496 + $0x160] sm:%s489]
                %521 = vst [vmem:[%s497 + $0x58] sm:%s489] %v520
                %v522 = vld [vmem:[%s496 + $0x180] sm:%s489]
                %523 = vst [vmem:[%s497 + $0x60] sm:%s489] %v522
                %v524 = vld [vmem:[%s496 + $0x1a0] sm:%s489]
                %525 = vst [vmem:[%s497 + $0x68] sm:%s489] %v524
                %v526 = vld [vmem:[%s496 + $0x1c0] sm:%s489]
                %527 = vst [vmem:[%s497 + $0x70] sm:%s489] %v526
                %v528 = vld [vmem:[%s496 + $0x1e0] sm:%s489]
                %529 = vst [vmem:[%s497 + $0x78] sm:%s489] %v528
                %v530 = vld [vmem:[%s496 + $0x200] sm:%s489]
                %531 = vst [vmem:[%s497 + $0x80] sm:%s489] %v530
                %v532 = vld [vmem:[%s496 + $0x220] sm:%s489]
                %533 = vst [vmem:[%s497 + $0x88] sm:%s489] %v532
                %v534 = vld [vmem:[%s496 + $0x240] sm:%s489]
                %535 = vst [vmem:[%s497 + $0x90] sm:%s489] %v534
                %v536 = vld [vmem:[%s496 + $0x260] sm:%s489]
                %537 = vst [vmem:[%s497 + $0x98] sm:%s489] %v536
                %v538 = vld [vmem:[%s496 + $0x280] sm:%s489]
                %539 = vst [vmem:[%s497 + $0xa0] sm:%s489] %v538
                %v540 = vld [vmem:[%s496 + $0x2a0] sm:%s489]
                %541 = vst [vmem:[%s497 + $0xa8] sm:%s489] %v540
                %v542 = vld [vmem:[%s496 + $0x2c0] sm:%s489]
                %543 = vst [vmem:[%s497 + $0xb0] sm:%s489] %v542
                %v544 = vld [vmem:[%s496 + $0x2e0] sm:%s489]
                %545 = vst [vmem:[%s497 + $0xb8] sm:%s489] %v544
                %v546 = vld [vmem:[%s496 + $0x300] sm:%s489]
                %547 = vst [vmem:[%s497 + $0xc0] sm:%s489] %v546
                %v548 = vld [vmem:[%s496 + $0x320] sm:%s489]
                %549 = vst [vmem:[%s497 + $0xc8] sm:%s489] %v548
                %v550 = vld [vmem:[%s496 + $0x340] sm:%s489]
                %551 = vst [vmem:[%s497 + $0xd0] sm:%s489] %v550
                %v552 = vld [vmem:[%s496 + $0x360] sm:%s489]
                %553 = vst [vmem:[%s497 + $0xd8] sm:%s489] %v552
                %v554 = vld [vmem:[%s496 + $0x380] sm:%s489]
                %555 = vst [vmem:[%s497 + $0xe0] sm:%s489] %v554
                %v556 = vld [vmem:[%s496 + $0x3a0] sm:%s489]
                %557 = vst [vmem:[%s497 + $0xe8] sm:%s489] %v556
                %v558 = vld [vmem:[%s496 + $0x3c0] sm:%s489]
                %559 = vst [vmem:[%s497 + $0xf0] sm:%s489] %v558
                %v560 = vld [vmem:[%s496 + $0x3e0] sm:%s489]
                %561 = vst [vmem:[%s497 + $0xf8] sm:%s489] %v560
              $region102: #{parallel_s2vit_block.1} parent=96 // loop_footer
                %s495 = sadd.s32 1, %s491
              $region103: #{parallel_s2vit_block.1} parent=96 // loop_footer_branch
                %490 = sbr.rel target = $region99
              $region104: #{parallel_s2vit_block.1} parent=96 // loop_exit
                _
            $region97: #{parallel_s2vit_block.1} parent=88 // pred_fallthru
              _
          $region89: #{parallel_s2vit_block.1} parent=84 // pred_fallthru
            _
          %638 = vnop
        $region85: #{parallel_s2vit_block.1} parent=39 // pred_fallthru
          _
      $region40: #{parallel_s2vit_block.1} parent=5 // pred_fallthru
        _
      %p639 = scmp.le.s32.totalorder 1, %s17
      %p640 = scmp.lt.s32.totalorder %s17, 9
      %p641 = pnand %p639, %p640
      %p642 = pneg %p641
      // Predicated region
      $region120: #{parallel_s2vit_block.1} parent=5 // pred_check
        _
      $region121: #{parallel_s2vit_block.1} parent=5 // pred_check_branch
        %644 = sbr.rel (%p641) target = $region123
      $region122: #{parallel_s2vit_block.1} parent=5 // pred_region
        %s645 = ssub.s32 %s17, 1
        %s646 = sand.u32 %s53, 1
        %s647 = sand.u32 %s53, 1
        %s648 = smul.addr %s647, 128
        %s649 = scalar_lea.vmem [#allocation2], %s648
        // Predicated region
        $region124: #{parallel_s2vit_block.1} parent=122 // pred_check
          %p650 = pneg %p66
        $region125: #{parallel_s2vit_block.1} parent=122 // pred_check_branch
          %652 = sbr.rel (%p650) target = $region127
        $region126: #{parallel_s2vit_block.1} parent=122 // pred_region
          _
        $region127: #{parallel_s2vit_block.1} parent=122 // pred_fallthru
          _
        %s653 = sand.u32 %s83, 1
        %s654 = sand.u32 %s83, 1
        %s655 = smul.addr %s654, 256
        %s656 = scalar_lea.vmem [#allocation3], %s655
        // Predicated region
        $region128: #{parallel_s2vit_block.1} parent=122 // pred_check
          %p657 = pneg %p96
        $region129: #{parallel_s2vit_block.1} parent=122 // pred_check_branch
          %659 = sbr.rel (%p657) target = $region131
        $region130: #{parallel_s2vit_block.1} parent=122 // pred_region
          _
        $region131: #{parallel_s2vit_block.1} parent=122 // pred_fallthru
          _
        %s660 = sand.u32 %s53, 1
        %s661 = sand.u32 %s53, 1
        %s662 = smul.addr %s661, 128
        %s663 = scalar_lea.vmem [#allocation2], %s662
        %p664 = pneg %p66
        %p665 = pneg %p63
        %s666 = sand.u32 %s83, 1
        %s667 = sand.u32 %s83, 1
        %s668 = smul.addr %s667, 256
        %s669 = scalar_lea.vmem [#allocation3], %s668
        %p670 = pneg %p96
        %p671 = pneg %p93
        %p672 = pneg %p117
        %p673 = pneg %p114
        %p674 = pneg %p138
        %p675 = pneg %p135
        %p676 = pneg %p159
        %p677 = pneg %p156
        %p678 = pneg %p180
        %p679 = pneg %p177
        %p680 = pneg %p201
        %p681 = pneg %p198
        %p682 = pneg %p222
        %p683 = pneg %p219
        %p684 = pneg %p252
        %p685 = pneg %p249
        %s686 = sand.u32 %s239, 1
        %s687 = scalar_lea.sflag [#allocation5], %s686
        %s688 = sand.u32 %s239, 1
        %s689 = smul.addr %s688, 256
        %s690 = scalar_lea.vmem [#allocation4], %s689
        %s691 = smul.u32 32, %s28
        %s692 = smul.u32 32, %s28
        %s693 = smul.u32 32, %s28
        %v695 = vld [vmem:[%s649] sm:$0xf]
        %v696 = vld [vmem:[%s649 + $0x4] sm:$0xf]
        %v697 = vld [vmem:[%s649 + $0x8] sm:$0xf]
        %v698 = vld [vmem:[%s649 + $0xc] sm:$0xf]
        %v699 = vld [vmem:[%s649 + $0x10] sm:$0xf]
        %v700 = vld [vmem:[%s649 + $0x14] sm:$0xf]
        %v701 = vld [vmem:[%s649 + $0x18] sm:$0xf]
        %v702 = vld [vmem:[%s649 + $0x1c] sm:$0xf]
        %v703 = vld [vmem:[%s649 + $0x20] sm:$0xf]
        %v704 = vld [vmem:[%s649 + $0x24] sm:$0xf]
        %v705 = vld [vmem:[%s649 + $0x28] sm:$0xf]
        %v706 = vld [vmem:[%s649 + $0x2c] sm:$0xf]
        %v707 = vld [vmem:[%s649 + $0x30] sm:$0xf]
        %v708 = vld [vmem:[%s649 + $0x34] sm:$0xf]
        %v709 = vld [vmem:[%s649 + $0x38] sm:$0xf]
        %v710 = vld [vmem:[%s649 + $0x3c] sm:$0xf]
        %v711 = vld [vmem:[%s649 + $0x40] sm:$0xf]
        %v712 = vld [vmem:[%s649 + $0x44] sm:$0xf]
        %v713 = vld [vmem:[%s649 + $0x48] sm:$0xf]
        %v714 = vld [vmem:[%s649 + $0x4c] sm:$0xf]
        %v715 = vld [vmem:[%s649 + $0x50] sm:$0xf]
        %v716 = vld [vmem:[%s649 + $0x54] sm:$0xf]
        %v717 = vld [vmem:[%s649 + $0x58] sm:$0xf]
        %v718 = vld [vmem:[%s649 + $0x5c] sm:$0xf]
        %v719 = vld [vmem:[%s649 + $0x60] sm:$0xf]
        %v720 = vld [vmem:[%s649 + $0x64] sm:$0xf]
        %v721 = vld [vmem:[%s649 + $0x68] sm:$0xf]
        %v722 = vld [vmem:[%s649 + $0x6c] sm:$0xf]
        %v723 = vld [vmem:[%s649 + $0x70] sm:$0xf]
        %v724 = vld [vmem:[%s649 + $0x74] sm:$0xf]
        %v725 = vld [vmem:[%s649 + $0x78] sm:$0xf]
        %v726 = vld [vmem:[%s649 + $0x7c] sm:$0xf]
        %v727 = vld [vmem:[%s656] sm:$0xff]
        %v728 = vld [vmem:[%s656 + $0x8] sm:$0xff]
        %v729 = vld [vmem:[%s656 + $0x10] sm:$0xff]
        %v730 = vld [vmem:[%s656 + $0x18] sm:$0xff]
        %v731 = vld [vmem:[%s656 + $0x20] sm:$0xff]
        %v732 = vld [vmem:[%s656 + $0x28] sm:$0xff]
        %v733 = vld [vmem:[%s656 + $0x30] sm:$0xff]
        %v734 = vld [vmem:[%s656 + $0x38] sm:$0xff]
        %v735 = vld [vmem:[%s656 + $0x40] sm:$0xff]
        %v736 = vld [vmem:[%s656 + $0x48] sm:$0xff]
        %v737 = vld [vmem:[%s656 + $0x50] sm:$0xff]
        %v738 = vld [vmem:[%s656 + $0x58] sm:$0xff]
        %v739 = vld [vmem:[%s656 + $0x60] sm:$0xff]
        %v740 = vld [vmem:[%s656 + $0x68] sm:$0xff]
        %v741 = vld [vmem:[%s656 + $0x70] sm:$0xff]
        %v742 = vld [vmem:[%s656 + $0x78] sm:$0xff]
        %v743 = vld [vmem:[%s656 + $0x80] sm:$0xff]
        %v744 = vld [vmem:[%s656 + $0x88] sm:$0xff]
        %v745 = vld [vmem:[%s656 + $0x90] sm:$0xff]
        %v746 = vld [vmem:[%s656 + $0x98] sm:$0xff]
        %v747 = vld [vmem:[%s656 + $0xa0] sm:$0xff]
        %v748 = vld [vmem:[%s656 + $0xa8] sm:$0xff]
        %v749 = vld [vmem:[%s656 + $0xb0] sm:$0xff]
        %v750 = vld [vmem:[%s656 + $0xb8] sm:$0xff]
        %v751 = vld [vmem:[%s656 + $0xc0] sm:$0xff]
        %v752 = vld [vmem:[%s656 + $0xc8] sm:$0xff]
        %v753 = vld [vmem:[%s656 + $0xd0] sm:$0xff]
        %v754 = vld [vmem:[%s656 + $0xd8] sm:$0xff]
        %v755 = vld [vmem:[%s656 + $0xe0] sm:$0xff]
        %v756 = vld [vmem:[%s656 + $0xe8] sm:$0xff]
        %v757 = vld [vmem:[%s656 + $0xf0] sm:$0xff]
        %v758 = vld [vmem:[%s656 + $0xf8] sm:$0xff]
        %v759 = vld [vmem:[%s2] sm:$0xff]
        %v760 = vld [vmem:[%s2 + $0x8] sm:$0xf]
        %v761 = vld [vmem:[%s2 + $0xc] sm:$0xff]
        %v762 = vld [vmem:[%s2 + $0x14] sm:$0xf]
        %v763 = vld [vmem:[%s2 + $0x18] sm:$0xff]
        %v764 = vld [vmem:[%s2 + $0x20] sm:$0xf]
        %v765 = vld [vmem:[%s2 + $0x24] sm:$0xff]
        %v766 = vld [vmem:[%s2 + $0x2c] sm:$0xf]
        %v767 = vld [vmem:[%s2 + $0x30] sm:$0xff]
        %v768 = vld [vmem:[%s2 + $0x38] sm:$0xf]
        %v769 = vld [vmem:[%s2 + $0x3c] sm:$0xff]
        %v770 = vld [vmem:[%s2 + $0x44] sm:$0xf]
        %v771 = vld [vmem:[%s2 + $0x48] sm:$0xff]
        %v772 = vld [vmem:[%s2 + $0x50] sm:$0xf]
        %v773 = vld [vmem:[%s2 + $0x54] sm:$0xff]
        %v774 = vld [vmem:[%s2 + $0x5c] sm:$0xf]
        %v775 = vld [vmem:[%s2 + $0x60] sm:$0xff]
        %v776 = vld [vmem:[%s2 + $0x68] sm:$0xf]
        %v777 = vld [vmem:[%s2 + $0x6c] sm:$0xff]
        %v778 = vld [vmem:[%s2 + $0x74] sm:$0xf]
        %v779 = vld [vmem:[%s2 + $0x78] sm:$0xff]
        %v780 = vld [vmem:[%s2 + $0x80] sm:$0xf]
        %v781 = vld [vmem:[%s2 + $0x84] sm:$0xff]
        %v782 = vld [vmem:[%s2 + $0x8c] sm:$0xf]
        %v783 = vld [vmem:[%s2 + $0x90] sm:$0xff]
        %v784 = vld [vmem:[%s2 + $0x98] sm:$0xf]
        %v785 = vld [vmem:[%s2 + $0x9c] sm:$0xff]
        %v786 = vld [vmem:[%s2 + $0xa4] sm:$0xf]
        %v787 = vld [vmem:[%s2 + $0xa8] sm:$0xff]
        %v788 = vld [vmem:[%s2 + $0xb0] sm:$0xf]
        %v789 = vld [vmem:[%s2 + $0xb4] sm:$0xff]
        %v790 = vld [vmem:[%s2 + $0xbc] sm:$0xf]
        %v823 = vunpack.c.l.b16 %v695
        %v824 = vunpack.c.l.b16 %v696
        %v825 = vunpack.c.l.b16 %v697
        %v826 = vunpack.c.l.b16 %v698
        %v827 = vunpack.c.l.b16 %v699
        %v828 = vunpack.c.l.b16 %v700
        %v829 = vunpack.c.l.b16 %v701
        %v830 = vunpack.c.l.b16 %v702
        %v831 = vunpack.c.l.b16 %v703
        %v832 = vunpack.c.l.b16 %v704
        %v833 = vunpack.c.l.b16 %v705
        %v834 = vunpack.c.l.b16 %v706
        %v835 = vunpack.c.l.b16 %v707
        %v836 = vunpack.c.l.b16 %v708
        %v837 = vunpack.c.l.b16 %v709
        %v838 = vunpack.c.l.b16 %v710
        %v839 = vunpack.c.l.b16 %v711
        %v840 = vunpack.c.l.b16 %v712
        %v841 = vunpack.c.l.b16 %v713
        %v842 = vunpack.c.l.b16 %v714
        %v843 = vunpack.c.l.b16 %v715
        %v844 = vunpack.c.l.b16 %v716
        %v845 = vunpack.c.l.b16 %v717
        %v846 = vunpack.c.l.b16 %v718
        %v847 = vunpack.c.l.b16 %v719
        %v848 = vunpack.c.l.b16 %v720
        %v849 = vunpack.c.l.b16 %v721
        %v850 = vunpack.c.l.b16 %v722
        %v851 = vunpack.c.l.b16 %v723
        %v852 = vunpack.c.l.b16 %v724
        %v853 = vunpack.c.l.b16 %v725
        %v854 = vunpack.c.l.b16 %v726
        %v855 = vpack.c.b16 %v824, %v823
        %v856 = vpack.c.b16 %v826, %v825
        %v857 = vpack.c.b16 %v828, %v827
        %v858 = vpack.c.b16 %v830, %v829
        %v859 = vpack.c.b16 %v832, %v831
        %v860 = vpack.c.b16 %v834, %v833
        %v861 = vpack.c.b16 %v836, %v835
        %v862 = vpack.c.b16 %v838, %v837
        %v863 = vpack.c.b16 %v840, %v839
        %v864 = vpack.c.b16 %v842, %v841
        %v865 = vpack.c.b16 %v844, %v843
        %v866 = vpack.c.b16 %v846, %v845
        %v867 = vpack.c.b16 %v848, %v847
        %v868 = vpack.c.b16 %v850, %v849
        %v869 = vpack.c.b16 %v852, %v851
        %v870 = vpack.c.b16 %v854, %v853
        %v919 = vunpack.c.l.b16 %v759
        %v920 = vunpack.c.h.b16 %v759
        %v921 = vunpack.c.l.b16 %v760
        %v922 = vunpack.c.l.b16 %v761
        %v923 = vunpack.c.h.b16 %v761
        %v924 = vunpack.c.l.b16 %v762
        %v925 = vunpack.c.l.b16 %v763
        %v926 = vunpack.c.h.b16 %v763
        %v927 = vunpack.c.l.b16 %v764
        %v928 = vunpack.c.l.b16 %v765
        %v929 = vunpack.c.h.b16 %v765
        %v930 = vunpack.c.l.b16 %v766
        %v931 = vunpack.c.l.b16 %v767
        %v932 = vunpack.c.h.b16 %v767
        %v933 = vunpack.c.l.b16 %v768
        %v934 = vunpack.c.l.b16 %v769
        %v935 = vunpack.c.h.b16 %v769
        %v936 = vunpack.c.l.b16 %v770
        %v937 = vunpack.c.l.b16 %v771
        %v938 = vunpack.c.h.b16 %v771
        %v939 = vunpack.c.l.b16 %v772
        %v940 = vunpack.c.l.b16 %v773
        %v941 = vunpack.c.h.b16 %v773
        %v942 = vunpack.c.l.b16 %v774
        %v943 = vunpack.c.l.b16 %v775
        %v944 = vunpack.c.h.b16 %v775
        %v945 = vunpack.c.l.b16 %v776
        %v946 = vunpack.c.l.b16 %v777
        %v947 = vunpack.c.h.b16 %v777
        %v948 = vunpack.c.l.b16 %v778
        %v949 = vunpack.c.l.b16 %v779
        %v950 = vunpack.c.h.b16 %v779
        %v951 = vunpack.c.l.b16 %v780
        %v952 = vunpack.c.l.b16 %v781
        %v953 = vunpack.c.h.b16 %v781
        %v954 = vunpack.c.l.b16 %v782
        %v955 = vunpack.c.l.b16 %v783
        %v956 = vunpack.c.h.b16 %v783
        %v957 = vunpack.c.l.b16 %v784
        %v958 = vunpack.c.l.b16 %v785
        %v959 = vunpack.c.h.b16 %v785
        %v960 = vunpack.c.l.b16 %v786
        %v961 = vunpack.c.l.b16 %v787
        %v962 = vunpack.c.h.b16 %v787
        %v963 = vunpack.c.l.b16 %v788
        %v964 = vunpack.c.l.b16 %v789
        %v965 = vunpack.c.h.b16 %v789
        %v966 = vunpack.c.l.b16 %v790
        %v967 = vpack.c.b16 %v922, %v919
        %v968 = vpack.c.b16 %v923, %v920
        %v969 = vpack.c.b16 %v924, %v921
        %v970 = vpack.c.b16 %v928, %v925
        %v971 = vpack.c.b16 %v929, %v926
        %v972 = vpack.c.b16 %v930, %v927
        %v973 = vpack.c.b16 %v934, %v931
        %v974 = vpack.c.b16 %v935, %v932
        %v975 = vpack.c.b16 %v936, %v933
        %v976 = vpack.c.b16 %v940, %v937
        %v977 = vpack.c.b16 %v941, %v938
        %v978 = vpack.c.b16 %v942, %v939
        %v979 = vpack.c.b16 %v946, %v943
        %v980 = vpack.c.b16 %v947, %v944
        %v981 = vpack.c.b16 %v948, %v945
        %v982 = vpack.c.b16 %v952, %v949
        %v983 = vpack.c.b16 %v953, %v950
        %v984 = vpack.c.b16 %v954, %v951
        %v985 = vpack.c.b16 %v958, %v955
        %v986 = vpack.c.b16 %v959, %v956
        %v987 = vpack.c.b16 %v960, %v957
        %v988 = vpack.c.b16 %v964, %v961
        %v989 = vpack.c.b16 %v965, %v962
        %v990 = vpack.c.b16 %v966, %v963
        %1015 = vmatprep.subr.bf16.mxu0 %v989
        %1016 = vmatpush1.bf16.msra.mxu0 %v988
        %1017 = vmatprep.subr.bf16.mxu0 %v986
        %1018 = vmatpush1.bf16.msra.mxu0 %v985
        %1019 = vmatprep.subr.bf16.mxu0 %v983
        %1020 = vmatpush1.bf16.msra.mxu0 %v982
        %1021 = vmatprep.subr.bf16.mxu0 %v980
        %1022 = vmatpush1.bf16.msra.mxu0 %v979
        %1023 = vmatprep.subr.bf16.mxu0 %v977
        %1024 = vmatpush1.bf16.msra.mxu0 %v976
        %1025 = vmatprep.subr.bf16.mxu0 %v974
        %1026 = vmatpush1.bf16.msra.mxu0 %v973
        %1027 = vmatprep.subr.bf16.mxu0 %v971
        %1028 = vmatpush1.bf16.msra.mxu0 %v970
        %1029 = vmatprep.subr.bf16.mxu0 %v968
        %1030 = vmatpush1.bf16.msra.mxu0 %v967
        %1031 = vmatprep.subr.bf16.mxu0 0
        %1032 = vmatpush2.bf16.msra.mxu0 0
        %1033 = vmatprep.subr.bf16.mxu0 0
        %1034 = vmatpush2.bf16.msra.mxu0 0
        %1035 = vmatprep.subr.bf16.mxu0 0
        %1036 = vmatpush2.bf16.msra.mxu0 0
        %1037 = vmatprep.subr.bf16.mxu0 0
        %1038 = vmatpush2.bf16.msra.mxu0 0
        %1039 = vmatprep.subr.bf16.mxu0 0
        %1040 = vmatpush2.bf16.msra.mxu0 0
        %1041 = vmatprep.subr.bf16.mxu0 0
        %1042 = vmatpush2.bf16.msra.mxu0 0
        %1043 = vmatprep.subr.bf16.mxu0 0
        %1044 = vmatpush2.bf16.msra.mxu0 0
        %1045 = vmatprep.subr.bf16.mxu0 0
        %1046 = vmatpush2.bf16.msra.mxu0 0
        %1047 = vmatprep.mubr.bf16.mxu0 0
        %1048 = vmatmul.mubr.bf16.gmra.mxu0 %v855
        %v1049 = vpop.f32.mrf.mxu0
        %v1050 = vadd.f32 0.0, %v1049
        %v1051 = vpop.f32.mrf.mxu0
        %v1052 = vadd.f32 0.0, %v1051
        %v1053 = vpop.f32.mrf.mxu0
        %v1054 = vadd.f32 0.0, %v1053
        %v1055 = vpop.f32.mrf.mxu0
        %v1056 = vadd.f32 0.0, %v1055
        %1057 = vmatprep.mubr.bf16.mxu0 0
        %1058 = vmatmul.mubr.bf16.gmra.mxu0 %v856
        %v1059 = vpop.f32.mrf.mxu0
        %v1060 = vadd.f32 0.0, %v1059
        %v1061 = vpop.f32.mrf.mxu0
        %v1062 = vadd.f32 0.0, %v1061
        %v1063 = vpop.f32.mrf.mxu0
        %v1064 = vadd.f32 0.0, %v1063
        %v1065 = vpop.f32.mrf.mxu0
        %v1066 = vadd.f32 0.0, %v1065
        %1067 = vmatprep.mubr.bf16.mxu0 0
        %1068 = vmatmul.mubr.bf16.gmra.mxu0 %v857
        %v1069 = vpop.f32.mrf.mxu0
        %v1070 = vadd.f32 0.0, %v1069
        %v1071 = vpop.f32.mrf.mxu0
        %v1072 = vadd.f32 0.0, %v1071
        %v1073 = vpop.f32.mrf.mxu0
        %v1074 = vadd.f32 0.0, %v1073
        %v1075 = vpop.f32.mrf.mxu0
        %v1076 = vadd.f32 0.0, %v1075
        %1077 = vmatprep.mubr.bf16.mxu0 0
        %1078 = vmatmul.mubr.bf16.gmra.mxu0 %v858
        %v1079 = vpop.f32.mrf.mxu0
        %v1080 = vadd.f32 0.0, %v1079
        %v1081 = vpop.f32.mrf.mxu0
        %v1082 = vadd.f32 0.0, %v1081
        %v1083 = vpop.f32.mrf.mxu0
        %v1084 = vadd.f32 0.0, %v1083
        %v1085 = vpop.f32.mrf.mxu0
        %v1086 = vadd.f32 0.0, %v1085
        %1087 = vmatprep.mubr.bf16.mxu0 0
        %1088 = vmatmul.mubr.bf16.gmra.mxu0 %v859
        %v1089 = vpop.f32.mrf.mxu0
        %v1090 = vadd.f32 0.0, %v1089
        %v1091 = vpop.f32.mrf.mxu0
        %v1092 = vadd.f32 0.0, %v1091
        %v1093 = vpop.f32.mrf.mxu0
        %v1094 = vadd.f32 0.0, %v1093
        %v1095 = vpop.f32.mrf.mxu0
        %v1096 = vadd.f32 0.0, %v1095
        %1097 = vmatprep.mubr.bf16.mxu0 0
        %1098 = vmatmul.mubr.bf16.gmra.mxu0 %v860
        %v1099 = vpop.f32.mrf.mxu0
        %v1100 = vadd.f32 0.0, %v1099
        %v1101 = vpop.f32.mrf.mxu0
        %v1102 = vadd.f32 0.0, %v1101
        %v1103 = vpop.f32.mrf.mxu0
        %v1104 = vadd.f32 0.0, %v1103
        %v1105 = vpop.f32.mrf.mxu0
        %v1106 = vadd.f32 0.0, %v1105
        %1107 = vmatprep.mubr.bf16.mxu0 0
        %1108 = vmatmul.mubr.bf16.gmra.mxu0 %v861
        %v1109 = vpop.f32.mrf.mxu0
        %v1110 = vadd.f32 0.0, %v1109
        %v1111 = vpop.f32.mrf.mxu0
        %v1112 = vadd.f32 0.0, %v1111
        %v1113 = vpop.f32.mrf.mxu0
        %v1114 = vadd.f32 0.0, %v1113
        %v1115 = vpop.f32.mrf.mxu0
        %v1116 = vadd.f32 0.0, %v1115
        %1117 = vmatprep.mubr.bf16.mxu0 0
        %1118 = vmatmul.mubr.bf16.gmra.mxu0 %v862
        %v1119 = vpop.f32.mrf.mxu0
        %v1120 = vadd.f32 0.0, %v1119
        %v1121 = vpop.f32.mrf.mxu0
        %v1122 = vadd.f32 0.0, %v1121
        %v1123 = vpop.f32.mrf.mxu0
        %v1124 = vadd.f32 0.0, %v1123
        %v1125 = vpop.f32.mrf.mxu0
        %v1126 = vadd.f32 0.0, %v1125
        %1127 = vmatprep.mubr.bf16.mxu0 0
        %1128 = vmatmul.mubr.bf16.gmra.mxu0 %v863
        %v1129 = vpop.f32.mrf.mxu0
        %v1130 = vadd.f32 0.0, %v1129
        %v1131 = vpop.f32.mrf.mxu0
        %v1132 = vadd.f32 0.0, %v1131
        %v1133 = vpop.f32.mrf.mxu0
        %v1134 = vadd.f32 0.0, %v1133
        %v1135 = vpop.f32.mrf.mxu0
        %v1136 = vadd.f32 0.0, %v1135
        %1137 = vmatprep.mubr.bf16.mxu0 0
        %1138 = vmatmul.mubr.bf16.gmra.mxu0 %v864
        %v1139 = vpop.f32.mrf.mxu0
        %v1140 = vadd.f32 0.0, %v1139
        %v1141 = vpop.f32.mrf.mxu0
        %v1142 = vadd.f32 0.0, %v1141
        %v1143 = vpop.f32.mrf.mxu0
        %v1144 = vadd.f32 0.0, %v1143
        %v1145 = vpop.f32.mrf.mxu0
        %v1146 = vadd.f32 0.0, %v1145
        %1147 = vmatprep.mubr.bf16.mxu0 0
        %1148 = vmatmul.mubr.bf16.gmra.mxu0 %v865
        %v1149 = vpop.f32.mrf.mxu0
        %v1150 = vadd.f32 0.0, %v1149
        %v1151 = vpop.f32.mrf.mxu0
        %v1152 = vadd.f32 0.0, %v1151
        %v1153 = vpop.f32.mrf.mxu0
        %v1154 = vadd.f32 0.0, %v1153
        %v1155 = vpop.f32.mrf.mxu0
        %v1156 = vadd.f32 0.0, %v1155
        %1157 = vmatprep.mubr.bf16.mxu0 0
        %1158 = vmatmul.mubr.bf16.gmra.mxu0 %v866
        %v1159 = vpop.f32.mrf.mxu0
        %v1160 = vadd.f32 0.0, %v1159
        %v1161 = vpop.f32.mrf.mxu0
        %v1162 = vadd.f32 0.0, %v1161
        %v1163 = vpop.f32.mrf.mxu0
        %v1164 = vadd.f32 0.0, %v1163
        %v1165 = vpop.f32.mrf.mxu0
        %v1166 = vadd.f32 0.0, %v1165
        %1167 = vmatprep.mubr.bf16.mxu0 0
        %1168 = vmatmul.mubr.bf16.gmra.mxu0 %v867
        %v1169 = vpop.f32.mrf.mxu0
        %v1170 = vadd.f32 0.0, %v1169
        %v1171 = vpop.f32.mrf.mxu0
        %v1172 = vadd.f32 0.0, %v1171
        %v1173 = vpop.f32.mrf.mxu0
        %v1174 = vadd.f32 0.0, %v1173
        %v1175 = vpop.f32.mrf.mxu0
        %v1176 = vadd.f32 0.0, %v1175
        %1177 = vmatprep.mubr.bf16.mxu0 0
        %1178 = vmatmul.mubr.bf16.gmra.mxu0 %v868
        %v1179 = vpop.f32.mrf.mxu0
        %v1180 = vadd.f32 0.0, %v1179
        %v1181 = vpop.f32.mrf.mxu0
        %v1182 = vadd.f32 0.0, %v1181
        %v1183 = vpop.f32.mrf.mxu0
        %v1184 = vadd.f32 0.0, %v1183
        %v1185 = vpop.f32.mrf.mxu0
        %v1186 = vadd.f32 0.0, %v1185
        %1187 = vmatprep.mubr.bf16.mxu0 0
        %1188 = vmatmul.mubr.bf16.gmra.mxu0 %v869
        %v1189 = vpop.f32.mrf.mxu0
        %v1190 = vadd.f32 0.0, %v1189
        %v1191 = vpop.f32.mrf.mxu0
        %v1192 = vadd.f32 0.0, %v1191
        %v1193 = vpop.f32.mrf.mxu0
        %v1194 = vadd.f32 0.0, %v1193
        %v1195 = vpop.f32.mrf.mxu0
        %v1196 = vadd.f32 0.0, %v1195
        %1197 = vmatprep.mubr.bf16.mxu0 0
        %1198 = vmatmul.mubr.bf16.gmra.mxu0 %v870
        %v1199 = vpop.f32.mrf.mxu0
        %v1200 = vadd.f32 0.0, %v1199
        %v1201 = vpop.f32.mrf.mxu0
        %v1202 = vadd.f32 0.0, %v1201
        %v1203 = vpop.f32.mrf.mxu0
        %v1204 = vadd.f32 0.0, %v1203
        %v1205 = vpop.f32.mrf.mxu0
        %v1206 = vadd.f32 0.0, %v1205
        %1207 = vdwg.mxu0
        %1208 = vmatprep.subr.bf16.mxu0 0
        %1209 = vmatpush1.bf16.msra.mxu0 %v990
        %1210 = vmatprep.subr.bf16.mxu0 0
        %1211 = vmatpush1.bf16.msra.mxu0 %v987
        %1212 = vmatprep.subr.bf16.mxu0 0
        %1213 = vmatpush1.bf16.msra.mxu0 %v984
        %1214 = vmatprep.subr.bf16.mxu0 0
        %1215 = vmatpush1.bf16.msra.mxu0 %v981
        %1216 = vmatprep.subr.bf16.mxu0 0
        %1217 = vmatpush1.bf16.msra.mxu0 %v978
        %1218 = vmatprep.subr.bf16.mxu0 0
        %1219 = vmatpush1.bf16.msra.mxu0 %v975
        %1220 = vmatprep.subr.bf16.mxu0 0
        %1221 = vmatpush1.bf16.msra.mxu0 %v972
        %1222 = vmatprep.subr.bf16.mxu0 0
        %1223 = vmatpush1.bf16.msra.mxu0 %v969
        %1224 = vmatprep.subr.bf16.mxu0 0
        %1225 = vmatpush2.bf16.msra.mxu0 0
        %1226 = vmatprep.subr.bf16.mxu0 0
        %1227 = vmatpush2.bf16.msra.mxu0 0
        %1228 = vmatprep.subr.bf16.mxu0 0
        %1229 = vmatpush2.bf16.msra.mxu0 0
        %1230 = vmatprep.subr.bf16.mxu0 0
        %1231 = vmatpush2.bf16.msra.mxu0 0
        %1232 = vmatprep.subr.bf16.mxu0 0
        %1233 = vmatpush2.bf16.msra.mxu0 0
        %1234 = vmatprep.subr.bf16.mxu0 0
        %1235 = vmatpush2.bf16.msra.mxu0 0
        %1236 = vmatprep.subr.bf16.mxu0 0
        %1237 = vmatpush2.bf16.msra.mxu0 0
        %1238 = vmatprep.subr.bf16.mxu0 0
        %1239 = vmatpush2.bf16.msra.mxu0 0
        %1240 = vmatprep.mubr.bf16.mxu0 0
        %1241 = vmatmul.mubr.bf16.gmra.mxu0 %v855
        %v1242 = vpop.f32.mrf.mxu0
        %v1243 = vadd.f32 0.0, %v1242
        %v1244 = vpop.f32.mrf.mxu0
        %v1245 = vpop.f32.mrf.mxu0
        %v1246 = vadd.f32 0.0, %v1245
        %v1247 = vpop.f32.mrf.mxu0
        %1248 = vmatprep.mubr.bf16.mxu0 0
        %1249 = vmatmul.mubr.bf16.gmra.mxu0 %v856
        %v1250 = vpop.f32.mrf.mxu0
        %v1251 = vadd.f32 0.0, %v1250
        %v1252 = vpop.f32.mrf.mxu0
        %v1253 = vpop.f32.mrf.mxu0
        %v1254 = vadd.f32 0.0, %v1253
        %v1255 = vpop.f32.mrf.mxu0
        %1256 = vmatprep.mubr.bf16.mxu0 0
        %1257 = vmatmul.mubr.bf16.gmra.mxu0 %v857
        %v1258 = vpop.f32.mrf.mxu0
        %v1259 = vadd.f32 0.0, %v1258
        %v1260 = vpop.f32.mrf.mxu0
        %v1261 = vpop.f32.mrf.mxu0
        %v1262 = vadd.f32 0.0, %v1261
        %v1263 = vpop.f32.mrf.mxu0
        %1264 = vmatprep.mubr.bf16.mxu0 0
        %1265 = vmatmul.mubr.bf16.gmra.mxu0 %v858
        %v1266 = vpop.f32.mrf.mxu0
        %v1267 = vadd.f32 0.0, %v1266
        %v1268 = vpop.f32.mrf.mxu0
        %v1269 = vpop.f32.mrf.mxu0
        %v1270 = vadd.f32 0.0, %v1269
        %v1271 = vpop.f32.mrf.mxu0
        %1272 = vmatprep.mubr.bf16.mxu0 0
        %1273 = vmatmul.mubr.bf16.gmra.mxu0 %v859
        %v1274 = vpop.f32.mrf.mxu0
        %v1275 = vadd.f32 0.0, %v1274
        %v1276 = vpop.f32.mrf.mxu0
        %v1277 = vpop.f32.mrf.mxu0
        %v1278 = vadd.f32 0.0, %v1277
        %v1279 = vpop.f32.mrf.mxu0
        %1280 = vmatprep.mubr.bf16.mxu0 0
        %1281 = vmatmul.mubr.bf16.gmra.mxu0 %v860
        %v1282 = vpop.f32.mrf.mxu0
        %v1283 = vadd.f32 0.0, %v1282
        %v1284 = vpop.f32.mrf.mxu0
        %v1285 = vpop.f32.mrf.mxu0
        %v1286 = vadd.f32 0.0, %v1285
        %v1287 = vpop.f32.mrf.mxu0
        %1288 = vmatprep.mubr.bf16.mxu0 0
        %1289 = vmatmul.mubr.bf16.gmra.mxu0 %v861
        %v1290 = vpop.f32.mrf.mxu0
        %v1291 = vadd.f32 0.0, %v1290
        %v1292 = vpop.f32.mrf.mxu0
        %v1293 = vpop.f32.mrf.mxu0
        %v1294 = vadd.f32 0.0, %v1293
        %v1295 = vpop.f32.mrf.mxu0
        %1296 = vmatprep.mubr.bf16.mxu0 0
        %1297 = vmatmul.mubr.bf16.gmra.mxu0 %v862
        %v1298 = vpop.f32.mrf.mxu0
        %v1299 = vadd.f32 0.0, %v1298
        %v1300 = vpop.f32.mrf.mxu0
        %v1301 = vpop.f32.mrf.mxu0
        %v1302 = vadd.f32 0.0, %v1301
        %v1303 = vpop.f32.mrf.mxu0
        %1304 = vmatprep.mubr.bf16.mxu0 0
        %1305 = vmatmul.mubr.bf16.gmra.mxu0 %v863
        %v1306 = vpop.f32.mrf.mxu0
        %v1307 = vadd.f32 0.0, %v1306
        %v1308 = vpop.f32.mrf.mxu0
        %v1309 = vpop.f32.mrf.mxu0
        %v1310 = vadd.f32 0.0, %v1309
        %v1311 = vpop.f32.mrf.mxu0
        %1312 = vmatprep.mubr.bf16.mxu0 0
        %1313 = vmatmul.mubr.bf16.gmra.mxu0 %v864
        %v1314 = vpop.f32.mrf.mxu0
        %v1315 = vadd.f32 0.0, %v1314
        %v1316 = vpop.f32.mrf.mxu0
        %v1317 = vpop.f32.mrf.mxu0
        %v1318 = vadd.f32 0.0, %v1317
        %v1319 = vpop.f32.mrf.mxu0
        %1320 = vmatprep.mubr.bf16.mxu0 0
        %1321 = vmatmul.mubr.bf16.gmra.mxu0 %v865
        %v1322 = vpop.f32.mrf.mxu0
        %v1323 = vadd.f32 0.0, %v1322
        %v1324 = vpop.f32.mrf.mxu0
        %v1325 = vpop.f32.mrf.mxu0
        %v1326 = vadd.f32 0.0, %v1325
        %v1327 = vpop.f32.mrf.mxu0
        %1328 = vmatprep.mubr.bf16.mxu0 0
        %1329 = vmatmul.mubr.bf16.gmra.mxu0 %v866
        %v1330 = vpop.f32.mrf.mxu0
        %v1331 = vadd.f32 0.0, %v1330
        %v1332 = vpop.f32.mrf.mxu0
        %v1333 = vpop.f32.mrf.mxu0
        %v1334 = vadd.f32 0.0, %v1333
        %v1335 = vpop.f32.mrf.mxu0
        %1336 = vmatprep.mubr.bf16.mxu0 0
        %1337 = vmatmul.mubr.bf16.gmra.mxu0 %v867
        %v1338 = vpop.f32.mrf.mxu0
        %v1339 = vadd.f32 0.0, %v1338
        %v1340 = vpop.f32.mrf.mxu0
        %v1341 = vpop.f32.mrf.mxu0
        %v1342 = vadd.f32 0.0, %v1341
        %v1343 = vpop.f32.mrf.mxu0
        %1344 = vmatprep.mubr.bf16.mxu0 0
        %1345 = vmatmul.mubr.bf16.gmra.mxu0 %v868
        %v1346 = vpop.f32.mrf.mxu0
        %v1347 = vadd.f32 0.0, %v1346
        %v1348 = vpop.f32.mrf.mxu0
        %v1349 = vpop.f32.mrf.mxu0
        %v1350 = vadd.f32 0.0, %v1349
        %v1351 = vpop.f32.mrf.mxu0
        %1352 = vmatprep.mubr.bf16.mxu0 0
        %1353 = vmatmul.mubr.bf16.gmra.mxu0 %v869
        %v1354 = vpop.f32.mrf.mxu0
        %v1355 = vadd.f32 0.0, %v1354
        %v1356 = vpop.f32.mrf.mxu0
        %v1357 = vpop.f32.mrf.mxu0
        %v1358 = vadd.f32 0.0, %v1357
        %v1359 = vpop.f32.mrf.mxu0
        %1360 = vmatprep.mubr.bf16.mxu0 0
        %1361 = vmatmul.mubr.bf16.gmra.mxu0 %v870
        %v1362 = vpop.f32.mrf.mxu0
        %v1363 = vadd.f32 0.0, %v1362
        %v1364 = vpop.f32.mrf.mxu0
        %v1365 = vpop.f32.mrf.mxu0
        %v1366 = vadd.f32 0.0, %v1365
        %v1367 = vpop.f32.mrf.mxu0
        %1368 = vdwg.mxu0
        %v1369 = vpack.c.bf16 %v1054, %v1050
        %v1370 = vpack.c.bf16 %v1056, %v1052
        %v1371 = vpack.c.bf16 %v1246, %v1243
        %v1372 = vpack.c.bf16 %v1064, %v1060
        %v1373 = vpack.c.bf16 %v1066, %v1062
        %v1374 = vpack.c.bf16 %v1254, %v1251
        %v1375 = vpack.c.bf16 %v1074, %v1070
        %v1376 = vpack.c.bf16 %v1076, %v1072
        %v1377 = vpack.c.bf16 %v1262, %v1259
        %v1378 = vpack.c.bf16 %v1084, %v1080
        %v1379 = vpack.c.bf16 %v1086, %v1082
        %v1380 = vpack.c.bf16 %v1270, %v1267
        %v1381 = vpack.c.bf16 %v1094, %v1090
        %v1382 = vpack.c.bf16 %v1096, %v1092
        %v1383 = vpack.c.bf16 %v1278, %v1275
        %v1384 = vpack.c.bf16 %v1104, %v1100
        %v1385 = vpack.c.bf16 %v1106, %v1102
        %v1386 = vpack.c.bf16 %v1286, %v1283
        %v1387 = vpack.c.bf16 %v1114, %v1110
        %v1388 = vpack.c.bf16 %v1116, %v1112
        %v1389 = vpack.c.bf16 %v1294, %v1291
        %v1390 = vpack.c.bf16 %v1124, %v1120
        %v1391 = vpack.c.bf16 %v1126, %v1122
        %v1392 = vpack.c.bf16 %v1302, %v1299
        %v1393 = vpack.c.bf16 %v1134, %v1130
        %v1394 = vpack.c.bf16 %v1136, %v1132
        %v1395 = vpack.c.bf16 %v1310, %v1307
        %v1396 = vpack.c.bf16 %v1144, %v1140
        %v1397 = vpack.c.bf16 %v1146, %v1142
        %v1398 = vpack.c.bf16 %v1318, %v1315
        %v1399 = vpack.c.bf16 %v1154, %v1150
        %v1400 = vpack.c.bf16 %v1156, %v1152
        %v1401 = vpack.c.bf16 %v1326, %v1323
        %v1402 = vpack.c.bf16 %v1164, %v1160
        %v1403 = vpack.c.bf16 %v1166, %v1162
        %v1404 = vpack.c.bf16 %v1334, %v1331
        %v1405 = vpack.c.bf16 %v1174, %v1170
        %v1406 = vpack.c.bf16 %v1176, %v1172
        %v1407 = vpack.c.bf16 %v1342, %v1339
        %v1408 = vpack.c.bf16 %v1184, %v1180
        %v1409 = vpack.c.bf16 %v1186, %v1182
        %v1410 = vpack.c.bf16 %v1350, %v1347
        %v1411 = vpack.c.bf16 %v1194, %v1190
        %v1412 = vpack.c.bf16 %v1196, %v1192
        %v1413 = vpack.c.bf16 %v1358, %v1355
        %v1414 = vpack.c.bf16 %v1204, %v1200
        %v1415 = vpack.c.bf16 %v1206, %v1202
        %v1416 = vpack.c.bf16 %v1366, %v1363
        %1433 = vrot.lane.b32.xlu0 %v1369, 96
        %v1434 = vpop.permute.xlu0 %1433
        %1435 = vrot.lane.b32.xlu0 %v1372, 96
        %v1436 = vpop.permute.xlu0 %1435
        %1437 = vrot.lane.b32.xlu0 %v1375, 96
        %v1438 = vpop.permute.xlu0 %1437
        %1439 = vrot.lane.b32.xlu0 %v1378, 96
        %v1440 = vpop.permute.xlu0 %1439
        %1441 = vrot.lane.b32.xlu0 %v1381, 96
        %v1442 = vpop.permute.xlu0 %1441
        %1443 = vrot.lane.b32.xlu0 %v1384, 96
        %v1444 = vpop.permute.xlu0 %1443
        %1445 = vrot.lane.b32.xlu0 %v1387, 96
        %v1446 = vpop.permute.xlu0 %1445
        %1447 = vrot.lane.b32.xlu0 %v1390, 96
        %v1448 = vpop.permute.xlu0 %1447
        %1449 = vrot.lane.b32.xlu0 %v1393, 96
        %v1450 = vpop.permute.xlu0 %1449
        %1451 = vrot.lane.b32.xlu0 %v1396, 96
        %v1452 = vpop.permute.xlu0 %1451
        %1453 = vrot.lane.b32.xlu0 %v1399, 96
        %v1454 = vpop.permute.xlu0 %1453
        %1455 = vrot.lane.b32.xlu0 %v1402, 96
        %v1456 = vpop.permute.xlu0 %1455
        %1457 = vrot.lane.b32.xlu0 %v1405, 96
        %v1458 = vpop.permute.xlu0 %1457
        %1459 = vrot.lane.b32.xlu0 %v1408, 96
        %v1460 = vpop.permute.xlu0 %1459
        %1461 = vrot.lane.b32.xlu0 %v1411, 96
        %v1462 = vpop.permute.xlu0 %1461
        %1463 = vrot.lane.b32.xlu0 %v1414, 96
        %v1464 = vpop.permute.xlu0 %1463
        %1465 = vrot.lane.b32.xlu0 %v1369, 64
        %v1466 = vpop.permute.xlu0 %1465
        %1467 = vrot.lane.b32.xlu0 %v1372, 64
        %v1468 = vpop.permute.xlu0 %1467
        %1469 = vrot.lane.b32.xlu0 %v1375, 64
        %v1470 = vpop.permute.xlu0 %1469
        %1471 = vrot.lane.b32.xlu0 %v1378, 64
        %v1472 = vpop.permute.xlu0 %1471
        %1473 = vrot.lane.b32.xlu0 %v1381, 64
        %v1474 = vpop.permute.xlu0 %1473
        %1475 = vrot.lane.b32.xlu0 %v1384, 64
        %v1476 = vpop.permute.xlu0 %1475
        %1477 = vrot.lane.b32.xlu0 %v1387, 64
        %v1478 = vpop.permute.xlu0 %1477
        %1479 = vrot.lane.b32.xlu0 %v1390, 64
        %v1480 = vpop.permute.xlu0 %1479
        %1481 = vrot.lane.b32.xlu0 %v1393, 64
        %v1482 = vpop.permute.xlu0 %1481
        %1483 = vrot.lane.b32.xlu0 %v1396, 64
        %v1484 = vpop.permute.xlu0 %1483
        %1485 = vrot.lane.b32.xlu0 %v1399, 64
        %v1486 = vpop.permute.xlu0 %1485
        %1487 = vrot.lane.b32.xlu0 %v1402, 64
        %v1488 = vpop.permute.xlu0 %1487
        %1489 = vrot.lane.b32.xlu0 %v1405, 64
        %v1490 = vpop.permute.xlu0 %1489
        %1491 = vrot.lane.b32.xlu0 %v1408, 64
        %v1492 = vpop.permute.xlu0 %1491
        %1493 = vrot.lane.b32.xlu0 %v1411, 64
        %v1494 = vpop.permute.xlu0 %1493
        %1495 = vrot.lane.b32.xlu0 %v1414, 64
        %v1496 = vpop.permute.xlu0 %1495
        %1497 = vrot.lane.b32.xlu0 %v1369, 32
        %v1498 = vpop.permute.xlu0 %1497
        %1499 = vrot.lane.b32.xlu0 %v1372, 32
        %v1500 = vpop.permute.xlu0 %1499
        %1501 = vrot.lane.b32.xlu0 %v1375, 32
        %v1502 = vpop.permute.xlu0 %1501
        %1503 = vrot.lane.b32.xlu0 %v1378, 32
        %v1504 = vpop.permute.xlu0 %1503
        %1505 = vrot.lane.b32.xlu0 %v1381, 32
        %v1506 = vpop.permute.xlu0 %1505
        %1507 = vrot.lane.b32.xlu0 %v1384, 32
        %v1508 = vpop.permute.xlu0 %1507
        %1509 = vrot.lane.b32.xlu0 %v1387, 32
        %v1510 = vpop.permute.xlu0 %1509
        %1511 = vrot.lane.b32.xlu0 %v1390, 32
        %v1512 = vpop.permute.xlu0 %1511
        %1513 = vrot.lane.b32.xlu0 %v1393, 32
        %v1514 = vpop.permute.xlu0 %1513
        %1515 = vrot.lane.b32.xlu0 %v1396, 32
        %v1516 = vpop.permute.xlu0 %1515
        %1517 = vrot.lane.b32.xlu0 %v1399, 32
        %v1518 = vpop.permute.xlu0 %1517
        %1519 = vrot.lane.b32.xlu0 %v1402, 32
        %v1520 = vpop.permute.xlu0 %1519
        %1521 = vrot.lane.b32.xlu0 %v1405, 32
        %v1522 = vpop.permute.xlu0 %1521
        %1523 = vrot.lane.b32.xlu0 %v1408, 32
        %v1524 = vpop.permute.xlu0 %1523
        %1525 = vrot.lane.b32.xlu0 %v1411, 32
        %v1526 = vpop.permute.xlu0 %1525
        %1527 = vrot.lane.b32.xlu0 %v1414, 32
        %v1528 = vpop.permute.xlu0 %1527
        %1545 = vrot.lane.b32.xlu0 %v1370, 96
        %v1546 = vpop.permute.xlu0 %1545
        %1547 = vrot.lane.b32.xlu0 %v1373, 96
        %v1548 = vpop.permute.xlu0 %1547
        %1549 = vrot.lane.b32.xlu0 %v1376, 96
        %v1550 = vpop.permute.xlu0 %1549
        %1551 = vrot.lane.b32.xlu0 %v1379, 96
        %v1552 = vpop.permute.xlu0 %1551
        %1553 = vrot.lane.b32.xlu0 %v1382, 96
        %v1554 = vpop.permute.xlu0 %1553
        %1555 = vrot.lane.b32.xlu0 %v1385, 96
        %v1556 = vpop.permute.xlu0 %1555
        %1557 = vrot.lane.b32.xlu0 %v1388, 96
        %v1558 = vpop.permute.xlu0 %1557
        %1559 = vrot.lane.b32.xlu0 %v1391, 96
        %v1560 = vpop.permute.xlu0 %1559
        %1561 = vrot.lane.b32.xlu0 %v1394, 96
        %v1562 = vpop.permute.xlu0 %1561
        %1563 = vrot.lane.b32.xlu0 %v1397, 96
        %v1564 = vpop.permute.xlu0 %1563
        %1565 = vrot.lane.b32.xlu0 %v1400, 96
        %v1566 = vpop.permute.xlu0 %1565
        %1567 = vrot.lane.b32.xlu0 %v1403, 96
        %v1568 = vpop.permute.xlu0 %1567
        %1569 = vrot.lane.b32.xlu0 %v1406, 96
        %v1570 = vpop.permute.xlu0 %1569
        %1571 = vrot.lane.b32.xlu0 %v1409, 96
        %v1572 = vpop.permute.xlu0 %1571
        %1573 = vrot.lane.b32.xlu0 %v1412, 96
        %v1574 = vpop.permute.xlu0 %1573
        %1575 = vrot.lane.b32.xlu0 %v1415, 96
        %v1576 = vpop.permute.xlu0 %1575
        %1577 = vrot.lane.b32.xlu0 %v1370, 64
        %v1578 = vpop.permute.xlu0 %1577
        %1579 = vrot.lane.b32.xlu0 %v1373, 64
        %v1580 = vpop.permute.xlu0 %1579
        %1581 = vrot.lane.b32.xlu0 %v1376, 64
        %v1582 = vpop.permute.xlu0 %1581
        %1583 = vrot.lane.b32.xlu0 %v1379, 64
        %v1584 = vpop.permute.xlu0 %1583
        %1585 = vrot.lane.b32.xlu0 %v1382, 64
        %v1586 = vpop.permute.xlu0 %1585
        %1587 = vrot.lane.b32.xlu0 %v1385, 64
        %v1588 = vpop.permute.xlu0 %1587
        %1589 = vrot.lane.b32.xlu0 %v1388, 64
        %v1590 = vpop.permute.xlu0 %1589
        %1591 = vrot.lane.b32.xlu0 %v1391, 64
        %v1592 = vpop.permute.xlu0 %1591
        %1593 = vrot.lane.b32.xlu0 %v1394, 64
        %v1594 = vpop.permute.xlu0 %1593
        %1595 = vrot.lane.b32.xlu0 %v1397, 64
        %v1596 = vpop.permute.xlu0 %1595
        %1597 = vrot.lane.b32.xlu0 %v1400, 64
        %v1598 = vpop.permute.xlu0 %1597
        %1599 = vrot.lane.b32.xlu0 %v1403, 64
        %v1600 = vpop.permute.xlu0 %1599
        %1601 = vrot.lane.b32.xlu0 %v1406, 64
        %v1602 = vpop.permute.xlu0 %1601
        %1603 = vrot.lane.b32.xlu0 %v1409, 64
        %v1604 = vpop.permute.xlu0 %1603
        %1605 = vrot.lane.b32.xlu0 %v1412, 64
        %v1606 = vpop.permute.xlu0 %1605
        %1607 = vrot.lane.b32.xlu0 %v1415, 64
        %v1608 = vpop.permute.xlu0 %1607
        %1609 = vrot.lane.b32.xlu0 %v1370, 32
        %v1610 = vpop.permute.xlu0 %1609
        %1611 = vrot.lane.b32.xlu0 %v1373, 32
        %v1612 = vpop.permute.xlu0 %1611
        %1613 = vrot.lane.b32.xlu0 %v1376, 32
        %v1614 = vpop.permute.xlu0 %1613
        %1615 = vrot.lane.b32.xlu0 %v1379, 32
        %v1616 = vpop.permute.xlu0 %1615
        %1617 = vrot.lane.b32.xlu0 %v1382, 32
        %v1618 = vpop.permute.xlu0 %1617
        %1619 = vrot.lane.b32.xlu0 %v1385, 32
        %v1620 = vpop.permute.xlu0 %1619
        %1621 = vrot.lane.b32.xlu0 %v1388, 32
        %v1622 = vpop.permute.xlu0 %1621
        %1623 = vrot.lane.b32.xlu0 %v1391, 32
        %v1624 = vpop.permute.xlu0 %1623
        %1625 = vrot.lane.b32.xlu0 %v1394, 32
        %v1626 = vpop.permute.xlu0 %1625
        %1627 = vrot.lane.b32.xlu0 %v1397, 32
        %v1628 = vpop.permute.xlu0 %1627
        %1629 = vrot.lane.b32.xlu0 %v1400, 32
        %v1630 = vpop.permute.xlu0 %1629
        %1631 = vrot.lane.b32.xlu0 %v1403, 32
        %v1632 = vpop.permute.xlu0 %1631
        %1633 = vrot.lane.b32.xlu0 %v1406, 32
        %v1634 = vpop.permute.xlu0 %1633
        %1635 = vrot.lane.b32.xlu0 %v1409, 32
        %v1636 = vpop.permute.xlu0 %1635
        %1637 = vrot.lane.b32.xlu0 %v1412, 32
        %v1638 = vpop.permute.xlu0 %1637
        %1639 = vrot.lane.b32.xlu0 %v1415, 32
        %v1640 = vpop.permute.xlu0 %1639
        %1657 = vrot.lane.b32.xlu0 %v1371, 96
        %v1658 = vpop.permute.xlu0 %1657
        %1659 = vrot.lane.b32.xlu0 %v1374, 96
        %v1660 = vpop.permute.xlu0 %1659
        %1661 = vrot.lane.b32.xlu0 %v1377, 96
        %v1662 = vpop.permute.xlu0 %1661
        %1663 = vrot.lane.b32.xlu0 %v1380, 96
        %v1664 = vpop.permute.xlu0 %1663
        %1665 = vrot.lane.b32.xlu0 %v1383, 96
        %v1666 = vpop.permute.xlu0 %1665
        %1667 = vrot.lane.b32.xlu0 %v1386, 96
        %v1668 = vpop.permute.xlu0 %1667
        %1669 = vrot.lane.b32.xlu0 %v1389, 96
        %v1670 = vpop.permute.xlu0 %1669
        %1671 = vrot.lane.b32.xlu0 %v1392, 96
        %v1672 = vpop.permute.xlu0 %1671
        %1673 = vrot.lane.b32.xlu0 %v1395, 96
        %v1674 = vpop.permute.xlu0 %1673
        %1675 = vrot.lane.b32.xlu0 %v1398, 96
        %v1676 = vpop.permute.xlu0 %1675
        %1677 = vrot.lane.b32.xlu0 %v1401, 96
        %v1678 = vpop.permute.xlu0 %1677
        %1679 = vrot.lane.b32.xlu0 %v1404, 96
        %v1680 = vpop.permute.xlu0 %1679
        %1681 = vrot.lane.b32.xlu0 %v1407, 96
        %v1682 = vpop.permute.xlu0 %1681
        %1683 = vrot.lane.b32.xlu0 %v1410, 96
        %v1684 = vpop.permute.xlu0 %1683
        %1685 = vrot.lane.b32.xlu0 %v1413, 96
        %v1686 = vpop.permute.xlu0 %1685
        %1687 = vrot.lane.b32.xlu0 %v1416, 96
        %v1688 = vpop.permute.xlu0 %1687
        %1705 = vrot.lane.b32.xlu0 %v1371, 64
        %v1706 = vpop.permute.xlu0 %1705
        %1707 = vrot.lane.b32.xlu0 %v1374, 64
        %v1708 = vpop.permute.xlu0 %1707
        %1709 = vrot.lane.b32.xlu0 %v1377, 64
        %v1710 = vpop.permute.xlu0 %1709
        %1711 = vrot.lane.b32.xlu0 %v1380, 64
        %v1712 = vpop.permute.xlu0 %1711
        %1713 = vrot.lane.b32.xlu0 %v1383, 64
        %v1714 = vpop.permute.xlu0 %1713
        %1715 = vrot.lane.b32.xlu0 %v1386, 64
        %v1716 = vpop.permute.xlu0 %1715
        %1717 = vrot.lane.b32.xlu0 %v1389, 64
        %v1718 = vpop.permute.xlu0 %1717
        %1719 = vrot.lane.b32.xlu0 %v1392, 64
        %v1720 = vpop.permute.xlu0 %1719
        %1721 = vrot.lane.b32.xlu0 %v1395, 64
        %v1722 = vpop.permute.xlu0 %1721
        %1723 = vrot.lane.b32.xlu0 %v1398, 64
        %v1724 = vpop.permute.xlu0 %1723
        %1725 = vrot.lane.b32.xlu0 %v1401, 64
        %v1726 = vpop.permute.xlu0 %1725
        %1727 = vrot.lane.b32.xlu0 %v1404, 64
        %v1728 = vpop.permute.xlu0 %1727
        %1729 = vrot.lane.b32.xlu0 %v1407, 64
        %v1730 = vpop.permute.xlu0 %1729
        %1731 = vrot.lane.b32.xlu0 %v1410, 64
        %v1732 = vpop.permute.xlu0 %1731
        %1733 = vrot.lane.b32.xlu0 %v1413, 64
        %v1734 = vpop.permute.xlu0 %1733
        %1735 = vrot.lane.b32.xlu0 %v1416, 64
        %v1736 = vpop.permute.xlu0 %1735
        %1753 = vrot.lane.b32.xlu0 %v1371, 32
        %v1754 = vpop.permute.xlu0 %1753
        %1755 = vrot.lane.b32.xlu0 %v1374, 32
        %v1756 = vpop.permute.xlu0 %1755
        %1757 = vrot.lane.b32.xlu0 %v1377, 32
        %v1758 = vpop.permute.xlu0 %1757
        %1759 = vrot.lane.b32.xlu0 %v1380, 32
        %v1760 = vpop.permute.xlu0 %1759
        %1761 = vrot.lane.b32.xlu0 %v1383, 32
        %v1762 = vpop.permute.xlu0 %1761
        %1763 = vrot.lane.b32.xlu0 %v1386, 32
        %v1764 = vpop.permute.xlu0 %1763
        %1765 = vrot.lane.b32.xlu0 %v1389, 32
        %v1766 = vpop.permute.xlu0 %1765
        %1767 = vrot.lane.b32.xlu0 %v1392, 32
        %v1768 = vpop.permute.xlu0 %1767
        %1769 = vrot.lane.b32.xlu0 %v1395, 32
        %v1770 = vpop.permute.xlu0 %1769
        %1771 = vrot.lane.b32.xlu0 %v1398, 32
        %v1772 = vpop.permute.xlu0 %1771
        %1773 = vrot.lane.b32.xlu0 %v1401, 32
        %v1774 = vpop.permute.xlu0 %1773
        %1775 = vrot.lane.b32.xlu0 %v1404, 32
        %v1776 = vpop.permute.xlu0 %1775
        %1777 = vrot.lane.b32.xlu0 %v1407, 32
        %v1778 = vpop.permute.xlu0 %1777
        %1779 = vrot.lane.b32.xlu0 %v1410, 32
        %v1780 = vpop.permute.xlu0 %1779
        %1781 = vrot.lane.b32.xlu0 %v1413, 32
        %v1782 = vpop.permute.xlu0 %1781
        %1783 = vrot.lane.b32.xlu0 %v1416, 32
        %v1784 = vpop.permute.xlu0 %1783
        %vm1801 = vcmask 261120
        %v1803 = vsel %vm1801, %v1369, 0
        %v1806 = vsel %vm1801, %v1372, 0
        %v1809 = vsel %vm1801, %v1375, 0
        %v1812 = vsel %vm1801, %v1378, 0
        %v1815 = vsel %vm1801, %v1370, 0
        %v1818 = vsel %vm1801, %v1373, 0
        %v1821 = vsel %vm1801, %v1376, 0
        %v1824 = vsel %vm1801, %v1379, 0
        %1826 = vmatprep.subr.bf16.mxu0 0
        %1827 = vmatpush1.bf16.xpose.msra.mxu0 0
        %1828 = vmatprep.subr.bf16.mxu0 0
        %1829 = vmatpush1.bf16.xpose.msra.mxu0 0
        %1830 = vmatprep.subr.bf16.mxu0 0
        %1831 = vmatpush1.bf16.xpose.msra.mxu0 0
        %1832 = vmatprep.subr.bf16.mxu0 0
        %1833 = vmatpush1.bf16.xpose.msra.mxu0 0
        %1834 = vmatprep.subr.bf16.mxu0 0
        %1835 = vmatpush1.bf16.xpose.msra.mxu0 %v1824
        %1836 = vmatprep.subr.bf16.mxu0 0
        %1837 = vmatpush1.bf16.xpose.msra.mxu0 %v1821
        %1838 = vmatprep.subr.bf16.mxu0 0
        %1839 = vmatpush1.bf16.xpose.msra.mxu0 %v1818
        %1840 = vmatprep.subr.bf16.mxu0 0
        %1841 = vmatpush1.bf16.xpose.msra.mxu0 %v1815
        %1842 = vmatprep.subr.bf16.mxu0 0
        %1843 = vmatpush2.bf16.xpose.msra.mxu0 0
        %1844 = vmatprep.subr.bf16.mxu0 0
        %1845 = vmatpush2.bf16.xpose.msra.mxu0 0
        %1846 = vmatprep.subr.bf16.mxu0 0
        %1847 = vmatpush2.bf16.xpose.msra.mxu0 0
        %1848 = vmatprep.subr.bf16.mxu0 0
        %1849 = vmatpush2.bf16.xpose.msra.mxu0 0
        %1850 = vmatprep.subr.bf16.mxu0 0
        %1851 = vmatpush2.bf16.xpose.msra.mxu0 0
        %1852 = vmatprep.subr.bf16.mxu0 0
        %1853 = vmatpush2.bf16.xpose.msra.mxu0 0
        %1854 = vmatprep.subr.bf16.mxu0 0
        %1855 = vmatpush2.bf16.xpose.msra.mxu0 0
        %1856 = vmatprep.subr.bf16.mxu0 0
        %1857 = vmatpush2.bf16.xpose.msra.mxu0 0
        %1858 = vmatprep.mubr.bf16.mxu0 0
        %1859 = vmatmul.mubr.bf16.gmra.mxu0 %v1803
        %v1860 = vpop.f32.mrf.mxu0
        %v1861 = vadd.f32 0.0, %v1860
        %v1862 = vpop.f32.mrf.mxu0
        %v1863 = vpop.f32.mrf.mxu0
        %v1864 = vadd.f32 0.0, %v1863
        %v1865 = vpop.f32.mrf.mxu0
        %1866 = vmatprep.mubr.bf16.mxu0 0
        %1867 = vmatmul.mubr.bf16.gmra.mxu0 %v1806
        %v1868 = vpop.f32.mrf.mxu0
        %v1869 = vadd.f32 0.0, %v1868
        %v1870 = vpop.f32.mrf.mxu0
        %v1871 = vpop.f32.mrf.mxu0
        %v1872 = vadd.f32 0.0, %v1871
        %v1873 = vpop.f32.mrf.mxu0
        %1874 = vmatprep.mubr.bf16.mxu0 0
        %1875 = vmatmul.mubr.bf16.gmra.mxu0 %v1809
        %v1876 = vpop.f32.mrf.mxu0
        %v1877 = vadd.f32 0.0, %v1876
        %v1878 = vpop.f32.mrf.mxu0
        %v1879 = vpop.f32.mrf.mxu0
        %v1880 = vadd.f32 0.0, %v1879
        %v1881 = vpop.f32.mrf.mxu0
        %1882 = vmatprep.mubr.bf16.mxu0 0
        %1883 = vmatmul.mubr.bf16.gmra.mxu0 %v1812
        %v1884 = vpop.f32.mrf.mxu0
        %v1885 = vadd.f32 0.0, %v1884
        %v1886 = vpop.f32.mrf.mxu0
        %v1887 = vpop.f32.mrf.mxu0
        %v1888 = vadd.f32 0.0, %v1887
        %v1889 = vpop.f32.mrf.mxu0
        %1890 = vdwg.mxu0
        %v1892 = vsel %vm1801, %v1381, 0
        %v1895 = vsel %vm1801, %v1384, 0
        %v1898 = vsel %vm1801, %v1387, 0
        %v1901 = vsel %vm1801, %v1390, 0
        %v1904 = vsel %vm1801, %v1382, 0
        %v1907 = vsel %vm1801, %v1385, 0
        %v1910 = vsel %vm1801, %v1388, 0
        %v1913 = vsel %vm1801, %v1391, 0
        %1915 = vmatprep.subr.bf16.mxu0 0
        %1916 = vmatpush1.bf16.xpose.msra.mxu0 0
        %1917 = vmatprep.subr.bf16.mxu0 0
        %1918 = vmatpush1.bf16.xpose.msra.mxu0 0
        %1919 = vmatprep.subr.bf16.mxu0 0
        %1920 = vmatpush1.bf16.xpose.msra.mxu0 0
        %1921 = vmatprep.subr.bf16.mxu0 0
        %1922 = vmatpush1.bf16.xpose.msra.mxu0 0
        %1923 = vmatprep.subr.bf16.mxu0 0
        %1924 = vmatpush1.bf16.xpose.msra.mxu0 %v1913
        %1925 = vmatprep.subr.bf16.mxu0 0
        %1926 = vmatpush1.bf16.xpose.msra.mxu0 %v1910
        %1927 = vmatprep.subr.bf16.mxu0 0
        %1928 = vmatpush1.bf16.xpose.msra.mxu0 %v1907
        %1929 = vmatprep.subr.bf16.mxu0 0
        %1930 = vmatpush1.bf16.xpose.msra.mxu0 %v1904
        %1931 = vmatprep.subr.bf16.mxu0 0
        %1932 = vmatpush2.bf16.xpose.msra.mxu0 0
        %1933 = vmatprep.subr.bf16.mxu0 0
        %1934 = vmatpush2.bf16.xpose.msra.mxu0 0
        %1935 = vmatprep.subr.bf16.mxu0 0
        %1936 = vmatpush2.bf16.xpose.msra.mxu0 0
        %1937 = vmatprep.subr.bf16.mxu0 0
        %1938 = vmatpush2.bf16.xpose.msra.mxu0 0
        %1939 = vmatprep.subr.bf16.mxu0 0
        %1940 = vmatpush2.bf16.xpose.msra.mxu0 0
        %1941 = vmatprep.subr.bf16.mxu0 0
        %1942 = vmatpush2.bf16.xpose.msra.mxu0 0
        %1943 = vmatprep.subr.bf16.mxu0 0
        %1944 = vmatpush2.bf16.xpose.msra.mxu0 0
        %1945 = vmatprep.subr.bf16.mxu0 0
        %1946 = vmatpush2.bf16.xpose.msra.mxu0 0
        %1947 = vmatprep.mubr.bf16.mxu0 0
        %1948 = vmatmul.mubr.bf16.gmra.mxu0 %v1892
        %v1949 = vpop.f32.mrf.mxu0
        %v1950 = vadd.f32 0.0, %v1949
        %v1951 = vpop.f32.mrf.mxu0
        %v1952 = vpop.f32.mrf.mxu0
        %v1953 = vadd.f32 0.0, %v1952
        %v1954 = vpop.f32.mrf.mxu0
        %1955 = vmatprep.mubr.bf16.mxu0 0
        %1956 = vmatmul.mubr.bf16.gmra.mxu0 %v1895
        %v1957 = vpop.f32.mrf.mxu0
        %v1958 = vadd.f32 0.0, %v1957
        %v1959 = vpop.f32.mrf.mxu0
        %v1960 = vpop.f32.mrf.mxu0
        %v1961 = vadd.f32 0.0, %v1960
        %v1962 = vpop.f32.mrf.mxu0
        %1963 = vmatprep.mubr.bf16.mxu0 0
        %1964 = vmatmul.mubr.bf16.gmra.mxu0 %v1898
        %v1965 = vpop.f32.mrf.mxu0
        %v1966 = vadd.f32 0.0, %v1965
        %v1967 = vpop.f32.mrf.mxu0
        %v1968 = vpop.f32.mrf.mxu0
        %v1969 = vadd.f32 0.0, %v1968
        %v1970 = vpop.f32.mrf.mxu0
        %1971 = vmatprep.mubr.bf16.mxu0 0
        %1972 = vmatmul.mubr.bf16.gmra.mxu0 %v1901
        %v1973 = vpop.f32.mrf.mxu0
        %v1974 = vadd.f32 0.0, %v1973
        %v1975 = vpop.f32.mrf.mxu0
        %v1976 = vpop.f32.mrf.mxu0
        %v1977 = vadd.f32 0.0, %v1976
        %v1978 = vpop.f32.mrf.mxu0
        %1979 = vdwg.mxu0
        %v1981 = vsel %vm1801, %v1393, 0
        %v1984 = vsel %vm1801, %v1396, 0
        %v1987 = vsel %vm1801, %v1399, 0
        %v1990 = vsel %vm1801, %v1402, 0
        %v1993 = vsel %vm1801, %v1394, 0
        %v1996 = vsel %vm1801, %v1397, 0
        %v1999 = vsel %vm1801, %v1400, 0
        %v2002 = vsel %vm1801, %v1403, 0
        %2004 = vmatprep.subr.bf16.mxu0 0
        %2005 = vmatpush1.bf16.xpose.msra.mxu0 0
        %2006 = vmatprep.subr.bf16.mxu0 0
        %2007 = vmatpush1.bf16.xpose.msra.mxu0 0
        %2008 = vmatprep.subr.bf16.mxu0 0
        %2009 = vmatpush1.bf16.xpose.msra.mxu0 0
        %2010 = vmatprep.subr.bf16.mxu0 0
        %2011 = vmatpush1.bf16.xpose.msra.mxu0 0
        %2012 = vmatprep.subr.bf16.mxu0 0
        %2013 = vmatpush1.bf16.xpose.msra.mxu0 %v2002
        %2014 = vmatprep.subr.bf16.mxu0 0
        %2015 = vmatpush1.bf16.xpose.msra.mxu0 %v1999
        %2016 = vmatprep.subr.bf16.mxu0 0
        %2017 = vmatpush1.bf16.xpose.msra.mxu0 %v1996
        %2018 = vmatprep.subr.bf16.mxu0 0
        %2019 = vmatpush1.bf16.xpose.msra.mxu0 %v1993
        %2020 = vmatprep.subr.bf16.mxu0 0
        %2021 = vmatpush2.bf16.xpose.msra.mxu0 0
        %2022 = vmatprep.subr.bf16.mxu0 0
        %2023 = vmatpush2.bf16.xpose.msra.mxu0 0
        %2024 = vmatprep.subr.bf16.mxu0 0
        %2025 = vmatpush2.bf16.xpose.msra.mxu0 0
        %2026 = vmatprep.subr.bf16.mxu0 0
        %2027 = vmatpush2.bf16.xpose.msra.mxu0 0
        %2028 = vmatprep.subr.bf16.mxu0 0
        %2029 = vmatpush2.bf16.xpose.msra.mxu0 0
        %2030 = vmatprep.subr.bf16.mxu0 0
        %2031 = vmatpush2.bf16.xpose.msra.mxu0 0
        %2032 = vmatprep.subr.bf16.mxu0 0
        %2033 = vmatpush2.bf16.xpose.msra.mxu0 0
        %2034 = vmatprep.subr.bf16.mxu0 0
        %2035 = vmatpush2.bf16.xpose.msra.mxu0 0
        %2036 = vmatprep.mubr.bf16.mxu0 0
        %2037 = vmatmul.mubr.bf16.gmra.mxu0 %v1981
        %v2038 = vpop.f32.mrf.mxu0
        %v2039 = vadd.f32 0.0, %v2038
        %v2040 = vpop.f32.mrf.mxu0
        %v2041 = vpop.f32.mrf.mxu0
        %v2042 = vadd.f32 0.0, %v2041
        %v2043 = vpop.f32.mrf.mxu0
        %2044 = vmatprep.mubr.bf16.mxu0 0
        %2045 = vmatmul.mubr.bf16.gmra.mxu0 %v1984
        %v2046 = vpop.f32.mrf.mxu0
        %v2047 = vadd.f32 0.0, %v2046
        %v2048 = vpop.f32.mrf.mxu0
        %v2049 = vpop.f32.mrf.mxu0
        %v2050 = vadd.f32 0.0, %v2049
        %v2051 = vpop.f32.mrf.mxu0
        %2052 = vmatprep.mubr.bf16.mxu0 0
        %2053 = vmatmul.mubr.bf16.gmra.mxu0 %v1987
        %v2054 = vpop.f32.mrf.mxu0
        %v2055 = vadd.f32 0.0, %v2054
        %v2056 = vpop.f32.mrf.mxu0
        %v2057 = vpop.f32.mrf.mxu0
        %v2058 = vadd.f32 0.0, %v2057
        %v2059 = vpop.f32.mrf.mxu0
        %2060 = vmatprep.mubr.bf16.mxu0 0
        %2061 = vmatmul.mubr.bf16.gmra.mxu0 %v1990
        %v2062 = vpop.f32.mrf.mxu0
        %v2063 = vadd.f32 0.0, %v2062
        %v2064 = vpop.f32.mrf.mxu0
        %v2065 = vpop.f32.mrf.mxu0
        %v2066 = vadd.f32 0.0, %v2065
        %v2067 = vpop.f32.mrf.mxu0
        %2068 = vdwg.mxu0
        %v2070 = vsel %vm1801, %v1405, 0
        %v2073 = vsel %vm1801, %v1408, 0
        %v2076 = vsel %vm1801, %v1411, 0
        %v2079 = vsel %vm1801, %v1414, 0
        %v2082 = vsel %vm1801, %v1406, 0
        %v2085 = vsel %vm1801, %v1409, 0
        %v2088 = vsel %vm1801, %v1412, 0
        %v2091 = vsel %vm1801, %v1415, 0
        %2093 = vmatprep.subr.bf16.mxu0 0
        %2094 = vmatpush1.bf16.xpose.msra.mxu0 0
        %2095 = vmatprep.subr.bf16.mxu0 0
        %2096 = vmatpush1.bf16.xpose.msra.mxu0 0
        %2097 = vmatprep.subr.bf16.mxu0 0
        %2098 = vmatpush1.bf16.xpose.msra.mxu0 0
        %2099 = vmatprep.subr.bf16.mxu0 0
        %2100 = vmatpush1.bf16.xpose.msra.mxu0 0
        %2101 = vmatprep.subr.bf16.mxu0 0
        %2102 = vmatpush1.bf16.xpose.msra.mxu0 %v2091
        %2103 = vmatprep.subr.bf16.mxu0 0
        %2104 = vmatpush1.bf16.xpose.msra.mxu0 %v2088
        %2105 = vmatprep.subr.bf16.mxu0 0
        %2106 = vmatpush1.bf16.xpose.msra.mxu0 %v2085
        %2107 = vmatprep.subr.bf16.mxu0 0
        %2108 = vmatpush1.bf16.xpose.msra.mxu0 %v2082
        %2109 = vmatprep.subr.bf16.mxu0 0
        %2110 = vmatpush2.bf16.xpose.msra.mxu0 0
        %2111 = vmatprep.subr.bf16.mxu0 0
        %2112 = vmatpush2.bf16.xpose.msra.mxu0 0
        %2113 = vmatprep.subr.bf16.mxu0 0
        %2114 = vmatpush2.bf16.xpose.msra.mxu0 0
        %2115 = vmatprep.subr.bf16.mxu0 0
        %2116 = vmatpush2.bf16.xpose.msra.mxu0 0
        %2117 = vmatprep.subr.bf16.mxu0 0
        %2118 = vmatpush2.bf16.xpose.msra.mxu0 0
        %2119 = vmatprep.subr.bf16.mxu0 0
        %2120 = vmatpush2.bf16.xpose.msra.mxu0 0
        %2121 = vmatprep.subr.bf16.mxu0 0
        %2122 = vmatpush2.bf16.xpose.msra.mxu0 0
        %2123 = vmatprep.subr.bf16.mxu0 0
        %2124 = vmatpush2.bf16.xpose.msra.mxu0 0
        %2125 = vmatprep.mubr.bf16.mxu0 0
        %2126 = vmatmul.mubr.bf16.gmra.mxu0 %v2070
        %v2127 = vpop.f32.mrf.mxu0
        %v2128 = vadd.f32 0.0, %v2127
        %v2129 = vpop.f32.mrf.mxu0
        %v2130 = vpop.f32.mrf.mxu0
        %v2131 = vadd.f32 0.0, %v2130
        %v2132 = vpop.f32.mrf.mxu0
        %2133 = vmatprep.mubr.bf16.mxu0 0
        %2134 = vmatmul.mubr.bf16.gmra.mxu0 %v2073
        %v2135 = vpop.f32.mrf.mxu0
        %v2136 = vadd.f32 0.0, %v2135
        %v2137 = vpop.f32.mrf.mxu0
        %v2138 = vpop.f32.mrf.mxu0
        %v2139 = vadd.f32 0.0, %v2138
        %v2140 = vpop.f32.mrf.mxu0
        %2141 = vmatprep.mubr.bf16.mxu0 0
        %2142 = vmatmul.mubr.bf16.gmra.mxu0 %v2076
        %v2143 = vpop.f32.mrf.mxu0
        %v2144 = vadd.f32 0.0, %v2143
        %v2145 = vpop.f32.mrf.mxu0
        %v2146 = vpop.f32.mrf.mxu0
        %v2147 = vadd.f32 0.0, %v2146
        %v2148 = vpop.f32.mrf.mxu0
        %2149 = vmatprep.mubr.bf16.mxu0 0
        %2150 = vmatmul.mubr.bf16.gmra.mxu0 %v2079
        %v2151 = vpop.f32.mrf.mxu0
        %v2152 = vadd.f32 0.0, %v2151
        %v2153 = vpop.f32.mrf.mxu0
        %v2154 = vpop.f32.mrf.mxu0
        %v2155 = vadd.f32 0.0, %v2154
        %v2156 = vpop.f32.mrf.mxu0
        %2157 = vdwg.mxu0
        %v2159 = vsel %vm1801, %v1434, 0
        %v2162 = vsel %vm1801, %v1436, 0
        %v2165 = vsel %vm1801, %v1438, 0
        %v2168 = vsel %vm1801, %v1440, 0
        %v2171 = vsel %vm1801, %v1546, 0
        %v2174 = vsel %vm1801, %v1548, 0
        %v2177 = vsel %vm1801, %v1550, 0
        %v2180 = vsel %vm1801, %v1552, 0
        %2182 = vmatprep.subr.bf16.mxu0 0
        %2183 = vmatpush1.bf16.xpose.msra.mxu0 0
        %2184 = vmatprep.subr.bf16.mxu0 0
        %2185 = vmatpush1.bf16.xpose.msra.mxu0 0
        %2186 = vmatprep.subr.bf16.mxu0 0
        %2187 = vmatpush1.bf16.xpose.msra.mxu0 0
        %2188 = vmatprep.subr.bf16.mxu0 0
        %2189 = vmatpush1.bf16.xpose.msra.mxu0 0
        %2190 = vmatprep.subr.bf16.mxu0 0
        %2191 = vmatpush1.bf16.xpose.msra.mxu0 %v2180
        %2192 = vmatprep.subr.bf16.mxu0 0
        %2193 = vmatpush1.bf16.xpose.msra.mxu0 %v2177
        %2194 = vmatprep.subr.bf16.mxu0 0
        %2195 = vmatpush1.bf16.xpose.msra.mxu0 %v2174
        %2196 = vmatprep.subr.bf16.mxu0 0
        %2197 = vmatpush1.bf16.xpose.msra.mxu0 %v2171
        %2198 = vmatprep.subr.bf16.mxu0 0
        %2199 = vmatpush2.bf16.xpose.msra.mxu0 0
        %2200 = vmatprep.subr.bf16.mxu0 0
        %2201 = vmatpush2.bf16.xpose.msra.mxu0 0
        %2202 = vmatprep.subr.bf16.mxu0 0
        %2203 = vmatpush2.bf16.xpose.msra.mxu0 0
        %2204 = vmatprep.subr.bf16.mxu0 0
        %2205 = vmatpush2.bf16.xpose.msra.mxu0 0
        %2206 = vmatprep.subr.bf16.mxu0 0
        %2207 = vmatpush2.bf16.xpose.msra.mxu0 0
        %2208 = vmatprep.subr.bf16.mxu0 0
        %2209 = vmatpush2.bf16.xpose.msra.mxu0 0
        %2210 = vmatprep.subr.bf16.mxu0 0
        %2211 = vmatpush2.bf16.xpose.msra.mxu0 0
        %2212 = vmatprep.subr.bf16.mxu0 0
        %2213 = vmatpush2.bf16.xpose.msra.mxu0 0
        %2214 = vmatprep.mubr.bf16.mxu0 0
        %2215 = vmatmul.mubr.bf16.gmra.mxu0 %v2159
        %v2216 = vpop.f32.mrf.mxu0
        %v2217 = vadd.f32 0.0, %v2216
        %v2218 = vpop.f32.mrf.mxu0
        %v2219 = vpop.f32.mrf.mxu0
        %v2220 = vadd.f32 0.0, %v2219
        %v2221 = vpop.f32.mrf.mxu0
        %2222 = vmatprep.mubr.bf16.mxu0 0
        %2223 = vmatmul.mubr.bf16.gmra.mxu0 %v2162
        %v2224 = vpop.f32.mrf.mxu0
        %v2225 = vadd.f32 0.0, %v2224
        %v2226 = vpop.f32.mrf.mxu0
        %v2227 = vpop.f32.mrf.mxu0
        %v2228 = vadd.f32 0.0, %v2227
        %v2229 = vpop.f32.mrf.mxu0
        %2230 = vmatprep.mubr.bf16.mxu0 0
        %2231 = vmatmul.mubr.bf16.gmra.mxu0 %v2165
        %v2232 = vpop.f32.mrf.mxu0
        %v2233 = vadd.f32 0.0, %v2232
        %v2234 = vpop.f32.mrf.mxu0
        %v2235 = vpop.f32.mrf.mxu0
        %v2236 = vadd.f32 0.0, %v2235
        %v2237 = vpop.f32.mrf.mxu0
        %2238 = vmatprep.mubr.bf16.mxu0 0
        %2239 = vmatmul.mubr.bf16.gmra.mxu0 %v2168
        %v2240 = vpop.f32.mrf.mxu0
        %v2241 = vadd.f32 0.0, %v2240
        %v2242 = vpop.f32.mrf.mxu0
        %v2243 = vpop.f32.mrf.mxu0
        %v2244 = vadd.f32 0.0, %v2243
        %v2245 = vpop.f32.mrf.mxu0
        %2246 = vdwg.mxu0
        %v2248 = vsel %vm1801, %v1442, 0
        %v2251 = vsel %vm1801, %v1444, 0
        %v2254 = vsel %vm1801, %v1446, 0
        %v2257 = vsel %vm1801, %v1448, 0
        %v2260 = vsel %vm1801, %v1554, 0
        %v2263 = vsel %vm1801, %v1556, 0
        %v2266 = vsel %vm1801, %v1558, 0
        %v2269 = vsel %vm1801, %v1560, 0
        %2271 = vmatprep.subr.bf16.mxu0 0
        %2272 = vmatpush1.bf16.xpose.msra.mxu0 0
        %2273 = vmatprep.subr.bf16.mxu0 0
        %2274 = vmatpush1.bf16.xpose.msra.mxu0 0
        %2275 = vmatprep.subr.bf16.mxu0 0
        %2276 = vmatpush1.bf16.xpose.msra.mxu0 0
        %2277 = vmatprep.subr.bf16.mxu0 0
        %2278 = vmatpush1.bf16.xpose.msra.mxu0 0
        %2279 = vmatprep.subr.bf16.mxu0 0
        %2280 = vmatpush1.bf16.xpose.msra.mxu0 %v2269
        %2281 = vmatprep.subr.bf16.mxu0 0
        %2282 = vmatpush1.bf16.xpose.msra.mxu0 %v2266
        %2283 = vmatprep.subr.bf16.mxu0 0
        %2284 = vmatpush1.bf16.xpose.msra.mxu0 %v2263
        %2285 = vmatprep.subr.bf16.mxu0 0
        %2286 = vmatpush1.bf16.xpose.msra.mxu0 %v2260
        %2287 = vmatprep.subr.bf16.mxu0 0
        %2288 = vmatpush2.bf16.xpose.msra.mxu0 0
        %2289 = vmatprep.subr.bf16.mxu0 0
        %2290 = vmatpush2.bf16.xpose.msra.mxu0 0
        %2291 = vmatprep.subr.bf16.mxu0 0
        %2292 = vmatpush2.bf16.xpose.msra.mxu0 0
        %2293 = vmatprep.subr.bf16.mxu0 0
        %2294 = vmatpush2.bf16.xpose.msra.mxu0 0
        %2295 = vmatprep.subr.bf16.mxu0 0
        %2296 = vmatpush2.bf16.xpose.msra.mxu0 0
        %2297 = vmatprep.subr.bf16.mxu0 0
        %2298 = vmatpush2.bf16.xpose.msra.mxu0 0
        %2299 = vmatprep.subr.bf16.mxu0 0
        %2300 = vmatpush2.bf16.xpose.msra.mxu0 0
        %2301 = vmatprep.subr.bf16.mxu0 0
        %2302 = vmatpush2.bf16.xpose.msra.mxu0 0
        %2303 = vmatprep.mubr.bf16.mxu0 0
        %2304 = vmatmul.mubr.bf16.gmra.mxu0 %v2248
        %v2305 = vpop.f32.mrf.mxu0
        %v2306 = vadd.f32 0.0, %v2305
        %v2307 = vpop.f32.mrf.mxu0
        %v2308 = vpop.f32.mrf.mxu0
        %v2309 = vadd.f32 0.0, %v2308
        %v2310 = vpop.f32.mrf.mxu0
        %2311 = vmatprep.mubr.bf16.mxu0 0
        %2312 = vmatmul.mubr.bf16.gmra.mxu0 %v2251
        %v2313 = vpop.f32.mrf.mxu0
        %v2314 = vadd.f32 0.0, %v2313
        %v2315 = vpop.f32.mrf.mxu0
        %v2316 = vpop.f32.mrf.mxu0
        %v2317 = vadd.f32 0.0, %v2316
        %v2318 = vpop.f32.mrf.mxu0
        %2319 = vmatprep.mubr.bf16.mxu0 0
        %2320 = vmatmul.mubr.bf16.gmra.mxu0 %v2254
        %v2321 = vpop.f32.mrf.mxu0
        %v2322 = vadd.f32 0.0, %v2321
        %v2323 = vpop.f32.mrf.mxu0
        %v2324 = vpop.f32.mrf.mxu0
        %v2325 = vadd.f32 0.0, %v2324
        %v2326 = vpop.f32.mrf.mxu0
        %2327 = vmatprep.mubr.bf16.mxu0 0
        %2328 = vmatmul.mubr.bf16.gmra.mxu0 %v2257
        %v2329 = vpop.f32.mrf.mxu0
        %v2330 = vadd.f32 0.0, %v2329
        %v2331 = vpop.f32.mrf.mxu0
        %v2332 = vpop.f32.mrf.mxu0
        %v2333 = vadd.f32 0.0, %v2332
        %v2334 = vpop.f32.mrf.mxu0
        %2335 = vdwg.mxu0
        %v2337 = vsel %vm1801, %v1450, 0
        %v2340 = vsel %vm1801, %v1452, 0
        %v2343 = vsel %vm1801, %v1454, 0
        %v2346 = vsel %vm1801, %v1456, 0
        %v2349 = vsel %vm1801, %v1562, 0
        %v2352 = vsel %vm1801, %v1564, 0
        %v2355 = vsel %vm1801, %v1566, 0
        %v2358 = vsel %vm1801, %v1568, 0
        %2360 = vmatprep.subr.bf16.mxu0 0
        %2361 = vmatpush1.bf16.xpose.msra.mxu0 0
        %2362 = vmatprep.subr.bf16.mxu0 0
        %2363 = vmatpush1.bf16.xpose.msra.mxu0 0
        %2364 = vmatprep.subr.bf16.mxu0 0
        %2365 = vmatpush1.bf16.xpose.msra.mxu0 0
        %2366 = vmatprep.subr.bf16.mxu0 0
        %2367 = vmatpush1.bf16.xpose.msra.mxu0 0
        %2368 = vmatprep.subr.bf16.mxu0 0
        %2369 = vmatpush1.bf16.xpose.msra.mxu0 %v2358
        %2370 = vmatprep.subr.bf16.mxu0 0
        %2371 = vmatpush1.bf16.xpose.msra.mxu0 %v2355
        %2372 = vmatprep.subr.bf16.mxu0 0
        %2373 = vmatpush1.bf16.xpose.msra.mxu0 %v2352
        %2374 = vmatprep.subr.bf16.mxu0 0
        %2375 = vmatpush1.bf16.xpose.msra.mxu0 %v2349
        %2376 = vmatprep.subr.bf16.mxu0 0
        %2377 = vmatpush2.bf16.xpose.msra.mxu0 0
        %2378 = vmatprep.subr.bf16.mxu0 0
        %2379 = vmatpush2.bf16.xpose.msra.mxu0 0
        %2380 = vmatprep.subr.bf16.mxu0 0
        %2381 = vmatpush2.bf16.xpose.msra.mxu0 0
        %2382 = vmatprep.subr.bf16.mxu0 0
        %2383 = vmatpush2.bf16.xpose.msra.mxu0 0
        %2384 = vmatprep.subr.bf16.mxu0 0
        %2385 = vmatpush2.bf16.xpose.msra.mxu0 0
        %2386 = vmatprep.subr.bf16.mxu0 0
        %2387 = vmatpush2.bf16.xpose.msra.mxu0 0
        %2388 = vmatprep.subr.bf16.mxu0 0
        %2389 = vmatpush2.bf16.xpose.msra.mxu0 0
        %2390 = vmatprep.subr.bf16.mxu0 0
        %2391 = vmatpush2.bf16.xpose.msra.mxu0 0
        %2392 = vmatprep.mubr.bf16.mxu0 0
        %2393 = vmatmul.mubr.bf16.gmra.mxu0 %v2337
        %v2394 = vpop.f32.mrf.mxu0
        %v2395 = vadd.f32 0.0, %v2394
        %v2396 = vpop.f32.mrf.mxu0
        %v2397 = vpop.f32.mrf.mxu0
        %v2398 = vadd.f32 0.0, %v2397
        %v2399 = vpop.f32.mrf.mxu0
        %2400 = vmatprep.mubr.bf16.mxu0 0
        %2401 = vmatmul.mubr.bf16.gmra.mxu0 %v2340
        %v2402 = vpop.f32.mrf.mxu0
        %v2403 = vadd.f32 0.0, %v2402
        %v2404 = vpop.f32.mrf.mxu0
        %v2405 = vpop.f32.mrf.mxu0
        %v2406 = vadd.f32 0.0, %v2405
        %v2407 = vpop.f32.mrf.mxu0
        %2408 = vmatprep.mubr.bf16.mxu0 0
        %2409 = vmatmul.mubr.bf16.gmra.mxu0 %v2343
        %v2410 = vpop.f32.mrf.mxu0
        %v2411 = vadd.f32 0.0, %v2410
        %v2412 = vpop.f32.mrf.mxu0
        %v2413 = vpop.f32.mrf.mxu0
        %v2414 = vadd.f32 0.0, %v2413
        %v2415 = vpop.f32.mrf.mxu0
        %2416 = vmatprep.mubr.bf16.mxu0 0
        %2417 = vmatmul.mubr.bf16.gmra.mxu0 %v2346
        %v2418 = vpop.f32.mrf.mxu0
        %v2419 = vadd.f32 0.0, %v2418
        %v2420 = vpop.f32.mrf.mxu0
        %v2421 = vpop.f32.mrf.mxu0
        %v2422 = vadd.f32 0.0, %v2421
        %v2423 = vpop.f32.mrf.mxu0
        %2424 = vdwg.mxu0
        %v2426 = vsel %vm1801, %v1458, 0
        %v2429 = vsel %vm1801, %v1460, 0
        %v2432 = vsel %vm1801, %v1462, 0
        %v2435 = vsel %vm1801, %v1464, 0
        %v2438 = vsel %vm1801, %v1570, 0
        %v2441 = vsel %vm1801, %v1572, 0
        %v2444 = vsel %vm1801, %v1574, 0
        %v2447 = vsel %vm1801, %v1576, 0
        %2449 = vmatprep.subr.bf16.mxu0 0
        %2450 = vmatpush1.bf16.xpose.msra.mxu0 0
        %2451 = vmatprep.subr.bf16.mxu0 0
        %2452 = vmatpush1.bf16.xpose.msra.mxu0 0
        %2453 = vmatprep.subr.bf16.mxu0 0
        %2454 = vmatpush1.bf16.xpose.msra.mxu0 0
        %2455 = vmatprep.subr.bf16.mxu0 0
        %2456 = vmatpush1.bf16.xpose.msra.mxu0 0
        %2457 = vmatprep.subr.bf16.mxu0 0
        %2458 = vmatpush1.bf16.xpose.msra.mxu0 %v2447
        %2459 = vmatprep.subr.bf16.mxu0 0
        %2460 = vmatpush1.bf16.xpose.msra.mxu0 %v2444
        %2461 = vmatprep.subr.bf16.mxu0 0
        %2462 = vmatpush1.bf16.xpose.msra.mxu0 %v2441
        %2463 = vmatprep.subr.bf16.mxu0 0
        %2464 = vmatpush1.bf16.xpose.msra.mxu0 %v2438
        %2465 = vmatprep.subr.bf16.mxu0 0
        %2466 = vmatpush2.bf16.xpose.msra.mxu0 0
        %2467 = vmatprep.subr.bf16.mxu0 0
        %2468 = vmatpush2.bf16.xpose.msra.mxu0 0
        %2469 = vmatprep.subr.bf16.mxu0 0
        %2470 = vmatpush2.bf16.xpose.msra.mxu0 0
        %2471 = vmatprep.subr.bf16.mxu0 0
        %2472 = vmatpush2.bf16.xpose.msra.mxu0 0
        %2473 = vmatprep.subr.bf16.mxu0 0
        %2474 = vmatpush2.bf16.xpose.msra.mxu0 0
        %2475 = vmatprep.subr.bf16.mxu0 0
        %2476 = vmatpush2.bf16.xpose.msra.mxu0 0
        %2477 = vmatprep.subr.bf16.mxu0 0
        %2478 = vmatpush2.bf16.xpose.msra.mxu0 0
        %2479 = vmatprep.subr.bf16.mxu0 0
        %2480 = vmatpush2.bf16.xpose.msra.mxu0 0
        %2481 = vmatprep.mubr.bf16.mxu0 0
        %2482 = vmatmul.mubr.bf16.gmra.mxu0 %v2426
        %v2483 = vpop.f32.mrf.mxu0
        %v2484 = vadd.f32 0.0, %v2483
        %v2485 = vpop.f32.mrf.mxu0
        %v2486 = vpop.f32.mrf.mxu0
        %v2487 = vadd.f32 0.0, %v2486
        %v2488 = vpop.f32.mrf.mxu0
        %2489 = vmatprep.mubr.bf16.mxu0 0
        %2490 = vmatmul.mubr.bf16.gmra.mxu0 %v2429
        %v2491 = vpop.f32.mrf.mxu0
        %v2492 = vadd.f32 0.0, %v2491
        %v2493 = vpop.f32.mrf.mxu0
        %v2494 = vpop.f32.mrf.mxu0
        %v2495 = vadd.f32 0.0, %v2494
        %v2496 = vpop.f32.mrf.mxu0
        %2497 = vmatprep.mubr.bf16.mxu0 0
        %2498 = vmatmul.mubr.bf16.gmra.mxu0 %v2432
        %v2499 = vpop.f32.mrf.mxu0
        %v2500 = vadd.f32 0.0, %v2499
        %v2501 = vpop.f32.mrf.mxu0
        %v2502 = vpop.f32.mrf.mxu0
        %v2503 = vadd.f32 0.0, %v2502
        %v2504 = vpop.f32.mrf.mxu0
        %2505 = vmatprep.mubr.bf16.mxu0 0
        %2506 = vmatmul.mubr.bf16.gmra.mxu0 %v2435
        %v2507 = vpop.f32.mrf.mxu0
        %v2508 = vadd.f32 0.0, %v2507
        %v2509 = vpop.f32.mrf.mxu0
        %v2510 = vpop.f32.mrf.mxu0
        %v2511 = vadd.f32 0.0, %v2510
        %v2512 = vpop.f32.mrf.mxu0
        %2513 = vdwg.mxu0
        %v2515 = vsel %vm1801, %v1466, 0
        %v2518 = vsel %vm1801, %v1468, 0
        %v2521 = vsel %vm1801, %v1470, 0
        %v2524 = vsel %vm1801, %v1472, 0
        %v2527 = vsel %vm1801, %v1578, 0
        %v2530 = vsel %vm1801, %v1580, 0
        %v2533 = vsel %vm1801, %v1582, 0
        %v2536 = vsel %vm1801, %v1584, 0
        %2538 = vmatprep.subr.bf16.mxu0 0
        %2539 = vmatpush1.bf16.xpose.msra.mxu0 0
        %2540 = vmatprep.subr.bf16.mxu0 0
        %2541 = vmatpush1.bf16.xpose.msra.mxu0 0
        %2542 = vmatprep.subr.bf16.mxu0 0
        %2543 = vmatpush1.bf16.xpose.msra.mxu0 0
        %2544 = vmatprep.subr.bf16.mxu0 0
        %2545 = vmatpush1.bf16.xpose.msra.mxu0 0
        %2546 = vmatprep.subr.bf16.mxu0 0
        %2547 = vmatpush1.bf16.xpose.msra.mxu0 %v2536
        %2548 = vmatprep.subr.bf16.mxu0 0
        %2549 = vmatpush1.bf16.xpose.msra.mxu0 %v2533
        %2550 = vmatprep.subr.bf16.mxu0 0
        %2551 = vmatpush1.bf16.xpose.msra.mxu0 %v2530
        %2552 = vmatprep.subr.bf16.mxu0 0
        %2553 = vmatpush1.bf16.xpose.msra.mxu0 %v2527
        %2554 = vmatprep.subr.bf16.mxu0 0
        %2555 = vmatpush2.bf16.xpose.msra.mxu0 0
        %2556 = vmatprep.subr.bf16.mxu0 0
        %2557 = vmatpush2.bf16.xpose.msra.mxu0 0
        %2558 = vmatprep.subr.bf16.mxu0 0
        %2559 = vmatpush2.bf16.xpose.msra.mxu0 0
        %2560 = vmatprep.subr.bf16.mxu0 0
        %2561 = vmatpush2.bf16.xpose.msra.mxu0 0
        %2562 = vmatprep.subr.bf16.mxu0 0
        %2563 = vmatpush2.bf16.xpose.msra.mxu0 0
        %2564 = vmatprep.subr.bf16.mxu0 0
        %2565 = vmatpush2.bf16.xpose.msra.mxu0 0
        %2566 = vmatprep.subr.bf16.mxu0 0
        %2567 = vmatpush2.bf16.xpose.msra.mxu0 0
        %2568 = vmatprep.subr.bf16.mxu0 0
        %2569 = vmatpush2.bf16.xpose.msra.mxu0 0
        %2570 = vmatprep.mubr.bf16.mxu0 0
        %2571 = vmatmul.mubr.bf16.gmra.mxu0 %v2515
        %v2572 = vpop.f32.mrf.mxu0
        %v2573 = vadd.f32 0.0, %v2572
        %v2574 = vpop.f32.mrf.mxu0
        %v2575 = vpop.f32.mrf.mxu0
        %v2576 = vadd.f32 0.0, %v2575
        %v2577 = vpop.f32.mrf.mxu0
        %2578 = vmatprep.mubr.bf16.mxu0 0
        %2579 = vmatmul.mubr.bf16.gmra.mxu0 %v2518
        %v2580 = vpop.f32.mrf.mxu0
        %v2581 = vadd.f32 0.0, %v2580
        %v2582 = vpop.f32.mrf.mxu0
        %v2583 = vpop.f32.mrf.mxu0
        %v2584 = vadd.f32 0.0, %v2583
        %v2585 = vpop.f32.mrf.mxu0
        %2586 = vmatprep.mubr.bf16.mxu0 0
        %2587 = vmatmul.mubr.bf16.gmra.mxu0 %v2521
        %v2588 = vpop.f32.mrf.mxu0
        %v2589 = vadd.f32 0.0, %v2588
        %v2590 = vpop.f32.mrf.mxu0
        %v2591 = vpop.f32.mrf.mxu0
        %v2592 = vadd.f32 0.0, %v2591
        %v2593 = vpop.f32.mrf.mxu0
        %2594 = vmatprep.mubr.bf16.mxu0 0
        %2595 = vmatmul.mubr.bf16.gmra.mxu0 %v2524
        %v2596 = vpop.f32.mrf.mxu0
        %v2597 = vadd.f32 0.0, %v2596
        %v2598 = vpop.f32.mrf.mxu0
        %v2599 = vpop.f32.mrf.mxu0
        %v2600 = vadd.f32 0.0, %v2599
        %v2601 = vpop.f32.mrf.mxu0
        %2602 = vdwg.mxu0
        %v2604 = vsel %vm1801, %v1474, 0
        %v2607 = vsel %vm1801, %v1476, 0
        %v2610 = vsel %vm1801, %v1478, 0
        %v2613 = vsel %vm1801, %v1480, 0
        %v2616 = vsel %vm1801, %v1586, 0
        %v2619 = vsel %vm1801, %v1588, 0
        %v2622 = vsel %vm1801, %v1590, 0
        %v2625 = vsel %vm1801, %v1592, 0
        %2627 = vmatprep.subr.bf16.mxu0 0
        %2628 = vmatpush1.bf16.xpose.msra.mxu0 0
        %2629 = vmatprep.subr.bf16.mxu0 0
        %2630 = vmatpush1.bf16.xpose.msra.mxu0 0
        %2631 = vmatprep.subr.bf16.mxu0 0
        %2632 = vmatpush1.bf16.xpose.msra.mxu0 0
        %2633 = vmatprep.subr.bf16.mxu0 0
        %2634 = vmatpush1.bf16.xpose.msra.mxu0 0
        %2635 = vmatprep.subr.bf16.mxu0 0
        %2636 = vmatpush1.bf16.xpose.msra.mxu0 %v2625
        %2637 = vmatprep.subr.bf16.mxu0 0
        %2638 = vmatpush1.bf16.xpose.msra.mxu0 %v2622
        %2639 = vmatprep.subr.bf16.mxu0 0
        %2640 = vmatpush1.bf16.xpose.msra.mxu0 %v2619
        %2641 = vmatprep.subr.bf16.mxu0 0
        %2642 = vmatpush1.bf16.xpose.msra.mxu0 %v2616
        %2643 = vmatprep.subr.bf16.mxu0 0
        %2644 = vmatpush2.bf16.xpose.msra.mxu0 0
        %2645 = vmatprep.subr.bf16.mxu0 0
        %2646 = vmatpush2.bf16.xpose.msra.mxu0 0
        %2647 = vmatprep.subr.bf16.mxu0 0
        %2648 = vmatpush2.bf16.xpose.msra.mxu0 0
        %2649 = vmatprep.subr.bf16.mxu0 0
        %2650 = vmatpush2.bf16.xpose.msra.mxu0 0
        %2651 = vmatprep.subr.bf16.mxu0 0
        %2652 = vmatpush2.bf16.xpose.msra.mxu0 0
        %2653 = vmatprep.subr.bf16.mxu0 0
        %2654 = vmatpush2.bf16.xpose.msra.mxu0 0
        %2655 = vmatprep.subr.bf16.mxu0 0
        %2656 = vmatpush2.bf16.xpose.msra.mxu0 0
        %2657 = vmatprep.subr.bf16.mxu0 0
        %2658 = vmatpush2.bf16.xpose.msra.mxu0 0
        %2659 = vmatprep.mubr.bf16.mxu0 0
        %2660 = vmatmul.mubr.bf16.gmra.mxu0 %v2604
        %v2661 = vpop.f32.mrf.mxu0
        %v2662 = vadd.f32 0.0, %v2661
        %v2663 = vpop.f32.mrf.mxu0
        %v2664 = vpop.f32.mrf.mxu0
        %v2665 = vadd.f32 0.0, %v2664
        %v2666 = vpop.f32.mrf.mxu0
        %2667 = vmatprep.mubr.bf16.mxu0 0
        %2668 = vmatmul.mubr.bf16.gmra.mxu0 %v2607
        %v2669 = vpop.f32.mrf.mxu0
        %v2670 = vadd.f32 0.0, %v2669
        %v2671 = vpop.f32.mrf.mxu0
        %v2672 = vpop.f32.mrf.mxu0
        %v2673 = vadd.f32 0.0, %v2672
        %v2674 = vpop.f32.mrf.mxu0
        %2675 = vmatprep.mubr.bf16.mxu0 0
        %2676 = vmatmul.mubr.bf16.gmra.mxu0 %v2610
        %v2677 = vpop.f32.mrf.mxu0
        %v2678 = vadd.f32 0.0, %v2677
        %v2679 = vpop.f32.mrf.mxu0
        %v2680 = vpop.f32.mrf.mxu0
        %v2681 = vadd.f32 0.0, %v2680
        %v2682 = vpop.f32.mrf.mxu0
        %2683 = vmatprep.mubr.bf16.mxu0 0
        %2684 = vmatmul.mubr.bf16.gmra.mxu0 %v2613
        %v2685 = vpop.f32.mrf.mxu0
        %v2686 = vadd.f32 0.0, %v2685
        %v2687 = vpop.f32.mrf.mxu0
        %v2688 = vpop.f32.mrf.mxu0
        %v2689 = vadd.f32 0.0, %v2688
        %v2690 = vpop.f32.mrf.mxu0
        %2691 = vdwg.mxu0
        %v2693 = vsel %vm1801, %v1482, 0
        %v2696 = vsel %vm1801, %v1484, 0
        %v2699 = vsel %vm1801, %v1486, 0
        %v2702 = vsel %vm1801, %v1488, 0
        %v2705 = vsel %vm1801, %v1594, 0
        %v2708 = vsel %vm1801, %v1596, 0
        %v2711 = vsel %vm1801, %v1598, 0
        %v2714 = vsel %vm1801, %v1600, 0
        %2716 = vmatprep.subr.bf16.mxu0 0
        %2717 = vmatpush1.bf16.xpose.msra.mxu0 0
        %2718 = vmatprep.subr.bf16.mxu0 0
        %2719 = vmatpush1.bf16.xpose.msra.mxu0 0
        %2720 = vmatprep.subr.bf16.mxu0 0
        %2721 = vmatpush1.bf16.xpose.msra.mxu0 0
        %2722 = vmatprep.subr.bf16.mxu0 0
        %2723 = vmatpush1.bf16.xpose.msra.mxu0 0
        %2724 = vmatprep.subr.bf16.mxu0 0
        %2725 = vmatpush1.bf16.xpose.msra.mxu0 %v2714
        %2726 = vmatprep.subr.bf16.mxu0 0
        %2727 = vmatpush1.bf16.xpose.msra.mxu0 %v2711
        %2728 = vmatprep.subr.bf16.mxu0 0
        %2729 = vmatpush1.bf16.xpose.msra.mxu0 %v2708
        %2730 = vmatprep.subr.bf16.mxu0 0
        %2731 = vmatpush1.bf16.xpose.msra.mxu0 %v2705
        %2732 = vmatprep.subr.bf16.mxu0 0
        %2733 = vmatpush2.bf16.xpose.msra.mxu0 0
        %2734 = vmatprep.subr.bf16.mxu0 0
        %2735 = vmatpush2.bf16.xpose.msra.mxu0 0
        %2736 = vmatprep.subr.bf16.mxu0 0
        %2737 = vmatpush2.bf16.xpose.msra.mxu0 0
        %2738 = vmatprep.subr.bf16.mxu0 0
        %2739 = vmatpush2.bf16.xpose.msra.mxu0 0
        %2740 = vmatprep.subr.bf16.mxu0 0
        %2741 = vmatpush2.bf16.xpose.msra.mxu0 0
        %2742 = vmatprep.subr.bf16.mxu0 0
        %2743 = vmatpush2.bf16.xpose.msra.mxu0 0
        %2744 = vmatprep.subr.bf16.mxu0 0
        %2745 = vmatpush2.bf16.xpose.msra.mxu0 0
        %2746 = vmatprep.subr.bf16.mxu0 0
        %2747 = vmatpush2.bf16.xpose.msra.mxu0 0
        %2748 = vmatprep.mubr.bf16.mxu0 0
        %2749 = vmatmul.mubr.bf16.gmra.mxu0 %v2693
        %v2750 = vpop.f32.mrf.mxu0
        %v2751 = vadd.f32 0.0, %v2750
        %v2752 = vpop.f32.mrf.mxu0
        %v2753 = vpop.f32.mrf.mxu0
        %v2754 = vadd.f32 0.0, %v2753
        %v2755 = vpop.f32.mrf.mxu0
        %2756 = vmatprep.mubr.bf16.mxu0 0
        %2757 = vmatmul.mubr.bf16.gmra.mxu0 %v2696
        %v2758 = vpop.f32.mrf.mxu0
        %v2759 = vadd.f32 0.0, %v2758
        %v2760 = vpop.f32.mrf.mxu0
        %v2761 = vpop.f32.mrf.mxu0
        %v2762 = vadd.f32 0.0, %v2761
        %v2763 = vpop.f32.mrf.mxu0
        %2764 = vmatprep.mubr.bf16.mxu0 0
        %2765 = vmatmul.mubr.bf16.gmra.mxu0 %v2699
        %v2766 = vpop.f32.mrf.mxu0
        %v2767 = vadd.f32 0.0, %v2766
        %v2768 = vpop.f32.mrf.mxu0
        %v2769 = vpop.f32.mrf.mxu0
        %v2770 = vadd.f32 0.0, %v2769
        %v2771 = vpop.f32.mrf.mxu0
        %2772 = vmatprep.mubr.bf16.mxu0 0
        %2773 = vmatmul.mubr.bf16.gmra.mxu0 %v2702
        %v2774 = vpop.f32.mrf.mxu0
        %v2775 = vadd.f32 0.0, %v2774
        %v2776 = vpop.f32.mrf.mxu0
        %v2777 = vpop.f32.mrf.mxu0
        %v2778 = vadd.f32 0.0, %v2777
        %v2779 = vpop.f32.mrf.mxu0
        %2780 = vdwg.mxu0
        %v2782 = vsel %vm1801, %v1490, 0
        %v2785 = vsel %vm1801, %v1492, 0
        %v2788 = vsel %vm1801, %v1494, 0
        %v2791 = vsel %vm1801, %v1496, 0
        %v2794 = vsel %vm1801, %v1602, 0
        %v2797 = vsel %vm1801, %v1604, 0
        %v2800 = vsel %vm1801, %v1606, 0
        %v2803 = vsel %vm1801, %v1608, 0
        %2805 = vmatprep.subr.bf16.mxu0 0
        %2806 = vmatpush1.bf16.xpose.msra.mxu0 0
        %2807 = vmatprep.subr.bf16.mxu0 0
        %2808 = vmatpush1.bf16.xpose.msra.mxu0 0
        %2809 = vmatprep.subr.bf16.mxu0 0
        %2810 = vmatpush1.bf16.xpose.msra.mxu0 0
        %2811 = vmatprep.subr.bf16.mxu0 0
        %2812 = vmatpush1.bf16.xpose.msra.mxu0 0
        %2813 = vmatprep.subr.bf16.mxu0 0
        %2814 = vmatpush1.bf16.xpose.msra.mxu0 %v2803
        %2815 = vmatprep.subr.bf16.mxu0 0
        %2816 = vmatpush1.bf16.xpose.msra.mxu0 %v2800
        %2817 = vmatprep.subr.bf16.mxu0 0
        %2818 = vmatpush1.bf16.xpose.msra.mxu0 %v2797
        %2819 = vmatprep.subr.bf16.mxu0 0
        %2820 = vmatpush1.bf16.xpose.msra.mxu0 %v2794
        %2821 = vmatprep.subr.bf16.mxu0 0
        %2822 = vmatpush2.bf16.xpose.msra.mxu0 0
        %2823 = vmatprep.subr.bf16.mxu0 0
        %2824 = vmatpush2.bf16.xpose.msra.mxu0 0
        %2825 = vmatprep.subr.bf16.mxu0 0
        %2826 = vmatpush2.bf16.xpose.msra.mxu0 0
        %2827 = vmatprep.subr.bf16.mxu0 0
        %2828 = vmatpush2.bf16.xpose.msra.mxu0 0
        %2829 = vmatprep.subr.bf16.mxu0 0
        %2830 = vmatpush2.bf16.xpose.msra.mxu0 0
        %2831 = vmatprep.subr.bf16.mxu0 0
        %2832 = vmatpush2.bf16.xpose.msra.mxu0 0
        %2833 = vmatprep.subr.bf16.mxu0 0
        %2834 = vmatpush2.bf16.xpose.msra.mxu0 0
        %2835 = vmatprep.subr.bf16.mxu0 0
        %2836 = vmatpush2.bf16.xpose.msra.mxu0 0
        %2837 = vmatprep.mubr.bf16.mxu0 0
        %2838 = vmatmul.mubr.bf16.gmra.mxu0 %v2782
        %v2839 = vpop.f32.mrf.mxu0
        %v2840 = vadd.f32 0.0, %v2839
        %v2841 = vpop.f32.mrf.mxu0
        %v2842 = vpop.f32.mrf.mxu0
        %v2843 = vadd.f32 0.0, %v2842
        %v2844 = vpop.f32.mrf.mxu0
        %2845 = vmatprep.mubr.bf16.mxu0 0
        %2846 = vmatmul.mubr.bf16.gmra.mxu0 %v2785
        %v2847 = vpop.f32.mrf.mxu0
        %v2848 = vadd.f32 0.0, %v2847
        %v2849 = vpop.f32.mrf.mxu0
        %v2850 = vpop.f32.mrf.mxu0
        %v2851 = vadd.f32 0.0, %v2850
        %v2852 = vpop.f32.mrf.mxu0
        %2853 = vmatprep.mubr.bf16.mxu0 0
        %2854 = vmatmul.mubr.bf16.gmra.mxu0 %v2788
        %v2855 = vpop.f32.mrf.mxu0
        %v2856 = vadd.f32 0.0, %v2855
        %v2857 = vpop.f32.mrf.mxu0
        %v2858 = vpop.f32.mrf.mxu0
        %v2859 = vadd.f32 0.0, %v2858
        %v2860 = vpop.f32.mrf.mxu0
        %2861 = vmatprep.mubr.bf16.mxu0 0
        %2862 = vmatmul.mubr.bf16.gmra.mxu0 %v2791
        %v2863 = vpop.f32.mrf.mxu0
        %v2864 = vadd.f32 0.0, %v2863
        %v2865 = vpop.f32.mrf.mxu0
        %v2866 = vpop.f32.mrf.mxu0
        %v2867 = vadd.f32 0.0, %v2866
        %v2868 = vpop.f32.mrf.mxu0
        %2869 = vdwg.mxu0
        %v2871 = vsel %vm1801, %v1498, 0
        %v2874 = vsel %vm1801, %v1500, 0
        %v2877 = vsel %vm1801, %v1502, 0
        %v2880 = vsel %vm1801, %v1504, 0
        %v2883 = vsel %vm1801, %v1610, 0
        %v2886 = vsel %vm1801, %v1612, 0
        %v2889 = vsel %vm1801, %v1614, 0
        %v2892 = vsel %vm1801, %v1616, 0
        %2894 = vmatprep.subr.bf16.mxu0 0
        %2895 = vmatpush1.bf16.xpose.msra.mxu0 0
        %2896 = vmatprep.subr.bf16.mxu0 0
        %2897 = vmatpush1.bf16.xpose.msra.mxu0 0
        %2898 = vmatprep.subr.bf16.mxu0 0
        %2899 = vmatpush1.bf16.xpose.msra.mxu0 0
        %2900 = vmatprep.subr.bf16.mxu0 0
        %2901 = vmatpush1.bf16.xpose.msra.mxu0 0
        %2902 = vmatprep.subr.bf16.mxu0 0
        %2903 = vmatpush1.bf16.xpose.msra.mxu0 %v2892
        %2904 = vmatprep.subr.bf16.mxu0 0
        %2905 = vmatpush1.bf16.xpose.msra.mxu0 %v2889
        %2906 = vmatprep.subr.bf16.mxu0 0
        %2907 = vmatpush1.bf16.xpose.msra.mxu0 %v2886
        %2908 = vmatprep.subr.bf16.mxu0 0
        %2909 = vmatpush1.bf16.xpose.msra.mxu0 %v2883
        %2910 = vmatprep.subr.bf16.mxu0 0
        %2911 = vmatpush2.bf16.xpose.msra.mxu0 0
        %2912 = vmatprep.subr.bf16.mxu0 0
        %2913 = vmatpush2.bf16.xpose.msra.mxu0 0
        %2914 = vmatprep.subr.bf16.mxu0 0
        %2915 = vmatpush2.bf16.xpose.msra.mxu0 0
        %2916 = vmatprep.subr.bf16.mxu0 0
        %2917 = vmatpush2.bf16.xpose.msra.mxu0 0
        %2918 = vmatprep.subr.bf16.mxu0 0
        %2919 = vmatpush2.bf16.xpose.msra.mxu0 0
        %2920 = vmatprep.subr.bf16.mxu0 0
        %2921 = vmatpush2.bf16.xpose.msra.mxu0 0
        %2922 = vmatprep.subr.bf16.mxu0 0
        %2923 = vmatpush2.bf16.xpose.msra.mxu0 0
        %2924 = vmatprep.subr.bf16.mxu0 0
        %2925 = vmatpush2.bf16.xpose.msra.mxu0 0
        %2926 = vmatprep.mubr.bf16.mxu0 0
        %2927 = vmatmul.mubr.bf16.gmra.mxu0 %v2871
        %v2928 = vpop.f32.mrf.mxu0
        %v2929 = vadd.f32 0.0, %v2928
        %v2930 = vpop.f32.mrf.mxu0
        %v2931 = vpop.f32.mrf.mxu0
        %v2932 = vadd.f32 0.0, %v2931
        %v2933 = vpop.f32.mrf.mxu0
        %2934 = vmatprep.mubr.bf16.mxu0 0
        %2935 = vmatmul.mubr.bf16.gmra.mxu0 %v2874
        %v2936 = vpop.f32.mrf.mxu0
        %v2937 = vadd.f32 0.0, %v2936
        %v2938 = vpop.f32.mrf.mxu0
        %v2939 = vpop.f32.mrf.mxu0
        %v2940 = vadd.f32 0.0, %v2939
        %v2941 = vpop.f32.mrf.mxu0
        %2942 = vmatprep.mubr.bf16.mxu0 0
        %2943 = vmatmul.mubr.bf16.gmra.mxu0 %v2877
        %v2944 = vpop.f32.mrf.mxu0
        %v2945 = vadd.f32 0.0, %v2944
        %v2946 = vpop.f32.mrf.mxu0
        %v2947 = vpop.f32.mrf.mxu0
        %v2948 = vadd.f32 0.0, %v2947
        %v2949 = vpop.f32.mrf.mxu0
        %2950 = vmatprep.mubr.bf16.mxu0 0
        %2951 = vmatmul.mubr.bf16.gmra.mxu0 %v2880
        %v2952 = vpop.f32.mrf.mxu0
        %v2953 = vadd.f32 0.0, %v2952
        %v2954 = vpop.f32.mrf.mxu0
        %v2955 = vpop.f32.mrf.mxu0
        %v2956 = vadd.f32 0.0, %v2955
        %v2957 = vpop.f32.mrf.mxu0
        %2958 = vdwg.mxu0
        %v2960 = vsel %vm1801, %v1506, 0
        %v2963 = vsel %vm1801, %v1508, 0
        %v2966 = vsel %vm1801, %v1510, 0
        %v2969 = vsel %vm1801, %v1512, 0
        %v2972 = vsel %vm1801, %v1618, 0
        %v2975 = vsel %vm1801, %v1620, 0
        %v2978 = vsel %vm1801, %v1622, 0
        %v2981 = vsel %vm1801, %v1624, 0
        %2983 = vmatprep.subr.bf16.mxu0 0
        %2984 = vmatpush1.bf16.xpose.msra.mxu0 0
        %2985 = vmatprep.subr.bf16.mxu0 0
        %2986 = vmatpush1.bf16.xpose.msra.mxu0 0
        %2987 = vmatprep.subr.bf16.mxu0 0
        %2988 = vmatpush1.bf16.xpose.msra.mxu0 0
        %2989 = vmatprep.subr.bf16.mxu0 0
        %2990 = vmatpush1.bf16.xpose.msra.mxu0 0
        %2991 = vmatprep.subr.bf16.mxu0 0
        %2992 = vmatpush1.bf16.xpose.msra.mxu0 %v2981
        %2993 = vmatprep.subr.bf16.mxu0 0
        %2994 = vmatpush1.bf16.xpose.msra.mxu0 %v2978
        %2995 = vmatprep.subr.bf16.mxu0 0
        %2996 = vmatpush1.bf16.xpose.msra.mxu0 %v2975
        %2997 = vmatprep.subr.bf16.mxu0 0
        %2998 = vmatpush1.bf16.xpose.msra.mxu0 %v2972
        %2999 = vmatprep.subr.bf16.mxu0 0
        %3000 = vmatpush2.bf16.xpose.msra.mxu0 0
        %3001 = vmatprep.subr.bf16.mxu0 0
        %3002 = vmatpush2.bf16.xpose.msra.mxu0 0
        %3003 = vmatprep.subr.bf16.mxu0 0
        %3004 = vmatpush2.bf16.xpose.msra.mxu0 0
        %3005 = vmatprep.subr.bf16.mxu0 0
        %3006 = vmatpush2.bf16.xpose.msra.mxu0 0
        %3007 = vmatprep.subr.bf16.mxu0 0
        %3008 = vmatpush2.bf16.xpose.msra.mxu0 0
        %3009 = vmatprep.subr.bf16.mxu0 0
        %3010 = vmatpush2.bf16.xpose.msra.mxu0 0
        %3011 = vmatprep.subr.bf16.mxu0 0
        %3012 = vmatpush2.bf16.xpose.msra.mxu0 0
        %3013 = vmatprep.subr.bf16.mxu0 0
        %3014 = vmatpush2.bf16.xpose.msra.mxu0 0
        %3015 = vmatprep.mubr.bf16.mxu0 0
        %3016 = vmatmul.mubr.bf16.gmra.mxu0 %v2960
        %v3017 = vpop.f32.mrf.mxu0
        %v3018 = vadd.f32 0.0, %v3017
        %v3019 = vpop.f32.mrf.mxu0
        %v3020 = vpop.f32.mrf.mxu0
        %v3021 = vadd.f32 0.0, %v3020
        %v3022 = vpop.f32.mrf.mxu0
        %3023 = vmatprep.mubr.bf16.mxu0 0
        %3024 = vmatmul.mubr.bf16.gmra.mxu0 %v2963
        %v3025 = vpop.f32.mrf.mxu0
        %v3026 = vadd.f32 0.0, %v3025
        %v3027 = vpop.f32.mrf.mxu0
        %v3028 = vpop.f32.mrf.mxu0
        %v3029 = vadd.f32 0.0, %v3028
        %v3030 = vpop.f32.mrf.mxu0
        %3031 = vmatprep.mubr.bf16.mxu0 0
        %3032 = vmatmul.mubr.bf16.gmra.mxu0 %v2966
        %v3033 = vpop.f32.mrf.mxu0
        %v3034 = vadd.f32 0.0, %v3033
        %v3035 = vpop.f32.mrf.mxu0
        %v3036 = vpop.f32.mrf.mxu0
        %v3037 = vadd.f32 0.0, %v3036
        %v3038 = vpop.f32.mrf.mxu0
        %3039 = vmatprep.mubr.bf16.mxu0 0
        %3040 = vmatmul.mubr.bf16.gmra.mxu0 %v2969
        %v3041 = vpop.f32.mrf.mxu0
        %v3042 = vadd.f32 0.0, %v3041
        %v3043 = vpop.f32.mrf.mxu0
        %v3044 = vpop.f32.mrf.mxu0
        %v3045 = vadd.f32 0.0, %v3044
        %v3046 = vpop.f32.mrf.mxu0
        %3047 = vdwg.mxu0
        %v3049 = vsel %vm1801, %v1514, 0
        %v3052 = vsel %vm1801, %v1516, 0
        %v3055 = vsel %vm1801, %v1518, 0
        %v3058 = vsel %vm1801, %v1520, 0
        %v3061 = vsel %vm1801, %v1626, 0
        %v3064 = vsel %vm1801, %v1628, 0
        %v3067 = vsel %vm1801, %v1630, 0
        %v3070 = vsel %vm1801, %v1632, 0
        %3072 = vmatprep.subr.bf16.mxu0 0
        %3073 = vmatpush1.bf16.xpose.msra.mxu0 0
        %3074 = vmatprep.subr.bf16.mxu0 0
        %3075 = vmatpush1.bf16.xpose.msra.mxu0 0
        %3076 = vmatprep.subr.bf16.mxu0 0
        %3077 = vmatpush1.bf16.xpose.msra.mxu0 0
        %3078 = vmatprep.subr.bf16.mxu0 0
        %3079 = vmatpush1.bf16.xpose.msra.mxu0 0
        %3080 = vmatprep.subr.bf16.mxu0 0
        %3081 = vmatpush1.bf16.xpose.msra.mxu0 %v3070
        %3082 = vmatprep.subr.bf16.mxu0 0
        %3083 = vmatpush1.bf16.xpose.msra.mxu0 %v3067
        %3084 = vmatprep.subr.bf16.mxu0 0
        %3085 = vmatpush1.bf16.xpose.msra.mxu0 %v3064
        %3086 = vmatprep.subr.bf16.mxu0 0
        %3087 = vmatpush1.bf16.xpose.msra.mxu0 %v3061
        %3088 = vmatprep.subr.bf16.mxu0 0
        %3089 = vmatpush2.bf16.xpose.msra.mxu0 0
        %3090 = vmatprep.subr.bf16.mxu0 0
        %3091 = vmatpush2.bf16.xpose.msra.mxu0 0
        %3092 = vmatprep.subr.bf16.mxu0 0
        %3093 = vmatpush2.bf16.xpose.msra.mxu0 0
        %3094 = vmatprep.subr.bf16.mxu0 0
        %3095 = vmatpush2.bf16.xpose.msra.mxu0 0
        %3096 = vmatprep.subr.bf16.mxu0 0
        %3097 = vmatpush2.bf16.xpose.msra.mxu0 0
        %3098 = vmatprep.subr.bf16.mxu0 0
        %3099 = vmatpush2.bf16.xpose.msra.mxu0 0
        %3100 = vmatprep.subr.bf16.mxu0 0
        %3101 = vmatpush2.bf16.xpose.msra.mxu0 0
        %3102 = vmatprep.subr.bf16.mxu0 0
        %3103 = vmatpush2.bf16.xpose.msra.mxu0 0
        %3104 = vmatprep.mubr.bf16.mxu0 0
        %3105 = vmatmul.mubr.bf16.gmra.mxu0 %v3049
        %v3106 = vpop.f32.mrf.mxu0
        %v3107 = vadd.f32 0.0, %v3106
        %v3108 = vpop.f32.mrf.mxu0
        %v3109 = vpop.f32.mrf.mxu0
        %v3110 = vadd.f32 0.0, %v3109
        %v3111 = vpop.f32.mrf.mxu0
        %3112 = vmatprep.mubr.bf16.mxu0 0
        %3113 = vmatmul.mubr.bf16.gmra.mxu0 %v3052
        %v3114 = vpop.f32.mrf.mxu0
        %v3115 = vadd.f32 0.0, %v3114
        %v3116 = vpop.f32.mrf.mxu0
        %v3117 = vpop.f32.mrf.mxu0
        %v3118 = vadd.f32 0.0, %v3117
        %v3119 = vpop.f32.mrf.mxu0
        %3120 = vmatprep.mubr.bf16.mxu0 0
        %3121 = vmatmul.mubr.bf16.gmra.mxu0 %v3055
        %v3122 = vpop.f32.mrf.mxu0
        %v3123 = vadd.f32 0.0, %v3122
        %v3124 = vpop.f32.mrf.mxu0
        %v3125 = vpop.f32.mrf.mxu0
        %v3126 = vadd.f32 0.0, %v3125
        %v3127 = vpop.f32.mrf.mxu0
        %3128 = vmatprep.mubr.bf16.mxu0 0
        %3129 = vmatmul.mubr.bf16.gmra.mxu0 %v3058
        %v3130 = vpop.f32.mrf.mxu0
        %v3131 = vadd.f32 0.0, %v3130
        %v3132 = vpop.f32.mrf.mxu0
        %v3133 = vpop.f32.mrf.mxu0
        %v3134 = vadd.f32 0.0, %v3133
        %v3135 = vpop.f32.mrf.mxu0
        %3136 = vdwg.mxu0
        %v3138 = vsel %vm1801, %v1522, 0
        %v3141 = vsel %vm1801, %v1524, 0
        %v3144 = vsel %vm1801, %v1526, 0
        %v3147 = vsel %vm1801, %v1528, 0
        %v3150 = vsel %vm1801, %v1634, 0
        %v3153 = vsel %vm1801, %v1636, 0
        %v3156 = vsel %vm1801, %v1638, 0
        %v3159 = vsel %vm1801, %v1640, 0
        %3161 = vmatprep.subr.bf16.mxu0 0
        %3162 = vmatpush1.bf16.xpose.msra.mxu0 0
        %3163 = vmatprep.subr.bf16.mxu0 0
        %3164 = vmatpush1.bf16.xpose.msra.mxu0 0
        %3165 = vmatprep.subr.bf16.mxu0 0
        %3166 = vmatpush1.bf16.xpose.msra.mxu0 0
        %3167 = vmatprep.subr.bf16.mxu0 0
        %3168 = vmatpush1.bf16.xpose.msra.mxu0 0
        %3169 = vmatprep.subr.bf16.mxu0 0
        %3170 = vmatpush1.bf16.xpose.msra.mxu0 %v3159
        %3171 = vmatprep.subr.bf16.mxu0 0
        %3172 = vmatpush1.bf16.xpose.msra.mxu0 %v3156
        %3173 = vmatprep.subr.bf16.mxu0 0
        %3174 = vmatpush1.bf16.xpose.msra.mxu0 %v3153
        %3175 = vmatprep.subr.bf16.mxu0 0
        %3176 = vmatpush1.bf16.xpose.msra.mxu0 %v3150
        %3177 = vmatprep.subr.bf16.mxu0 0
        %3178 = vmatpush2.bf16.xpose.msra.mxu0 0
        %3179 = vmatprep.subr.bf16.mxu0 0
        %3180 = vmatpush2.bf16.xpose.msra.mxu0 0
        %3181 = vmatprep.subr.bf16.mxu0 0
        %3182 = vmatpush2.bf16.xpose.msra.mxu0 0
        %3183 = vmatprep.subr.bf16.mxu0 0
        %3184 = vmatpush2.bf16.xpose.msra.mxu0 0
        %3185 = vmatprep.subr.bf16.mxu0 0
        %3186 = vmatpush2.bf16.xpose.msra.mxu0 0
        %3187 = vmatprep.subr.bf16.mxu0 0
        %3188 = vmatpush2.bf16.xpose.msra.mxu0 0
        %3189 = vmatprep.subr.bf16.mxu0 0
        %3190 = vmatpush2.bf16.xpose.msra.mxu0 0
        %3191 = vmatprep.subr.bf16.mxu0 0
        %3192 = vmatpush2.bf16.xpose.msra.mxu0 0
        %3193 = vmatprep.mubr.bf16.mxu0 0
        %3194 = vmatmul.mubr.bf16.gmra.mxu0 %v3138
        %v3195 = vpop.f32.mrf.mxu0
        %v3196 = vadd.f32 0.0, %v3195
        %v3197 = vpop.f32.mrf.mxu0
        %v3198 = vpop.f32.mrf.mxu0
        %v3199 = vadd.f32 0.0, %v3198
        %v3200 = vpop.f32.mrf.mxu0
        %3201 = vmatprep.mubr.bf16.mxu0 0
        %3202 = vmatmul.mubr.bf16.gmra.mxu0 %v3141
        %v3203 = vpop.f32.mrf.mxu0
        %v3204 = vadd.f32 0.0, %v3203
        %v3205 = vpop.f32.mrf.mxu0
        %v3206 = vpop.f32.mrf.mxu0
        %v3207 = vadd.f32 0.0, %v3206
        %v3208 = vpop.f32.mrf.mxu0
        %3209 = vmatprep.mubr.bf16.mxu0 0
        %3210 = vmatmul.mubr.bf16.gmra.mxu0 %v3144
        %v3211 = vpop.f32.mrf.mxu0
        %v3212 = vadd.f32 0.0, %v3211
        %v3213 = vpop.f32.mrf.mxu0
        %v3214 = vpop.f32.mrf.mxu0
        %v3215 = vadd.f32 0.0, %v3214
        %v3216 = vpop.f32.mrf.mxu0
        %3217 = vmatprep.mubr.bf16.mxu0 0
        %3218 = vmatmul.mubr.bf16.gmra.mxu0 %v3147
        %v3219 = vpop.f32.mrf.mxu0
        %v3220 = vadd.f32 0.0, %v3219
        %v3221 = vpop.f32.mrf.mxu0
        %v3222 = vpop.f32.mrf.mxu0
        %v3223 = vadd.f32 0.0, %v3222
        %v3224 = vpop.f32.mrf.mxu0
        %3225 = vdwg.mxu0
        %vm3226 = vcmask 523264
        %v3227 = vsel %vm3226, %v1861, -inf
        %3228 = vmax.xlane.f32.xlu0 %v3227
        %v3229 = vpop.xlane.xlu0 %3228
        %v3230 = vsel %vm3226, %v1864, -inf
        %3231 = vmax.xlane.f32.xlu0 %v3230
        %v3232 = vpop.xlane.xlu0 %3231
        %v3233 = vsel %vm3226, %v1869, -inf
        %3234 = vmax.xlane.f32.xlu0 %v3233
        %v3235 = vpop.xlane.xlu0 %3234
        %v3236 = vsel %vm3226, %v1872, -inf
        %3237 = vmax.xlane.f32.xlu0 %v3236
        %v3238 = vpop.xlane.xlu0 %3237
        %v3239 = vsel %vm3226, %v1877, -inf
        %3240 = vmax.xlane.f32.xlu0 %v3239
        %v3241 = vpop.xlane.xlu0 %3240
        %v3242 = vsel %vm3226, %v1880, -inf
        %3243 = vmax.xlane.f32.xlu0 %v3242
        %v3244 = vpop.xlane.xlu0 %3243
        %v3245 = vsel %vm3226, %v1885, -inf
        %3246 = vmax.xlane.f32.xlu0 %v3245
        %v3247 = vpop.xlane.xlu0 %3246
        %v3248 = vsel %vm3226, %v1888, -inf
        %3249 = vmax.xlane.f32.xlu0 %v3248
        %v3250 = vpop.xlane.xlu0 %3249
        %v3251 = vsel %vm3226, %v1950, -inf
        %3252 = vmax.xlane.f32.xlu0 %v3251
        %v3253 = vpop.xlane.xlu0 %3252
        %v3254 = vsel %vm3226, %v1953, -inf
        %3255 = vmax.xlane.f32.xlu0 %v3254
        %v3256 = vpop.xlane.xlu0 %3255
        %v3257 = vsel %vm3226, %v1958, -inf
        %3258 = vmax.xlane.f32.xlu0 %v3257
        %v3259 = vpop.xlane.xlu0 %3258
        %v3260 = vsel %vm3226, %v1961, -inf
        %3261 = vmax.xlane.f32.xlu0 %v3260
        %v3262 = vpop.xlane.xlu0 %3261
        %v3263 = vsel %vm3226, %v1966, -inf
        %3264 = vmax.xlane.f32.xlu0 %v3263
        %v3265 = vpop.xlane.xlu0 %3264
        %v3266 = vsel %vm3226, %v1969, -inf
        %3267 = vmax.xlane.f32.xlu0 %v3266
        %v3268 = vpop.xlane.xlu0 %3267
        %v3269 = vsel %vm3226, %v1974, -inf
        %3270 = vmax.xlane.f32.xlu0 %v3269
        %v3271 = vpop.xlane.xlu0 %3270
        %v3272 = vsel %vm3226, %v1977, -inf
        %3273 = vmax.xlane.f32.xlu0 %v3272
        %v3274 = vpop.xlane.xlu0 %3273
        %v3275 = vsel %vm3226, %v2039, -inf
        %3276 = vmax.xlane.f32.xlu0 %v3275
        %v3277 = vpop.xlane.xlu0 %3276
        %v3278 = vsel %vm3226, %v2042, -inf
        %3279 = vmax.xlane.f32.xlu0 %v3278
        %v3280 = vpop.xlane.xlu0 %3279
        %v3281 = vsel %vm3226, %v2047, -inf
        %3282 = vmax.xlane.f32.xlu0 %v3281
        %v3283 = vpop.xlane.xlu0 %3282
        %v3284 = vsel %vm3226, %v2050, -inf
        %3285 = vmax.xlane.f32.xlu0 %v3284
        %v3286 = vpop.xlane.xlu0 %3285
        %v3287 = vsel %vm3226, %v2055, -inf
        %3288 = vmax.xlane.f32.xlu0 %v3287
        %v3289 = vpop.xlane.xlu0 %3288
        %v3290 = vsel %vm3226, %v2058, -inf
        %3291 = vmax.xlane.f32.xlu0 %v3290
        %v3292 = vpop.xlane.xlu0 %3291
        %v3293 = vsel %vm3226, %v2063, -inf
        %3294 = vmax.xlane.f32.xlu0 %v3293
        %v3295 = vpop.xlane.xlu0 %3294
        %v3296 = vsel %vm3226, %v2066, -inf
        %3297 = vmax.xlane.f32.xlu0 %v3296
        %v3298 = vpop.xlane.xlu0 %3297
        %v3299 = vsel %vm3226, %v2128, -inf
        %3300 = vmax.xlane.f32.xlu0 %v3299
        %v3301 = vpop.xlane.xlu0 %3300
        %v3302 = vsel %vm3226, %v2131, -inf
        %3303 = vmax.xlane.f32.xlu0 %v3302
        %v3304 = vpop.xlane.xlu0 %3303
        %v3305 = vsel %vm3226, %v2136, -inf
        %3306 = vmax.xlane.f32.xlu0 %v3305
        %v3307 = vpop.xlane.xlu0 %3306
        %v3308 = vsel %vm3226, %v2139, -inf
        %3309 = vmax.xlane.f32.xlu0 %v3308
        %v3310 = vpop.xlane.xlu0 %3309
        %v3311 = vsel %vm3226, %v2144, -inf
        %3312 = vmax.xlane.f32.xlu0 %v3311
        %v3313 = vpop.xlane.xlu0 %3312
        %v3314 = vsel %vm3226, %v2147, -inf
        %3315 = vmax.xlane.f32.xlu0 %v3314
        %v3316 = vpop.xlane.xlu0 %3315
        %v3317 = vsel %vm3226, %v2152, -inf
        %3318 = vmax.xlane.f32.xlu0 %v3317
        %v3319 = vpop.xlane.xlu0 %3318
        %v3320 = vsel %vm3226, %v2155, -inf
        %3321 = vmax.xlane.f32.xlu0 %v3320
        %v3322 = vpop.xlane.xlu0 %3321
        %v3323 = vsel %vm3226, %v2217, -inf
        %3324 = vmax.xlane.f32.xlu0 %v3323
        %v3325 = vpop.xlane.xlu0 %3324
        %v3326 = vsel %vm3226, %v2220, -inf
        %3327 = vmax.xlane.f32.xlu0 %v3326
        %v3328 = vpop.xlane.xlu0 %3327
        %v3329 = vsel %vm3226, %v2225, -inf
        %3330 = vmax.xlane.f32.xlu0 %v3329
        %v3331 = vpop.xlane.xlu0 %3330
        %v3332 = vsel %vm3226, %v2228, -inf
        %3333 = vmax.xlane.f32.xlu0 %v3332
        %v3334 = vpop.xlane.xlu0 %3333
        %v3335 = vsel %vm3226, %v2233, -inf
        %3336 = vmax.xlane.f32.xlu0 %v3335
        %v3337 = vpop.xlane.xlu0 %3336
        %v3338 = vsel %vm3226, %v2236, -inf
        %3339 = vmax.xlane.f32.xlu0 %v3338
        %v3340 = vpop.xlane.xlu0 %3339
        %v3341 = vsel %vm3226, %v2241, -inf
        %3342 = vmax.xlane.f32.xlu0 %v3341
        %v3343 = vpop.xlane.xlu0 %3342
        %v3344 = vsel %vm3226, %v2244, -inf
        %3345 = vmax.xlane.f32.xlu0 %v3344
        %v3346 = vpop.xlane.xlu0 %3345
        %v3347 = vsel %vm3226, %v2306, -inf
        %3348 = vmax.xlane.f32.xlu0 %v3347
        %v3349 = vpop.xlane.xlu0 %3348
        %v3350 = vsel %vm3226, %v2309, -inf
        %3351 = vmax.xlane.f32.xlu0 %v3350
        %v3352 = vpop.xlane.xlu0 %3351
        %v3353 = vsel %vm3226, %v2314, -inf
        %3354 = vmax.xlane.f32.xlu0 %v3353
        %v3355 = vpop.xlane.xlu0 %3354
        %v3356 = vsel %vm3226, %v2317, -inf
        %3357 = vmax.xlane.f32.xlu0 %v3356
        %v3358 = vpop.xlane.xlu0 %3357
        %v3359 = vsel %vm3226, %v2322, -inf
        %3360 = vmax.xlane.f32.xlu0 %v3359
        %v3361 = vpop.xlane.xlu0 %3360
        %v3362 = vsel %vm3226, %v2325, -inf
        %3363 = vmax.xlane.f32.xlu0 %v3362
        %v3364 = vpop.xlane.xlu0 %3363
        %v3365 = vsel %vm3226, %v2330, -inf
        %3366 = vmax.xlane.f32.xlu0 %v3365
        %v3367 = vpop.xlane.xlu0 %3366
        %v3368 = vsel %vm3226, %v2333, -inf
        %3369 = vmax.xlane.f32.xlu0 %v3368
        %v3370 = vpop.xlane.xlu0 %3369
        %v3371 = vsel %vm3226, %v2395, -inf
        %3372 = vmax.xlane.f32.xlu0 %v3371
        %v3373 = vpop.xlane.xlu0 %3372
        %v3374 = vsel %vm3226, %v2398, -inf
        %3375 = vmax.xlane.f32.xlu0 %v3374
        %v3376 = vpop.xlane.xlu0 %3375
        %v3377 = vsel %vm3226, %v2403, -inf
        %3378 = vmax.xlane.f32.xlu0 %v3377
        %v3379 = vpop.xlane.xlu0 %3378
        %v3380 = vsel %vm3226, %v2406, -inf
        %3381 = vmax.xlane.f32.xlu0 %v3380
        %v3382 = vpop.xlane.xlu0 %3381
        %v3383 = vsel %vm3226, %v2411, -inf
        %3384 = vmax.xlane.f32.xlu0 %v3383
        %v3385 = vpop.xlane.xlu0 %3384
        %v3386 = vsel %vm3226, %v2414, -inf
        %3387 = vmax.xlane.f32.xlu0 %v3386
        %v3388 = vpop.xlane.xlu0 %3387
        %v3389 = vsel %vm3226, %v2419, -inf
        %3390 = vmax.xlane.f32.xlu0 %v3389
        %v3391 = vpop.xlane.xlu0 %3390
        %v3392 = vsel %vm3226, %v2422, -inf
        %3393 = vmax.xlane.f32.xlu0 %v3392
        %v3394 = vpop.xlane.xlu0 %3393
        %v3395 = vsel %vm3226, %v2484, -inf
        %3396 = vmax.xlane.f32.xlu0 %v3395
        %v3397 = vpop.xlane.xlu0 %3396
        %v3398 = vsel %vm3226, %v2487, -inf
        %3399 = vmax.xlane.f32.xlu0 %v3398
        %v3400 = vpop.xlane.xlu0 %3399
        %v3401 = vsel %vm3226, %v2492, -inf
        %3402 = vmax.xlane.f32.xlu0 %v3401
        %v3403 = vpop.xlane.xlu0 %3402
        %v3404 = vsel %vm3226, %v2495, -inf
        %3405 = vmax.xlane.f32.xlu0 %v3404
        %v3406 = vpop.xlane.xlu0 %3405
        %v3407 = vsel %vm3226, %v2500, -inf
        %3408 = vmax.xlane.f32.xlu0 %v3407
        %v3409 = vpop.xlane.xlu0 %3408
        %v3410 = vsel %vm3226, %v2503, -inf
        %3411 = vmax.xlane.f32.xlu0 %v3410
        %v3412 = vpop.xlane.xlu0 %3411
        %v3413 = vsel %vm3226, %v2508, -inf
        %3414 = vmax.xlane.f32.xlu0 %v3413
        %v3415 = vpop.xlane.xlu0 %3414
        %v3416 = vsel %vm3226, %v2511, -inf
        %3417 = vmax.xlane.f32.xlu0 %v3416
        %v3418 = vpop.xlane.xlu0 %3417
        %v3419 = vsel %vm3226, %v2573, -inf
        %3420 = vmax.xlane.f32.xlu0 %v3419
        %v3421 = vpop.xlane.xlu0 %3420
        %v3422 = vsel %vm3226, %v2576, -inf
        %3423 = vmax.xlane.f32.xlu0 %v3422
        %v3424 = vpop.xlane.xlu0 %3423
        %v3425 = vsel %vm3226, %v2581, -inf
        %3426 = vmax.xlane.f32.xlu0 %v3425
        %v3427 = vpop.xlane.xlu0 %3426
        %v3428 = vsel %vm3226, %v2584, -inf
        %3429 = vmax.xlane.f32.xlu0 %v3428
        %v3430 = vpop.xlane.xlu0 %3429
        %v3431 = vsel %vm3226, %v2589, -inf
        %3432 = vmax.xlane.f32.xlu0 %v3431
        %v3433 = vpop.xlane.xlu0 %3432
        %v3434 = vsel %vm3226, %v2592, -inf
        %3435 = vmax.xlane.f32.xlu0 %v3434
        %v3436 = vpop.xlane.xlu0 %3435
        %v3437 = vsel %vm3226, %v2597, -inf
        %3438 = vmax.xlane.f32.xlu0 %v3437
        %v3439 = vpop.xlane.xlu0 %3438
        %v3440 = vsel %vm3226, %v2600, -inf
        %3441 = vmax.xlane.f32.xlu0 %v3440
        %v3442 = vpop.xlane.xlu0 %3441
        %v3443 = vsel %vm3226, %v2662, -inf
        %3444 = vmax.xlane.f32.xlu0 %v3443
        %v3445 = vpop.xlane.xlu0 %3444
        %v3446 = vsel %vm3226, %v2665, -inf
        %3447 = vmax.xlane.f32.xlu0 %v3446
        %v3448 = vpop.xlane.xlu0 %3447
        %v3449 = vsel %vm3226, %v2670, -inf
        %3450 = vmax.xlane.f32.xlu0 %v3449
        %v3451 = vpop.xlane.xlu0 %3450
        %v3452 = vsel %vm3226, %v2673, -inf
        %3453 = vmax.xlane.f32.xlu0 %v3452
        %v3454 = vpop.xlane.xlu0 %3453
        %v3455 = vsel %vm3226, %v2678, -inf
        %3456 = vmax.xlane.f32.xlu0 %v3455
        %v3457 = vpop.xlane.xlu0 %3456
        %v3458 = vsel %vm3226, %v2681, -inf
        %3459 = vmax.xlane.f32.xlu0 %v3458
        %v3460 = vpop.xlane.xlu0 %3459
        %v3461 = vsel %vm3226, %v2686, -inf
        %3462 = vmax.xlane.f32.xlu0 %v3461
        %v3463 = vpop.xlane.xlu0 %3462
        %v3464 = vsel %vm3226, %v2689, -inf
        %3465 = vmax.xlane.f32.xlu0 %v3464
        %v3466 = vpop.xlane.xlu0 %3465
        %v3467 = vsel %vm3226, %v2751, -inf
        %3468 = vmax.xlane.f32.xlu0 %v3467
        %v3469 = vpop.xlane.xlu0 %3468
        %v3470 = vsel %vm3226, %v2754, -inf
        %3471 = vmax.xlane.f32.xlu0 %v3470
        %v3472 = vpop.xlane.xlu0 %3471
        %v3473 = vsel %vm3226, %v2759, -inf
        %3474 = vmax.xlane.f32.xlu0 %v3473
        %v3475 = vpop.xlane.xlu0 %3474
        %v3476 = vsel %vm3226, %v2762, -inf
        %3477 = vmax.xlane.f32.xlu0 %v3476
        %v3478 = vpop.xlane.xlu0 %3477
        %v3479 = vsel %vm3226, %v2767, -inf
        %3480 = vmax.xlane.f32.xlu0 %v3479
        %v3481 = vpop.xlane.xlu0 %3480
        %v3482 = vsel %vm3226, %v2770, -inf
        %3483 = vmax.xlane.f32.xlu0 %v3482
        %v3484 = vpop.xlane.xlu0 %3483
        %v3485 = vsel %vm3226, %v2775, -inf
        %3486 = vmax.xlane.f32.xlu0 %v3485
        %v3487 = vpop.xlane.xlu0 %3486
        %v3488 = vsel %vm3226, %v2778, -inf
        %3489 = vmax.xlane.f32.xlu0 %v3488
        %v3490 = vpop.xlane.xlu0 %3489
        %v3491 = vsel %vm3226, %v2840, -inf
        %3492 = vmax.xlane.f32.xlu0 %v3491
        %v3493 = vpop.xlane.xlu0 %3492
        %v3494 = vsel %vm3226, %v2843, -inf
        %3495 = vmax.xlane.f32.xlu0 %v3494
        %v3496 = vpop.xlane.xlu0 %3495
        %v3497 = vsel %vm3226, %v2848, -inf
        %3498 = vmax.xlane.f32.xlu0 %v3497
        %v3499 = vpop.xlane.xlu0 %3498
        %v3500 = vsel %vm3226, %v2851, -inf
        %3501 = vmax.xlane.f32.xlu0 %v3500
        %v3502 = vpop.xlane.xlu0 %3501
        %v3503 = vsel %vm3226, %v2856, -inf
        %3504 = vmax.xlane.f32.xlu0 %v3503
        %v3505 = vpop.xlane.xlu0 %3504
        %v3506 = vsel %vm3226, %v2859, -inf
        %3507 = vmax.xlane.f32.xlu0 %v3506
        %v3508 = vpop.xlane.xlu0 %3507
        %v3509 = vsel %vm3226, %v2864, -inf
        %3510 = vmax.xlane.f32.xlu0 %v3509
        %v3511 = vpop.xlane.xlu0 %3510
        %v3512 = vsel %vm3226, %v2867, -inf
        %3513 = vmax.xlane.f32.xlu0 %v3512
        %v3514 = vpop.xlane.xlu0 %3513
        %v3515 = vsel %vm3226, %v2929, -inf
        %3516 = vmax.xlane.f32.xlu0 %v3515
        %v3517 = vpop.xlane.xlu0 %3516
        %v3518 = vsel %vm3226, %v2932, -inf
        %3519 = vmax.xlane.f32.xlu0 %v3518
        %v3520 = vpop.xlane.xlu0 %3519
        %v3521 = vsel %vm3226, %v2937, -inf
        %3522 = vmax.xlane.f32.xlu0 %v3521
        %v3523 = vpop.xlane.xlu0 %3522
        %v3524 = vsel %vm3226, %v2940, -inf
        %3525 = vmax.xlane.f32.xlu0 %v3524
        %v3526 = vpop.xlane.xlu0 %3525
        %v3527 = vsel %vm3226, %v2945, -inf
        %3528 = vmax.xlane.f32.xlu0 %v3527
        %v3529 = vpop.xlane.xlu0 %3528
        %v3530 = vsel %vm3226, %v2948, -inf
        %3531 = vmax.xlane.f32.xlu0 %v3530
        %v3532 = vpop.xlane.xlu0 %3531
        %v3533 = vsel %vm3226, %v2953, -inf
        %3534 = vmax.xlane.f32.xlu0 %v3533
        %v3535 = vpop.xlane.xlu0 %3534
        %v3536 = vsel %vm3226, %v2956, -inf
        %3537 = vmax.xlane.f32.xlu0 %v3536
        %v3538 = vpop.xlane.xlu0 %3537
        %v3539 = vsel %vm3226, %v3018, -inf
        %3540 = vmax.xlane.f32.xlu0 %v3539
        %v3541 = vpop.xlane.xlu0 %3540
        %v3542 = vsel %vm3226, %v3021, -inf
        %3543 = vmax.xlane.f32.xlu0 %v3542
        %v3544 = vpop.xlane.xlu0 %3543
        %v3545 = vsel %vm3226, %v3026, -inf
        %3546 = vmax.xlane.f32.xlu0 %v3545
        %v3547 = vpop.xlane.xlu0 %3546
        %v3548 = vsel %vm3226, %v3029, -inf
        %3549 = vmax.xlane.f32.xlu0 %v3548
        %v3550 = vpop.xlane.xlu0 %3549
        %v3551 = vsel %vm3226, %v3034, -inf
        %3552 = vmax.xlane.f32.xlu0 %v3551
        %v3553 = vpop.xlane.xlu0 %3552
        %v3554 = vsel %vm3226, %v3037, -inf
        %3555 = vmax.xlane.f32.xlu0 %v3554
        %v3556 = vpop.xlane.xlu0 %3555
        %v3557 = vsel %vm3226, %v3042, -inf
        %3558 = vmax.xlane.f32.xlu0 %v3557
        %v3559 = vpop.xlane.xlu0 %3558
        %v3560 = vsel %vm3226, %v3045, -inf
        %3561 = vmax.xlane.f32.xlu0 %v3560
        %v3562 = vpop.xlane.xlu0 %3561
        %v3563 = vsel %vm3226, %v3107, -inf
        %3564 = vmax.xlane.f32.xlu0 %v3563
        %v3565 = vpop.xlane.xlu0 %3564
        %v3566 = vsel %vm3226, %v3110, -inf
        %3567 = vmax.xlane.f32.xlu0 %v3566
        %v3568 = vpop.xlane.xlu0 %3567
        %v3569 = vsel %vm3226, %v3115, -inf
        %3570 = vmax.xlane.f32.xlu0 %v3569
        %v3571 = vpop.xlane.xlu0 %3570
        %v3572 = vsel %vm3226, %v3118, -inf
        %3573 = vmax.xlane.f32.xlu0 %v3572
        %v3574 = vpop.xlane.xlu0 %3573
        %v3575 = vsel %vm3226, %v3123, -inf
        %3576 = vmax.xlane.f32.xlu0 %v3575
        %v3577 = vpop.xlane.xlu0 %3576
        %v3578 = vsel %vm3226, %v3126, -inf
        %3579 = vmax.xlane.f32.xlu0 %v3578
        %v3580 = vpop.xlane.xlu0 %3579
        %v3581 = vsel %vm3226, %v3131, -inf
        %3582 = vmax.xlane.f32.xlu0 %v3581
        %v3583 = vpop.xlane.xlu0 %3582
        %v3584 = vsel %vm3226, %v3134, -inf
        %3585 = vmax.xlane.f32.xlu0 %v3584
        %v3586 = vpop.xlane.xlu0 %3585
        %v3587 = vsel %vm3226, %v3196, -inf
        %3588 = vmax.xlane.f32.xlu0 %v3587
        %v3589 = vpop.xlane.xlu0 %3588
        %v3590 = vsel %vm3226, %v3199, -inf
        %3591 = vmax.xlane.f32.xlu0 %v3590
        %v3592 = vpop.xlane.xlu0 %3591
        %v3593 = vsel %vm3226, %v3204, -inf
        %3594 = vmax.xlane.f32.xlu0 %v3593
        %v3595 = vpop.xlane.xlu0 %3594
        %v3596 = vsel %vm3226, %v3207, -inf
        %3597 = vmax.xlane.f32.xlu0 %v3596
        %v3598 = vpop.xlane.xlu0 %3597
        %v3599 = vsel %vm3226, %v3212, -inf
        %3600 = vmax.xlane.f32.xlu0 %v3599
        %v3601 = vpop.xlane.xlu0 %3600
        %v3602 = vsel %vm3226, %v3215, -inf
        %3603 = vmax.xlane.f32.xlu0 %v3602
        %v3604 = vpop.xlane.xlu0 %3603
        %v3605 = vsel %vm3226, %v3220, -inf
        %3606 = vmax.xlane.f32.xlu0 %v3605
        %v3607 = vpop.xlane.xlu0 %3606
        %v3608 = vsel %vm3226, %v3223, -inf
        %3609 = vmax.xlane.f32.xlu0 %v3608
        %v3610 = vpop.xlane.xlu0 %3609
        %v3611 = vsub.f32 %v1861, %v3229
        %v3612 = vsub.f32 %v1864, %v3232
        %v3613 = vsub.f32 %v1869, %v3235
        %v3614 = vsub.f32 %v1872, %v3238
        %v3615 = vsub.f32 %v1877, %v3241
        %v3616 = vsub.f32 %v1880, %v3244
        %v3617 = vsub.f32 %v1885, %v3247
        %v3618 = vsub.f32 %v1888, %v3250
        %v3619 = vsub.f32 %v1950, %v3253
        %v3620 = vsub.f32 %v1953, %v3256
        %v3621 = vsub.f32 %v1958, %v3259
        %v3622 = vsub.f32 %v1961, %v3262
        %v3623 = vsub.f32 %v1966, %v3265
        %v3624 = vsub.f32 %v1969, %v3268
        %v3625 = vsub.f32 %v1974, %v3271
        %v3626 = vsub.f32 %v1977, %v3274
        %v3627 = vsub.f32 %v2039, %v3277
        %v3628 = vsub.f32 %v2042, %v3280
        %v3629 = vsub.f32 %v2047, %v3283
        %v3630 = vsub.f32 %v2050, %v3286
        %v3631 = vsub.f32 %v2055, %v3289
        %v3632 = vsub.f32 %v2058, %v3292
        %v3633 = vsub.f32 %v2063, %v3295
        %v3634 = vsub.f32 %v2066, %v3298
        %v3635 = vsub.f32 %v2128, %v3301
        %v3636 = vsub.f32 %v2131, %v3304
        %v3637 = vsub.f32 %v2136, %v3307
        %v3638 = vsub.f32 %v2139, %v3310
        %v3639 = vsub.f32 %v2144, %v3313
        %v3640 = vsub.f32 %v2147, %v3316
        %v3641 = vsub.f32 %v2152, %v3319
        %v3642 = vsub.f32 %v2155, %v3322
        %v3643 = vsub.f32 %v2217, %v3325
        %v3644 = vsub.f32 %v2220, %v3328
        %v3645 = vsub.f32 %v2225, %v3331
        %v3646 = vsub.f32 %v2228, %v3334
        %v3647 = vsub.f32 %v2233, %v3337
        %v3648 = vsub.f32 %v2236, %v3340
        %v3649 = vsub.f32 %v2241, %v3343
        %v3650 = vsub.f32 %v2244, %v3346
        %v3651 = vsub.f32 %v2306, %v3349
        %v3652 = vsub.f32 %v2309, %v3352
        %v3653 = vsub.f32 %v2314, %v3355
        %v3654 = vsub.f32 %v2317, %v3358
        %v3655 = vsub.f32 %v2322, %v3361
        %v3656 = vsub.f32 %v2325, %v3364
        %v3657 = vsub.f32 %v2330, %v3367
        %v3658 = vsub.f32 %v2333, %v3370
        %v3659 = vsub.f32 %v2395, %v3373
        %v3660 = vsub.f32 %v2398, %v3376
        %v3661 = vsub.f32 %v2403, %v3379
        %v3662 = vsub.f32 %v2406, %v3382
        %v3663 = vsub.f32 %v2411, %v3385
        %v3664 = vsub.f32 %v2414, %v3388
        %v3665 = vsub.f32 %v2419, %v3391
        %v3666 = vsub.f32 %v2422, %v3394
        %v3667 = vsub.f32 %v2484, %v3397
        %v3668 = vsub.f32 %v2487, %v3400
        %v3669 = vsub.f32 %v2492, %v3403
        %v3670 = vsub.f32 %v2495, %v3406
        %v3671 = vsub.f32 %v2500, %v3409
        %v3672 = vsub.f32 %v2503, %v3412
        %v3673 = vsub.f32 %v2508, %v3415
        %v3674 = vsub.f32 %v2511, %v3418
        %v3675 = vsub.f32 %v2573, %v3421
        %v3676 = vsub.f32 %v2576, %v3424
        %v3677 = vsub.f32 %v2581, %v3427
        %v3678 = vsub.f32 %v2584, %v3430
        %v3679 = vsub.f32 %v2589, %v3433
        %v3680 = vsub.f32 %v2592, %v3436
        %v3681 = vsub.f32 %v2597, %v3439
        %v3682 = vsub.f32 %v2600, %v3442
        %v3683 = vsub.f32 %v2662, %v3445
        %v3684 = vsub.f32 %v2665, %v3448
        %v3685 = vsub.f32 %v2670, %v3451
        %v3686 = vsub.f32 %v2673, %v3454
        %v3687 = vsub.f32 %v2678, %v3457
        %v3688 = vsub.f32 %v2681, %v3460
        %v3689 = vsub.f32 %v2686, %v3463
        %v3690 = vsub.f32 %v2689, %v3466
        %v3691 = vsub.f32 %v2751, %v3469
        %v3692 = vsub.f32 %v2754, %v3472
        %v3693 = vsub.f32 %v2759, %v3475
        %v3694 = vsub.f32 %v2762, %v3478
        %v3695 = vsub.f32 %v2767, %v3481
        %v3696 = vsub.f32 %v2770, %v3484
        %v3697 = vsub.f32 %v2775, %v3487
        %v3698 = vsub.f32 %v2778, %v3490
        %v3699 = vsub.f32 %v2840, %v3493
        %v3700 = vsub.f32 %v2843, %v3496
        %v3701 = vsub.f32 %v2848, %v3499
        %v3702 = vsub.f32 %v2851, %v3502
        %v3703 = vsub.f32 %v2856, %v3505
        %v3704 = vsub.f32 %v2859, %v3508
        %v3705 = vsub.f32 %v2864, %v3511
        %v3706 = vsub.f32 %v2867, %v3514
        %v3707 = vsub.f32 %v2929, %v3517
        %v3708 = vsub.f32 %v2932, %v3520
        %v3709 = vsub.f32 %v2937, %v3523
        %v3710 = vsub.f32 %v2940, %v3526
        %v3711 = vsub.f32 %v2945, %v3529
        %v3712 = vsub.f32 %v2948, %v3532
        %v3713 = vsub.f32 %v2953, %v3535
        %v3714 = vsub.f32 %v2956, %v3538
        %v3715 = vsub.f32 %v3018, %v3541
        %v3716 = vsub.f32 %v3021, %v3544
        %v3717 = vsub.f32 %v3026, %v3547
        %v3718 = vsub.f32 %v3029, %v3550
        %v3719 = vsub.f32 %v3034, %v3553
        %v3720 = vsub.f32 %v3037, %v3556
        %v3721 = vsub.f32 %v3042, %v3559
        %v3722 = vsub.f32 %v3045, %v3562
        %v3723 = vsub.f32 %v3107, %v3565
        %v3724 = vsub.f32 %v3110, %v3568
        %v3725 = vsub.f32 %v3115, %v3571
        %v3726 = vsub.f32 %v3118, %v3574
        %v3727 = vsub.f32 %v3123, %v3577
        %v3728 = vsub.f32 %v3126, %v3580
        %v3729 = vsub.f32 %v3131, %v3583
        %v3730 = vsub.f32 %v3134, %v3586
        %v3731 = vsub.f32 %v3196, %v3589
        %v3732 = vsub.f32 %v3199, %v3592
        %v3733 = vsub.f32 %v3204, %v3595
        %v3734 = vsub.f32 %v3207, %v3598
        %v3735 = vsub.f32 %v3212, %v3601
        %v3736 = vsub.f32 %v3215, %v3604
        %v3737 = vsub.f32 %v3220, %v3607
        %v3738 = vsub.f32 %v3223, %v3610
        %v3739 = vmul.f32 %v3611, 1.442695
        %v3740 = vpow.pop %v3739
        %v3741 = vmul.f32 %v3612, 1.442695
        %v3742 = vpow.pop %v3741
        %v3743 = vmul.f32 %v3613, 1.442695
        %v3744 = vpow.pop %v3743
        %v3745 = vmul.f32 %v3614, 1.442695
        %v3746 = vpow.pop %v3745
        %v3747 = vmul.f32 %v3615, 1.442695
        %v3748 = vpow.pop %v3747
        %v3749 = vmul.f32 %v3616, 1.442695
        %v3750 = vpow.pop %v3749
        %v3751 = vmul.f32 %v3617, 1.442695
        %v3752 = vpow.pop %v3751
        %v3753 = vmul.f32 %v3618, 1.442695
        %v3754 = vpow.pop %v3753
        %v3755 = vmul.f32 %v3619, 1.442695
        %v3756 = vpow.pop %v3755
        %v3757 = vmul.f32 %v3620, 1.442695
        %v3758 = vpow.pop %v3757
        %v3759 = vmul.f32 %v3621, 1.442695
        %v3760 = vpow.pop %v3759
        %v3761 = vmul.f32 %v3622, 1.442695
        %v3762 = vpow.pop %v3761
        %v3763 = vmul.f32 %v3623, 1.442695
        %v3764 = vpow.pop %v3763
        %v3765 = vmul.f32 %v3624, 1.442695
        %v3766 = vpow.pop %v3765
        %v3767 = vmul.f32 %v3625, 1.442695
        %v3768 = vpow.pop %v3767
        %v3769 = vmul.f32 %v3626, 1.442695
        %v3770 = vpow.pop %v3769
        %v3771 = vmul.f32 %v3627, 1.442695
        %v3772 = vpow.pop %v3771
        %v3773 = vmul.f32 %v3628, 1.442695
        %v3774 = vpow.pop %v3773
        %v3775 = vmul.f32 %v3629, 1.442695
        %v3776 = vpow.pop %v3775
        %v3777 = vmul.f32 %v3630, 1.442695
        %v3778 = vpow.pop %v3777
        %v3779 = vmul.f32 %v3631, 1.442695
        %v3780 = vpow.pop %v3779
        %v3781 = vmul.f32 %v3632, 1.442695
        %v3782 = vpow.pop %v3781
        %v3783 = vmul.f32 %v3633, 1.442695
        %v3784 = vpow.pop %v3783
        %v3785 = vmul.f32 %v3634, 1.442695
        %v3786 = vpow.pop %v3785
        %v3787 = vmul.f32 %v3635, 1.442695
        %v3788 = vpow.pop %v3787
        %v3789 = vmul.f32 %v3636, 1.442695
        %v3790 = vpow.pop %v3789
        %v3791 = vmul.f32 %v3637, 1.442695
        %v3792 = vpow.pop %v3791
        %v3793 = vmul.f32 %v3638, 1.442695
        %v3794 = vpow.pop %v3793
        %v3795 = vmul.f32 %v3639, 1.442695
        %v3796 = vpow.pop %v3795
        %v3797 = vmul.f32 %v3640, 1.442695
        %v3798 = vpow.pop %v3797
        %v3799 = vmul.f32 %v3641, 1.442695
        %v3800 = vpow.pop %v3799
        %v3801 = vmul.f32 %v3642, 1.442695
        %v3802 = vpow.pop %v3801
        %v3803 = vmul.f32 %v3643, 1.442695
        %v3804 = vpow.pop %v3803
        %v3805 = vmul.f32 %v3644, 1.442695
        %v3806 = vpow.pop %v3805
        %v3807 = vmul.f32 %v3645, 1.442695
        %v3808 = vpow.pop %v3807
        %v3809 = vmul.f32 %v3646, 1.442695
        %v3810 = vpow.pop %v3809
        %v3811 = vmul.f32 %v3647, 1.442695
        %v3812 = vpow.pop %v3811
        %v3813 = vmul.f32 %v3648, 1.442695
        %v3814 = vpow.pop %v3813
        %v3815 = vmul.f32 %v3649, 1.442695
        %v3816 = vpow.pop %v3815
        %v3817 = vmul.f32 %v3650, 1.442695
        %v3818 = vpow.pop %v3817
        %v3819 = vmul.f32 %v3651, 1.442695
        %v3820 = vpow.pop %v3819
        %v3821 = vmul.f32 %v3652, 1.442695
        %v3822 = vpow.pop %v3821
        %v3823 = vmul.f32 %v3653, 1.442695
        %v3824 = vpow.pop %v3823
        %v3825 = vmul.f32 %v3654, 1.442695
        %v3826 = vpow.pop %v3825
        %v3827 = vmul.f32 %v3655, 1.442695
        %v3828 = vpow.pop %v3827
        %v3829 = vmul.f32 %v3656, 1.442695
        %v3830 = vpow.pop %v3829
        %v3831 = vmul.f32 %v3657, 1.442695
        %v3832 = vpow.pop %v3831
        %v3833 = vmul.f32 %v3658, 1.442695
        %v3834 = vpow.pop %v3833
        %v3835 = vmul.f32 %v3659, 1.442695
        %v3836 = vpow.pop %v3835
        %v3837 = vmul.f32 %v3660, 1.442695
        %v3838 = vpow.pop %v3837
        %v3839 = vmul.f32 %v3661, 1.442695
        %v3840 = vpow.pop %v3839
        %v3841 = vmul.f32 %v3662, 1.442695
        %v3842 = vpow.pop %v3841
        %v3843 = vmul.f32 %v3663, 1.442695
        %v3844 = vpow.pop %v3843
        %v3845 = vmul.f32 %v3664, 1.442695
        %v3846 = vpow.pop %v3845
        %v3847 = vmul.f32 %v3665, 1.442695
        %v3848 = vpow.pop %v3847
        %v3849 = vmul.f32 %v3666, 1.442695
        %v3850 = vpow.pop %v3849
        %v3851 = vmul.f32 %v3667, 1.442695
        %v3852 = vpow.pop %v3851
        %v3853 = vmul.f32 %v3668, 1.442695
        %v3854 = vpow.pop %v3853
        %v3855 = vmul.f32 %v3669, 1.442695
        %v3856 = vpow.pop %v3855
        %v3857 = vmul.f32 %v3670, 1.442695
        %v3858 = vpow.pop %v3857
        %v3859 = vmul.f32 %v3671, 1.442695
        %v3860 = vpow.pop %v3859
        %v3861 = vmul.f32 %v3672, 1.442695
        %v3862 = vpow.pop %v3861
        %v3863 = vmul.f32 %v3673, 1.442695
        %v3864 = vpow.pop %v3863
        %v3865 = vmul.f32 %v3674, 1.442695
        %v3866 = vpow.pop %v3865
        %v3867 = vmul.f32 %v3675, 1.442695
        %v3868 = vpow.pop %v3867
        %v3869 = vmul.f32 %v3676, 1.442695
        %v3870 = vpow.pop %v3869
        %v3871 = vmul.f32 %v3677, 1.442695
        %v3872 = vpow.pop %v3871
        %v3873 = vmul.f32 %v3678, 1.442695
        %v3874 = vpow.pop %v3873
        %v3875 = vmul.f32 %v3679, 1.442695
        %v3876 = vpow.pop %v3875
        %v3877 = vmul.f32 %v3680, 1.442695
        %v3878 = vpow.pop %v3877
        %v3879 = vmul.f32 %v3681, 1.442695
        %v3880 = vpow.pop %v3879
        %v3881 = vmul.f32 %v3682, 1.442695
        %v3882 = vpow.pop %v3881
        %v3883 = vmul.f32 %v3683, 1.442695
        %v3884 = vpow.pop %v3883
        %v3885 = vmul.f32 %v3684, 1.442695
        %v3886 = vpow.pop %v3885
        %v3887 = vmul.f32 %v3685, 1.442695
        %v3888 = vpow.pop %v3887
        %v3889 = vmul.f32 %v3686, 1.442695
        %v3890 = vpow.pop %v3889
        %v3891 = vmul.f32 %v3687, 1.442695
        %v3892 = vpow.pop %v3891
        %v3893 = vmul.f32 %v3688, 1.442695
        %v3894 = vpow.pop %v3893
        %v3895 = vmul.f32 %v3689, 1.442695
        %v3896 = vpow.pop %v3895
        %v3897 = vmul.f32 %v3690, 1.442695
        %v3898 = vpow.pop %v3897
        %v3899 = vmul.f32 %v3691, 1.442695
        %v3900 = vpow.pop %v3899
        %v3901 = vmul.f32 %v3692, 1.442695
        %v3902 = vpow.pop %v3901
        %v3903 = vmul.f32 %v3693, 1.442695
        %v3904 = vpow.pop %v3903
        %v3905 = vmul.f32 %v3694, 1.442695
        %v3906 = vpow.pop %v3905
        %v3907 = vmul.f32 %v3695, 1.442695
        %v3908 = vpow.pop %v3907
        %v3909 = vmul.f32 %v3696, 1.442695
        %v3910 = vpow.pop %v3909
        %v3911 = vmul.f32 %v3697, 1.442695
        %v3912 = vpow.pop %v3911
        %v3913 = vmul.f32 %v3698, 1.442695
        %v3914 = vpow.pop %v3913
        %v3915 = vmul.f32 %v3699, 1.442695
        %v3916 = vpow.pop %v3915
        %v3917 = vmul.f32 %v3700, 1.442695
        %v3918 = vpow.pop %v3917
        %v3919 = vmul.f32 %v3701, 1.442695
        %v3920 = vpow.pop %v3919
        %v3921 = vmul.f32 %v3702, 1.442695
        %v3922 = vpow.pop %v3921
        %v3923 = vmul.f32 %v3703, 1.442695
        %v3924 = vpow.pop %v3923
        %v3925 = vmul.f32 %v3704, 1.442695
        %v3926 = vpow.pop %v3925
        %v3927 = vmul.f32 %v3705, 1.442695
        %v3928 = vpow.pop %v3927
        %v3929 = vmul.f32 %v3706, 1.442695
        %v3930 = vpow.pop %v3929
        %v3931 = vmul.f32 %v3707, 1.442695
        %v3932 = vpow.pop %v3931
        %v3933 = vmul.f32 %v3708, 1.442695
        %v3934 = vpow.pop %v3933
        %v3935 = vmul.f32 %v3709, 1.442695
        %v3936 = vpow.pop %v3935
        %v3937 = vmul.f32 %v3710, 1.442695
        %v3938 = vpow.pop %v3937
        %v3939 = vmul.f32 %v3711, 1.442695
        %v3940 = vpow.pop %v3939
        %v3941 = vmul.f32 %v3712, 1.442695
        %v3942 = vpow.pop %v3941
        %v3943 = vmul.f32 %v3713, 1.442695
        %v3944 = vpow.pop %v3943
        %v3945 = vmul.f32 %v3714, 1.442695
        %v3946 = vpow.pop %v3945
        %v3947 = vmul.f32 %v3715, 1.442695
        %v3948 = vpow.pop %v3947
        %v3949 = vmul.f32 %v3716, 1.442695
        %v3950 = vpow.pop %v3949
        %v3951 = vmul.f32 %v3717, 1.442695
        %v3952 = vpow.pop %v3951
        %v3953 = vmul.f32 %v3718, 1.442695
        %v3954 = vpow.pop %v3953
        %v3955 = vmul.f32 %v3719, 1.442695
        %v3956 = vpow.pop %v3955
        %v3957 = vmul.f32 %v3720, 1.442695
        %v3958 = vpow.pop %v3957
        %v3959 = vmul.f32 %v3721, 1.442695
        %v3960 = vpow.pop %v3959
        %v3961 = vmul.f32 %v3722, 1.442695
        %v3962 = vpow.pop %v3961
        %v3963 = vmul.f32 %v3723, 1.442695
        %v3964 = vpow.pop %v3963
        %v3965 = vmul.f32 %v3724, 1.442695
        %v3966 = vpow.pop %v3965
        %v3967 = vmul.f32 %v3725, 1.442695
        %v3968 = vpow.pop %v3967
        %v3969 = vmul.f32 %v3726, 1.442695
        %v3970 = vpow.pop %v3969
        %v3971 = vmul.f32 %v3727, 1.442695
        %v3972 = vpow.pop %v3971
        %v3973 = vmul.f32 %v3728, 1.442695
        %v3974 = vpow.pop %v3973
        %v3975 = vmul.f32 %v3729, 1.442695
        %v3976 = vpow.pop %v3975
        %v3977 = vmul.f32 %v3730, 1.442695
        %v3978 = vpow.pop %v3977
        %v3979 = vmul.f32 %v3731, 1.442695
        %v3980 = vpow.pop %v3979
        %v3981 = vmul.f32 %v3732, 1.442695
        %v3982 = vpow.pop %v3981
        %v3983 = vmul.f32 %v3733, 1.442695
        %v3984 = vpow.pop %v3983
        %v3985 = vmul.f32 %v3734, 1.442695
        %v3986 = vpow.pop %v3985
        %v3987 = vmul.f32 %v3735, 1.442695
        %v3988 = vpow.pop %v3987
        %v3989 = vmul.f32 %v3736, 1.442695
        %v3990 = vpow.pop %v3989
        %v3991 = vmul.f32 %v3737, 1.442695
        %v3992 = vpow.pop %v3991
        %v3993 = vmul.f32 %v3738, 1.442695
        %v3994 = vpow.pop %v3993
        %v3995 = vsel %vm3226, %v3740, 0.0
        %3996 = vadd.xlane.f32.xlu0 %v3995
        %v3997 = vpop.xlane.xlu0 %3996
        %v3998 = vsel %vm3226, %v3742, 0.0
        %3999 = vadd.xlane.f32.xlu0 %v3998
        %v4000 = vpop.xlane.xlu0 %3999
        %v4001 = vsel %vm3226, %v3744, 0.0
        %4002 = vadd.xlane.f32.xlu0 %v4001
        %v4003 = vpop.xlane.xlu0 %4002
        %v4004 = vsel %vm3226, %v3746, 0.0
        %4005 = vadd.xlane.f32.xlu0 %v4004
        %v4006 = vpop.xlane.xlu0 %4005
        %v4007 = vsel %vm3226, %v3748, 0.0
        %4008 = vadd.xlane.f32.xlu0 %v4007
        %v4009 = vpop.xlane.xlu0 %4008
        %v4010 = vsel %vm3226, %v3750, 0.0
        %4011 = vadd.xlane.f32.xlu0 %v4010
        %v4012 = vpop.xlane.xlu0 %4011
        %v4013 = vsel %vm3226, %v3752, 0.0
        %4014 = vadd.xlane.f32.xlu0 %v4013
        %v4015 = vpop.xlane.xlu0 %4014
        %v4016 = vsel %vm3226, %v3754, 0.0
        %4017 = vadd.xlane.f32.xlu0 %v4016
        %v4018 = vpop.xlane.xlu0 %4017
        %v4019 = vsel %vm3226, %v3756, 0.0
        %4020 = vadd.xlane.f32.xlu0 %v4019
        %v4021 = vpop.xlane.xlu0 %4020
        %v4022 = vsel %vm3226, %v3758, 0.0
        %4023 = vadd.xlane.f32.xlu0 %v4022
        %v4024 = vpop.xlane.xlu0 %4023
        %v4025 = vsel %vm3226, %v3760, 0.0
        %4026 = vadd.xlane.f32.xlu0 %v4025
        %v4027 = vpop.xlane.xlu0 %4026
        %v4028 = vsel %vm3226, %v3762, 0.0
        %4029 = vadd.xlane.f32.xlu0 %v4028
        %v4030 = vpop.xlane.xlu0 %4029
        %v4031 = vsel %vm3226, %v3764, 0.0
        %4032 = vadd.xlane.f32.xlu0 %v4031
        %v4033 = vpop.xlane.xlu0 %4032
        %v4034 = vsel %vm3226, %v3766, 0.0
        %4035 = vadd.xlane.f32.xlu0 %v4034
        %v4036 = vpop.xlane.xlu0 %4035
        %v4037 = vsel %vm3226, %v3768, 0.0
        %4038 = vadd.xlane.f32.xlu0 %v4037
        %v4039 = vpop.xlane.xlu0 %4038
        %v4040 = vsel %vm3226, %v3770, 0.0
        %4041 = vadd.xlane.f32.xlu0 %v4040
        %v4042 = vpop.xlane.xlu0 %4041
        %v4043 = vsel %vm3226, %v3772, 0.0
        %4044 = vadd.xlane.f32.xlu0 %v4043
        %v4045 = vpop.xlane.xlu0 %4044
        %v4046 = vsel %vm3226, %v3774, 0.0
        %4047 = vadd.xlane.f32.xlu0 %v4046
        %v4048 = vpop.xlane.xlu0 %4047
        %v4049 = vsel %vm3226, %v3776, 0.0
        %4050 = vadd.xlane.f32.xlu0 %v4049
        %v4051 = vpop.xlane.xlu0 %4050
        %v4052 = vsel %vm3226, %v3778, 0.0
        %4053 = vadd.xlane.f32.xlu0 %v4052
        %v4054 = vpop.xlane.xlu0 %4053
        %v4055 = vsel %vm3226, %v3780, 0.0
        %4056 = vadd.xlane.f32.xlu0 %v4055
        %v4057 = vpop.xlane.xlu0 %4056
        %v4058 = vsel %vm3226, %v3782, 0.0
        %4059 = vadd.xlane.f32.xlu0 %v4058
        %v4060 = vpop.xlane.xlu0 %4059
        %v4061 = vsel %vm3226, %v3784, 0.0
        %4062 = vadd.xlane.f32.xlu0 %v4061
        %v4063 = vpop.xlane.xlu0 %4062
        %v4064 = vsel %vm3226, %v3786, 0.0
        %4065 = vadd.xlane.f32.xlu0 %v4064
        %v4066 = vpop.xlane.xlu0 %4065
        %v4067 = vsel %vm3226, %v3788, 0.0
        %4068 = vadd.xlane.f32.xlu0 %v4067
        %v4069 = vpop.xlane.xlu0 %4068
        %v4070 = vsel %vm3226, %v3790, 0.0
        %4071 = vadd.xlane.f32.xlu0 %v4070
        %v4072 = vpop.xlane.xlu0 %4071
        %v4073 = vsel %vm3226, %v3792, 0.0
        %4074 = vadd.xlane.f32.xlu0 %v4073
        %v4075 = vpop.xlane.xlu0 %4074
        %v4076 = vsel %vm3226, %v3794, 0.0
        %4077 = vadd.xlane.f32.xlu0 %v4076
        %v4078 = vpop.xlane.xlu0 %4077
        %v4079 = vsel %vm3226, %v3796, 0.0
        %4080 = vadd.xlane.f32.xlu0 %v4079
        %v4081 = vpop.xlane.xlu0 %4080
        %v4082 = vsel %vm3226, %v3798, 0.0
        %4083 = vadd.xlane.f32.xlu0 %v4082
        %v4084 = vpop.xlane.xlu0 %4083
        %v4085 = vsel %vm3226, %v3800, 0.0
        %4086 = vadd.xlane.f32.xlu0 %v4085
        %v4087 = vpop.xlane.xlu0 %4086
        %v4088 = vsel %vm3226, %v3802, 0.0
        %4089 = vadd.xlane.f32.xlu0 %v4088
        %v4090 = vpop.xlane.xlu0 %4089
        %v4091 = vsel %vm3226, %v3804, 0.0
        %4092 = vadd.xlane.f32.xlu0 %v4091
        %v4093 = vpop.xlane.xlu0 %4092
        %v4094 = vsel %vm3226, %v3806, 0.0
        %4095 = vadd.xlane.f32.xlu0 %v4094
        %v4096 = vpop.xlane.xlu0 %4095
        %v4097 = vsel %vm3226, %v3808, 0.0
        %4098 = vadd.xlane.f32.xlu0 %v4097
        %v4099 = vpop.xlane.xlu0 %4098
        %v4100 = vsel %vm3226, %v3810, 0.0
        %4101 = vadd.xlane.f32.xlu0 %v4100
        %v4102 = vpop.xlane.xlu0 %4101
        %v4103 = vsel %vm3226, %v3812, 0.0
        %4104 = vadd.xlane.f32.xlu0 %v4103
        %v4105 = vpop.xlane.xlu0 %4104
        %v4106 = vsel %vm3226, %v3814, 0.0
        %4107 = vadd.xlane.f32.xlu0 %v4106
        %v4108 = vpop.xlane.xlu0 %4107
        %v4109 = vsel %vm3226, %v3816, 0.0
        %4110 = vadd.xlane.f32.xlu0 %v4109
        %v4111 = vpop.xlane.xlu0 %4110
        %v4112 = vsel %vm3226, %v3818, 0.0
        %4113 = vadd.xlane.f32.xlu0 %v4112
        %v4114 = vpop.xlane.xlu0 %4113
        %v4115 = vsel %vm3226, %v3820, 0.0
        %4116 = vadd.xlane.f32.xlu0 %v4115
        %v4117 = vpop.xlane.xlu0 %4116
        %v4118 = vsel %vm3226, %v3822, 0.0
        %4119 = vadd.xlane.f32.xlu0 %v4118
        %v4120 = vpop.xlane.xlu0 %4119
        %v4121 = vsel %vm3226, %v3824, 0.0
        %4122 = vadd.xlane.f32.xlu0 %v4121
        %v4123 = vpop.xlane.xlu0 %4122
        %v4124 = vsel %vm3226, %v3826, 0.0
        %4125 = vadd.xlane.f32.xlu0 %v4124
        %v4126 = vpop.xlane.xlu0 %4125
        %v4127 = vsel %vm3226, %v3828, 0.0
        %4128 = vadd.xlane.f32.xlu0 %v4127
        %v4129 = vpop.xlane.xlu0 %4128
        %v4130 = vsel %vm3226, %v3830, 0.0
        %4131 = vadd.xlane.f32.xlu0 %v4130
        %v4132 = vpop.xlane.xlu0 %4131
        %v4133 = vsel %vm3226, %v3832, 0.0
        %4134 = vadd.xlane.f32.xlu0 %v4133
        %v4135 = vpop.xlane.xlu0 %4134
        %v4136 = vsel %vm3226, %v3834, 0.0
        %4137 = vadd.xlane.f32.xlu0 %v4136
        %v4138 = vpop.xlane.xlu0 %4137
        %v4139 = vsel %vm3226, %v3836, 0.0
        %4140 = vadd.xlane.f32.xlu0 %v4139
        %v4141 = vpop.xlane.xlu0 %4140
        %v4142 = vsel %vm3226, %v3838, 0.0
        %4143 = vadd.xlane.f32.xlu0 %v4142
        %v4144 = vpop.xlane.xlu0 %4143
        %v4145 = vsel %vm3226, %v3840, 0.0
        %4146 = vadd.xlane.f32.xlu0 %v4145
        %v4147 = vpop.xlane.xlu0 %4146
        %v4148 = vsel %vm3226, %v3842, 0.0
        %4149 = vadd.xlane.f32.xlu0 %v4148
        %v4150 = vpop.xlane.xlu0 %4149
        %v4151 = vsel %vm3226, %v3844, 0.0
        %4152 = vadd.xlane.f32.xlu0 %v4151
        %v4153 = vpop.xlane.xlu0 %4152
        %v4154 = vsel %vm3226, %v3846, 0.0
        %4155 = vadd.xlane.f32.xlu0 %v4154
        %v4156 = vpop.xlane.xlu0 %4155
        %v4157 = vsel %vm3226, %v3848, 0.0
        %4158 = vadd.xlane.f32.xlu0 %v4157
        %v4159 = vpop.xlane.xlu0 %4158
        %v4160 = vsel %vm3226, %v3850, 0.0
        %4161 = vadd.xlane.f32.xlu0 %v4160
        %v4162 = vpop.xlane.xlu0 %4161
        %v4163 = vsel %vm3226, %v3852, 0.0
        %4164 = vadd.xlane.f32.xlu0 %v4163
        %v4165 = vpop.xlane.xlu0 %4164
        %v4166 = vsel %vm3226, %v3854, 0.0
        %4167 = vadd.xlane.f32.xlu0 %v4166
        %v4168 = vpop.xlane.xlu0 %4167
        %v4169 = vsel %vm3226, %v3856, 0.0
        %4170 = vadd.xlane.f32.xlu0 %v4169
        %v4171 = vpop.xlane.xlu0 %4170
        %v4172 = vsel %vm3226, %v3858, 0.0
        %4173 = vadd.xlane.f32.xlu0 %v4172
        %v4174 = vpop.xlane.xlu0 %4173
        %v4175 = vsel %vm3226, %v3860, 0.0
        %4176 = vadd.xlane.f32.xlu0 %v4175
        %v4177 = vpop.xlane.xlu0 %4176
        %v4178 = vsel %vm3226, %v3862, 0.0
        %4179 = vadd.xlane.f32.xlu0 %v4178
        %v4180 = vpop.xlane.xlu0 %4179
        %v4181 = vsel %vm3226, %v3864, 0.0
        %4182 = vadd.xlane.f32.xlu0 %v4181
        %v4183 = vpop.xlane.xlu0 %4182
        %v4184 = vsel %vm3226, %v3866, 0.0
        %4185 = vadd.xlane.f32.xlu0 %v4184
        %v4186 = vpop.xlane.xlu0 %4185
        %v4187 = vsel %vm3226, %v3868, 0.0
        %4188 = vadd.xlane.f32.xlu0 %v4187
        %v4189 = vpop.xlane.xlu0 %4188
        %v4190 = vsel %vm3226, %v3870, 0.0
        %4191 = vadd.xlane.f32.xlu0 %v4190
        %v4192 = vpop.xlane.xlu0 %4191
        %v4193 = vsel %vm3226, %v3872, 0.0
        %4194 = vadd.xlane.f32.xlu0 %v4193
        %v4195 = vpop.xlane.xlu0 %4194
        %v4196 = vsel %vm3226, %v3874, 0.0
        %4197 = vadd.xlane.f32.xlu0 %v4196
        %v4198 = vpop.xlane.xlu0 %4197
        %v4199 = vsel %vm3226, %v3876, 0.0
        %4200 = vadd.xlane.f32.xlu0 %v4199
        %v4201 = vpop.xlane.xlu0 %4200
        %v4202 = vsel %vm3226, %v3878, 0.0
        %4203 = vadd.xlane.f32.xlu0 %v4202
        %v4204 = vpop.xlane.xlu0 %4203
        %v4205 = vsel %vm3226, %v3880, 0.0
        %4206 = vadd.xlane.f32.xlu0 %v4205
        %v4207 = vpop.xlane.xlu0 %4206
        %v4208 = vsel %vm3226, %v3882, 0.0
        %4209 = vadd.xlane.f32.xlu0 %v4208
        %v4210 = vpop.xlane.xlu0 %4209
        %v4211 = vsel %vm3226, %v3884, 0.0
        %4212 = vadd.xlane.f32.xlu0 %v4211
        %v4213 = vpop.xlane.xlu0 %4212
        %v4214 = vsel %vm3226, %v3886, 0.0
        %4215 = vadd.xlane.f32.xlu0 %v4214
        %v4216 = vpop.xlane.xlu0 %4215
        %v4217 = vsel %vm3226, %v3888, 0.0
        %4218 = vadd.xlane.f32.xlu0 %v4217
        %v4219 = vpop.xlane.xlu0 %4218
        %v4220 = vsel %vm3226, %v3890, 0.0
        %4221 = vadd.xlane.f32.xlu0 %v4220
        %v4222 = vpop.xlane.xlu0 %4221
        %v4223 = vsel %vm3226, %v3892, 0.0
        %4224 = vadd.xlane.f32.xlu0 %v4223
        %v4225 = vpop.xlane.xlu0 %4224
        %v4226 = vsel %vm3226, %v3894, 0.0
        %4227 = vadd.xlane.f32.xlu0 %v4226
        %v4228 = vpop.xlane.xlu0 %4227
        %v4229 = vsel %vm3226, %v3896, 0.0
        %4230 = vadd.xlane.f32.xlu0 %v4229
        %v4231 = vpop.xlane.xlu0 %4230
        %v4232 = vsel %vm3226, %v3898, 0.0
        %4233 = vadd.xlane.f32.xlu0 %v4232
        %v4234 = vpop.xlane.xlu0 %4233
        %v4235 = vsel %vm3226, %v3900, 0.0
        %4236 = vadd.xlane.f32.xlu0 %v4235
        %v4237 = vpop.xlane.xlu0 %4236
        %v4238 = vsel %vm3226, %v3902, 0.0
        %4239 = vadd.xlane.f32.xlu0 %v4238
        %v4240 = vpop.xlane.xlu0 %4239
        %v4241 = vsel %vm3226, %v3904, 0.0
        %4242 = vadd.xlane.f32.xlu0 %v4241
        %v4243 = vpop.xlane.xlu0 %4242
        %v4244 = vsel %vm3226, %v3906, 0.0
        %4245 = vadd.xlane.f32.xlu0 %v4244
        %v4246 = vpop.xlane.xlu0 %4245
        %v4247 = vsel %vm3226, %v3908, 0.0
        %4248 = vadd.xlane.f32.xlu0 %v4247
        %v4249 = vpop.xlane.xlu0 %4248
        %v4250 = vsel %vm3226, %v3910, 0.0
        %4251 = vadd.xlane.f32.xlu0 %v4250
        %v4252 = vpop.xlane.xlu0 %4251
        %v4253 = vsel %vm3226, %v3912, 0.0
        %4254 = vadd.xlane.f32.xlu0 %v4253
        %v4255 = vpop.xlane.xlu0 %4254
        %v4256 = vsel %vm3226, %v3914, 0.0
        %4257 = vadd.xlane.f32.xlu0 %v4256
        %v4258 = vpop.xlane.xlu0 %4257
        %v4259 = vsel %vm3226, %v3916, 0.0
        %4260 = vadd.xlane.f32.xlu0 %v4259
        %v4261 = vpop.xlane.xlu0 %4260
        %v4262 = vsel %vm3226, %v3918, 0.0
        %4263 = vadd.xlane.f32.xlu0 %v4262
        %v4264 = vpop.xlane.xlu0 %4263
        %v4265 = vsel %vm3226, %v3920, 0.0
        %4266 = vadd.xlane.f32.xlu0 %v4265
        %v4267 = vpop.xlane.xlu0 %4266
        %v4268 = vsel %vm3226, %v3922, 0.0
        %4269 = vadd.xlane.f32.xlu0 %v4268
        %v4270 = vpop.xlane.xlu0 %4269
        %v4271 = vsel %vm3226, %v3924, 0.0
        %4272 = vadd.xlane.f32.xlu0 %v4271
        %v4273 = vpop.xlane.xlu0 %4272
        %v4274 = vsel %vm3226, %v3926, 0.0
        %4275 = vadd.xlane.f32.xlu0 %v4274
        %v4276 = vpop.xlane.xlu0 %4275
        %v4277 = vsel %vm3226, %v3928, 0.0
        %4278 = vadd.xlane.f32.xlu0 %v4277
        %v4279 = vpop.xlane.xlu0 %4278
        %v4280 = vsel %vm3226, %v3930, 0.0
        %4281 = vadd.xlane.f32.xlu0 %v4280
        %v4282 = vpop.xlane.xlu0 %4281
        %v4283 = vsel %vm3226, %v3932, 0.0
        %4284 = vadd.xlane.f32.xlu0 %v4283
        %v4285 = vpop.xlane.xlu0 %4284
        %v4286 = vsel %vm3226, %v3934, 0.0
        %4287 = vadd.xlane.f32.xlu0 %v4286
        %v4288 = vpop.xlane.xlu0 %4287
        %v4289 = vsel %vm3226, %v3936, 0.0
        %4290 = vadd.xlane.f32.xlu0 %v4289
        %v4291 = vpop.xlane.xlu0 %4290
        %v4292 = vsel %vm3226, %v3938, 0.0
        %4293 = vadd.xlane.f32.xlu0 %v4292
        %v4294 = vpop.xlane.xlu0 %4293
        %v4295 = vsel %vm3226, %v3940, 0.0
        %4296 = vadd.xlane.f32.xlu0 %v4295
        %v4297 = vpop.xlane.xlu0 %4296
        %v4298 = vsel %vm3226, %v3942, 0.0
        %4299 = vadd.xlane.f32.xlu0 %v4298
        %v4300 = vpop.xlane.xlu0 %4299
        %v4301 = vsel %vm3226, %v3944, 0.0
        %4302 = vadd.xlane.f32.xlu0 %v4301
        %v4303 = vpop.xlane.xlu0 %4302
        %v4304 = vsel %vm3226, %v3946, 0.0
        %4305 = vadd.xlane.f32.xlu0 %v4304
        %v4306 = vpop.xlane.xlu0 %4305
        %v4307 = vsel %vm3226, %v3948, 0.0
        %4308 = vadd.xlane.f32.xlu0 %v4307
        %v4309 = vpop.xlane.xlu0 %4308
        %v4310 = vsel %vm3226, %v3950, 0.0
        %4311 = vadd.xlane.f32.xlu0 %v4310
        %v4312 = vpop.xlane.xlu0 %4311
        %v4313 = vsel %vm3226, %v3952, 0.0
        %4314 = vadd.xlane.f32.xlu0 %v4313
        %v4315 = vpop.xlane.xlu0 %4314
        %v4316 = vsel %vm3226, %v3954, 0.0
        %4317 = vadd.xlane.f32.xlu0 %v4316
        %v4318 = vpop.xlane.xlu0 %4317
        %v4319 = vsel %vm3226, %v3956, 0.0
        %4320 = vadd.xlane.f32.xlu0 %v4319
        %v4321 = vpop.xlane.xlu0 %4320
        %v4322 = vsel %vm3226, %v3958, 0.0
        %4323 = vadd.xlane.f32.xlu0 %v4322
        %v4324 = vpop.xlane.xlu0 %4323
        %v4325 = vsel %vm3226, %v3960, 0.0
        %4326 = vadd.xlane.f32.xlu0 %v4325
        %v4327 = vpop.xlane.xlu0 %4326
        %v4328 = vsel %vm3226, %v3962, 0.0
        %4329 = vadd.xlane.f32.xlu0 %v4328
        %v4330 = vpop.xlane.xlu0 %4329
        %v4331 = vsel %vm3226, %v3964, 0.0
        %4332 = vadd.xlane.f32.xlu0 %v4331
        %v4333 = vpop.xlane.xlu0 %4332
        %v4334 = vsel %vm3226, %v3966, 0.0
        %4335 = vadd.xlane.f32.xlu0 %v4334
        %v4336 = vpop.xlane.xlu0 %4335
        %v4337 = vsel %vm3226, %v3968, 0.0
        %4338 = vadd.xlane.f32.xlu0 %v4337
        %v4339 = vpop.xlane.xlu0 %4338
        %v4340 = vsel %vm3226, %v3970, 0.0
        %4341 = vadd.xlane.f32.xlu0 %v4340
        %v4342 = vpop.xlane.xlu0 %4341
        %v4343 = vsel %vm3226, %v3972, 0.0
        %4344 = vadd.xlane.f32.xlu0 %v4343
        %v4345 = vpop.xlane.xlu0 %4344
        %v4346 = vsel %vm3226, %v3974, 0.0
        %4347 = vadd.xlane.f32.xlu0 %v4346
        %v4348 = vpop.xlane.xlu0 %4347
        %v4349 = vsel %vm3226, %v3976, 0.0
        %4350 = vadd.xlane.f32.xlu0 %v4349
        %v4351 = vpop.xlane.xlu0 %4350
        %v4352 = vsel %vm3226, %v3978, 0.0
        %4353 = vadd.xlane.f32.xlu0 %v4352
        %v4354 = vpop.xlane.xlu0 %4353
        %v4355 = vsel %vm3226, %v3980, 0.0
        %4356 = vadd.xlane.f32.xlu0 %v4355
        %v4357 = vpop.xlane.xlu0 %4356
        %v4358 = vsel %vm3226, %v3982, 0.0
        %4359 = vadd.xlane.f32.xlu0 %v4358
        %v4360 = vpop.xlane.xlu0 %4359
        %v4361 = vsel %vm3226, %v3984, 0.0
        %4362 = vadd.xlane.f32.xlu0 %v4361
        %v4363 = vpop.xlane.xlu0 %4362
        %v4364 = vsel %vm3226, %v3986, 0.0
        %4365 = vadd.xlane.f32.xlu0 %v4364
        %v4366 = vpop.xlane.xlu0 %4365
        %v4367 = vsel %vm3226, %v3988, 0.0
        %4368 = vadd.xlane.f32.xlu0 %v4367
        %v4369 = vpop.xlane.xlu0 %4368
        %v4370 = vsel %vm3226, %v3990, 0.0
        %4371 = vadd.xlane.f32.xlu0 %v4370
        %v4372 = vpop.xlane.xlu0 %4371
        %v4373 = vsel %vm3226, %v3992, 0.0
        %4374 = vadd.xlane.f32.xlu0 %v4373
        %v4375 = vpop.xlane.xlu0 %4374
        %v4376 = vsel %vm3226, %v3994, 0.0
        %4377 = vadd.xlane.f32.xlu0 %v4376
        %v4378 = vpop.xlane.xlu0 %4377
        %v4379 = vrcp.pop %v3997
        %v4380 = vrcp.pop %v4000
        %v4381 = vrcp.pop %v4003
        %v4382 = vrcp.pop %v4006
        %v4383 = vrcp.pop %v4009
        %v4384 = vrcp.pop %v4012
        %v4385 = vrcp.pop %v4015
        %v4386 = vrcp.pop %v4018
        %v4387 = vrcp.pop %v4021
        %v4388 = vrcp.pop %v4024
        %v4389 = vrcp.pop %v4027
        %v4390 = vrcp.pop %v4030
        %v4391 = vrcp.pop %v4033
        %v4392 = vrcp.pop %v4036
        %v4393 = vrcp.pop %v4039
        %v4394 = vrcp.pop %v4042
        %v4395 = vrcp.pop %v4045
        %v4396 = vrcp.pop %v4048
        %v4397 = vrcp.pop %v4051
        %v4398 = vrcp.pop %v4054
        %v4399 = vrcp.pop %v4057
        %v4400 = vrcp.pop %v4060
        %v4401 = vrcp.pop %v4063
        %v4402 = vrcp.pop %v4066
        %v4403 = vrcp.pop %v4069
        %v4404 = vrcp.pop %v4072
        %v4405 = vrcp.pop %v4075
        %v4406 = vrcp.pop %v4078
        %v4407 = vrcp.pop %v4081
        %v4408 = vrcp.pop %v4084
        %v4409 = vrcp.pop %v4087
        %v4410 = vrcp.pop %v4090
        %v4411 = vrcp.pop %v4093
        %v4412 = vrcp.pop %v4096
        %v4413 = vrcp.pop %v4099
        %v4414 = vrcp.pop %v4102
        %v4415 = vrcp.pop %v4105
        %v4416 = vrcp.pop %v4108
        %v4417 = vrcp.pop %v4111
        %v4418 = vrcp.pop %v4114
        %v4419 = vrcp.pop %v4117
        %v4420 = vrcp.pop %v4120
        %v4421 = vrcp.pop %v4123
        %v4422 = vrcp.pop %v4126
        %v4423 = vrcp.pop %v4129
        %v4424 = vrcp.pop %v4132
        %v4425 = vrcp.pop %v4135
        %v4426 = vrcp.pop %v4138
        %v4427 = vrcp.pop %v4141
        %v4428 = vrcp.pop %v4144
        %v4429 = vrcp.pop %v4147
        %v4430 = vrcp.pop %v4150
        %v4431 = vrcp.pop %v4153
        %v4432 = vrcp.pop %v4156
        %v4433 = vrcp.pop %v4159
        %v4434 = vrcp.pop %v4162
        %v4435 = vrcp.pop %v4165
        %v4436 = vrcp.pop %v4168
        %v4437 = vrcp.pop %v4171
        %v4438 = vrcp.pop %v4174
        %v4439 = vrcp.pop %v4177
        %v4440 = vrcp.pop %v4180
        %v4441 = vrcp.pop %v4183
        %v4442 = vrcp.pop %v4186
        %v4443 = vrcp.pop %v4189
        %v4444 = vrcp.pop %v4192
        %v4445 = vrcp.pop %v4195
        %v4446 = vrcp.pop %v4198
        %v4447 = vrcp.pop %v4201
        %v4448 = vrcp.pop %v4204
        %v4449 = vrcp.pop %v4207
        %v4450 = vrcp.pop %v4210
        %v4451 = vrcp.pop %v4213
        %v4452 = vrcp.pop %v4216
        %v4453 = vrcp.pop %v4219
        %v4454 = vrcp.pop %v4222
        %v4455 = vrcp.pop %v4225
        %v4456 = vrcp.pop %v4228
        %v4457 = vrcp.pop %v4231
        %v4458 = vrcp.pop %v4234
        %v4459 = vrcp.pop %v4237
        %v4460 = vrcp.pop %v4240
        %v4461 = vrcp.pop %v4243
        %v4462 = vrcp.pop %v4246
        %v4463 = vrcp.pop %v4249
        %v4464 = vrcp.pop %v4252
        %v4465 = vrcp.pop %v4255
        %v4466 = vrcp.pop %v4258
        %v4467 = vrcp.pop %v4261
        %v4468 = vrcp.pop %v4264
        %v4469 = vrcp.pop %v4267
        %v4470 = vrcp.pop %v4270
        %v4471 = vrcp.pop %v4273
        %v4472 = vrcp.pop %v4276
        %v4473 = vrcp.pop %v4279
        %v4474 = vrcp.pop %v4282
        %v4475 = vrcp.pop %v4285
        %v4476 = vrcp.pop %v4288
        %v4477 = vrcp.pop %v4291
        %v4478 = vrcp.pop %v4294
        %v4479 = vrcp.pop %v4297
        %v4480 = vrcp.pop %v4300
        %v4481 = vrcp.pop %v4303
        %v4482 = vrcp.pop %v4306
        %v4483 = vrcp.pop %v4309
        %v4484 = vrcp.pop %v4312
        %v4485 = vrcp.pop %v4315
        %v4486 = vrcp.pop %v4318
        %v4487 = vrcp.pop %v4321
        %v4488 = vrcp.pop %v4324
        %v4489 = vrcp.pop %v4327
        %v4490 = vrcp.pop %v4330
        %v4491 = vrcp.pop %v4333
        %v4492 = vrcp.pop %v4336
        %v4493 = vrcp.pop %v4339
        %v4494 = vrcp.pop %v4342
        %v4495 = vrcp.pop %v4345
        %v4496 = vrcp.pop %v4348
        %v4497 = vrcp.pop %v4351
        %v4498 = vrcp.pop %v4354
        %v4499 = vrcp.pop %v4357
        %v4500 = vrcp.pop %v4360
        %v4501 = vrcp.pop %v4363
        %v4502 = vrcp.pop %v4366
        %v4503 = vrcp.pop %v4369
        %v4504 = vrcp.pop %v4372
        %v4505 = vrcp.pop %v4375
        %v4506 = vrcp.pop %v4378
        %v4507 = vmul.f32 %v3740, %v4379
        %v4508 = vmul.f32 %v3742, %v4380
        %v4509 = vmul.f32 %v3744, %v4381
        %v4510 = vmul.f32 %v3746, %v4382
        %v4511 = vmul.f32 %v3748, %v4383
        %v4512 = vmul.f32 %v3750, %v4384
        %v4513 = vmul.f32 %v3752, %v4385
        %v4514 = vmul.f32 %v3754, %v4386
        %v4515 = vmul.f32 %v3756, %v4387
        %v4516 = vmul.f32 %v3758, %v4388
        %v4517 = vmul.f32 %v3760, %v4389
        %v4518 = vmul.f32 %v3762, %v4390
        %v4519 = vmul.f32 %v3764, %v4391
        %v4520 = vmul.f32 %v3766, %v4392
        %v4521 = vmul.f32 %v3768, %v4393
        %v4522 = vmul.f32 %v3770, %v4394
        %v4523 = vmul.f32 %v3772, %v4395
        %v4524 = vmul.f32 %v3774, %v4396
        %v4525 = vmul.f32 %v3776, %v4397
        %v4526 = vmul.f32 %v3778, %v4398
        %v4527 = vmul.f32 %v3780, %v4399
        %v4528 = vmul.f32 %v3782, %v4400
        %v4529 = vmul.f32 %v3784, %v4401
        %v4530 = vmul.f32 %v3786, %v4402
        %v4531 = vmul.f32 %v3788, %v4403
        %v4532 = vmul.f32 %v3790, %v4404
        %v4533 = vmul.f32 %v3792, %v4405
        %v4534 = vmul.f32 %v3794, %v4406
        %v4535 = vmul.f32 %v3796, %v4407
        %v4536 = vmul.f32 %v3798, %v4408
        %v4537 = vmul.f32 %v3800, %v4409
        %v4538 = vmul.f32 %v3802, %v4410
        %v4539 = vmul.f32 %v3804, %v4411
        %v4540 = vmul.f32 %v3806, %v4412
        %v4541 = vmul.f32 %v3808, %v4413
        %v4542 = vmul.f32 %v3810, %v4414
        %v4543 = vmul.f32 %v3812, %v4415
        %v4544 = vmul.f32 %v3814, %v4416
        %v4545 = vmul.f32 %v3816, %v4417
        %v4546 = vmul.f32 %v3818, %v4418
        %v4547 = vmul.f32 %v3820, %v4419
        %v4548 = vmul.f32 %v3822, %v4420
        %v4549 = vmul.f32 %v3824, %v4421
        %v4550 = vmul.f32 %v3826, %v4422
        %v4551 = vmul.f32 %v3828, %v4423
        %v4552 = vmul.f32 %v3830, %v4424
        %v4553 = vmul.f32 %v3832, %v4425
        %v4554 = vmul.f32 %v3834, %v4426
        %v4555 = vmul.f32 %v3836, %v4427
        %v4556 = vmul.f32 %v3838, %v4428
        %v4557 = vmul.f32 %v3840, %v4429
        %v4558 = vmul.f32 %v3842, %v4430
        %v4559 = vmul.f32 %v3844, %v4431
        %v4560 = vmul.f32 %v3846, %v4432
        %v4561 = vmul.f32 %v3848, %v4433
        %v4562 = vmul.f32 %v3850, %v4434
        %v4563 = vmul.f32 %v3852, %v4435
        %v4564 = vmul.f32 %v3854, %v4436
        %v4565 = vmul.f32 %v3856, %v4437
        %v4566 = vmul.f32 %v3858, %v4438
        %v4567 = vmul.f32 %v3860, %v4439
        %v4568 = vmul.f32 %v3862, %v4440
        %v4569 = vmul.f32 %v3864, %v4441
        %v4570 = vmul.f32 %v3866, %v4442
        %v4571 = vmul.f32 %v3868, %v4443
        %v4572 = vmul.f32 %v3870, %v4444
        %v4573 = vmul.f32 %v3872, %v4445
        %v4574 = vmul.f32 %v3874, %v4446
        %v4575 = vmul.f32 %v3876, %v4447
        %v4576 = vmul.f32 %v3878, %v4448
        %v4577 = vmul.f32 %v3880, %v4449
        %v4578 = vmul.f32 %v3882, %v4450
        %v4579 = vmul.f32 %v3884, %v4451
        %v4580 = vmul.f32 %v3886, %v4452
        %v4581 = vmul.f32 %v3888, %v4453
        %v4582 = vmul.f32 %v3890, %v4454
        %v4583 = vmul.f32 %v3892, %v4455
        %v4584 = vmul.f32 %v3894, %v4456
        %v4585 = vmul.f32 %v3896, %v4457
        %v4586 = vmul.f32 %v3898, %v4458
        %v4587 = vmul.f32 %v3900, %v4459
        %v4588 = vmul.f32 %v3902, %v4460
        %v4589 = vmul.f32 %v3904, %v4461
        %v4590 = vmul.f32 %v3906, %v4462
        %v4591 = vmul.f32 %v3908, %v4463
        %v4592 = vmul.f32 %v3910, %v4464
        %v4593 = vmul.f32 %v3912, %v4465
        %v4594 = vmul.f32 %v3914, %v4466
        %v4595 = vmul.f32 %v3916, %v4467
        %v4596 = vmul.f32 %v3918, %v4468
        %v4597 = vmul.f32 %v3920, %v4469
        %v4598 = vmul.f32 %v3922, %v4470
        %v4599 = vmul.f32 %v3924, %v4471
        %v4600 = vmul.f32 %v3926, %v4472
        %v4601 = vmul.f32 %v3928, %v4473
        %v4602 = vmul.f32 %v3930, %v4474
        %v4603 = vmul.f32 %v3932, %v4475
        %v4604 = vmul.f32 %v3934, %v4476
        %v4605 = vmul.f32 %v3936, %v4477
        %v4606 = vmul.f32 %v3938, %v4478
        %v4607 = vmul.f32 %v3940, %v4479
        %v4608 = vmul.f32 %v3942, %v4480
        %v4609 = vmul.f32 %v3944, %v4481
        %v4610 = vmul.f32 %v3946, %v4482
        %v4611 = vmul.f32 %v3948, %v4483
        %v4612 = vmul.f32 %v3950, %v4484
        %v4613 = vmul.f32 %v3952, %v4485
        %v4614 = vmul.f32 %v3954, %v4486
        %v4615 = vmul.f32 %v3956, %v4487
        %v4616 = vmul.f32 %v3958, %v4488
        %v4617 = vmul.f32 %v3960, %v4489
        %v4618 = vmul.f32 %v3962, %v4490
        %v4619 = vmul.f32 %v3964, %v4491
        %v4620 = vmul.f32 %v3966, %v4492
        %v4621 = vmul.f32 %v3968, %v4493
        %v4622 = vmul.f32 %v3970, %v4494
        %v4623 = vmul.f32 %v3972, %v4495
        %v4624 = vmul.f32 %v3974, %v4496
        %v4625 = vmul.f32 %v3976, %v4497
        %v4626 = vmul.f32 %v3978, %v4498
        %v4627 = vmul.f32 %v3980, %v4499
        %v4628 = vmul.f32 %v3982, %v4500
        %v4629 = vmul.f32 %v3984, %v4501
        %v4630 = vmul.f32 %v3986, %v4502
        %v4631 = vmul.f32 %v3988, %v4503
        %v4632 = vmul.f32 %v3990, %v4504
        %v4633 = vmul.f32 %v3992, %v4505
        %v4634 = vmul.f32 %v3994, %v4506
        %v4635 = vpack.c.bf16 %v4508, %v4507
        %v4636 = vpack.c.bf16 %v4510, %v4509
        %v4637 = vpack.c.bf16 %v4512, %v4511
        %v4638 = vpack.c.bf16 %v4514, %v4513
        %v4639 = vpack.c.bf16 %v4516, %v4515
        %v4640 = vpack.c.bf16 %v4518, %v4517
        %v4641 = vpack.c.bf16 %v4520, %v4519
        %v4642 = vpack.c.bf16 %v4522, %v4521
        %v4643 = vpack.c.bf16 %v4524, %v4523
        %v4644 = vpack.c.bf16 %v4526, %v4525
        %v4645 = vpack.c.bf16 %v4528, %v4527
        %v4646 = vpack.c.bf16 %v4530, %v4529
        %v4647 = vpack.c.bf16 %v4532, %v4531
        %v4648 = vpack.c.bf16 %v4534, %v4533
        %v4649 = vpack.c.bf16 %v4536, %v4535
        %v4650 = vpack.c.bf16 %v4538, %v4537
        %v4651 = vpack.c.bf16 %v4540, %v4539
        %v4652 = vpack.c.bf16 %v4542, %v4541
        %v4653 = vpack.c.bf16 %v4544, %v4543
        %v4654 = vpack.c.bf16 %v4546, %v4545
        %v4655 = vpack.c.bf16 %v4548, %v4547
        %v4656 = vpack.c.bf16 %v4550, %v4549
        %v4657 = vpack.c.bf16 %v4552, %v4551
        %v4658 = vpack.c.bf16 %v4554, %v4553
        %v4659 = vpack.c.bf16 %v4556, %v4555
        %v4660 = vpack.c.bf16 %v4558, %v4557
        %v4661 = vpack.c.bf16 %v4560, %v4559
        %v4662 = vpack.c.bf16 %v4562, %v4561
        %v4663 = vpack.c.bf16 %v4564, %v4563
        %v4664 = vpack.c.bf16 %v4566, %v4565
        %v4665 = vpack.c.bf16 %v4568, %v4567
        %v4666 = vpack.c.bf16 %v4570, %v4569
        %v4667 = vpack.c.bf16 %v4572, %v4571
        %v4668 = vpack.c.bf16 %v4574, %v4573
        %v4669 = vpack.c.bf16 %v4576, %v4575
        %v4670 = vpack.c.bf16 %v4578, %v4577
        %v4671 = vpack.c.bf16 %v4580, %v4579
        %v4672 = vpack.c.bf16 %v4582, %v4581
        %v4673 = vpack.c.bf16 %v4584, %v4583
        %v4674 = vpack.c.bf16 %v4586, %v4585
        %v4675 = vpack.c.bf16 %v4588, %v4587
        %v4676 = vpack.c.bf16 %v4590, %v4589
        %v4677 = vpack.c.bf16 %v4592, %v4591
        %v4678 = vpack.c.bf16 %v4594, %v4593
        %v4679 = vpack.c.bf16 %v4596, %v4595
        %v4680 = vpack.c.bf16 %v4598, %v4597
        %v4681 = vpack.c.bf16 %v4600, %v4599
        %v4682 = vpack.c.bf16 %v4602, %v4601
        %v4683 = vpack.c.bf16 %v4604, %v4603
        %v4684 = vpack.c.bf16 %v4606, %v4605
        %v4685 = vpack.c.bf16 %v4608, %v4607
        %v4686 = vpack.c.bf16 %v4610, %v4609
        %v4687 = vpack.c.bf16 %v4612, %v4611
        %v4688 = vpack.c.bf16 %v4614, %v4613
        %v4689 = vpack.c.bf16 %v4616, %v4615
        %v4690 = vpack.c.bf16 %v4618, %v4617
        %v4691 = vpack.c.bf16 %v4620, %v4619
        %v4692 = vpack.c.bf16 %v4622, %v4621
        %v4693 = vpack.c.bf16 %v4624, %v4623
        %v4694 = vpack.c.bf16 %v4626, %v4625
        %v4695 = vpack.c.bf16 %v4628, %v4627
        %v4696 = vpack.c.bf16 %v4630, %v4629
        %v4697 = vpack.c.bf16 %v4632, %v4631
        %v4698 = vpack.c.bf16 %v4634, %v4633
        %v4700 = vsel %vm3226, %v4635, 0
        %v4703 = vsel %vm3226, %v4636, 0
        %v4706 = vsel %vm3226, %v4637, 0
        %v4709 = vsel %vm3226, %v4638, 0
        %4711 = vmatprep.subr.bf16.mxu0 0
        %4712 = vmatpush1.bf16.msra.mxu0 0
        %4713 = vmatprep.subr.bf16.mxu0 0
        %4714 = vmatpush1.bf16.msra.mxu0 0
        %4715 = vmatprep.subr.bf16.mxu0 0
        %4716 = vmatpush1.bf16.msra.mxu0 0
        %4717 = vmatprep.subr.bf16.mxu0 0
        %4718 = vmatpush1.bf16.msra.mxu0 0
        %4719 = vmatprep.subr.bf16.mxu0 0
        %4720 = vmatpush1.bf16.msra.mxu0 %v1380
        %4721 = vmatprep.subr.bf16.mxu0 0
        %4722 = vmatpush1.bf16.msra.mxu0 %v1377
        %4723 = vmatprep.subr.bf16.mxu0 0
        %4724 = vmatpush1.bf16.msra.mxu0 %v1374
        %4725 = vmatprep.subr.bf16.mxu0 0
        %4726 = vmatpush1.bf16.msra.mxu0 %v1371
        %4727 = vmatprep.subr.bf16.mxu0 0
        %4728 = vmatpush2.bf16.msra.mxu0 0
        %4729 = vmatprep.subr.bf16.mxu0 0
        %4730 = vmatpush2.bf16.msra.mxu0 0
        %4731 = vmatprep.subr.bf16.mxu0 0
        %4732 = vmatpush2.bf16.msra.mxu0 0
        %4733 = vmatprep.subr.bf16.mxu0 0
        %4734 = vmatpush2.bf16.msra.mxu0 0
        %4735 = vmatprep.subr.bf16.mxu0 0
        %4736 = vmatpush2.bf16.msra.mxu0 0
        %4737 = vmatprep.subr.bf16.mxu0 0
        %4738 = vmatpush2.bf16.msra.mxu0 0
        %4739 = vmatprep.subr.bf16.mxu0 0
        %4740 = vmatpush2.bf16.msra.mxu0 0
        %4741 = vmatprep.subr.bf16.mxu0 0
        %4742 = vmatpush2.bf16.msra.mxu0 0
        %4743 = vmatprep.mubr.bf16.mxu0 0
        %4744 = vmatmul.mubr.bf16.gmra.mxu0 %v4700
        %v4745 = vpop.f32.mrf.mxu0
        %v4746 = vadd.f32 0.0, %v4745
        %v4747 = vpop.f32.mrf.mxu0
        %v4748 = vpop.f32.mrf.mxu0
        %v4749 = vadd.f32 0.0, %v4748
        %v4750 = vpop.f32.mrf.mxu0
        %4751 = vmatprep.mubr.bf16.mxu0 0
        %4752 = vmatmul.mubr.bf16.gmra.mxu0 %v4703
        %v4753 = vpop.f32.mrf.mxu0
        %v4754 = vadd.f32 0.0, %v4753
        %v4755 = vpop.f32.mrf.mxu0
        %v4756 = vpop.f32.mrf.mxu0
        %v4757 = vadd.f32 0.0, %v4756
        %v4758 = vpop.f32.mrf.mxu0
        %4759 = vmatprep.mubr.bf16.mxu0 0
        %4760 = vmatmul.mubr.bf16.gmra.mxu0 %v4706
        %v4761 = vpop.f32.mrf.mxu0
        %v4762 = vadd.f32 0.0, %v4761
        %v4763 = vpop.f32.mrf.mxu0
        %v4764 = vpop.f32.mrf.mxu0
        %v4765 = vadd.f32 0.0, %v4764
        %v4766 = vpop.f32.mrf.mxu0
        %4767 = vmatprep.mubr.bf16.mxu0 0
        %4768 = vmatmul.mubr.bf16.gmra.mxu0 %v4709
        %v4769 = vpop.f32.mrf.mxu0
        %v4770 = vadd.f32 0.0, %v4769
        %v4771 = vpop.f32.mrf.mxu0
        %v4772 = vpop.f32.mrf.mxu0
        %v4773 = vadd.f32 0.0, %v4772
        %v4774 = vpop.f32.mrf.mxu0
        %4775 = vdwg.mxu0
        %v4777 = vsel %vm3226, %v4639, 0
        %v4780 = vsel %vm3226, %v4640, 0
        %v4783 = vsel %vm3226, %v4641, 0
        %v4786 = vsel %vm3226, %v4642, 0
        %4788 = vmatprep.subr.bf16.mxu0 0
        %4789 = vmatpush1.bf16.msra.mxu0 0
        %4790 = vmatprep.subr.bf16.mxu0 0
        %4791 = vmatpush1.bf16.msra.mxu0 0
        %4792 = vmatprep.subr.bf16.mxu0 0
        %4793 = vmatpush1.bf16.msra.mxu0 0
        %4794 = vmatprep.subr.bf16.mxu0 0
        %4795 = vmatpush1.bf16.msra.mxu0 0
        %4796 = vmatprep.subr.bf16.mxu0 0
        %4797 = vmatpush1.bf16.msra.mxu0 %v1392
        %4798 = vmatprep.subr.bf16.mxu0 0
        %4799 = vmatpush1.bf16.msra.mxu0 %v1389
        %4800 = vmatprep.subr.bf16.mxu0 0
        %4801 = vmatpush1.bf16.msra.mxu0 %v1386
        %4802 = vmatprep.subr.bf16.mxu0 0
        %4803 = vmatpush1.bf16.msra.mxu0 %v1383
        %4804 = vmatprep.subr.bf16.mxu0 0
        %4805 = vmatpush2.bf16.msra.mxu0 0
        %4806 = vmatprep.subr.bf16.mxu0 0
        %4807 = vmatpush2.bf16.msra.mxu0 0
        %4808 = vmatprep.subr.bf16.mxu0 0
        %4809 = vmatpush2.bf16.msra.mxu0 0
        %4810 = vmatprep.subr.bf16.mxu0 0
        %4811 = vmatpush2.bf16.msra.mxu0 0
        %4812 = vmatprep.subr.bf16.mxu0 0
        %4813 = vmatpush2.bf16.msra.mxu0 0
        %4814 = vmatprep.subr.bf16.mxu0 0
        %4815 = vmatpush2.bf16.msra.mxu0 0
        %4816 = vmatprep.subr.bf16.mxu0 0
        %4817 = vmatpush2.bf16.msra.mxu0 0
        %4818 = vmatprep.subr.bf16.mxu0 0
        %4819 = vmatpush2.bf16.msra.mxu0 0
        %4820 = vmatprep.mubr.bf16.mxu0 0
        %4821 = vmatmul.mubr.bf16.gmra.mxu0 %v4777
        %v4822 = vpop.f32.mrf.mxu0
        %v4823 = vadd.f32 0.0, %v4822
        %v4824 = vpop.f32.mrf.mxu0
        %v4825 = vpop.f32.mrf.mxu0
        %v4826 = vadd.f32 0.0, %v4825
        %v4827 = vpop.f32.mrf.mxu0
        %4828 = vmatprep.mubr.bf16.mxu0 0
        %4829 = vmatmul.mubr.bf16.gmra.mxu0 %v4780
        %v4830 = vpop.f32.mrf.mxu0
        %v4831 = vadd.f32 0.0, %v4830
        %v4832 = vpop.f32.mrf.mxu0
        %v4833 = vpop.f32.mrf.mxu0
        %v4834 = vadd.f32 0.0, %v4833
        %v4835 = vpop.f32.mrf.mxu0
        %4836 = vmatprep.mubr.bf16.mxu0 0
        %4837 = vmatmul.mubr.bf16.gmra.mxu0 %v4783
        %v4838 = vpop.f32.mrf.mxu0
        %v4839 = vadd.f32 0.0, %v4838
        %v4840 = vpop.f32.mrf.mxu0
        %v4841 = vpop.f32.mrf.mxu0
        %v4842 = vadd.f32 0.0, %v4841
        %v4843 = vpop.f32.mrf.mxu0
        %4844 = vmatprep.mubr.bf16.mxu0 0
        %4845 = vmatmul.mubr.bf16.gmra.mxu0 %v4786
        %v4846 = vpop.f32.mrf.mxu0
        %v4847 = vadd.f32 0.0, %v4846
        %v4848 = vpop.f32.mrf.mxu0
        %v4849 = vpop.f32.mrf.mxu0
        %v4850 = vadd.f32 0.0, %v4849
        %v4851 = vpop.f32.mrf.mxu0
        %4852 = vdwg.mxu0
        %v4854 = vsel %vm3226, %v4643, 0
        %v4857 = vsel %vm3226, %v4644, 0
        %v4860 = vsel %vm3226, %v4645, 0
        %v4863 = vsel %vm3226, %v4646, 0
        %4865 = vmatprep.subr.bf16.mxu0 0
        %4866 = vmatpush1.bf16.msra.mxu0 0
        %4867 = vmatprep.subr.bf16.mxu0 0
        %4868 = vmatpush1.bf16.msra.mxu0 0
        %4869 = vmatprep.subr.bf16.mxu0 0
        %4870 = vmatpush1.bf16.msra.mxu0 0
        %4871 = vmatprep.subr.bf16.mxu0 0
        %4872 = vmatpush1.bf16.msra.mxu0 0
        %4873 = vmatprep.subr.bf16.mxu0 0
        %4874 = vmatpush1.bf16.msra.mxu0 %v1404
        %4875 = vmatprep.subr.bf16.mxu0 0
        %4876 = vmatpush1.bf16.msra.mxu0 %v1401
        %4877 = vmatprep.subr.bf16.mxu0 0
        %4878 = vmatpush1.bf16.msra.mxu0 %v1398
        %4879 = vmatprep.subr.bf16.mxu0 0
        %4880 = vmatpush1.bf16.msra.mxu0 %v1395
        %4881 = vmatprep.subr.bf16.mxu0 0
        %4882 = vmatpush2.bf16.msra.mxu0 0
        %4883 = vmatprep.subr.bf16.mxu0 0
        %4884 = vmatpush2.bf16.msra.mxu0 0
        %4885 = vmatprep.subr.bf16.mxu0 0
        %4886 = vmatpush2.bf16.msra.mxu0 0
        %4887 = vmatprep.subr.bf16.mxu0 0
        %4888 = vmatpush2.bf16.msra.mxu0 0
        %4889 = vmatprep.subr.bf16.mxu0 0
        %4890 = vmatpush2.bf16.msra.mxu0 0
        %4891 = vmatprep.subr.bf16.mxu0 0
        %4892 = vmatpush2.bf16.msra.mxu0 0
        %4893 = vmatprep.subr.bf16.mxu0 0
        %4894 = vmatpush2.bf16.msra.mxu0 0
        %4895 = vmatprep.subr.bf16.mxu0 0
        %4896 = vmatpush2.bf16.msra.mxu0 0
        %4897 = vmatprep.mubr.bf16.mxu0 0
        %4898 = vmatmul.mubr.bf16.gmra.mxu0 %v4854
        %v4899 = vpop.f32.mrf.mxu0
        %v4900 = vadd.f32 0.0, %v4899
        %v4901 = vpop.f32.mrf.mxu0
        %v4902 = vpop.f32.mrf.mxu0
        %v4903 = vadd.f32 0.0, %v4902
        %v4904 = vpop.f32.mrf.mxu0
        %4905 = vmatprep.mubr.bf16.mxu0 0
        %4906 = vmatmul.mubr.bf16.gmra.mxu0 %v4857
        %v4907 = vpop.f32.mrf.mxu0
        %v4908 = vadd.f32 0.0, %v4907
        %v4909 = vpop.f32.mrf.mxu0
        %v4910 = vpop.f32.mrf.mxu0
        %v4911 = vadd.f32 0.0, %v4910
        %v4912 = vpop.f32.mrf.mxu0
        %4913 = vmatprep.mubr.bf16.mxu0 0
        %4914 = vmatmul.mubr.bf16.gmra.mxu0 %v4860
        %v4915 = vpop.f32.mrf.mxu0
        %v4916 = vadd.f32 0.0, %v4915
        %v4917 = vpop.f32.mrf.mxu0
        %v4918 = vpop.f32.mrf.mxu0
        %v4919 = vadd.f32 0.0, %v4918
        %v4920 = vpop.f32.mrf.mxu0
        %4921 = vmatprep.mubr.bf16.mxu0 0
        %4922 = vmatmul.mubr.bf16.gmra.mxu0 %v4863
        %v4923 = vpop.f32.mrf.mxu0
        %v4924 = vadd.f32 0.0, %v4923
        %v4925 = vpop.f32.mrf.mxu0
        %v4926 = vpop.f32.mrf.mxu0
        %v4927 = vadd.f32 0.0, %v4926
        %v4928 = vpop.f32.mrf.mxu0
        %4929 = vdwg.mxu0
        %v4931 = vsel %vm3226, %v4647, 0
        %v4934 = vsel %vm3226, %v4648, 0
        %v4937 = vsel %vm3226, %v4649, 0
        %v4940 = vsel %vm3226, %v4650, 0
        %4942 = vmatprep.subr.bf16.mxu0 0
        %4943 = vmatpush1.bf16.msra.mxu0 0
        %4944 = vmatprep.subr.bf16.mxu0 0
        %4945 = vmatpush1.bf16.msra.mxu0 0
        %4946 = vmatprep.subr.bf16.mxu0 0
        %4947 = vmatpush1.bf16.msra.mxu0 0
        %4948 = vmatprep.subr.bf16.mxu0 0
        %4949 = vmatpush1.bf16.msra.mxu0 0
        %4950 = vmatprep.subr.bf16.mxu0 0
        %4951 = vmatpush1.bf16.msra.mxu0 %v1416
        %4952 = vmatprep.subr.bf16.mxu0 0
        %4953 = vmatpush1.bf16.msra.mxu0 %v1413
        %4954 = vmatprep.subr.bf16.mxu0 0
        %4955 = vmatpush1.bf16.msra.mxu0 %v1410
        %4956 = vmatprep.subr.bf16.mxu0 0
        %4957 = vmatpush1.bf16.msra.mxu0 %v1407
        %4958 = vmatprep.subr.bf16.mxu0 0
        %4959 = vmatpush2.bf16.msra.mxu0 0
        %4960 = vmatprep.subr.bf16.mxu0 0
        %4961 = vmatpush2.bf16.msra.mxu0 0
        %4962 = vmatprep.subr.bf16.mxu0 0
        %4963 = vmatpush2.bf16.msra.mxu0 0
        %4964 = vmatprep.subr.bf16.mxu0 0
        %4965 = vmatpush2.bf16.msra.mxu0 0
        %4966 = vmatprep.subr.bf16.mxu0 0
        %4967 = vmatpush2.bf16.msra.mxu0 0
        %4968 = vmatprep.subr.bf16.mxu0 0
        %4969 = vmatpush2.bf16.msra.mxu0 0
        %4970 = vmatprep.subr.bf16.mxu0 0
        %4971 = vmatpush2.bf16.msra.mxu0 0
        %4972 = vmatprep.subr.bf16.mxu0 0
        %4973 = vmatpush2.bf16.msra.mxu0 0
        %4974 = vmatprep.mubr.bf16.mxu0 0
        %4975 = vmatmul.mubr.bf16.gmra.mxu0 %v4931
        %v4976 = vpop.f32.mrf.mxu0
        %v4977 = vadd.f32 0.0, %v4976
        %v4978 = vpop.f32.mrf.mxu0
        %v4979 = vpop.f32.mrf.mxu0
        %v4980 = vadd.f32 0.0, %v4979
        %v4981 = vpop.f32.mrf.mxu0
        %4982 = vmatprep.mubr.bf16.mxu0 0
        %4983 = vmatmul.mubr.bf16.gmra.mxu0 %v4934
        %v4984 = vpop.f32.mrf.mxu0
        %v4985 = vadd.f32 0.0, %v4984
        %v4986 = vpop.f32.mrf.mxu0
        %v4987 = vpop.f32.mrf.mxu0
        %v4988 = vadd.f32 0.0, %v4987
        %v4989 = vpop.f32.mrf.mxu0
        %4990 = vmatprep.mubr.bf16.mxu0 0
        %4991 = vmatmul.mubr.bf16.gmra.mxu0 %v4937
        %v4992 = vpop.f32.mrf.mxu0
        %v4993 = vadd.f32 0.0, %v4992
        %v4994 = vpop.f32.mrf.mxu0
        %v4995 = vpop.f32.mrf.mxu0
        %v4996 = vadd.f32 0.0, %v4995
        %v4997 = vpop.f32.mrf.mxu0
        %4998 = vmatprep.mubr.bf16.mxu0 0
        %4999 = vmatmul.mubr.bf16.gmra.mxu0 %v4940
        %v5000 = vpop.f32.mrf.mxu0
        %v5001 = vadd.f32 0.0, %v5000
        %v5002 = vpop.f32.mrf.mxu0
        %v5003 = vpop.f32.mrf.mxu0
        %v5004 = vadd.f32 0.0, %v5003
        %v5005 = vpop.f32.mrf.mxu0
        %5006 = vdwg.mxu0
        %v5008 = vsel %vm3226, %v4651, 0
        %v5011 = vsel %vm3226, %v4652, 0
        %v5014 = vsel %vm3226, %v4653, 0
        %v5017 = vsel %vm3226, %v4654, 0
        %5019 = vmatprep.subr.bf16.mxu0 0
        %5020 = vmatpush1.bf16.msra.mxu0 0
        %5021 = vmatprep.subr.bf16.mxu0 0
        %5022 = vmatpush1.bf16.msra.mxu0 0
        %5023 = vmatprep.subr.bf16.mxu0 0
        %5024 = vmatpush1.bf16.msra.mxu0 0
        %5025 = vmatprep.subr.bf16.mxu0 0
        %5026 = vmatpush1.bf16.msra.mxu0 0
        %5027 = vmatprep.subr.bf16.mxu0 0
        %5028 = vmatpush1.bf16.msra.mxu0 %v1664
        %5029 = vmatprep.subr.bf16.mxu0 0
        %5030 = vmatpush1.bf16.msra.mxu0 %v1662
        %5031 = vmatprep.subr.bf16.mxu0 0
        %5032 = vmatpush1.bf16.msra.mxu0 %v1660
        %5033 = vmatprep.subr.bf16.mxu0 0
        %5034 = vmatpush1.bf16.msra.mxu0 %v1658
        %5035 = vmatprep.subr.bf16.mxu0 0
        %5036 = vmatpush2.bf16.msra.mxu0 0
        %5037 = vmatprep.subr.bf16.mxu0 0
        %5038 = vmatpush2.bf16.msra.mxu0 0
        %5039 = vmatprep.subr.bf16.mxu0 0
        %5040 = vmatpush2.bf16.msra.mxu0 0
        %5041 = vmatprep.subr.bf16.mxu0 0
        %5042 = vmatpush2.bf16.msra.mxu0 0
        %5043 = vmatprep.subr.bf16.mxu0 0
        %5044 = vmatpush2.bf16.msra.mxu0 0
        %5045 = vmatprep.subr.bf16.mxu0 0
        %5046 = vmatpush2.bf16.msra.mxu0 0
        %5047 = vmatprep.subr.bf16.mxu0 0
        %5048 = vmatpush2.bf16.msra.mxu0 0
        %5049 = vmatprep.subr.bf16.mxu0 0
        %5050 = vmatpush2.bf16.msra.mxu0 0
        %5051 = vmatprep.mubr.bf16.mxu0 0
        %5052 = vmatmul.mubr.bf16.gmra.mxu0 %v5008
        %v5053 = vpop.f32.mrf.mxu0
        %v5054 = vadd.f32 0.0, %v5053
        %v5055 = vpop.f32.mrf.mxu0
        %v5056 = vpop.f32.mrf.mxu0
        %v5057 = vadd.f32 0.0, %v5056
        %v5058 = vpop.f32.mrf.mxu0
        %5059 = vmatprep.mubr.bf16.mxu0 0
        %5060 = vmatmul.mubr.bf16.gmra.mxu0 %v5011
        %v5061 = vpop.f32.mrf.mxu0
        %v5062 = vadd.f32 0.0, %v5061
        %v5063 = vpop.f32.mrf.mxu0
        %v5064 = vpop.f32.mrf.mxu0
        %v5065 = vadd.f32 0.0, %v5064
        %v5066 = vpop.f32.mrf.mxu0
        %5067 = vmatprep.mubr.bf16.mxu0 0
        %5068 = vmatmul.mubr.bf16.gmra.mxu0 %v5014
        %v5069 = vpop.f32.mrf.mxu0
        %v5070 = vadd.f32 0.0, %v5069
        %v5071 = vpop.f32.mrf.mxu0
        %v5072 = vpop.f32.mrf.mxu0
        %v5073 = vadd.f32 0.0, %v5072
        %v5074 = vpop.f32.mrf.mxu0
        %5075 = vmatprep.mubr.bf16.mxu0 0
        %5076 = vmatmul.mubr.bf16.gmra.mxu0 %v5017
        %v5077 = vpop.f32.mrf.mxu0
        %v5078 = vadd.f32 0.0, %v5077
        %v5079 = vpop.f32.mrf.mxu0
        %v5080 = vpop.f32.mrf.mxu0
        %v5081 = vadd.f32 0.0, %v5080
        %v5082 = vpop.f32.mrf.mxu0
        %5083 = vdwg.mxu0
        %v5085 = vsel %vm3226, %v4655, 0
        %v5088 = vsel %vm3226, %v4656, 0
        %v5091 = vsel %vm3226, %v4657, 0
        %v5094 = vsel %vm3226, %v4658, 0
        %5096 = vmatprep.subr.bf16.mxu0 0
        %5097 = vmatpush1.bf16.msra.mxu0 0
        %5098 = vmatprep.subr.bf16.mxu0 0
        %5099 = vmatpush1.bf16.msra.mxu0 0
        %5100 = vmatprep.subr.bf16.mxu0 0
        %5101 = vmatpush1.bf16.msra.mxu0 0
        %5102 = vmatprep.subr.bf16.mxu0 0
        %5103 = vmatpush1.bf16.msra.mxu0 0
        %5104 = vmatprep.subr.bf16.mxu0 0
        %5105 = vmatpush1.bf16.msra.mxu0 %v1672
        %5106 = vmatprep.subr.bf16.mxu0 0
        %5107 = vmatpush1.bf16.msra.mxu0 %v1670
        %5108 = vmatprep.subr.bf16.mxu0 0
        %5109 = vmatpush1.bf16.msra.mxu0 %v1668
        %5110 = vmatprep.subr.bf16.mxu0 0
        %5111 = vmatpush1.bf16.msra.mxu0 %v1666
        %5112 = vmatprep.subr.bf16.mxu0 0
        %5113 = vmatpush2.bf16.msra.mxu0 0
        %5114 = vmatprep.subr.bf16.mxu0 0
        %5115 = vmatpush2.bf16.msra.mxu0 0
        %5116 = vmatprep.subr.bf16.mxu0 0
        %5117 = vmatpush2.bf16.msra.mxu0 0
        %5118 = vmatprep.subr.bf16.mxu0 0
        %5119 = vmatpush2.bf16.msra.mxu0 0
        %5120 = vmatprep.subr.bf16.mxu0 0
        %5121 = vmatpush2.bf16.msra.mxu0 0
        %5122 = vmatprep.subr.bf16.mxu0 0
        %5123 = vmatpush2.bf16.msra.mxu0 0
        %5124 = vmatprep.subr.bf16.mxu0 0
        %5125 = vmatpush2.bf16.msra.mxu0 0
        %5126 = vmatprep.subr.bf16.mxu0 0
        %5127 = vmatpush2.bf16.msra.mxu0 0
        %5128 = vmatprep.mubr.bf16.mxu0 0
        %5129 = vmatmul.mubr.bf16.gmra.mxu0 %v5085
        %v5130 = vpop.f32.mrf.mxu0
        %v5131 = vadd.f32 0.0, %v5130
        %v5132 = vpop.f32.mrf.mxu0
        %v5133 = vpop.f32.mrf.mxu0
        %v5134 = vadd.f32 0.0, %v5133
        %v5135 = vpop.f32.mrf.mxu0
        %5136 = vmatprep.mubr.bf16.mxu0 0
        %5137 = vmatmul.mubr.bf16.gmra.mxu0 %v5088
        %v5138 = vpop.f32.mrf.mxu0
        %v5139 = vadd.f32 0.0, %v5138
        %v5140 = vpop.f32.mrf.mxu0
        %v5141 = vpop.f32.mrf.mxu0
        %v5142 = vadd.f32 0.0, %v5141
        %v5143 = vpop.f32.mrf.mxu0
        %5144 = vmatprep.mubr.bf16.mxu0 0
        %5145 = vmatmul.mubr.bf16.gmra.mxu0 %v5091
        %v5146 = vpop.f32.mrf.mxu0
        %v5147 = vadd.f32 0.0, %v5146
        %v5148 = vpop.f32.mrf.mxu0
        %v5149 = vpop.f32.mrf.mxu0
        %v5150 = vadd.f32 0.0, %v5149
        %v5151 = vpop.f32.mrf.mxu0
        %5152 = vmatprep.mubr.bf16.mxu0 0
        %5153 = vmatmul.mubr.bf16.gmra.mxu0 %v5094
        %v5154 = vpop.f32.mrf.mxu0
        %v5155 = vadd.f32 0.0, %v5154
        %v5156 = vpop.f32.mrf.mxu0
        %v5157 = vpop.f32.mrf.mxu0
        %v5158 = vadd.f32 0.0, %v5157
        %v5159 = vpop.f32.mrf.mxu0
        %5160 = vdwg.mxu0
        %v5162 = vsel %vm3226, %v4659, 0
        %v5165 = vsel %vm3226, %v4660, 0
        %v5168 = vsel %vm3226, %v4661, 0
        %v5171 = vsel %vm3226, %v4662, 0
        %5173 = vmatprep.subr.bf16.mxu0 0
        %5174 = vmatpush1.bf16.msra.mxu0 0
        %5175 = vmatprep.subr.bf16.mxu0 0
        %5176 = vmatpush1.bf16.msra.mxu0 0
        %5177 = vmatprep.subr.bf16.mxu0 0
        %5178 = vmatpush1.bf16.msra.mxu0 0
        %5179 = vmatprep.subr.bf16.mxu0 0
        %5180 = vmatpush1.bf16.msra.mxu0 0
        %5181 = vmatprep.subr.bf16.mxu0 0
        %5182 = vmatpush1.bf16.msra.mxu0 %v1680
        %5183 = vmatprep.subr.bf16.mxu0 0
        %5184 = vmatpush1.bf16.msra.mxu0 %v1678
        %5185 = vmatprep.subr.bf16.mxu0 0
        %5186 = vmatpush1.bf16.msra.mxu0 %v1676
        %5187 = vmatprep.subr.bf16.mxu0 0
        %5188 = vmatpush1.bf16.msra.mxu0 %v1674
        %5189 = vmatprep.subr.bf16.mxu0 0
        %5190 = vmatpush2.bf16.msra.mxu0 0
        %5191 = vmatprep.subr.bf16.mxu0 0
        %5192 = vmatpush2.bf16.msra.mxu0 0
        %5193 = vmatprep.subr.bf16.mxu0 0
        %5194 = vmatpush2.bf16.msra.mxu0 0
        %5195 = vmatprep.subr.bf16.mxu0 0
        %5196 = vmatpush2.bf16.msra.mxu0 0
        %5197 = vmatprep.subr.bf16.mxu0 0
        %5198 = vmatpush2.bf16.msra.mxu0 0
        %5199 = vmatprep.subr.bf16.mxu0 0
        %5200 = vmatpush2.bf16.msra.mxu0 0
        %5201 = vmatprep.subr.bf16.mxu0 0
        %5202 = vmatpush2.bf16.msra.mxu0 0
        %5203 = vmatprep.subr.bf16.mxu0 0
        %5204 = vmatpush2.bf16.msra.mxu0 0
        %5205 = vmatprep.mubr.bf16.mxu0 0
        %5206 = vmatmul.mubr.bf16.gmra.mxu0 %v5162
        %v5207 = vpop.f32.mrf.mxu0
        %v5208 = vadd.f32 0.0, %v5207
        %v5209 = vpop.f32.mrf.mxu0
        %v5210 = vpop.f32.mrf.mxu0
        %v5211 = vadd.f32 0.0, %v5210
        %v5212 = vpop.f32.mrf.mxu0
        %5213 = vmatprep.mubr.bf16.mxu0 0
        %5214 = vmatmul.mubr.bf16.gmra.mxu0 %v5165
        %v5215 = vpop.f32.mrf.mxu0
        %v5216 = vadd.f32 0.0, %v5215
        %v5217 = vpop.f32.mrf.mxu0
        %v5218 = vpop.f32.mrf.mxu0
        %v5219 = vadd.f32 0.0, %v5218
        %v5220 = vpop.f32.mrf.mxu0
        %5221 = vmatprep.mubr.bf16.mxu0 0
        %5222 = vmatmul.mubr.bf16.gmra.mxu0 %v5168
        %v5223 = vpop.f32.mrf.mxu0
        %v5224 = vadd.f32 0.0, %v5223
        %v5225 = vpop.f32.mrf.mxu0
        %v5226 = vpop.f32.mrf.mxu0
        %v5227 = vadd.f32 0.0, %v5226
        %v5228 = vpop.f32.mrf.mxu0
        %5229 = vmatprep.mubr.bf16.mxu0 0
        %5230 = vmatmul.mubr.bf16.gmra.mxu0 %v5171
        %v5231 = vpop.f32.mrf.mxu0
        %v5232 = vadd.f32 0.0, %v5231
        %v5233 = vpop.f32.mrf.mxu0
        %v5234 = vpop.f32.mrf.mxu0
        %v5235 = vadd.f32 0.0, %v5234
        %v5236 = vpop.f32.mrf.mxu0
        %5237 = vdwg.mxu0
        %v5239 = vsel %vm3226, %v4663, 0
        %v5242 = vsel %vm3226, %v4664, 0
        %v5245 = vsel %vm3226, %v4665, 0
        %v5248 = vsel %vm3226, %v4666, 0
        %5250 = vmatprep.subr.bf16.mxu0 0
        %5251 = vmatpush1.bf16.msra.mxu0 0
        %5252 = vmatprep.subr.bf16.mxu0 0
        %5253 = vmatpush1.bf16.msra.mxu0 0
        %5254 = vmatprep.subr.bf16.mxu0 0
        %5255 = vmatpush1.bf16.msra.mxu0 0
        %5256 = vmatprep.subr.bf16.mxu0 0
        %5257 = vmatpush1.bf16.msra.mxu0 0
        %5258 = vmatprep.subr.bf16.mxu0 0
        %5259 = vmatpush1.bf16.msra.mxu0 %v1688
        %5260 = vmatprep.subr.bf16.mxu0 0
        %5261 = vmatpush1.bf16.msra.mxu0 %v1686
        %5262 = vmatprep.subr.bf16.mxu0 0
        %5263 = vmatpush1.bf16.msra.mxu0 %v1684
        %5264 = vmatprep.subr.bf16.mxu0 0
        %5265 = vmatpush1.bf16.msra.mxu0 %v1682
        %5266 = vmatprep.subr.bf16.mxu0 0
        %5267 = vmatpush2.bf16.msra.mxu0 0
        %5268 = vmatprep.subr.bf16.mxu0 0
        %5269 = vmatpush2.bf16.msra.mxu0 0
        %5270 = vmatprep.subr.bf16.mxu0 0
        %5271 = vmatpush2.bf16.msra.mxu0 0
        %5272 = vmatprep.subr.bf16.mxu0 0
        %5273 = vmatpush2.bf16.msra.mxu0 0
        %5274 = vmatprep.subr.bf16.mxu0 0
        %5275 = vmatpush2.bf16.msra.mxu0 0
        %5276 = vmatprep.subr.bf16.mxu0 0
        %5277 = vmatpush2.bf16.msra.mxu0 0
        %5278 = vmatprep.subr.bf16.mxu0 0
        %5279 = vmatpush2.bf16.msra.mxu0 0
        %5280 = vmatprep.subr.bf16.mxu0 0
        %5281 = vmatpush2.bf16.msra.mxu0 0
        %5282 = vmatprep.mubr.bf16.mxu0 0
        %5283 = vmatmul.mubr.bf16.gmra.mxu0 %v5239
        %v5284 = vpop.f32.mrf.mxu0
        %v5285 = vadd.f32 0.0, %v5284
        %v5286 = vpop.f32.mrf.mxu0
        %v5287 = vpop.f32.mrf.mxu0
        %v5288 = vadd.f32 0.0, %v5287
        %v5289 = vpop.f32.mrf.mxu0
        %5290 = vmatprep.mubr.bf16.mxu0 0
        %5291 = vmatmul.mubr.bf16.gmra.mxu0 %v5242
        %v5292 = vpop.f32.mrf.mxu0
        %v5293 = vadd.f32 0.0, %v5292
        %v5294 = vpop.f32.mrf.mxu0
        %v5295 = vpop.f32.mrf.mxu0
        %v5296 = vadd.f32 0.0, %v5295
        %v5297 = vpop.f32.mrf.mxu0
        %5298 = vmatprep.mubr.bf16.mxu0 0
        %5299 = vmatmul.mubr.bf16.gmra.mxu0 %v5245
        %v5300 = vpop.f32.mrf.mxu0
        %v5301 = vadd.f32 0.0, %v5300
        %v5302 = vpop.f32.mrf.mxu0
        %v5303 = vpop.f32.mrf.mxu0
        %v5304 = vadd.f32 0.0, %v5303
        %v5305 = vpop.f32.mrf.mxu0
        %5306 = vmatprep.mubr.bf16.mxu0 0
        %5307 = vmatmul.mubr.bf16.gmra.mxu0 %v5248
        %v5308 = vpop.f32.mrf.mxu0
        %v5309 = vadd.f32 0.0, %v5308
        %v5310 = vpop.f32.mrf.mxu0
        %v5311 = vpop.f32.mrf.mxu0
        %v5312 = vadd.f32 0.0, %v5311
        %v5313 = vpop.f32.mrf.mxu0
        %5314 = vdwg.mxu0
        %v5316 = vsel %vm3226, %v4667, 0
        %v5319 = vsel %vm3226, %v4668, 0
        %v5322 = vsel %vm3226, %v4669, 0
        %v5325 = vsel %vm3226, %v4670, 0
        %5327 = vmatprep.subr.bf16.mxu0 0
        %5328 = vmatpush1.bf16.msra.mxu0 0
        %5329 = vmatprep.subr.bf16.mxu0 0
        %5330 = vmatpush1.bf16.msra.mxu0 0
        %5331 = vmatprep.subr.bf16.mxu0 0
        %5332 = vmatpush1.bf16.msra.mxu0 0
        %5333 = vmatprep.subr.bf16.mxu0 0
        %5334 = vmatpush1.bf16.msra.mxu0 0
        %5335 = vmatprep.subr.bf16.mxu0 0
        %5336 = vmatpush1.bf16.msra.mxu0 %v1712
        %5337 = vmatprep.subr.bf16.mxu0 0
        %5338 = vmatpush1.bf16.msra.mxu0 %v1710
        %5339 = vmatprep.subr.bf16.mxu0 0
        %5340 = vmatpush1.bf16.msra.mxu0 %v1708
        %5341 = vmatprep.subr.bf16.mxu0 0
        %5342 = vmatpush1.bf16.msra.mxu0 %v1706
        %5343 = vmatprep.subr.bf16.mxu0 0
        %5344 = vmatpush2.bf16.msra.mxu0 0
        %5345 = vmatprep.subr.bf16.mxu0 0
        %5346 = vmatpush2.bf16.msra.mxu0 0
        %5347 = vmatprep.subr.bf16.mxu0 0
        %5348 = vmatpush2.bf16.msra.mxu0 0
        %5349 = vmatprep.subr.bf16.mxu0 0
        %5350 = vmatpush2.bf16.msra.mxu0 0
        %5351 = vmatprep.subr.bf16.mxu0 0
        %5352 = vmatpush2.bf16.msra.mxu0 0
        %5353 = vmatprep.subr.bf16.mxu0 0
        %5354 = vmatpush2.bf16.msra.mxu0 0
        %5355 = vmatprep.subr.bf16.mxu0 0
        %5356 = vmatpush2.bf16.msra.mxu0 0
        %5357 = vmatprep.subr.bf16.mxu0 0
        %5358 = vmatpush2.bf16.msra.mxu0 0
        %5359 = vmatprep.mubr.bf16.mxu0 0
        %5360 = vmatmul.mubr.bf16.gmra.mxu0 %v5316
        %v5361 = vpop.f32.mrf.mxu0
        %v5362 = vadd.f32 0.0, %v5361
        %v5363 = vpop.f32.mrf.mxu0
        %v5364 = vpop.f32.mrf.mxu0
        %v5365 = vadd.f32 0.0, %v5364
        %v5366 = vpop.f32.mrf.mxu0
        %5367 = vmatprep.mubr.bf16.mxu0 0
        %5368 = vmatmul.mubr.bf16.gmra.mxu0 %v5319
        %v5369 = vpop.f32.mrf.mxu0
        %v5370 = vadd.f32 0.0, %v5369
        %v5371 = vpop.f32.mrf.mxu0
        %v5372 = vpop.f32.mrf.mxu0
        %v5373 = vadd.f32 0.0, %v5372
        %v5374 = vpop.f32.mrf.mxu0
        %5375 = vmatprep.mubr.bf16.mxu0 0
        %5376 = vmatmul.mubr.bf16.gmra.mxu0 %v5322
        %v5377 = vpop.f32.mrf.mxu0
        %v5378 = vadd.f32 0.0, %v5377
        %v5379 = vpop.f32.mrf.mxu0
        %v5380 = vpop.f32.mrf.mxu0
        %v5381 = vadd.f32 0.0, %v5380
        %v5382 = vpop.f32.mrf.mxu0
        %5383 = vmatprep.mubr.bf16.mxu0 0
        %5384 = vmatmul.mubr.bf16.gmra.mxu0 %v5325
        %v5385 = vpop.f32.mrf.mxu0
        %v5386 = vadd.f32 0.0, %v5385
        %v5387 = vpop.f32.mrf.mxu0
        %v5388 = vpop.f32.mrf.mxu0
        %v5389 = vadd.f32 0.0, %v5388
        %v5390 = vpop.f32.mrf.mxu0
        %5391 = vdwg.mxu0
        %v5393 = vsel %vm3226, %v4671, 0
        %v5396 = vsel %vm3226, %v4672, 0
        %v5399 = vsel %vm3226, %v4673, 0
        %v5402 = vsel %vm3226, %v4674, 0
        %5404 = vmatprep.subr.bf16.mxu0 0
        %5405 = vmatpush1.bf16.msra.mxu0 0
        %5406 = vmatprep.subr.bf16.mxu0 0
        %5407 = vmatpush1.bf16.msra.mxu0 0
        %5408 = vmatprep.subr.bf16.mxu0 0
        %5409 = vmatpush1.bf16.msra.mxu0 0
        %5410 = vmatprep.subr.bf16.mxu0 0
        %5411 = vmatpush1.bf16.msra.mxu0 0
        %5412 = vmatprep.subr.bf16.mxu0 0
        %5413 = vmatpush1.bf16.msra.mxu0 %v1720
        %5414 = vmatprep.subr.bf16.mxu0 0
        %5415 = vmatpush1.bf16.msra.mxu0 %v1718
        %5416 = vmatprep.subr.bf16.mxu0 0
        %5417 = vmatpush1.bf16.msra.mxu0 %v1716
        %5418 = vmatprep.subr.bf16.mxu0 0
        %5419 = vmatpush1.bf16.msra.mxu0 %v1714
        %5420 = vmatprep.subr.bf16.mxu0 0
        %5421 = vmatpush2.bf16.msra.mxu0 0
        %5422 = vmatprep.subr.bf16.mxu0 0
        %5423 = vmatpush2.bf16.msra.mxu0 0
        %5424 = vmatprep.subr.bf16.mxu0 0
        %5425 = vmatpush2.bf16.msra.mxu0 0
        %5426 = vmatprep.subr.bf16.mxu0 0
        %5427 = vmatpush2.bf16.msra.mxu0 0
        %5428 = vmatprep.subr.bf16.mxu0 0
        %5429 = vmatpush2.bf16.msra.mxu0 0
        %5430 = vmatprep.subr.bf16.mxu0 0
        %5431 = vmatpush2.bf16.msra.mxu0 0
        %5432 = vmatprep.subr.bf16.mxu0 0
        %5433 = vmatpush2.bf16.msra.mxu0 0
        %5434 = vmatprep.subr.bf16.mxu0 0
        %5435 = vmatpush2.bf16.msra.mxu0 0
        %5436 = vmatprep.mubr.bf16.mxu0 0
        %5437 = vmatmul.mubr.bf16.gmra.mxu0 %v5393
        %v5438 = vpop.f32.mrf.mxu0
        %v5439 = vadd.f32 0.0, %v5438
        %v5440 = vpop.f32.mrf.mxu0
        %v5441 = vpop.f32.mrf.mxu0
        %v5442 = vadd.f32 0.0, %v5441
        %v5443 = vpop.f32.mrf.mxu0
        %5444 = vmatprep.mubr.bf16.mxu0 0
        %5445 = vmatmul.mubr.bf16.gmra.mxu0 %v5396
        %v5446 = vpop.f32.mrf.mxu0
        %v5447 = vadd.f32 0.0, %v5446
        %v5448 = vpop.f32.mrf.mxu0
        %v5449 = vpop.f32.mrf.mxu0
        %v5450 = vadd.f32 0.0, %v5449
        %v5451 = vpop.f32.mrf.mxu0
        %5452 = vmatprep.mubr.bf16.mxu0 0
        %5453 = vmatmul.mubr.bf16.gmra.mxu0 %v5399
        %v5454 = vpop.f32.mrf.mxu0
        %v5455 = vadd.f32 0.0, %v5454
        %v5456 = vpop.f32.mrf.mxu0
        %v5457 = vpop.f32.mrf.mxu0
        %v5458 = vadd.f32 0.0, %v5457
        %v5459 = vpop.f32.mrf.mxu0
        %5460 = vmatprep.mubr.bf16.mxu0 0
        %5461 = vmatmul.mubr.bf16.gmra.mxu0 %v5402
        %v5462 = vpop.f32.mrf.mxu0
        %v5463 = vadd.f32 0.0, %v5462
        %v5464 = vpop.f32.mrf.mxu0
        %v5465 = vpop.f32.mrf.mxu0
        %v5466 = vadd.f32 0.0, %v5465
        %v5467 = vpop.f32.mrf.mxu0
        %5468 = vdwg.mxu0
        %v5470 = vsel %vm3226, %v4675, 0
        %v5473 = vsel %vm3226, %v4676, 0
        %v5476 = vsel %vm3226, %v4677, 0
        %v5479 = vsel %vm3226, %v4678, 0
        %5481 = vmatprep.subr.bf16.mxu0 0
        %5482 = vmatpush1.bf16.msra.mxu0 0
        %5483 = vmatprep.subr.bf16.mxu0 0
        %5484 = vmatpush1.bf16.msra.mxu0 0
        %5485 = vmatprep.subr.bf16.mxu0 0
        %5486 = vmatpush1.bf16.msra.mxu0 0
        %5487 = vmatprep.subr.bf16.mxu0 0
        %5488 = vmatpush1.bf16.msra.mxu0 0
        %5489 = vmatprep.subr.bf16.mxu0 0
        %5490 = vmatpush1.bf16.msra.mxu0 %v1728
        %5491 = vmatprep.subr.bf16.mxu0 0
        %5492 = vmatpush1.bf16.msra.mxu0 %v1726
        %5493 = vmatprep.subr.bf16.mxu0 0
        %5494 = vmatpush1.bf16.msra.mxu0 %v1724
        %5495 = vmatprep.subr.bf16.mxu0 0
        %5496 = vmatpush1.bf16.msra.mxu0 %v1722
        %5497 = vmatprep.subr.bf16.mxu0 0
        %5498 = vmatpush2.bf16.msra.mxu0 0
        %5499 = vmatprep.subr.bf16.mxu0 0
        %5500 = vmatpush2.bf16.msra.mxu0 0
        %5501 = vmatprep.subr.bf16.mxu0 0
        %5502 = vmatpush2.bf16.msra.mxu0 0
        %5503 = vmatprep.subr.bf16.mxu0 0
        %5504 = vmatpush2.bf16.msra.mxu0 0
        %5505 = vmatprep.subr.bf16.mxu0 0
        %5506 = vmatpush2.bf16.msra.mxu0 0
        %5507 = vmatprep.subr.bf16.mxu0 0
        %5508 = vmatpush2.bf16.msra.mxu0 0
        %5509 = vmatprep.subr.bf16.mxu0 0
        %5510 = vmatpush2.bf16.msra.mxu0 0
        %5511 = vmatprep.subr.bf16.mxu0 0
        %5512 = vmatpush2.bf16.msra.mxu0 0
        %5513 = vmatprep.mubr.bf16.mxu0 0
        %5514 = vmatmul.mubr.bf16.gmra.mxu0 %v5470
        %v5515 = vpop.f32.mrf.mxu0
        %v5516 = vadd.f32 0.0, %v5515
        %v5517 = vpop.f32.mrf.mxu0
        %v5518 = vpop.f32.mrf.mxu0
        %v5519 = vadd.f32 0.0, %v5518
        %v5520 = vpop.f32.mrf.mxu0
        %5521 = vmatprep.mubr.bf16.mxu0 0
        %5522 = vmatmul.mubr.bf16.gmra.mxu0 %v5473
        %v5523 = vpop.f32.mrf.mxu0
        %v5524 = vadd.f32 0.0, %v5523
        %v5525 = vpop.f32.mrf.mxu0
        %v5526 = vpop.f32.mrf.mxu0
        %v5527 = vadd.f32 0.0, %v5526
        %v5528 = vpop.f32.mrf.mxu0
        %5529 = vmatprep.mubr.bf16.mxu0 0
        %5530 = vmatmul.mubr.bf16.gmra.mxu0 %v5476
        %v5531 = vpop.f32.mrf.mxu0
        %v5532 = vadd.f32 0.0, %v5531
        %v5533 = vpop.f32.mrf.mxu0
        %v5534 = vpop.f32.mrf.mxu0
        %v5535 = vadd.f32 0.0, %v5534
        %v5536 = vpop.f32.mrf.mxu0
        %5537 = vmatprep.mubr.bf16.mxu0 0
        %5538 = vmatmul.mubr.bf16.gmra.mxu0 %v5479
        %v5539 = vpop.f32.mrf.mxu0
        %v5540 = vadd.f32 0.0, %v5539
        %v5541 = vpop.f32.mrf.mxu0
        %v5542 = vpop.f32.mrf.mxu0
        %v5543 = vadd.f32 0.0, %v5542
        %v5544 = vpop.f32.mrf.mxu0
        %5545 = vdwg.mxu0
        %v5547 = vsel %vm3226, %v4679, 0
        %v5550 = vsel %vm3226, %v4680, 0
        %v5553 = vsel %vm3226, %v4681, 0
        %v5556 = vsel %vm3226, %v4682, 0
        %5558 = vmatprep.subr.bf16.mxu0 0
        %5559 = vmatpush1.bf16.msra.mxu0 0
        %5560 = vmatprep.subr.bf16.mxu0 0
        %5561 = vmatpush1.bf16.msra.mxu0 0
        %5562 = vmatprep.subr.bf16.mxu0 0
        %5563 = vmatpush1.bf16.msra.mxu0 0
        %5564 = vmatprep.subr.bf16.mxu0 0
        %5565 = vmatpush1.bf16.msra.mxu0 0
        %5566 = vmatprep.subr.bf16.mxu0 0
        %5567 = vmatpush1.bf16.msra.mxu0 %v1736
        %5568 = vmatprep.subr.bf16.mxu0 0
        %5569 = vmatpush1.bf16.msra.mxu0 %v1734
        %5570 = vmatprep.subr.bf16.mxu0 0
        %5571 = vmatpush1.bf16.msra.mxu0 %v1732
        %5572 = vmatprep.subr.bf16.mxu0 0
        %5573 = vmatpush1.bf16.msra.mxu0 %v1730
        %5574 = vmatprep.subr.bf16.mxu0 0
        %5575 = vmatpush2.bf16.msra.mxu0 0
        %5576 = vmatprep.subr.bf16.mxu0 0
        %5577 = vmatpush2.bf16.msra.mxu0 0
        %5578 = vmatprep.subr.bf16.mxu0 0
        %5579 = vmatpush2.bf16.msra.mxu0 0
        %5580 = vmatprep.subr.bf16.mxu0 0
        %5581 = vmatpush2.bf16.msra.mxu0 0
        %5582 = vmatprep.subr.bf16.mxu0 0
        %5583 = vmatpush2.bf16.msra.mxu0 0
        %5584 = vmatprep.subr.bf16.mxu0 0
        %5585 = vmatpush2.bf16.msra.mxu0 0
        %5586 = vmatprep.subr.bf16.mxu0 0
        %5587 = vmatpush2.bf16.msra.mxu0 0
        %5588 = vmatprep.subr.bf16.mxu0 0
        %5589 = vmatpush2.bf16.msra.mxu0 0
        %5590 = vmatprep.mubr.bf16.mxu0 0
        %5591 = vmatmul.mubr.bf16.gmra.mxu0 %v5547
        %v5592 = vpop.f32.mrf.mxu0
        %v5593 = vadd.f32 0.0, %v5592
        %v5594 = vpop.f32.mrf.mxu0
        %v5595 = vpop.f32.mrf.mxu0
        %v5596 = vadd.f32 0.0, %v5595
        %v5597 = vpop.f32.mrf.mxu0
        %5598 = vmatprep.mubr.bf16.mxu0 0
        %5599 = vmatmul.mubr.bf16.gmra.mxu0 %v5550
        %v5600 = vpop.f32.mrf.mxu0
        %v5601 = vadd.f32 0.0, %v5600
        %v5602 = vpop.f32.mrf.mxu0
        %v5603 = vpop.f32.mrf.mxu0
        %v5604 = vadd.f32 0.0, %v5603
        %v5605 = vpop.f32.mrf.mxu0
        %5606 = vmatprep.mubr.bf16.mxu0 0
        %5607 = vmatmul.mubr.bf16.gmra.mxu0 %v5553
        %v5608 = vpop.f32.mrf.mxu0
        %v5609 = vadd.f32 0.0, %v5608
        %v5610 = vpop.f32.mrf.mxu0
        %v5611 = vpop.f32.mrf.mxu0
        %v5612 = vadd.f32 0.0, %v5611
        %v5613 = vpop.f32.mrf.mxu0
        %5614 = vmatprep.mubr.bf16.mxu0 0
        %5615 = vmatmul.mubr.bf16.gmra.mxu0 %v5556
        %v5616 = vpop.f32.mrf.mxu0
        %v5617 = vadd.f32 0.0, %v5616
        %v5618 = vpop.f32.mrf.mxu0
        %v5619 = vpop.f32.mrf.mxu0
        %v5620 = vadd.f32 0.0, %v5619
        %v5621 = vpop.f32.mrf.mxu0
        %5622 = vdwg.mxu0
        %v5624 = vsel %vm3226, %v4683, 0
        %v5627 = vsel %vm3226, %v4684, 0
        %v5630 = vsel %vm3226, %v4685, 0
        %v5633 = vsel %vm3226, %v4686, 0
        %5635 = vmatprep.subr.bf16.mxu0 0
        %5636 = vmatpush1.bf16.msra.mxu0 0
        %5637 = vmatprep.subr.bf16.mxu0 0
        %5638 = vmatpush1.bf16.msra.mxu0 0
        %5639 = vmatprep.subr.bf16.mxu0 0
        %5640 = vmatpush1.bf16.msra.mxu0 0
        %5641 = vmatprep.subr.bf16.mxu0 0
        %5642 = vmatpush1.bf16.msra.mxu0 0
        %5643 = vmatprep.subr.bf16.mxu0 0
        %5644 = vmatpush1.bf16.msra.mxu0 %v1760
        %5645 = vmatprep.subr.bf16.mxu0 0
        %5646 = vmatpush1.bf16.msra.mxu0 %v1758
        %5647 = vmatprep.subr.bf16.mxu0 0
        %5648 = vmatpush1.bf16.msra.mxu0 %v1756
        %5649 = vmatprep.subr.bf16.mxu0 0
        %5650 = vmatpush1.bf16.msra.mxu0 %v1754
        %5651 = vmatprep.subr.bf16.mxu0 0
        %5652 = vmatpush2.bf16.msra.mxu0 0
        %5653 = vmatprep.subr.bf16.mxu0 0
        %5654 = vmatpush2.bf16.msra.mxu0 0
        %5655 = vmatprep.subr.bf16.mxu0 0
        %5656 = vmatpush2.bf16.msra.mxu0 0
        %5657 = vmatprep.subr.bf16.mxu0 0
        %5658 = vmatpush2.bf16.msra.mxu0 0
        %5659 = vmatprep.subr.bf16.mxu0 0
        %5660 = vmatpush2.bf16.msra.mxu0 0
        %5661 = vmatprep.subr.bf16.mxu0 0
        %5662 = vmatpush2.bf16.msra.mxu0 0
        %5663 = vmatprep.subr.bf16.mxu0 0
        %5664 = vmatpush2.bf16.msra.mxu0 0
        %5665 = vmatprep.subr.bf16.mxu0 0
        %5666 = vmatpush2.bf16.msra.mxu0 0
        %5667 = vmatprep.mubr.bf16.mxu0 0
        %5668 = vmatmul.mubr.bf16.gmra.mxu0 %v5624
        %v5669 = vpop.f32.mrf.mxu0
        %v5670 = vadd.f32 0.0, %v5669
        %v5671 = vpop.f32.mrf.mxu0
        %v5672 = vpop.f32.mrf.mxu0
        %v5673 = vadd.f32 0.0, %v5672
        %v5674 = vpop.f32.mrf.mxu0
        %5675 = vmatprep.mubr.bf16.mxu0 0
        %5676 = vmatmul.mubr.bf16.gmra.mxu0 %v5627
        %v5677 = vpop.f32.mrf.mxu0
        %v5678 = vadd.f32 0.0, %v5677
        %v5679 = vpop.f32.mrf.mxu0
        %v5680 = vpop.f32.mrf.mxu0
        %v5681 = vadd.f32 0.0, %v5680
        %v5682 = vpop.f32.mrf.mxu0
        %5683 = vmatprep.mubr.bf16.mxu0 0
        %5684 = vmatmul.mubr.bf16.gmra.mxu0 %v5630
        %v5685 = vpop.f32.mrf.mxu0
        %v5686 = vadd.f32 0.0, %v5685
        %v5687 = vpop.f32.mrf.mxu0
        %v5688 = vpop.f32.mrf.mxu0
        %v5689 = vadd.f32 0.0, %v5688
        %v5690 = vpop.f32.mrf.mxu0
        %5691 = vmatprep.mubr.bf16.mxu0 0
        %5692 = vmatmul.mubr.bf16.gmra.mxu0 %v5633
        %v5693 = vpop.f32.mrf.mxu0
        %v5694 = vadd.f32 0.0, %v5693
        %v5695 = vpop.f32.mrf.mxu0
        %v5696 = vpop.f32.mrf.mxu0
        %v5697 = vadd.f32 0.0, %v5696
        %v5698 = vpop.f32.mrf.mxu0
        %5699 = vdwg.mxu0
        %v5701 = vsel %vm3226, %v4687, 0
        %v5704 = vsel %vm3226, %v4688, 0
        %v5707 = vsel %vm3226, %v4689, 0
        %v5710 = vsel %vm3226, %v4690, 0
        %5712 = vmatprep.subr.bf16.mxu0 0
        %5713 = vmatpush1.bf16.msra.mxu0 0
        %5714 = vmatprep.subr.bf16.mxu0 0
        %5715 = vmatpush1.bf16.msra.mxu0 0
        %5716 = vmatprep.subr.bf16.mxu0 0
        %5717 = vmatpush1.bf16.msra.mxu0 0
        %5718 = vmatprep.subr.bf16.mxu0 0
        %5719 = vmatpush1.bf16.msra.mxu0 0
        %5720 = vmatprep.subr.bf16.mxu0 0
        %5721 = vmatpush1.bf16.msra.mxu0 %v1768
        %5722 = vmatprep.subr.bf16.mxu0 0
        %5723 = vmatpush1.bf16.msra.mxu0 %v1766
        %5724 = vmatprep.subr.bf16.mxu0 0
        %5725 = vmatpush1.bf16.msra.mxu0 %v1764
        %5726 = vmatprep.subr.bf16.mxu0 0
        %5727 = vmatpush1.bf16.msra.mxu0 %v1762
        %5728 = vmatprep.subr.bf16.mxu0 0
        %5729 = vmatpush2.bf16.msra.mxu0 0
        %5730 = vmatprep.subr.bf16.mxu0 0
        %5731 = vmatpush2.bf16.msra.mxu0 0
        %5732 = vmatprep.subr.bf16.mxu0 0
        %5733 = vmatpush2.bf16.msra.mxu0 0
        %5734 = vmatprep.subr.bf16.mxu0 0
        %5735 = vmatpush2.bf16.msra.mxu0 0
        %5736 = vmatprep.subr.bf16.mxu0 0
        %5737 = vmatpush2.bf16.msra.mxu0 0
        %5738 = vmatprep.subr.bf16.mxu0 0
        %5739 = vmatpush2.bf16.msra.mxu0 0
        %5740 = vmatprep.subr.bf16.mxu0 0
        %5741 = vmatpush2.bf16.msra.mxu0 0
        %5742 = vmatprep.subr.bf16.mxu0 0
        %5743 = vmatpush2.bf16.msra.mxu0 0
        %5744 = vmatprep.mubr.bf16.mxu0 0
        %5745 = vmatmul.mubr.bf16.gmra.mxu0 %v5701
        %v5746 = vpop.f32.mrf.mxu0
        %v5747 = vadd.f32 0.0, %v5746
        %v5748 = vpop.f32.mrf.mxu0
        %v5749 = vpop.f32.mrf.mxu0
        %v5750 = vadd.f32 0.0, %v5749
        %v5751 = vpop.f32.mrf.mxu0
        %5752 = vmatprep.mubr.bf16.mxu0 0
        %5753 = vmatmul.mubr.bf16.gmra.mxu0 %v5704
        %v5754 = vpop.f32.mrf.mxu0
        %v5755 = vadd.f32 0.0, %v5754
        %v5756 = vpop.f32.mrf.mxu0
        %v5757 = vpop.f32.mrf.mxu0
        %v5758 = vadd.f32 0.0, %v5757
        %v5759 = vpop.f32.mrf.mxu0
        %5760 = vmatprep.mubr.bf16.mxu0 0
        %5761 = vmatmul.mubr.bf16.gmra.mxu0 %v5707
        %v5762 = vpop.f32.mrf.mxu0
        %v5763 = vadd.f32 0.0, %v5762
        %v5764 = vpop.f32.mrf.mxu0
        %v5765 = vpop.f32.mrf.mxu0
        %v5766 = vadd.f32 0.0, %v5765
        %v5767 = vpop.f32.mrf.mxu0
        %5768 = vmatprep.mubr.bf16.mxu0 0
        %5769 = vmatmul.mubr.bf16.gmra.mxu0 %v5710
        %v5770 = vpop.f32.mrf.mxu0
        %v5771 = vadd.f32 0.0, %v5770
        %v5772 = vpop.f32.mrf.mxu0
        %v5773 = vpop.f32.mrf.mxu0
        %v5774 = vadd.f32 0.0, %v5773
        %v5775 = vpop.f32.mrf.mxu0
        %5776 = vdwg.mxu0
        %v5778 = vsel %vm3226, %v4691, 0
        %v5781 = vsel %vm3226, %v4692, 0
        %v5784 = vsel %vm3226, %v4693, 0
        %v5787 = vsel %vm3226, %v4694, 0
        %5789 = vmatprep.subr.bf16.mxu0 0
        %5790 = vmatpush1.bf16.msra.mxu0 0
        %5791 = vmatprep.subr.bf16.mxu0 0
        %5792 = vmatpush1.bf16.msra.mxu0 0
        %5793 = vmatprep.subr.bf16.mxu0 0
        %5794 = vmatpush1.bf16.msra.mxu0 0
        %5795 = vmatprep.subr.bf16.mxu0 0
        %5796 = vmatpush1.bf16.msra.mxu0 0
        %5797 = vmatprep.subr.bf16.mxu0 0
        %5798 = vmatpush1.bf16.msra.mxu0 %v1776
        %5799 = vmatprep.subr.bf16.mxu0 0
        %5800 = vmatpush1.bf16.msra.mxu0 %v1774
        %5801 = vmatprep.subr.bf16.mxu0 0
        %5802 = vmatpush1.bf16.msra.mxu0 %v1772
        %5803 = vmatprep.subr.bf16.mxu0 0
        %5804 = vmatpush1.bf16.msra.mxu0 %v1770
        %5805 = vmatprep.subr.bf16.mxu0 0
        %5806 = vmatpush2.bf16.msra.mxu0 0
        %5807 = vmatprep.subr.bf16.mxu0 0
        %5808 = vmatpush2.bf16.msra.mxu0 0
        %5809 = vmatprep.subr.bf16.mxu0 0
        %5810 = vmatpush2.bf16.msra.mxu0 0
        %5811 = vmatprep.subr.bf16.mxu0 0
        %5812 = vmatpush2.bf16.msra.mxu0 0
        %5813 = vmatprep.subr.bf16.mxu0 0
        %5814 = vmatpush2.bf16.msra.mxu0 0
        %5815 = vmatprep.subr.bf16.mxu0 0
        %5816 = vmatpush2.bf16.msra.mxu0 0
        %5817 = vmatprep.subr.bf16.mxu0 0
        %5818 = vmatpush2.bf16.msra.mxu0 0
        %5819 = vmatprep.subr.bf16.mxu0 0
        %5820 = vmatpush2.bf16.msra.mxu0 0
        %5821 = vmatprep.mubr.bf16.mxu0 0
        %5822 = vmatmul.mubr.bf16.gmra.mxu0 %v5778
        %v5823 = vpop.f32.mrf.mxu0
        %v5824 = vadd.f32 0.0, %v5823
        %v5825 = vpop.f32.mrf.mxu0
        %v5826 = vpop.f32.mrf.mxu0
        %v5827 = vadd.f32 0.0, %v5826
        %v5828 = vpop.f32.mrf.mxu0
        %5829 = vmatprep.mubr.bf16.mxu0 0
        %5830 = vmatmul.mubr.bf16.gmra.mxu0 %v5781
        %v5831 = vpop.f32.mrf.mxu0
        %v5832 = vadd.f32 0.0, %v5831
        %v5833 = vpop.f32.mrf.mxu0
        %v5834 = vpop.f32.mrf.mxu0
        %v5835 = vadd.f32 0.0, %v5834
        %v5836 = vpop.f32.mrf.mxu0
        %5837 = vmatprep.mubr.bf16.mxu0 0
        %5838 = vmatmul.mubr.bf16.gmra.mxu0 %v5784
        %v5839 = vpop.f32.mrf.mxu0
        %v5840 = vadd.f32 0.0, %v5839
        %v5841 = vpop.f32.mrf.mxu0
        %v5842 = vpop.f32.mrf.mxu0
        %v5843 = vadd.f32 0.0, %v5842
        %v5844 = vpop.f32.mrf.mxu0
        %5845 = vmatprep.mubr.bf16.mxu0 0
        %5846 = vmatmul.mubr.bf16.gmra.mxu0 %v5787
        %v5847 = vpop.f32.mrf.mxu0
        %v5848 = vadd.f32 0.0, %v5847
        %v5849 = vpop.f32.mrf.mxu0
        %v5850 = vpop.f32.mrf.mxu0
        %v5851 = vadd.f32 0.0, %v5850
        %v5852 = vpop.f32.mrf.mxu0
        %5853 = vdwg.mxu0
        %v5855 = vsel %vm3226, %v4695, 0
        %v5858 = vsel %vm3226, %v4696, 0
        %v5861 = vsel %vm3226, %v4697, 0
        %v5864 = vsel %vm3226, %v4698, 0
        %5866 = vmatprep.subr.bf16.mxu0 0
        %5867 = vmatpush1.bf16.msra.mxu0 0
        %5868 = vmatprep.subr.bf16.mxu0 0
        %5869 = vmatpush1.bf16.msra.mxu0 0
        %5870 = vmatprep.subr.bf16.mxu0 0
        %5871 = vmatpush1.bf16.msra.mxu0 0
        %5872 = vmatprep.subr.bf16.mxu0 0
        %5873 = vmatpush1.bf16.msra.mxu0 0
        %5874 = vmatprep.subr.bf16.mxu0 0
        %5875 = vmatpush1.bf16.msra.mxu0 %v1784
        %5876 = vmatprep.subr.bf16.mxu0 0
        %5877 = vmatpush1.bf16.msra.mxu0 %v1782
        %5878 = vmatprep.subr.bf16.mxu0 0
        %5879 = vmatpush1.bf16.msra.mxu0 %v1780
        %5880 = vmatprep.subr.bf16.mxu0 0
        %5881 = vmatpush1.bf16.msra.mxu0 %v1778
        %5882 = vmatprep.subr.bf16.mxu0 0
        %5883 = vmatpush2.bf16.msra.mxu0 0
        %5884 = vmatprep.subr.bf16.mxu0 0
        %5885 = vmatpush2.bf16.msra.mxu0 0
        %5886 = vmatprep.subr.bf16.mxu0 0
        %5887 = vmatpush2.bf16.msra.mxu0 0
        %5888 = vmatprep.subr.bf16.mxu0 0
        %5889 = vmatpush2.bf16.msra.mxu0 0
        %5890 = vmatprep.subr.bf16.mxu0 0
        %5891 = vmatpush2.bf16.msra.mxu0 0
        %5892 = vmatprep.subr.bf16.mxu0 0
        %5893 = vmatpush2.bf16.msra.mxu0 0
        %5894 = vmatprep.subr.bf16.mxu0 0
        %5895 = vmatpush2.bf16.msra.mxu0 0
        %5896 = vmatprep.subr.bf16.mxu0 0
        %5897 = vmatpush2.bf16.msra.mxu0 0
        %5898 = vmatprep.mubr.bf16.mxu0 0
        %5899 = vmatmul.mubr.bf16.gmra.mxu0 %v5855
        %v5900 = vpop.f32.mrf.mxu0
        %v5901 = vadd.f32 0.0, %v5900
        %v5902 = vpop.f32.mrf.mxu0
        %v5903 = vpop.f32.mrf.mxu0
        %v5904 = vadd.f32 0.0, %v5903
        %v5905 = vpop.f32.mrf.mxu0
        %5906 = vmatprep.mubr.bf16.mxu0 0
        %5907 = vmatmul.mubr.bf16.gmra.mxu0 %v5858
        %v5908 = vpop.f32.mrf.mxu0
        %v5909 = vadd.f32 0.0, %v5908
        %v5910 = vpop.f32.mrf.mxu0
        %v5911 = vpop.f32.mrf.mxu0
        %v5912 = vadd.f32 0.0, %v5911
        %v5913 = vpop.f32.mrf.mxu0
        %5914 = vmatprep.mubr.bf16.mxu0 0
        %5915 = vmatmul.mubr.bf16.gmra.mxu0 %v5861
        %v5916 = vpop.f32.mrf.mxu0
        %v5917 = vadd.f32 0.0, %v5916
        %v5918 = vpop.f32.mrf.mxu0
        %v5919 = vpop.f32.mrf.mxu0
        %v5920 = vadd.f32 0.0, %v5919
        %v5921 = vpop.f32.mrf.mxu0
        %5922 = vmatprep.mubr.bf16.mxu0 0
        %5923 = vmatmul.mubr.bf16.gmra.mxu0 %v5864
        %v5924 = vpop.f32.mrf.mxu0
        %v5925 = vadd.f32 0.0, %v5924
        %v5926 = vpop.f32.mrf.mxu0
        %v5927 = vpop.f32.mrf.mxu0
        %v5928 = vadd.f32 0.0, %v5927
        %v5929 = vpop.f32.mrf.mxu0
        %5930 = vdwg.mxu0
        %v5931 = vpack.c.bf16 %v4749, %v4746
        %v5932 = vpack.c.bf16 %v4757, %v4754
        %v5933 = vpack.c.bf16 %v4765, %v4762
        %v5934 = vpack.c.bf16 %v4773, %v4770
        %v5935 = vpack.c.bf16 %v4826, %v4823
        %v5936 = vpack.c.bf16 %v4834, %v4831
        %v5937 = vpack.c.bf16 %v4842, %v4839
        %v5938 = vpack.c.bf16 %v4850, %v4847
        %v5939 = vpack.c.bf16 %v4903, %v4900
        %v5940 = vpack.c.bf16 %v4911, %v4908
        %v5941 = vpack.c.bf16 %v4919, %v4916
        %v5942 = vpack.c.bf16 %v4927, %v4924
        %v5943 = vpack.c.bf16 %v4980, %v4977
        %v5944 = vpack.c.bf16 %v4988, %v4985
        %v5945 = vpack.c.bf16 %v4996, %v4993
        %v5946 = vpack.c.bf16 %v5004, %v5001
        %v5947 = vpack.c.bf16 %v5057, %v5054
        %v5948 = vpack.c.bf16 %v5065, %v5062
        %v5949 = vpack.c.bf16 %v5073, %v5070
        %v5950 = vpack.c.bf16 %v5081, %v5078
        %v5951 = vpack.c.bf16 %v5134, %v5131
        %v5952 = vpack.c.bf16 %v5142, %v5139
        %v5953 = vpack.c.bf16 %v5150, %v5147
        %v5954 = vpack.c.bf16 %v5158, %v5155
        %v5955 = vpack.c.bf16 %v5211, %v5208
        %v5956 = vpack.c.bf16 %v5219, %v5216
        %v5957 = vpack.c.bf16 %v5227, %v5224
        %v5958 = vpack.c.bf16 %v5235, %v5232
        %v5959 = vpack.c.bf16 %v5288, %v5285
        %v5960 = vpack.c.bf16 %v5296, %v5293
        %v5961 = vpack.c.bf16 %v5304, %v5301
        %v5962 = vpack.c.bf16 %v5312, %v5309
        %v5963 = vpack.c.bf16 %v5365, %v5362
        %v5964 = vpack.c.bf16 %v5373, %v5370
        %v5965 = vpack.c.bf16 %v5381, %v5378
        %v5966 = vpack.c.bf16 %v5389, %v5386
        %v5967 = vpack.c.bf16 %v5442, %v5439
        %v5968 = vpack.c.bf16 %v5450, %v5447
        %v5969 = vpack.c.bf16 %v5458, %v5455
        %v5970 = vpack.c.bf16 %v5466, %v5463
        %v5971 = vpack.c.bf16 %v5519, %v5516
        %v5972 = vpack.c.bf16 %v5527, %v5524
        %v5973 = vpack.c.bf16 %v5535, %v5532
        %v5974 = vpack.c.bf16 %v5543, %v5540
        %v5975 = vpack.c.bf16 %v5596, %v5593
        %v5976 = vpack.c.bf16 %v5604, %v5601
        %v5977 = vpack.c.bf16 %v5612, %v5609
        %v5978 = vpack.c.bf16 %v5620, %v5617
        %v5979 = vpack.c.bf16 %v5673, %v5670
        %v5980 = vpack.c.bf16 %v5681, %v5678
        %v5981 = vpack.c.bf16 %v5689, %v5686
        %v5982 = vpack.c.bf16 %v5697, %v5694
        %v5983 = vpack.c.bf16 %v5750, %v5747
        %v5984 = vpack.c.bf16 %v5758, %v5755
        %v5985 = vpack.c.bf16 %v5766, %v5763
        %v5986 = vpack.c.bf16 %v5774, %v5771
        %v5987 = vpack.c.bf16 %v5827, %v5824
        %v5988 = vpack.c.bf16 %v5835, %v5832
        %v5989 = vpack.c.bf16 %v5843, %v5840
        %v5990 = vpack.c.bf16 %v5851, %v5848
        %v5991 = vpack.c.bf16 %v5904, %v5901
        %v5992 = vpack.c.bf16 %v5912, %v5909
        %v5993 = vpack.c.bf16 %v5920, %v5917
        %v5994 = vpack.c.bf16 %v5928, %v5925
        %6011 = vrot.lane.b32.xlu0 %v5947, 32
        %v6012 = vpop.permute.xlu0 %6011
        %6013 = vrot.lane.b32.xlu0 %v5948, 32
        %v6014 = vpop.permute.xlu0 %6013
        %6015 = vrot.lane.b32.xlu0 %v5949, 32
        %v6016 = vpop.permute.xlu0 %6015
        %6017 = vrot.lane.b32.xlu0 %v5950, 32
        %v6018 = vpop.permute.xlu0 %6017
        %6019 = vrot.lane.b32.xlu0 %v5951, 32
        %v6020 = vpop.permute.xlu0 %6019
        %6021 = vrot.lane.b32.xlu0 %v5952, 32
        %v6022 = vpop.permute.xlu0 %6021
        %6023 = vrot.lane.b32.xlu0 %v5953, 32
        %v6024 = vpop.permute.xlu0 %6023
        %6025 = vrot.lane.b32.xlu0 %v5954, 32
        %v6026 = vpop.permute.xlu0 %6025
        %6027 = vrot.lane.b32.xlu0 %v5955, 32
        %v6028 = vpop.permute.xlu0 %6027
        %6029 = vrot.lane.b32.xlu0 %v5956, 32
        %v6030 = vpop.permute.xlu0 %6029
        %6031 = vrot.lane.b32.xlu0 %v5957, 32
        %v6032 = vpop.permute.xlu0 %6031
        %6033 = vrot.lane.b32.xlu0 %v5958, 32
        %v6034 = vpop.permute.xlu0 %6033
        %6035 = vrot.lane.b32.xlu0 %v5959, 32
        %v6036 = vpop.permute.xlu0 %6035
        %6037 = vrot.lane.b32.xlu0 %v5960, 32
        %v6038 = vpop.permute.xlu0 %6037
        %6039 = vrot.lane.b32.xlu0 %v5961, 32
        %v6040 = vpop.permute.xlu0 %6039
        %6041 = vrot.lane.b32.xlu0 %v5962, 32
        %v6042 = vpop.permute.xlu0 %6041
        %6059 = vrot.lane.b32.xlu0 %v5963, 64
        %v6060 = vpop.permute.xlu0 %6059
        %6061 = vrot.lane.b32.xlu0 %v5964, 64
        %v6062 = vpop.permute.xlu0 %6061
        %6063 = vrot.lane.b32.xlu0 %v5965, 64
        %v6064 = vpop.permute.xlu0 %6063
        %6065 = vrot.lane.b32.xlu0 %v5966, 64
        %v6066 = vpop.permute.xlu0 %6065
        %6067 = vrot.lane.b32.xlu0 %v5967, 64
        %v6068 = vpop.permute.xlu0 %6067
        %6069 = vrot.lane.b32.xlu0 %v5968, 64
        %v6070 = vpop.permute.xlu0 %6069
        %6071 = vrot.lane.b32.xlu0 %v5969, 64
        %v6072 = vpop.permute.xlu0 %6071
        %6073 = vrot.lane.b32.xlu0 %v5970, 64
        %v6074 = vpop.permute.xlu0 %6073
        %6075 = vrot.lane.b32.xlu0 %v5971, 64
        %v6076 = vpop.permute.xlu0 %6075
        %6077 = vrot.lane.b32.xlu0 %v5972, 64
        %v6078 = vpop.permute.xlu0 %6077
        %6079 = vrot.lane.b32.xlu0 %v5973, 64
        %v6080 = vpop.permute.xlu0 %6079
        %6081 = vrot.lane.b32.xlu0 %v5974, 64
        %v6082 = vpop.permute.xlu0 %6081
        %6083 = vrot.lane.b32.xlu0 %v5975, 64
        %v6084 = vpop.permute.xlu0 %6083
        %6085 = vrot.lane.b32.xlu0 %v5976, 64
        %v6086 = vpop.permute.xlu0 %6085
        %6087 = vrot.lane.b32.xlu0 %v5977, 64
        %v6088 = vpop.permute.xlu0 %6087
        %6089 = vrot.lane.b32.xlu0 %v5978, 64
        %v6090 = vpop.permute.xlu0 %6089
        %6107 = vrot.lane.b32.xlu0 %v5979, 96
        %v6108 = vpop.permute.xlu0 %6107
        %6109 = vrot.lane.b32.xlu0 %v5980, 96
        %v6110 = vpop.permute.xlu0 %6109
        %6111 = vrot.lane.b32.xlu0 %v5981, 96
        %v6112 = vpop.permute.xlu0 %6111
        %6113 = vrot.lane.b32.xlu0 %v5982, 96
        %v6114 = vpop.permute.xlu0 %6113
        %6115 = vrot.lane.b32.xlu0 %v5983, 96
        %v6116 = vpop.permute.xlu0 %6115
        %6117 = vrot.lane.b32.xlu0 %v5984, 96
        %v6118 = vpop.permute.xlu0 %6117
        %6119 = vrot.lane.b32.xlu0 %v5985, 96
        %v6120 = vpop.permute.xlu0 %6119
        %6121 = vrot.lane.b32.xlu0 %v5986, 96
        %v6122 = vpop.permute.xlu0 %6121
        %6123 = vrot.lane.b32.xlu0 %v5987, 96
        %v6124 = vpop.permute.xlu0 %6123
        %6125 = vrot.lane.b32.xlu0 %v5988, 96
        %v6126 = vpop.permute.xlu0 %6125
        %6127 = vrot.lane.b32.xlu0 %v5989, 96
        %v6128 = vpop.permute.xlu0 %6127
        %6129 = vrot.lane.b32.xlu0 %v5990, 96
        %v6130 = vpop.permute.xlu0 %6129
        %6131 = vrot.lane.b32.xlu0 %v5991, 96
        %v6132 = vpop.permute.xlu0 %6131
        %6133 = vrot.lane.b32.xlu0 %v5992, 96
        %v6134 = vpop.permute.xlu0 %6133
        %6135 = vrot.lane.b32.xlu0 %v5993, 96
        %v6136 = vpop.permute.xlu0 %6135
        %6137 = vrot.lane.b32.xlu0 %v5994, 96
        %v6138 = vpop.permute.xlu0 %6137
        %v6141 = vsel %vm1801, %v5931, %v6012
        %v6144 = vsel %vm1801, %v5932, %v6014
        %v6147 = vsel %vm1801, %v5933, %v6016
        %v6150 = vsel %vm1801, %v5934, %v6018
        %v6153 = vsel %vm1801, %v5935, %v6020
        %v6156 = vsel %vm1801, %v5936, %v6022
        %v6159 = vsel %vm1801, %v5937, %v6024
        %v6162 = vsel %vm1801, %v5938, %v6026
        %v6165 = vsel %vm1801, %v5939, %v6028
        %v6168 = vsel %vm1801, %v5940, %v6030
        %v6171 = vsel %vm1801, %v5941, %v6032
        %v6174 = vsel %vm1801, %v5942, %v6034
        %v6177 = vsel %vm1801, %v5943, %v6036
        %v6180 = vsel %vm1801, %v5944, %v6038
        %v6183 = vsel %vm1801, %v5945, %v6040
        %v6186 = vsel %vm1801, %v5946, %v6042
        %v6188 = vsel %vm3226, %v6141, %v6060
        %v6190 = vsel %vm3226, %v6144, %v6062
        %v6192 = vsel %vm3226, %v6147, %v6064
        %v6194 = vsel %vm3226, %v6150, %v6066
        %v6196 = vsel %vm3226, %v6153, %v6068
        %v6198 = vsel %vm3226, %v6156, %v6070
        %v6200 = vsel %vm3226, %v6159, %v6072
        %v6202 = vsel %vm3226, %v6162, %v6074
        %v6204 = vsel %vm3226, %v6165, %v6076
        %v6206 = vsel %vm3226, %v6168, %v6078
        %v6208 = vsel %vm3226, %v6171, %v6080
        %v6210 = vsel %vm3226, %v6174, %v6082
        %v6212 = vsel %vm3226, %v6177, %v6084
        %v6214 = vsel %vm3226, %v6180, %v6086
        %v6216 = vsel %vm3226, %v6183, %v6088
        %v6218 = vsel %vm3226, %v6186, %v6090
        %vm6219 = vcmask 785408
        %v6221 = vsel %vm6219, %v6188, %v6108
        %v6224 = vsel %vm6219, %v6190, %v6110
        %v6227 = vsel %vm6219, %v6192, %v6112
        %v6230 = vsel %vm6219, %v6194, %v6114
        %v6233 = vsel %vm6219, %v6196, %v6116
        %v6236 = vsel %vm6219, %v6198, %v6118
        %v6239 = vsel %vm6219, %v6200, %v6120
        %v6242 = vsel %vm6219, %v6202, %v6122
        %v6245 = vsel %vm6219, %v6204, %v6124
        %v6248 = vsel %vm6219, %v6206, %v6126
        %v6251 = vsel %vm6219, %v6208, %v6128
        %v6254 = vsel %vm6219, %v6210, %v6130
        %v6257 = vsel %vm6219, %v6212, %v6132
        %v6260 = vsel %vm6219, %v6214, %v6134
        %v6263 = vsel %vm6219, %v6216, %v6136
        %v6266 = vsel %vm6219, %v6218, %v6138
        %v6268 = vld [vmem:[%s3] sm:$0xf]
        %v6269 = vld [vmem:[%s3 + $0x4] sm:$0xf]
        %v6270 = vld [vmem:[%s3 + $0x8] sm:$0xf]
        %v6271 = vld [vmem:[%s3 + $0xc] sm:$0xf]
        %v6272 = vld [vmem:[%s3 + $0x10] sm:$0xf]
        %v6273 = vld [vmem:[%s3 + $0x14] sm:$0xf]
        %v6274 = vld [vmem:[%s3 + $0x18] sm:$0xf]
        %v6275 = vld [vmem:[%s3 + $0x1c] sm:$0xf]
        %v6276 = vld [vmem:[%s3 + $0x20] sm:$0xf]
        %v6277 = vld [vmem:[%s3 + $0x24] sm:$0xf]
        %v6278 = vld [vmem:[%s3 + $0x28] sm:$0xf]
        %v6279 = vld [vmem:[%s3 + $0x2c] sm:$0xf]
        %v6280 = vld [vmem:[%s3 + $0x30] sm:$0xf]
        %v6281 = vld [vmem:[%s3 + $0x34] sm:$0xf]
        %v6282 = vld [vmem:[%s3 + $0x38] sm:$0xf]
        %v6283 = vld [vmem:[%s3 + $0x3c] sm:$0xf]
        %v6300 = vunpack.c.l.b16 %v6268
        %v6301 = vunpack.c.l.b16 %v6269
        %v6302 = vunpack.c.l.b16 %v6270
        %v6303 = vunpack.c.l.b16 %v6271
        %v6304 = vunpack.c.l.b16 %v6272
        %v6305 = vunpack.c.l.b16 %v6273
        %v6306 = vunpack.c.l.b16 %v6274
        %v6307 = vunpack.c.l.b16 %v6275
        %v6308 = vunpack.c.l.b16 %v6276
        %v6309 = vunpack.c.l.b16 %v6277
        %v6310 = vunpack.c.l.b16 %v6278
        %v6311 = vunpack.c.l.b16 %v6279
        %v6312 = vunpack.c.l.b16 %v6280
        %v6313 = vunpack.c.l.b16 %v6281
        %v6314 = vunpack.c.l.b16 %v6282
        %v6315 = vunpack.c.l.b16 %v6283
        %v6316 = vpack.c.b16 %v6301, %v6300
        %v6317 = vpack.c.b16 %v6303, %v6302
        %v6318 = vpack.c.b16 %v6305, %v6304
        %v6319 = vpack.c.b16 %v6307, %v6306
        %v6320 = vpack.c.b16 %v6309, %v6308
        %v6321 = vpack.c.b16 %v6311, %v6310
        %v6322 = vpack.c.b16 %v6313, %v6312
        %v6323 = vpack.c.b16 %v6315, %v6314
        %6332 = vmatprep.subr.bf16.mxu0 0
        %6333 = vmatpush1.bf16.msra.mxu0 %v6323
        %6334 = vmatprep.subr.bf16.mxu0 0
        %6335 = vmatpush1.bf16.msra.mxu0 %v6322
        %6336 = vmatprep.subr.bf16.mxu0 0
        %6337 = vmatpush1.bf16.msra.mxu0 %v6321
        %6338 = vmatprep.subr.bf16.mxu0 0
        %6339 = vmatpush1.bf16.msra.mxu0 %v6320
        %6340 = vmatprep.subr.bf16.mxu0 0
        %6341 = vmatpush1.bf16.msra.mxu0 %v6319
        %6342 = vmatprep.subr.bf16.mxu0 0
        %6343 = vmatpush1.bf16.msra.mxu0 %v6318
        %6344 = vmatprep.subr.bf16.mxu0 0
        %6345 = vmatpush1.bf16.msra.mxu0 %v6317
        %6346 = vmatprep.subr.bf16.mxu0 0
        %6347 = vmatpush1.bf16.msra.mxu0 %v6316
        %6348 = vmatprep.subr.bf16.mxu0 0
        %6349 = vmatpush2.bf16.msra.mxu0 0
        %6350 = vmatprep.subr.bf16.mxu0 0
        %6351 = vmatpush2.bf16.msra.mxu0 0
        %6352 = vmatprep.subr.bf16.mxu0 0
        %6353 = vmatpush2.bf16.msra.mxu0 0
        %6354 = vmatprep.subr.bf16.mxu0 0
        %6355 = vmatpush2.bf16.msra.mxu0 0
        %6356 = vmatprep.subr.bf16.mxu0 0
        %6357 = vmatpush2.bf16.msra.mxu0 0
        %6358 = vmatprep.subr.bf16.mxu0 0
        %6359 = vmatpush2.bf16.msra.mxu0 0
        %6360 = vmatprep.subr.bf16.mxu0 0
        %6361 = vmatpush2.bf16.msra.mxu0 0
        %6362 = vmatprep.subr.bf16.mxu0 0
        %6363 = vmatpush2.bf16.msra.mxu0 0
        %6364 = vmatprep.mubr.bf16.mxu0 0
        %6365 = vmatmul.mubr.bf16.gmra.mxu0 %v6221
        %v6366 = vpop.f32.mrf.mxu0
        %v6367 = vadd.f32 0.0, %v6366
        %v6368 = vpop.f32.mrf.mxu0
        %v6369 = vpop.f32.mrf.mxu0
        %v6370 = vadd.f32 0.0, %v6369
        %v6371 = vpop.f32.mrf.mxu0
        %6372 = vmatprep.mubr.bf16.mxu0 0
        %6373 = vmatmul.mubr.bf16.gmra.mxu0 %v6224
        %v6374 = vpop.f32.mrf.mxu0
        %v6375 = vadd.f32 0.0, %v6374
        %v6376 = vpop.f32.mrf.mxu0
        %v6377 = vpop.f32.mrf.mxu0
        %v6378 = vadd.f32 0.0, %v6377
        %v6379 = vpop.f32.mrf.mxu0
        %6380 = vmatprep.mubr.bf16.mxu0 0
        %6381 = vmatmul.mubr.bf16.gmra.mxu0 %v6227
        %v6382 = vpop.f32.mrf.mxu0
        %v6383 = vadd.f32 0.0, %v6382
        %v6384 = vpop.f32.mrf.mxu0
        %v6385 = vpop.f32.mrf.mxu0
        %v6386 = vadd.f32 0.0, %v6385
        %v6387 = vpop.f32.mrf.mxu0
        %6388 = vmatprep.mubr.bf16.mxu0 0
        %6389 = vmatmul.mubr.bf16.gmra.mxu0 %v6230
        %v6390 = vpop.f32.mrf.mxu0
        %v6391 = vadd.f32 0.0, %v6390
        %v6392 = vpop.f32.mrf.mxu0
        %v6393 = vpop.f32.mrf.mxu0
        %v6394 = vadd.f32 0.0, %v6393
        %v6395 = vpop.f32.mrf.mxu0
        %6396 = vmatprep.mubr.bf16.mxu0 0
        %6397 = vmatmul.mubr.bf16.gmra.mxu0 %v6233
        %v6398 = vpop.f32.mrf.mxu0
        %v6399 = vadd.f32 0.0, %v6398
        %v6400 = vpop.f32.mrf.mxu0
        %v6401 = vpop.f32.mrf.mxu0
        %v6402 = vadd.f32 0.0, %v6401
        %v6403 = vpop.f32.mrf.mxu0
        %6404 = vmatprep.mubr.bf16.mxu0 0
        %6405 = vmatmul.mubr.bf16.gmra.mxu0 %v6236
        %v6406 = vpop.f32.mrf.mxu0
        %v6407 = vadd.f32 0.0, %v6406
        %v6408 = vpop.f32.mrf.mxu0
        %v6409 = vpop.f32.mrf.mxu0
        %v6410 = vadd.f32 0.0, %v6409
        %v6411 = vpop.f32.mrf.mxu0
        %6412 = vmatprep.mubr.bf16.mxu0 0
        %6413 = vmatmul.mubr.bf16.gmra.mxu0 %v6239
        %v6414 = vpop.f32.mrf.mxu0
        %v6415 = vadd.f32 0.0, %v6414
        %v6416 = vpop.f32.mrf.mxu0
        %v6417 = vpop.f32.mrf.mxu0
        %v6418 = vadd.f32 0.0, %v6417
        %v6419 = vpop.f32.mrf.mxu0
        %6420 = vmatprep.mubr.bf16.mxu0 0
        %6421 = vmatmul.mubr.bf16.gmra.mxu0 %v6242
        %v6422 = vpop.f32.mrf.mxu0
        %v6423 = vadd.f32 0.0, %v6422
        %v6424 = vpop.f32.mrf.mxu0
        %v6425 = vpop.f32.mrf.mxu0
        %v6426 = vadd.f32 0.0, %v6425
        %v6427 = vpop.f32.mrf.mxu0
        %6428 = vmatprep.mubr.bf16.mxu0 0
        %6429 = vmatmul.mubr.bf16.gmra.mxu0 %v6245
        %v6430 = vpop.f32.mrf.mxu0
        %v6431 = vadd.f32 0.0, %v6430
        %v6432 = vpop.f32.mrf.mxu0
        %v6433 = vpop.f32.mrf.mxu0
        %v6434 = vadd.f32 0.0, %v6433
        %v6435 = vpop.f32.mrf.mxu0
        %6436 = vmatprep.mubr.bf16.mxu0 0
        %6437 = vmatmul.mubr.bf16.gmra.mxu0 %v6248
        %v6438 = vpop.f32.mrf.mxu0
        %v6439 = vadd.f32 0.0, %v6438
        %v6440 = vpop.f32.mrf.mxu0
        %v6441 = vpop.f32.mrf.mxu0
        %v6442 = vadd.f32 0.0, %v6441
        %v6443 = vpop.f32.mrf.mxu0
        %6444 = vmatprep.mubr.bf16.mxu0 0
        %6445 = vmatmul.mubr.bf16.gmra.mxu0 %v6251
        %v6446 = vpop.f32.mrf.mxu0
        %v6447 = vadd.f32 0.0, %v6446
        %v6448 = vpop.f32.mrf.mxu0
        %v6449 = vpop.f32.mrf.mxu0
        %v6450 = vadd.f32 0.0, %v6449
        %v6451 = vpop.f32.mrf.mxu0
        %6452 = vmatprep.mubr.bf16.mxu0 0
        %6453 = vmatmul.mubr.bf16.gmra.mxu0 %v6254
        %v6454 = vpop.f32.mrf.mxu0
        %v6455 = vadd.f32 0.0, %v6454
        %v6456 = vpop.f32.mrf.mxu0
        %v6457 = vpop.f32.mrf.mxu0
        %v6458 = vadd.f32 0.0, %v6457
        %v6459 = vpop.f32.mrf.mxu0
        %6460 = vmatprep.mubr.bf16.mxu0 0
        %6461 = vmatmul.mubr.bf16.gmra.mxu0 %v6257
        %v6462 = vpop.f32.mrf.mxu0
        %v6463 = vadd.f32 0.0, %v6462
        %v6464 = vpop.f32.mrf.mxu0
        %v6465 = vpop.f32.mrf.mxu0
        %v6466 = vadd.f32 0.0, %v6465
        %v6467 = vpop.f32.mrf.mxu0
        %6468 = vmatprep.mubr.bf16.mxu0 0
        %6469 = vmatmul.mubr.bf16.gmra.mxu0 %v6260
        %v6470 = vpop.f32.mrf.mxu0
        %v6471 = vadd.f32 0.0, %v6470
        %v6472 = vpop.f32.mrf.mxu0
        %v6473 = vpop.f32.mrf.mxu0
        %v6474 = vadd.f32 0.0, %v6473
        %v6475 = vpop.f32.mrf.mxu0
        %6476 = vmatprep.mubr.bf16.mxu0 0
        %6477 = vmatmul.mubr.bf16.gmra.mxu0 %v6263
        %v6478 = vpop.f32.mrf.mxu0
        %v6479 = vadd.f32 0.0, %v6478
        %v6480 = vpop.f32.mrf.mxu0
        %v6481 = vpop.f32.mrf.mxu0
        %v6482 = vadd.f32 0.0, %v6481
        %v6483 = vpop.f32.mrf.mxu0
        %6484 = vmatprep.mubr.bf16.mxu0 0
        %6485 = vmatmul.mubr.bf16.gmra.mxu0 %v6266
        %v6486 = vpop.f32.mrf.mxu0
        %v6487 = vadd.f32 0.0, %v6486
        %v6488 = vpop.f32.mrf.mxu0
        %v6489 = vpop.f32.mrf.mxu0
        %v6490 = vadd.f32 0.0, %v6489
        %v6491 = vpop.f32.mrf.mxu0
        %6492 = vdwg.mxu0
        %6493 = vadd.xlane.f32.xlu0 %v6367
        %v6494 = vpop.xlane.xlu0 %6493
        %6495 = vadd.xlane.f32.xlu0 %v6370
        %v6496 = vpop.xlane.xlu0 %6495
        %6497 = vadd.xlane.f32.xlu0 %v6375
        %v6498 = vpop.xlane.xlu0 %6497
        %6499 = vadd.xlane.f32.xlu0 %v6378
        %v6500 = vpop.xlane.xlu0 %6499
        %6501 = vadd.xlane.f32.xlu0 %v6383
        %v6502 = vpop.xlane.xlu0 %6501
        %6503 = vadd.xlane.f32.xlu0 %v6386
        %v6504 = vpop.xlane.xlu0 %6503
        %6505 = vadd.xlane.f32.xlu0 %v6391
        %v6506 = vpop.xlane.xlu0 %6505
        %6507 = vadd.xlane.f32.xlu0 %v6394
        %v6508 = vpop.xlane.xlu0 %6507
        %6509 = vadd.xlane.f32.xlu0 %v6399
        %v6510 = vpop.xlane.xlu0 %6509
        %6511 = vadd.xlane.f32.xlu0 %v6402
        %v6512 = vpop.xlane.xlu0 %6511
        %6513 = vadd.xlane.f32.xlu0 %v6407
        %v6514 = vpop.xlane.xlu0 %6513
        %6515 = vadd.xlane.f32.xlu0 %v6410
        %v6516 = vpop.xlane.xlu0 %6515
        %6517 = vadd.xlane.f32.xlu0 %v6415
        %v6518 = vpop.xlane.xlu0 %6517
        %6519 = vadd.xlane.f32.xlu0 %v6418
        %v6520 = vpop.xlane.xlu0 %6519
        %6521 = vadd.xlane.f32.xlu0 %v6423
        %v6522 = vpop.xlane.xlu0 %6521
        %6523 = vadd.xlane.f32.xlu0 %v6426
        %v6524 = vpop.xlane.xlu0 %6523
        %6525 = vadd.xlane.f32.xlu0 %v6431
        %v6526 = vpop.xlane.xlu0 %6525
        %6527 = vadd.xlane.f32.xlu0 %v6434
        %v6528 = vpop.xlane.xlu0 %6527
        %6529 = vadd.xlane.f32.xlu0 %v6439
        %v6530 = vpop.xlane.xlu0 %6529
        %6531 = vadd.xlane.f32.xlu0 %v6442
        %v6532 = vpop.xlane.xlu0 %6531
        %6533 = vadd.xlane.f32.xlu0 %v6447
        %v6534 = vpop.xlane.xlu0 %6533
        %6535 = vadd.xlane.f32.xlu0 %v6450
        %v6536 = vpop.xlane.xlu0 %6535
        %6537 = vadd.xlane.f32.xlu0 %v6455
        %v6538 = vpop.xlane.xlu0 %6537
        %6539 = vadd.xlane.f32.xlu0 %v6458
        %v6540 = vpop.xlane.xlu0 %6539
        %6541 = vadd.xlane.f32.xlu0 %v6463
        %v6542 = vpop.xlane.xlu0 %6541
        %6543 = vadd.xlane.f32.xlu0 %v6466
        %v6544 = vpop.xlane.xlu0 %6543
        %6545 = vadd.xlane.f32.xlu0 %v6471
        %v6546 = vpop.xlane.xlu0 %6545
        %6547 = vadd.xlane.f32.xlu0 %v6474
        %v6548 = vpop.xlane.xlu0 %6547
        %6549 = vadd.xlane.f32.xlu0 %v6479
        %v6550 = vpop.xlane.xlu0 %6549
        %6551 = vadd.xlane.f32.xlu0 %v6482
        %v6552 = vpop.xlane.xlu0 %6551
        %6553 = vadd.xlane.f32.xlu0 %v6487
        %v6554 = vpop.xlane.xlu0 %6553
        %6555 = vadd.xlane.f32.xlu0 %v6490
        %v6556 = vpop.xlane.xlu0 %6555
        %v6557 = vrcp.pop 128.0
        %v6558 = vmul.f32 %v6494, %v6557
        %v6559 = vmul.f32 %v6496, %v6557
        %v6560 = vmul.f32 %v6498, %v6557
        %v6561 = vmul.f32 %v6500, %v6557
        %v6562 = vmul.f32 %v6502, %v6557
        %v6563 = vmul.f32 %v6504, %v6557
        %v6564 = vmul.f32 %v6506, %v6557
        %v6565 = vmul.f32 %v6508, %v6557
        %v6566 = vmul.f32 %v6510, %v6557
        %v6567 = vmul.f32 %v6512, %v6557
        %v6568 = vmul.f32 %v6514, %v6557
        %v6569 = vmul.f32 %v6516, %v6557
        %v6570 = vmul.f32 %v6518, %v6557
        %v6571 = vmul.f32 %v6520, %v6557
        %v6572 = vmul.f32 %v6522, %v6557
        %v6573 = vmul.f32 %v6524, %v6557
        %v6574 = vmul.f32 %v6526, %v6557
        %v6575 = vmul.f32 %v6528, %v6557
        %v6576 = vmul.f32 %v6530, %v6557
        %v6577 = vmul.f32 %v6532, %v6557
        %v6578 = vmul.f32 %v6534, %v6557
        %v6579 = vmul.f32 %v6536, %v6557
        %v6580 = vmul.f32 %v6538, %v6557
        %v6581 = vmul.f32 %v6540, %v6557
        %v6582 = vmul.f32 %v6542, %v6557
        %v6583 = vmul.f32 %v6544, %v6557
        %v6584 = vmul.f32 %v6546, %v6557
        %v6585 = vmul.f32 %v6548, %v6557
        %v6586 = vmul.f32 %v6550, %v6557
        %v6587 = vmul.f32 %v6552, %v6557
        %v6588 = vmul.f32 %v6554, %v6557
        %v6589 = vmul.f32 %v6556, %v6557
        %v6590 = vsub.f32 %v6367, %v6558
        %v6591 = vsub.f32 %v6370, %v6559
        %v6592 = vsub.f32 %v6375, %v6560
        %v6593 = vsub.f32 %v6378, %v6561
        %v6594 = vsub.f32 %v6383, %v6562
        %v6595 = vsub.f32 %v6386, %v6563
        %v6596 = vsub.f32 %v6391, %v6564
        %v6597 = vsub.f32 %v6394, %v6565
        %v6598 = vsub.f32 %v6399, %v6566
        %v6599 = vsub.f32 %v6402, %v6567
        %v6600 = vsub.f32 %v6407, %v6568
        %v6601 = vsub.f32 %v6410, %v6569
        %v6602 = vsub.f32 %v6415, %v6570
        %v6603 = vsub.f32 %v6418, %v6571
        %v6604 = vsub.f32 %v6423, %v6572
        %v6605 = vsub.f32 %v6426, %v6573
        %v6606 = vsub.f32 %v6431, %v6574
        %v6607 = vsub.f32 %v6434, %v6575
        %v6608 = vsub.f32 %v6439, %v6576
        %v6609 = vsub.f32 %v6442, %v6577
        %v6610 = vsub.f32 %v6447, %v6578
        %v6611 = vsub.f32 %v6450, %v6579
        %v6612 = vsub.f32 %v6455, %v6580
        %v6613 = vsub.f32 %v6458, %v6581
        %v6614 = vsub.f32 %v6463, %v6582
        %v6615 = vsub.f32 %v6466, %v6583
        %v6616 = vsub.f32 %v6471, %v6584
        %v6617 = vsub.f32 %v6474, %v6585
        %v6618 = vsub.f32 %v6479, %v6586
        %v6619 = vsub.f32 %v6482, %v6587
        %v6620 = vsub.f32 %v6487, %v6588
        %v6621 = vsub.f32 %v6490, %v6589
        %v6622 = vmul.f32 %v6590, %v6590
        %v6623 = vmul.f32 %v6591, %v6591
        %v6624 = vmul.f32 %v6592, %v6592
        %v6625 = vmul.f32 %v6593, %v6593
        %v6626 = vmul.f32 %v6594, %v6594
        %v6627 = vmul.f32 %v6595, %v6595
        %v6628 = vmul.f32 %v6596, %v6596
        %v6629 = vmul.f32 %v6597, %v6597
        %v6630 = vmul.f32 %v6598, %v6598
        %v6631 = vmul.f32 %v6599, %v6599
        %v6632 = vmul.f32 %v6600, %v6600
        %v6633 = vmul.f32 %v6601, %v6601
        %v6634 = vmul.f32 %v6602, %v6602
        %v6635 = vmul.f32 %v6603, %v6603
        %v6636 = vmul.f32 %v6604, %v6604
        %v6637 = vmul.f32 %v6605, %v6605
        %v6638 = vmul.f32 %v6606, %v6606
        %v6639 = vmul.f32 %v6607, %v6607
        %v6640 = vmul.f32 %v6608, %v6608
        %v6641 = vmul.f32 %v6609, %v6609
        %v6642 = vmul.f32 %v6610, %v6610
        %v6643 = vmul.f32 %v6611, %v6611
        %v6644 = vmul.f32 %v6612, %v6612
        %v6645 = vmul.f32 %v6613, %v6613
        %v6646 = vmul.f32 %v6614, %v6614
        %v6647 = vmul.f32 %v6615, %v6615
        %v6648 = vmul.f32 %v6616, %v6616
        %v6649 = vmul.f32 %v6617, %v6617
        %v6650 = vmul.f32 %v6618, %v6618
        %v6651 = vmul.f32 %v6619, %v6619
        %v6652 = vmul.f32 %v6620, %v6620
        %v6653 = vmul.f32 %v6621, %v6621
        %6654 = vadd.xlane.f32.xlu0 %v6622
        %v6655 = vpop.xlane.xlu0 %6654
        %6656 = vadd.xlane.f32.xlu0 %v6623
        %v6657 = vpop.xlane.xlu0 %6656
        %6658 = vadd.xlane.f32.xlu0 %v6624
        %v6659 = vpop.xlane.xlu0 %6658
        %6660 = vadd.xlane.f32.xlu0 %v6625
        %v6661 = vpop.xlane.xlu0 %6660
        %6662 = vadd.xlane.f32.xlu0 %v6626
        %v6663 = vpop.xlane.xlu0 %6662
        %6664 = vadd.xlane.f32.xlu0 %v6627
        %v6665 = vpop.xlane.xlu0 %6664
        %6666 = vadd.xlane.f32.xlu0 %v6628
        %v6667 = vpop.xlane.xlu0 %6666
        %6668 = vadd.xlane.f32.xlu0 %v6629
        %v6669 = vpop.xlane.xlu0 %6668
        %6670 = vadd.xlane.f32.xlu0 %v6630
        %v6671 = vpop.xlane.xlu0 %6670
        %6672 = vadd.xlane.f32.xlu0 %v6631
        %v6673 = vpop.xlane.xlu0 %6672
        %6674 = vadd.xlane.f32.xlu0 %v6632
        %v6675 = vpop.xlane.xlu0 %6674
        %6676 = vadd.xlane.f32.xlu0 %v6633
        %v6677 = vpop.xlane.xlu0 %6676
        %6678 = vadd.xlane.f32.xlu0 %v6634
        %v6679 = vpop.xlane.xlu0 %6678
        %6680 = vadd.xlane.f32.xlu0 %v6635
        %v6681 = vpop.xlane.xlu0 %6680
        %6682 = vadd.xlane.f32.xlu0 %v6636
        %v6683 = vpop.xlane.xlu0 %6682
        %6684 = vadd.xlane.f32.xlu0 %v6637
        %v6685 = vpop.xlane.xlu0 %6684
        %6686 = vadd.xlane.f32.xlu0 %v6638
        %v6687 = vpop.xlane.xlu0 %6686
        %6688 = vadd.xlane.f32.xlu0 %v6639
        %v6689 = vpop.xlane.xlu0 %6688
        %6690 = vadd.xlane.f32.xlu0 %v6640
        %v6691 = vpop.xlane.xlu0 %6690
        %6692 = vadd.xlane.f32.xlu0 %v6641
        %v6693 = vpop.xlane.xlu0 %6692
        %6694 = vadd.xlane.f32.xlu0 %v6642
        %v6695 = vpop.xlane.xlu0 %6694
        %6696 = vadd.xlane.f32.xlu0 %v6643
        %v6697 = vpop.xlane.xlu0 %6696
        %6698 = vadd.xlane.f32.xlu0 %v6644
        %v6699 = vpop.xlane.xlu0 %6698
        %6700 = vadd.xlane.f32.xlu0 %v6645
        %v6701 = vpop.xlane.xlu0 %6700
        %6702 = vadd.xlane.f32.xlu0 %v6646
        %v6703 = vpop.xlane.xlu0 %6702
        %6704 = vadd.xlane.f32.xlu0 %v6647
        %v6705 = vpop.xlane.xlu0 %6704
        %6706 = vadd.xlane.f32.xlu0 %v6648
        %v6707 = vpop.xlane.xlu0 %6706
        %6708 = vadd.xlane.f32.xlu0 %v6649
        %v6709 = vpop.xlane.xlu0 %6708
        %6710 = vadd.xlane.f32.xlu0 %v6650
        %v6711 = vpop.xlane.xlu0 %6710
        %6712 = vadd.xlane.f32.xlu0 %v6651
        %v6713 = vpop.xlane.xlu0 %6712
        %6714 = vadd.xlane.f32.xlu0 %v6652
        %v6715 = vpop.xlane.xlu0 %6714
        %6716 = vadd.xlane.f32.xlu0 %v6653
        %v6717 = vpop.xlane.xlu0 %6716
        %v6718 = vmul.f32 %v6655, %v6557
        %v6719 = vmul.f32 %v6657, %v6557
        %v6720 = vmul.f32 %v6659, %v6557
        %v6721 = vmul.f32 %v6661, %v6557
        %v6722 = vmul.f32 %v6663, %v6557
        %v6723 = vmul.f32 %v6665, %v6557
        %v6724 = vmul.f32 %v6667, %v6557
        %v6725 = vmul.f32 %v6669, %v6557
        %v6726 = vmul.f32 %v6671, %v6557
        %v6727 = vmul.f32 %v6673, %v6557
        %v6728 = vmul.f32 %v6675, %v6557
        %v6729 = vmul.f32 %v6677, %v6557
        %v6730 = vmul.f32 %v6679, %v6557
        %v6731 = vmul.f32 %v6681, %v6557
        %v6732 = vmul.f32 %v6683, %v6557
        %v6733 = vmul.f32 %v6685, %v6557
        %v6734 = vmul.f32 %v6687, %v6557
        %v6735 = vmul.f32 %v6689, %v6557
        %v6736 = vmul.f32 %v6691, %v6557
        %v6737 = vmul.f32 %v6693, %v6557
        %v6738 = vmul.f32 %v6695, %v6557
        %v6739 = vmul.f32 %v6697, %v6557
        %v6740 = vmul.f32 %v6699, %v6557
        %v6741 = vmul.f32 %v6701, %v6557
        %v6742 = vmul.f32 %v6703, %v6557
        %v6743 = vmul.f32 %v6705, %v6557
        %v6744 = vmul.f32 %v6707, %v6557
        %v6745 = vmul.f32 %v6709, %v6557
        %v6746 = vmul.f32 %v6711, %v6557
        %v6747 = vmul.f32 %v6713, %v6557
        %v6748 = vmul.f32 %v6715, %v6557
        %v6749 = vmul.f32 %v6717, %v6557
        %v6750 = vadd.f32 %v6718, 1e-05
        %v6751 = vadd.f32 %v6719, 1e-05
        %v6752 = vadd.f32 %v6720, 1e-05
        %v6753 = vadd.f32 %v6721, 1e-05
        %v6754 = vadd.f32 %v6722, 1e-05
        %v6755 = vadd.f32 %v6723, 1e-05
        %v6756 = vadd.f32 %v6724, 1e-05
        %v6757 = vadd.f32 %v6725, 1e-05
        %v6758 = vadd.f32 %v6726, 1e-05
        %v6759 = vadd.f32 %v6727, 1e-05
        %v6760 = vadd.f32 %v6728, 1e-05
        %v6761 = vadd.f32 %v6729, 1e-05
        %v6762 = vadd.f32 %v6730, 1e-05
        %v6763 = vadd.f32 %v6731, 1e-05
        %v6764 = vadd.f32 %v6732, 1e-05
        %v6765 = vadd.f32 %v6733, 1e-05
        %v6766 = vadd.f32 %v6734, 1e-05
        %v6767 = vadd.f32 %v6735, 1e-05
        %v6768 = vadd.f32 %v6736, 1e-05
        %v6769 = vadd.f32 %v6737, 1e-05
        %v6770 = vadd.f32 %v6738, 1e-05
        %v6771 = vadd.f32 %v6739, 1e-05
        %v6772 = vadd.f32 %v6740, 1e-05
        %v6773 = vadd.f32 %v6741, 1e-05
        %v6774 = vadd.f32 %v6742, 1e-05
        %v6775 = vadd.f32 %v6743, 1e-05
        %v6776 = vadd.f32 %v6744, 1e-05
        %v6777 = vadd.f32 %v6745, 1e-05
        %v6778 = vadd.f32 %v6746, 1e-05
        %v6779 = vadd.f32 %v6747, 1e-05
        %v6780 = vadd.f32 %v6748, 1e-05
        %v6781 = vadd.f32 %v6749, 1e-05
        %v6782 = vrsqrt.pop %v6750
        %v6783 = vrsqrt.pop %v6751
        %v6784 = vrsqrt.pop %v6752
        %v6785 = vrsqrt.pop %v6753
        %v6786 = vrsqrt.pop %v6754
        %v6787 = vrsqrt.pop %v6755
        %v6788 = vrsqrt.pop %v6756
        %v6789 = vrsqrt.pop %v6757
        %v6790 = vrsqrt.pop %v6758
        %v6791 = vrsqrt.pop %v6759
        %v6792 = vrsqrt.pop %v6760
        %v6793 = vrsqrt.pop %v6761
        %v6794 = vrsqrt.pop %v6762
        %v6795 = vrsqrt.pop %v6763
        %v6796 = vrsqrt.pop %v6764
        %v6797 = vrsqrt.pop %v6765
        %v6798 = vrsqrt.pop %v6766
        %v6799 = vrsqrt.pop %v6767
        %v6800 = vrsqrt.pop %v6768
        %v6801 = vrsqrt.pop %v6769
        %v6802 = vrsqrt.pop %v6770
        %v6803 = vrsqrt.pop %v6771
        %v6804 = vrsqrt.pop %v6772
        %v6805 = vrsqrt.pop %v6773
        %v6806 = vrsqrt.pop %v6774
        %v6807 = vrsqrt.pop %v6775
        %v6808 = vrsqrt.pop %v6776
        %v6809 = vrsqrt.pop %v6777
        %v6810 = vrsqrt.pop %v6778
        %v6811 = vrsqrt.pop %v6779
        %v6812 = vrsqrt.pop %v6780
        %v6813 = vrsqrt.pop %v6781
        %v6814 = vmul.f32 %v6590, %v6782
        %v6815 = vmul.f32 %v6591, %v6783
        %v6816 = vmul.f32 %v6592, %v6784
        %v6817 = vmul.f32 %v6593, %v6785
        %v6818 = vmul.f32 %v6594, %v6786
        %v6819 = vmul.f32 %v6595, %v6787
        %v6820 = vmul.f32 %v6596, %v6788
        %v6821 = vmul.f32 %v6597, %v6789
        %v6822 = vmul.f32 %v6598, %v6790
        %v6823 = vmul.f32 %v6599, %v6791
        %v6824 = vmul.f32 %v6600, %v6792
        %v6825 = vmul.f32 %v6601, %v6793
        %v6826 = vmul.f32 %v6602, %v6794
        %v6827 = vmul.f32 %v6603, %v6795
        %v6828 = vmul.f32 %v6604, %v6796
        %v6829 = vmul.f32 %v6605, %v6797
        %v6830 = vmul.f32 %v6606, %v6798
        %v6831 = vmul.f32 %v6607, %v6799
        %v6832 = vmul.f32 %v6608, %v6800
        %v6833 = vmul.f32 %v6609, %v6801
        %v6834 = vmul.f32 %v6610, %v6802
        %v6835 = vmul.f32 %v6611, %v6803
        %v6836 = vmul.f32 %v6612, %v6804
        %v6837 = vmul.f32 %v6613, %v6805
        %v6838 = vmul.f32 %v6614, %v6806
        %v6839 = vmul.f32 %v6615, %v6807
        %v6840 = vmul.f32 %v6616, %v6808
        %v6841 = vmul.f32 %v6617, %v6809
        %v6842 = vmul.f32 %v6618, %v6810
        %v6843 = vmul.f32 %v6619, %v6811
        %v6844 = vmul.f32 %v6620, %v6812
        %v6845 = vmul.f32 %v6621, %v6813
        %v6846 = vld [vmem:[%s4] sm:$0x1]
        %v6848 = vlaneseq
        %v6849 = vshrl.u32 %v6848, 7
        %v6850 = vsub.s32 0, %v6849
        %v6851 = vrot.slane %v6846, %v6850
        %v6853 = vmul.f32 %v6814, %v6851
        %v6854 = vmul.f32 %v6815, %v6851
        %v6855 = vmul.f32 %v6816, %v6851
        %v6856 = vmul.f32 %v6817, %v6851
        %v6857 = vmul.f32 %v6818, %v6851
        %v6858 = vmul.f32 %v6819, %v6851
        %v6859 = vmul.f32 %v6820, %v6851
        %v6860 = vmul.f32 %v6821, %v6851
        %v6861 = vmul.f32 %v6822, %v6851
        %v6862 = vmul.f32 %v6823, %v6851
        %v6863 = vmul.f32 %v6824, %v6851
        %v6864 = vmul.f32 %v6825, %v6851
        %v6865 = vmul.f32 %v6826, %v6851
        %v6866 = vmul.f32 %v6827, %v6851
        %v6867 = vmul.f32 %v6828, %v6851
        %v6868 = vmul.f32 %v6829, %v6851
        %v6869 = vmul.f32 %v6830, %v6851
        %v6870 = vmul.f32 %v6831, %v6851
        %v6871 = vmul.f32 %v6832, %v6851
        %v6872 = vmul.f32 %v6833, %v6851
        %v6873 = vmul.f32 %v6834, %v6851
        %v6874 = vmul.f32 %v6835, %v6851
        %v6875 = vmul.f32 %v6836, %v6851
        %v6876 = vmul.f32 %v6837, %v6851
        %v6877 = vmul.f32 %v6838, %v6851
        %v6878 = vmul.f32 %v6839, %v6851
        %v6879 = vmul.f32 %v6840, %v6851
        %v6880 = vmul.f32 %v6841, %v6851
        %v6881 = vmul.f32 %v6842, %v6851
        %v6882 = vmul.f32 %v6843, %v6851
        %v6883 = vmul.f32 %v6844, %v6851
        %v6884 = vmul.f32 %v6845, %v6851
        %v6885 = vadd.f32 %v727, %v6853
        %v6886 = vadd.f32 %v728, %v6854
        %v6887 = vadd.f32 %v729, %v6855
        %v6888 = vadd.f32 %v730, %v6856
        %v6889 = vadd.f32 %v731, %v6857
        %v6890 = vadd.f32 %v732, %v6858
        %v6891 = vadd.f32 %v733, %v6859
        %v6892 = vadd.f32 %v734, %v6860
        %v6893 = vadd.f32 %v735, %v6861
        %v6894 = vadd.f32 %v736, %v6862
        %v6895 = vadd.f32 %v737, %v6863
        %v6896 = vadd.f32 %v738, %v6864
        %v6897 = vadd.f32 %v739, %v6865
        %v6898 = vadd.f32 %v740, %v6866
        %v6899 = vadd.f32 %v741, %v6867
        %v6900 = vadd.f32 %v742, %v6868
        %v6901 = vadd.f32 %v743, %v6869
        %v6902 = vadd.f32 %v744, %v6870
        %v6903 = vadd.f32 %v745, %v6871
        %v6904 = vadd.f32 %v746, %v6872
        %v6905 = vadd.f32 %v747, %v6873
        %v6906 = vadd.f32 %v748, %v6874
        %v6907 = vadd.f32 %v749, %v6875
        %v6908 = vadd.f32 %v750, %v6876
        %v6909 = vadd.f32 %v751, %v6877
        %v6910 = vadd.f32 %v752, %v6878
        %v6911 = vadd.f32 %v753, %v6879
        %v6912 = vadd.f32 %v754, %v6880
        %v6913 = vadd.f32 %v755, %v6881
        %v6914 = vadd.f32 %v756, %v6882
        %v6915 = vadd.f32 %v757, %v6883
        %v6916 = vadd.f32 %v758, %v6884
        %v6917 = vpack.c.bf16 %v6886, %v6885
        %v6918 = vpack.c.bf16 %v6888, %v6887
        %v6919 = vpack.c.bf16 %v6890, %v6889
        %v6920 = vpack.c.bf16 %v6892, %v6891
        %v6921 = vpack.c.bf16 %v6894, %v6893
        %v6922 = vpack.c.bf16 %v6896, %v6895
        %v6923 = vpack.c.bf16 %v6898, %v6897
        %v6924 = vpack.c.bf16 %v6900, %v6899
        %v6925 = vpack.c.bf16 %v6902, %v6901
        %v6926 = vpack.c.bf16 %v6904, %v6903
        %v6927 = vpack.c.bf16 %v6906, %v6905
        %v6928 = vpack.c.bf16 %v6908, %v6907
        %v6929 = vpack.c.bf16 %v6910, %v6909
        %v6930 = vpack.c.bf16 %v6912, %v6911
        %v6931 = vpack.c.bf16 %v6914, %v6913
        %v6932 = vpack.c.bf16 %v6916, %v6915
        %v6933 = vld [vmem:[%s5] sm:$0xff]
        %v6934 = vld [vmem:[%s5 + $0x8] sm:$0xff]
        %v6935 = vld [vmem:[%s5 + $0x10] sm:$0xff]
        %v6936 = vld [vmem:[%s5 + $0x18] sm:$0xff]
        %v6937 = vld [vmem:[%s5 + $0x20] sm:$0xff]
        %v6938 = vld [vmem:[%s5 + $0x28] sm:$0xff]
        %v6939 = vld [vmem:[%s5 + $0x30] sm:$0xff]
        %v6940 = vld [vmem:[%s5 + $0x38] sm:$0xff]
        %v6941 = vld [vmem:[%s5 + $0x40] sm:$0xff]
        %v6942 = vld [vmem:[%s5 + $0x48] sm:$0xff]
        %v6943 = vld [vmem:[%s5 + $0x50] sm:$0xff]
        %v6944 = vld [vmem:[%s5 + $0x58] sm:$0xff]
        %v6945 = vld [vmem:[%s5 + $0x60] sm:$0xff]
        %v6946 = vld [vmem:[%s5 + $0x68] sm:$0xff]
        %v6947 = vld [vmem:[%s5 + $0x70] sm:$0xff]
        %v6948 = vld [vmem:[%s5 + $0x78] sm:$0xff]
        %v6949 = vld [vmem:[%s5 + $0x80] sm:$0xff]
        %v6950 = vld [vmem:[%s5 + $0x88] sm:$0xff]
        %v6951 = vld [vmem:[%s5 + $0x90] sm:$0xff]
        %v6952 = vld [vmem:[%s5 + $0x98] sm:$0xff]
        %v6953 = vld [vmem:[%s5 + $0xa0] sm:$0xff]
        %v6954 = vld [vmem:[%s5 + $0xa8] sm:$0xff]
        %v6955 = vld [vmem:[%s5 + $0xb0] sm:$0xff]
        %v6956 = vld [vmem:[%s5 + $0xb8] sm:$0xff]
        %v6957 = vld [vmem:[%s5 + $0xc0] sm:$0xff]
        %v6958 = vld [vmem:[%s5 + $0xc8] sm:$0xff]
        %v6959 = vld [vmem:[%s5 + $0xd0] sm:$0xff]
        %v6960 = vld [vmem:[%s5 + $0xd8] sm:$0xff]
        %v6961 = vld [vmem:[%s5 + $0xe0] sm:$0xff]
        %v6962 = vld [vmem:[%s5 + $0xe8] sm:$0xff]
        %v6963 = vld [vmem:[%s5 + $0xf0] sm:$0xff]
        %v6964 = vld [vmem:[%s5 + $0xf8] sm:$0xff]
        %v6997 = vunpack.c.l.b16 %v6933
        %v6998 = vunpack.c.h.b16 %v6933
        %v6999 = vunpack.c.l.b16 %v6934
        %v7000 = vunpack.c.h.b16 %v6934
        %v7001 = vunpack.c.l.b16 %v6935
        %v7002 = vunpack.c.h.b16 %v6935
        %v7003 = vunpack.c.l.b16 %v6936
        %v7004 = vunpack.c.h.b16 %v6936
        %v7005 = vunpack.c.l.b16 %v6937
        %v7006 = vunpack.c.h.b16 %v6937
        %v7007 = vunpack.c.l.b16 %v6938
        %v7008 = vunpack.c.h.b16 %v6938
        %v7009 = vunpack.c.l.b16 %v6939
        %v7010 = vunpack.c.h.b16 %v6939
        %v7011 = vunpack.c.l.b16 %v6940
        %v7012 = vunpack.c.h.b16 %v6940
        %v7013 = vunpack.c.l.b16 %v6941
        %v7014 = vunpack.c.h.b16 %v6941
        %v7015 = vunpack.c.l.b16 %v6942
        %v7016 = vunpack.c.h.b16 %v6942
        %v7017 = vunpack.c.l.b16 %v6943
        %v7018 = vunpack.c.h.b16 %v6943
        %v7019 = vunpack.c.l.b16 %v6944
        %v7020 = vunpack.c.h.b16 %v6944
        %v7021 = vunpack.c.l.b16 %v6945
        %v7022 = vunpack.c.h.b16 %v6945
        %v7023 = vunpack.c.l.b16 %v6946
        %v7024 = vunpack.c.h.b16 %v6946
        %v7025 = vunpack.c.l.b16 %v6947
        %v7026 = vunpack.c.h.b16 %v6947
        %v7027 = vunpack.c.l.b16 %v6948
        %v7028 = vunpack.c.h.b16 %v6948
        %v7029 = vunpack.c.l.b16 %v6949
        %v7030 = vunpack.c.h.b16 %v6949
        %v7031 = vunpack.c.l.b16 %v6950
        %v7032 = vunpack.c.h.b16 %v6950
        %v7033 = vunpack.c.l.b16 %v6951
        %v7034 = vunpack.c.h.b16 %v6951
        %v7035 = vunpack.c.l.b16 %v6952
        %v7036 = vunpack.c.h.b16 %v6952
        %v7037 = vunpack.c.l.b16 %v6953
        %v7038 = vunpack.c.h.b16 %v6953
        %v7039 = vunpack.c.l.b16 %v6954
        %v7040 = vunpack.c.h.b16 %v6954
        %v7041 = vunpack.c.l.b16 %v6955
        %v7042 = vunpack.c.h.b16 %v6955
        %v7043 = vunpack.c.l.b16 %v6956
        %v7044 = vunpack.c.h.b16 %v6956
        %v7045 = vunpack.c.l.b16 %v6957
        %v7046 = vunpack.c.h.b16 %v6957
        %v7047 = vunpack.c.l.b16 %v6958
        %v7048 = vunpack.c.h.b16 %v6958
        %v7049 = vunpack.c.l.b16 %v6959
        %v7050 = vunpack.c.h.b16 %v6959
        %v7051 = vunpack.c.l.b16 %v6960
        %v7052 = vunpack.c.h.b16 %v6960
        %v7053 = vunpack.c.l.b16 %v6961
        %v7054 = vunpack.c.h.b16 %v6961
        %v7055 = vunpack.c.l.b16 %v6962
        %v7056 = vunpack.c.h.b16 %v6962
        %v7057 = vunpack.c.l.b16 %v6963
        %v7058 = vunpack.c.h.b16 %v6963
        %v7059 = vunpack.c.l.b16 %v6964
        %v7060 = vunpack.c.h.b16 %v6964
        %v7061 = vpack.c.b16 %v7001, %v6997
        %v7062 = vpack.c.b16 %v7002, %v6998
        %v7063 = vpack.c.b16 %v7003, %v6999
        %v7064 = vpack.c.b16 %v7004, %v7000
        %v7065 = vpack.c.b16 %v7009, %v7005
        %v7066 = vpack.c.b16 %v7010, %v7006
        %v7067 = vpack.c.b16 %v7011, %v7007
        %v7068 = vpack.c.b16 %v7012, %v7008
        %v7069 = vpack.c.b16 %v7017, %v7013
        %v7070 = vpack.c.b16 %v7018, %v7014
        %v7071 = vpack.c.b16 %v7019, %v7015
        %v7072 = vpack.c.b16 %v7020, %v7016
        %v7073 = vpack.c.b16 %v7025, %v7021
        %v7074 = vpack.c.b16 %v7026, %v7022
        %v7075 = vpack.c.b16 %v7027, %v7023
        %v7076 = vpack.c.b16 %v7028, %v7024
        %v7077 = vpack.c.b16 %v7033, %v7029
        %v7078 = vpack.c.b16 %v7034, %v7030
        %v7079 = vpack.c.b16 %v7035, %v7031
        %v7080 = vpack.c.b16 %v7036, %v7032
        %v7081 = vpack.c.b16 %v7041, %v7037
        %v7082 = vpack.c.b16 %v7042, %v7038
        %v7083 = vpack.c.b16 %v7043, %v7039
        %v7084 = vpack.c.b16 %v7044, %v7040
        %v7085 = vpack.c.b16 %v7049, %v7045
        %v7086 = vpack.c.b16 %v7050, %v7046
        %v7087 = vpack.c.b16 %v7051, %v7047
        %v7088 = vpack.c.b16 %v7052, %v7048
        %v7089 = vpack.c.b16 %v7057, %v7053
        %v7090 = vpack.c.b16 %v7058, %v7054
        %v7091 = vpack.c.b16 %v7059, %v7055
        %v7092 = vpack.c.b16 %v7060, %v7056
        %7125 = vmatprep.subr.bf16.mxu0 %v7090
        %7126 = vmatpush1.bf16.msra.mxu0 %v7089
        %7127 = vmatprep.subr.bf16.mxu0 %v7086
        %7128 = vmatpush1.bf16.msra.mxu0 %v7085
        %7129 = vmatprep.subr.bf16.mxu0 %v7082
        %7130 = vmatpush1.bf16.msra.mxu0 %v7081
        %7131 = vmatprep.subr.bf16.mxu0 %v7078
        %7132 = vmatpush1.bf16.msra.mxu0 %v7077
        %7133 = vmatprep.subr.bf16.mxu0 %v7074
        %7134 = vmatpush1.bf16.msra.mxu0 %v7073
        %7135 = vmatprep.subr.bf16.mxu0 %v7070
        %7136 = vmatpush1.bf16.msra.mxu0 %v7069
        %7137 = vmatprep.subr.bf16.mxu0 %v7066
        %7138 = vmatpush1.bf16.msra.mxu0 %v7065
        %7139 = vmatprep.subr.bf16.mxu0 %v7062
        %7140 = vmatpush1.bf16.msra.mxu0 %v7061
        %7141 = vmatprep.subr.bf16.mxu0 0
        %7142 = vmatpush2.bf16.msra.mxu0 0
        %7143 = vmatprep.subr.bf16.mxu0 0
        %7144 = vmatpush2.bf16.msra.mxu0 0
        %7145 = vmatprep.subr.bf16.mxu0 0
        %7146 = vmatpush2.bf16.msra.mxu0 0
        %7147 = vmatprep.subr.bf16.mxu0 0
        %7148 = vmatpush2.bf16.msra.mxu0 0
        %7149 = vmatprep.subr.bf16.mxu0 0
        %7150 = vmatpush2.bf16.msra.mxu0 0
        %7151 = vmatprep.subr.bf16.mxu0 0
        %7152 = vmatpush2.bf16.msra.mxu0 0
        %7153 = vmatprep.subr.bf16.mxu0 0
        %7154 = vmatpush2.bf16.msra.mxu0 0
        %7155 = vmatprep.subr.bf16.mxu0 0
        %7156 = vmatpush2.bf16.msra.mxu0 0
        %7157 = vmatprep.mubr.bf16.mxu0 0
        %7158 = vmatmul.mubr.bf16.gmra.mxu0 %v6917
        %v7159 = vpop.f32.mrf.mxu0
        %v7160 = vadd.f32 0.0, %v7159
        %v7161 = vpop.f32.mrf.mxu0
        %v7162 = vadd.f32 0.0, %v7161
        %v7163 = vpop.f32.mrf.mxu0
        %v7164 = vadd.f32 0.0, %v7163
        %v7165 = vpop.f32.mrf.mxu0
        %v7166 = vadd.f32 0.0, %v7165
        %7167 = vmatprep.mubr.bf16.mxu0 0
        %7168 = vmatmul.mubr.bf16.gmra.mxu0 %v6918
        %v7169 = vpop.f32.mrf.mxu0
        %v7170 = vadd.f32 0.0, %v7169
        %v7171 = vpop.f32.mrf.mxu0
        %v7172 = vadd.f32 0.0, %v7171
        %v7173 = vpop.f32.mrf.mxu0
        %v7174 = vadd.f32 0.0, %v7173
        %v7175 = vpop.f32.mrf.mxu0
        %v7176 = vadd.f32 0.0, %v7175
        %7177 = vmatprep.mubr.bf16.mxu0 0
        %7178 = vmatmul.mubr.bf16.gmra.mxu0 %v6919
        %v7179 = vpop.f32.mrf.mxu0
        %v7180 = vadd.f32 0.0, %v7179
        %v7181 = vpop.f32.mrf.mxu0
        %v7182 = vadd.f32 0.0, %v7181
        %v7183 = vpop.f32.mrf.mxu0
        %v7184 = vadd.f32 0.0, %v7183
        %v7185 = vpop.f32.mrf.mxu0
        %v7186 = vadd.f32 0.0, %v7185
        %7187 = vmatprep.mubr.bf16.mxu0 0
        %7188 = vmatmul.mubr.bf16.gmra.mxu0 %v6920
        %v7189 = vpop.f32.mrf.mxu0
        %v7190 = vadd.f32 0.0, %v7189
        %v7191 = vpop.f32.mrf.mxu0
        %v7192 = vadd.f32 0.0, %v7191
        %v7193 = vpop.f32.mrf.mxu0
        %v7194 = vadd.f32 0.0, %v7193
        %v7195 = vpop.f32.mrf.mxu0
        %v7196 = vadd.f32 0.0, %v7195
        %7197 = vmatprep.mubr.bf16.mxu0 0
        %7198 = vmatmul.mubr.bf16.gmra.mxu0 %v6921
        %v7199 = vpop.f32.mrf.mxu0
        %v7200 = vadd.f32 0.0, %v7199
        %v7201 = vpop.f32.mrf.mxu0
        %v7202 = vadd.f32 0.0, %v7201
        %v7203 = vpop.f32.mrf.mxu0
        %v7204 = vadd.f32 0.0, %v7203
        %v7205 = vpop.f32.mrf.mxu0
        %v7206 = vadd.f32 0.0, %v7205
        %7207 = vmatprep.mubr.bf16.mxu0 0
        %7208 = vmatmul.mubr.bf16.gmra.mxu0 %v6922
        %v7209 = vpop.f32.mrf.mxu0
        %v7210 = vadd.f32 0.0, %v7209
        %v7211 = vpop.f32.mrf.mxu0
        %v7212 = vadd.f32 0.0, %v7211
        %v7213 = vpop.f32.mrf.mxu0
        %v7214 = vadd.f32 0.0, %v7213
        %v7215 = vpop.f32.mrf.mxu0
        %v7216 = vadd.f32 0.0, %v7215
        %7217 = vmatprep.mubr.bf16.mxu0 0
        %7218 = vmatmul.mubr.bf16.gmra.mxu0 %v6923
        %v7219 = vpop.f32.mrf.mxu0
        %v7220 = vadd.f32 0.0, %v7219
        %v7221 = vpop.f32.mrf.mxu0
        %v7222 = vadd.f32 0.0, %v7221
        %v7223 = vpop.f32.mrf.mxu0
        %v7224 = vadd.f32 0.0, %v7223
        %v7225 = vpop.f32.mrf.mxu0
        %v7226 = vadd.f32 0.0, %v7225
        %7227 = vmatprep.mubr.bf16.mxu0 0
        %7228 = vmatmul.mubr.bf16.gmra.mxu0 %v6924
        %v7229 = vpop.f32.mrf.mxu0
        %v7230 = vadd.f32 0.0, %v7229
        %v7231 = vpop.f32.mrf.mxu0
        %v7232 = vadd.f32 0.0, %v7231
        %v7233 = vpop.f32.mrf.mxu0
        %v7234 = vadd.f32 0.0, %v7233
        %v7235 = vpop.f32.mrf.mxu0
        %v7236 = vadd.f32 0.0, %v7235
        %7237 = vmatprep.mubr.bf16.mxu0 0
        %7238 = vmatmul.mubr.bf16.gmra.mxu0 %v6925
        %v7239 = vpop.f32.mrf.mxu0
        %v7240 = vadd.f32 0.0, %v7239
        %v7241 = vpop.f32.mrf.mxu0
        %v7242 = vadd.f32 0.0, %v7241
        %v7243 = vpop.f32.mrf.mxu0
        %v7244 = vadd.f32 0.0, %v7243
        %v7245 = vpop.f32.mrf.mxu0
        %v7246 = vadd.f32 0.0, %v7245
        %7247 = vmatprep.mubr.bf16.mxu0 0
        %7248 = vmatmul.mubr.bf16.gmra.mxu0 %v6926
        %v7249 = vpop.f32.mrf.mxu0
        %v7250 = vadd.f32 0.0, %v7249
        %v7251 = vpop.f32.mrf.mxu0
        %v7252 = vadd.f32 0.0, %v7251
        %v7253 = vpop.f32.mrf.mxu0
        %v7254 = vadd.f32 0.0, %v7253
        %v7255 = vpop.f32.mrf.mxu0
        %v7256 = vadd.f32 0.0, %v7255
        %7257 = vmatprep.mubr.bf16.mxu0 0
        %7258 = vmatmul.mubr.bf16.gmra.mxu0 %v6927
        %v7259 = vpop.f32.mrf.mxu0
        %v7260 = vadd.f32 0.0, %v7259
        %v7261 = vpop.f32.mrf.mxu0
        %v7262 = vadd.f32 0.0, %v7261
        %v7263 = vpop.f32.mrf.mxu0
        %v7264 = vadd.f32 0.0, %v7263
        %v7265 = vpop.f32.mrf.mxu0
        %v7266 = vadd.f32 0.0, %v7265
        %7267 = vmatprep.mubr.bf16.mxu0 0
        %7268 = vmatmul.mubr.bf16.gmra.mxu0 %v6928
        %v7269 = vpop.f32.mrf.mxu0
        %v7270 = vadd.f32 0.0, %v7269
        %v7271 = vpop.f32.mrf.mxu0
        %v7272 = vadd.f32 0.0, %v7271
        %v7273 = vpop.f32.mrf.mxu0
        %v7274 = vadd.f32 0.0, %v7273
        %v7275 = vpop.f32.mrf.mxu0
        %v7276 = vadd.f32 0.0, %v7275
        %7277 = vmatprep.mubr.bf16.mxu0 0
        %7278 = vmatmul.mubr.bf16.gmra.mxu0 %v6929
        %v7279 = vpop.f32.mrf.mxu0
        %v7280 = vadd.f32 0.0, %v7279
        %v7281 = vpop.f32.mrf.mxu0
        %v7282 = vadd.f32 0.0, %v7281
        %v7283 = vpop.f32.mrf.mxu0
        %v7284 = vadd.f32 0.0, %v7283
        %v7285 = vpop.f32.mrf.mxu0
        %v7286 = vadd.f32 0.0, %v7285
        %7287 = vmatprep.mubr.bf16.mxu0 0
        %7288 = vmatmul.mubr.bf16.gmra.mxu0 %v6930
        %v7289 = vpop.f32.mrf.mxu0
        %v7290 = vadd.f32 0.0, %v7289
        %v7291 = vpop.f32.mrf.mxu0
        %v7292 = vadd.f32 0.0, %v7291
        %v7293 = vpop.f32.mrf.mxu0
        %v7294 = vadd.f32 0.0, %v7293
        %v7295 = vpop.f32.mrf.mxu0
        %v7296 = vadd.f32 0.0, %v7295
        %7297 = vmatprep.mubr.bf16.mxu0 0
        %7298 = vmatmul.mubr.bf16.gmra.mxu0 %v6931
        %v7299 = vpop.f32.mrf.mxu0
        %v7300 = vadd.f32 0.0, %v7299
        %v7301 = vpop.f32.mrf.mxu0
        %v7302 = vadd.f32 0.0, %v7301
        %v7303 = vpop.f32.mrf.mxu0
        %v7304 = vadd.f32 0.0, %v7303
        %v7305 = vpop.f32.mrf.mxu0
        %v7306 = vadd.f32 0.0, %v7305
        %7307 = vmatprep.mubr.bf16.mxu0 0
        %7308 = vmatmul.mubr.bf16.gmra.mxu0 %v6932
        %v7309 = vpop.f32.mrf.mxu0
        %v7310 = vadd.f32 0.0, %v7309
        %v7311 = vpop.f32.mrf.mxu0
        %v7312 = vadd.f32 0.0, %v7311
        %v7313 = vpop.f32.mrf.mxu0
        %v7314 = vadd.f32 0.0, %v7313
        %v7315 = vpop.f32.mrf.mxu0
        %v7316 = vadd.f32 0.0, %v7315
        %7317 = vdwg.mxu0
        %7318 = vmatprep.subr.bf16.mxu0 %v7092
        %7319 = vmatpush1.bf16.msra.mxu0 %v7091
        %7320 = vmatprep.subr.bf16.mxu0 %v7088
        %7321 = vmatpush1.bf16.msra.mxu0 %v7087
        %7322 = vmatprep.subr.bf16.mxu0 %v7084
        %7323 = vmatpush1.bf16.msra.mxu0 %v7083
        %7324 = vmatprep.subr.bf16.mxu0 %v7080
        %7325 = vmatpush1.bf16.msra.mxu0 %v7079
        %7326 = vmatprep.subr.bf16.mxu0 %v7076
        %7327 = vmatpush1.bf16.msra.mxu0 %v7075
        %7328 = vmatprep.subr.bf16.mxu0 %v7072
        %7329 = vmatpush1.bf16.msra.mxu0 %v7071
        %7330 = vmatprep.subr.bf16.mxu0 %v7068
        %7331 = vmatpush1.bf16.msra.mxu0 %v7067
        %7332 = vmatprep.subr.bf16.mxu0 %v7064
        %7333 = vmatpush1.bf16.msra.mxu0 %v7063
        %7334 = vmatprep.subr.bf16.mxu0 0
        %7335 = vmatpush2.bf16.msra.mxu0 0
        %7336 = vmatprep.subr.bf16.mxu0 0
        %7337 = vmatpush2.bf16.msra.mxu0 0
        %7338 = vmatprep.subr.bf16.mxu0 0
        %7339 = vmatpush2.bf16.msra.mxu0 0
        %7340 = vmatprep.subr.bf16.mxu0 0
        %7341 = vmatpush2.bf16.msra.mxu0 0
        %7342 = vmatprep.subr.bf16.mxu0 0
        %7343 = vmatpush2.bf16.msra.mxu0 0
        %7344 = vmatprep.subr.bf16.mxu0 0
        %7345 = vmatpush2.bf16.msra.mxu0 0
        %7346 = vmatprep.subr.bf16.mxu0 0
        %7347 = vmatpush2.bf16.msra.mxu0 0
        %7348 = vmatprep.subr.bf16.mxu0 0
        %7349 = vmatpush2.bf16.msra.mxu0 0
        %7350 = vmatprep.mubr.bf16.mxu0 0
        %7351 = vmatmul.mubr.bf16.gmra.mxu0 %v6917
        %v7352 = vpop.f32.mrf.mxu0
        %v7353 = vadd.f32 0.0, %v7352
        %v7354 = vpop.f32.mrf.mxu0
        %v7355 = vadd.f32 0.0, %v7354
        %v7356 = vpop.f32.mrf.mxu0
        %v7357 = vadd.f32 0.0, %v7356
        %v7358 = vpop.f32.mrf.mxu0
        %v7359 = vadd.f32 0.0, %v7358
        %7360 = vmatprep.mubr.bf16.mxu0 0
        %7361 = vmatmul.mubr.bf16.gmra.mxu0 %v6918
        %v7362 = vpop.f32.mrf.mxu0
        %v7363 = vadd.f32 0.0, %v7362
        %v7364 = vpop.f32.mrf.mxu0
        %v7365 = vadd.f32 0.0, %v7364
        %v7366 = vpop.f32.mrf.mxu0
        %v7367 = vadd.f32 0.0, %v7366
        %v7368 = vpop.f32.mrf.mxu0
        %v7369 = vadd.f32 0.0, %v7368
        %7370 = vmatprep.mubr.bf16.mxu0 0
        %7371 = vmatmul.mubr.bf16.gmra.mxu0 %v6919
        %v7372 = vpop.f32.mrf.mxu0
        %v7373 = vadd.f32 0.0, %v7372
        %v7374 = vpop.f32.mrf.mxu0
        %v7375 = vadd.f32 0.0, %v7374
        %v7376 = vpop.f32.mrf.mxu0
        %v7377 = vadd.f32 0.0, %v7376
        %v7378 = vpop.f32.mrf.mxu0
        %v7379 = vadd.f32 0.0, %v7378
        %7380 = vmatprep.mubr.bf16.mxu0 0
        %7381 = vmatmul.mubr.bf16.gmra.mxu0 %v6920
        %v7382 = vpop.f32.mrf.mxu0
        %v7383 = vadd.f32 0.0, %v7382
        %v7384 = vpop.f32.mrf.mxu0
        %v7385 = vadd.f32 0.0, %v7384
        %v7386 = vpop.f32.mrf.mxu0
        %v7387 = vadd.f32 0.0, %v7386
        %v7388 = vpop.f32.mrf.mxu0
        %v7389 = vadd.f32 0.0, %v7388
        %7390 = vmatprep.mubr.bf16.mxu0 0
        %7391 = vmatmul.mubr.bf16.gmra.mxu0 %v6921
        %v7392 = vpop.f32.mrf.mxu0
        %v7393 = vadd.f32 0.0, %v7392
        %v7394 = vpop.f32.mrf.mxu0
        %v7395 = vadd.f32 0.0, %v7394
        %v7396 = vpop.f32.mrf.mxu0
        %v7397 = vadd.f32 0.0, %v7396
        %v7398 = vpop.f32.mrf.mxu0
        %v7399 = vadd.f32 0.0, %v7398
        %7400 = vmatprep.mubr.bf16.mxu0 0
        %7401 = vmatmul.mubr.bf16.gmra.mxu0 %v6922
        %v7402 = vpop.f32.mrf.mxu0
        %v7403 = vadd.f32 0.0, %v7402
        %v7404 = vpop.f32.mrf.mxu0
        %v7405 = vadd.f32 0.0, %v7404
        %v7406 = vpop.f32.mrf.mxu0
        %v7407 = vadd.f32 0.0, %v7406
        %v7408 = vpop.f32.mrf.mxu0
        %v7409 = vadd.f32 0.0, %v7408
        %7410 = vmatprep.mubr.bf16.mxu0 0
        %7411 = vmatmul.mubr.bf16.gmra.mxu0 %v6923
        %v7412 = vpop.f32.mrf.mxu0
        %v7413 = vadd.f32 0.0, %v7412
        %v7414 = vpop.f32.mrf.mxu0
        %v7415 = vadd.f32 0.0, %v7414
        %v7416 = vpop.f32.mrf.mxu0
        %v7417 = vadd.f32 0.0, %v7416
        %v7418 = vpop.f32.mrf.mxu0
        %v7419 = vadd.f32 0.0, %v7418
        %7420 = vmatprep.mubr.bf16.mxu0 0
        %7421 = vmatmul.mubr.bf16.gmra.mxu0 %v6924
        %v7422 = vpop.f32.mrf.mxu0
        %v7423 = vadd.f32 0.0, %v7422
        %v7424 = vpop.f32.mrf.mxu0
        %v7425 = vadd.f32 0.0, %v7424
        %v7426 = vpop.f32.mrf.mxu0
        %v7427 = vadd.f32 0.0, %v7426
        %v7428 = vpop.f32.mrf.mxu0
        %v7429 = vadd.f32 0.0, %v7428
        %7430 = vmatprep.mubr.bf16.mxu0 0
        %7431 = vmatmul.mubr.bf16.gmra.mxu0 %v6925
        %v7432 = vpop.f32.mrf.mxu0
        %v7433 = vadd.f32 0.0, %v7432
        %v7434 = vpop.f32.mrf.mxu0
        %v7435 = vadd.f32 0.0, %v7434
        %v7436 = vpop.f32.mrf.mxu0
        %v7437 = vadd.f32 0.0, %v7436
        %v7438 = vpop.f32.mrf.mxu0
        %v7439 = vadd.f32 0.0, %v7438
        %7440 = vmatprep.mubr.bf16.mxu0 0
        %7441 = vmatmul.mubr.bf16.gmra.mxu0 %v6926
        %v7442 = vpop.f32.mrf.mxu0
        %v7443 = vadd.f32 0.0, %v7442
        %v7444 = vpop.f32.mrf.mxu0
        %v7445 = vadd.f32 0.0, %v7444
        %v7446 = vpop.f32.mrf.mxu0
        %v7447 = vadd.f32 0.0, %v7446
        %v7448 = vpop.f32.mrf.mxu0
        %v7449 = vadd.f32 0.0, %v7448
        %7450 = vmatprep.mubr.bf16.mxu0 0
        %7451 = vmatmul.mubr.bf16.gmra.mxu0 %v6927
        %v7452 = vpop.f32.mrf.mxu0
        %v7453 = vadd.f32 0.0, %v7452
        %v7454 = vpop.f32.mrf.mxu0
        %v7455 = vadd.f32 0.0, %v7454
        %v7456 = vpop.f32.mrf.mxu0
        %v7457 = vadd.f32 0.0, %v7456
        %v7458 = vpop.f32.mrf.mxu0
        %v7459 = vadd.f32 0.0, %v7458
        %7460 = vmatprep.mubr.bf16.mxu0 0
        %7461 = vmatmul.mubr.bf16.gmra.mxu0 %v6928
        %v7462 = vpop.f32.mrf.mxu0
        %v7463 = vadd.f32 0.0, %v7462
        %v7464 = vpop.f32.mrf.mxu0
        %v7465 = vadd.f32 0.0, %v7464
        %v7466 = vpop.f32.mrf.mxu0
        %v7467 = vadd.f32 0.0, %v7466
        %v7468 = vpop.f32.mrf.mxu0
        %v7469 = vadd.f32 0.0, %v7468
        %7470 = vmatprep.mubr.bf16.mxu0 0
        %7471 = vmatmul.mubr.bf16.gmra.mxu0 %v6929
        %v7472 = vpop.f32.mrf.mxu0
        %v7473 = vadd.f32 0.0, %v7472
        %v7474 = vpop.f32.mrf.mxu0
        %v7475 = vadd.f32 0.0, %v7474
        %v7476 = vpop.f32.mrf.mxu0
        %v7477 = vadd.f32 0.0, %v7476
        %v7478 = vpop.f32.mrf.mxu0
        %v7479 = vadd.f32 0.0, %v7478
        %7480 = vmatprep.mubr.bf16.mxu0 0
        %7481 = vmatmul.mubr.bf16.gmra.mxu0 %v6930
        %v7482 = vpop.f32.mrf.mxu0
        %v7483 = vadd.f32 0.0, %v7482
        %v7484 = vpop.f32.mrf.mxu0
        %v7485 = vadd.f32 0.0, %v7484
        %v7486 = vpop.f32.mrf.mxu0
        %v7487 = vadd.f32 0.0, %v7486
        %v7488 = vpop.f32.mrf.mxu0
        %v7489 = vadd.f32 0.0, %v7488
        %7490 = vmatprep.mubr.bf16.mxu0 0
        %7491 = vmatmul.mubr.bf16.gmra.mxu0 %v6931
        %v7492 = vpop.f32.mrf.mxu0
        %v7493 = vadd.f32 0.0, %v7492
        %v7494 = vpop.f32.mrf.mxu0
        %v7495 = vadd.f32 0.0, %v7494
        %v7496 = vpop.f32.mrf.mxu0
        %v7497 = vadd.f32 0.0, %v7496
        %v7498 = vpop.f32.mrf.mxu0
        %v7499 = vadd.f32 0.0, %v7498
        %7500 = vmatprep.mubr.bf16.mxu0 0
        %7501 = vmatmul.mubr.bf16.gmra.mxu0 %v6932
        %v7502 = vpop.f32.mrf.mxu0
        %v7503 = vadd.f32 0.0, %v7502
        %v7504 = vpop.f32.mrf.mxu0
        %v7505 = vadd.f32 0.0, %v7504
        %v7506 = vpop.f32.mrf.mxu0
        %v7507 = vadd.f32 0.0, %v7506
        %v7508 = vpop.f32.mrf.mxu0
        %v7509 = vadd.f32 0.0, %v7508
        %7510 = vdwg.mxu0
        %v7511 = vmul.f32 %v7160, %v7160
        %v7512 = vmul.f32 %v7162, %v7162
        %v7513 = vmul.f32 %v7353, %v7353
        %v7514 = vmul.f32 %v7355, %v7355
        %v7515 = vmul.f32 %v7164, %v7164
        %v7516 = vmul.f32 %v7166, %v7166
        %v7517 = vmul.f32 %v7357, %v7357
        %v7518 = vmul.f32 %v7359, %v7359
        %v7519 = vmul.f32 %v7170, %v7170
        %v7520 = vmul.f32 %v7172, %v7172
        %v7521 = vmul.f32 %v7363, %v7363
        %v7522 = vmul.f32 %v7365, %v7365
        %v7523 = vmul.f32 %v7174, %v7174
        %v7524 = vmul.f32 %v7176, %v7176
        %v7525 = vmul.f32 %v7367, %v7367
        %v7526 = vmul.f32 %v7369, %v7369
        %v7527 = vmul.f32 %v7180, %v7180
        %v7528 = vmul.f32 %v7182, %v7182
        %v7529 = vmul.f32 %v7373, %v7373
        %v7530 = vmul.f32 %v7375, %v7375
        %v7531 = vmul.f32 %v7184, %v7184
        %v7532 = vmul.f32 %v7186, %v7186
        %v7533 = vmul.f32 %v7377, %v7377
        %v7534 = vmul.f32 %v7379, %v7379
        %v7535 = vmul.f32 %v7190, %v7190
        %v7536 = vmul.f32 %v7192, %v7192
        %v7537 = vmul.f32 %v7383, %v7383
        %v7538 = vmul.f32 %v7385, %v7385
        %v7539 = vmul.f32 %v7194, %v7194
        %v7540 = vmul.f32 %v7196, %v7196
        %v7541 = vmul.f32 %v7387, %v7387
        %v7542 = vmul.f32 %v7389, %v7389
        %v7543 = vmul.f32 %v7200, %v7200
        %v7544 = vmul.f32 %v7202, %v7202
        %v7545 = vmul.f32 %v7393, %v7393
        %v7546 = vmul.f32 %v7395, %v7395
        %v7547 = vmul.f32 %v7204, %v7204
        %v7548 = vmul.f32 %v7206, %v7206
        %v7549 = vmul.f32 %v7397, %v7397
        %v7550 = vmul.f32 %v7399, %v7399
        %v7551 = vmul.f32 %v7210, %v7210
        %v7552 = vmul.f32 %v7212, %v7212
        %v7553 = vmul.f32 %v7403, %v7403
        %v7554 = vmul.f32 %v7405, %v7405
        %v7555 = vmul.f32 %v7214, %v7214
        %v7556 = vmul.f32 %v7216, %v7216
        %v7557 = vmul.f32 %v7407, %v7407
        %v7558 = vmul.f32 %v7409, %v7409
        %v7559 = vmul.f32 %v7220, %v7220
        %v7560 = vmul.f32 %v7222, %v7222
        %v7561 = vmul.f32 %v7413, %v7413
        %v7562 = vmul.f32 %v7415, %v7415
        %v7563 = vmul.f32 %v7224, %v7224
        %v7564 = vmul.f32 %v7226, %v7226
        %v7565 = vmul.f32 %v7417, %v7417
        %v7566 = vmul.f32 %v7419, %v7419
        %v7567 = vmul.f32 %v7230, %v7230
        %v7568 = vmul.f32 %v7232, %v7232
        %v7569 = vmul.f32 %v7423, %v7423
        %v7570 = vmul.f32 %v7425, %v7425
        %v7571 = vmul.f32 %v7234, %v7234
        %v7572 = vmul.f32 %v7236, %v7236
        %v7573 = vmul.f32 %v7427, %v7427
        %v7574 = vmul.f32 %v7429, %v7429
        %v7575 = vmul.f32 %v7240, %v7240
        %v7576 = vmul.f32 %v7242, %v7242
        %v7577 = vmul.f32 %v7433, %v7433
        %v7578 = vmul.f32 %v7435, %v7435
        %v7579 = vmul.f32 %v7244, %v7244
        %v7580 = vmul.f32 %v7246, %v7246
        %v7581 = vmul.f32 %v7437, %v7437
        %v7582 = vmul.f32 %v7439, %v7439
        %v7583 = vmul.f32 %v7250, %v7250
        %v7584 = vmul.f32 %v7252, %v7252
        %v7585 = vmul.f32 %v7443, %v7443
        %v7586 = vmul.f32 %v7445, %v7445
        %v7587 = vmul.f32 %v7254, %v7254
        %v7588 = vmul.f32 %v7256, %v7256
        %v7589 = vmul.f32 %v7447, %v7447
        %v7590 = vmul.f32 %v7449, %v7449
        %v7591 = vmul.f32 %v7260, %v7260
        %v7592 = vmul.f32 %v7262, %v7262
        %v7593 = vmul.f32 %v7453, %v7453
        %v7594 = vmul.f32 %v7455, %v7455
        %v7595 = vmul.f32 %v7264, %v7264
        %v7596 = vmul.f32 %v7266, %v7266
        %v7597 = vmul.f32 %v7457, %v7457
        %v7598 = vmul.f32 %v7459, %v7459
        %v7599 = vmul.f32 %v7270, %v7270
        %v7600 = vmul.f32 %v7272, %v7272
        %v7601 = vmul.f32 %v7463, %v7463
        %v7602 = vmul.f32 %v7465, %v7465
        %v7603 = vmul.f32 %v7274, %v7274
        %v7604 = vmul.f32 %v7276, %v7276
        %v7605 = vmul.f32 %v7467, %v7467
        %v7606 = vmul.f32 %v7469, %v7469
        %v7607 = vmul.f32 %v7280, %v7280
        %v7608 = vmul.f32 %v7282, %v7282
        %v7609 = vmul.f32 %v7473, %v7473
        %v7610 = vmul.f32 %v7475, %v7475
        %v7611 = vmul.f32 %v7284, %v7284
        %v7612 = vmul.f32 %v7286, %v7286
        %v7613 = vmul.f32 %v7477, %v7477
        %v7614 = vmul.f32 %v7479, %v7479
        %v7615 = vmul.f32 %v7290, %v7290
        %v7616 = vmul.f32 %v7292, %v7292
        %v7617 = vmul.f32 %v7483, %v7483
        %v7618 = vmul.f32 %v7485, %v7485
        %v7619 = vmul.f32 %v7294, %v7294
        %v7620 = vmul.f32 %v7296, %v7296
        %v7621 = vmul.f32 %v7487, %v7487
        %v7622 = vmul.f32 %v7489, %v7489
        %v7623 = vmul.f32 %v7300, %v7300
        %v7624 = vmul.f32 %v7302, %v7302
        %v7625 = vmul.f32 %v7493, %v7493
        %v7626 = vmul.f32 %v7495, %v7495
        %v7627 = vmul.f32 %v7304, %v7304
        %v7628 = vmul.f32 %v7306, %v7306
        %v7629 = vmul.f32 %v7497, %v7497
        %v7630 = vmul.f32 %v7499, %v7499
        %v7631 = vmul.f32 %v7310, %v7310
        %v7632 = vmul.f32 %v7312, %v7312
        %v7633 = vmul.f32 %v7503, %v7503
        %v7634 = vmul.f32 %v7505, %v7505
        %v7635 = vmul.f32 %v7314, %v7314
        %v7636 = vmul.f32 %v7316, %v7316
        %v7637 = vmul.f32 %v7507, %v7507
        %v7638 = vmul.f32 %v7509, %v7509
        %v7639 = vmul.f32 %v7160, %v7511
        %v7640 = vmul.f32 %v7162, %v7512
        %v7641 = vmul.f32 %v7353, %v7513
        %v7642 = vmul.f32 %v7355, %v7514
        %v7643 = vmul.f32 %v7164, %v7515
        %v7644 = vmul.f32 %v7166, %v7516
        %v7645 = vmul.f32 %v7357, %v7517
        %v7646 = vmul.f32 %v7359, %v7518
        %v7647 = vmul.f32 %v7170, %v7519
        %v7648 = vmul.f32 %v7172, %v7520
        %v7649 = vmul.f32 %v7363, %v7521
        %v7650 = vmul.f32 %v7365, %v7522
        %v7651 = vmul.f32 %v7174, %v7523
        %v7652 = vmul.f32 %v7176, %v7524
        %v7653 = vmul.f32 %v7367, %v7525
        %v7654 = vmul.f32 %v7369, %v7526
        %v7655 = vmul.f32 %v7180, %v7527
        %v7656 = vmul.f32 %v7182, %v7528
        %v7657 = vmul.f32 %v7373, %v7529
        %v7658 = vmul.f32 %v7375, %v7530
        %v7659 = vmul.f32 %v7184, %v7531
        %v7660 = vmul.f32 %v7186, %v7532
        %v7661 = vmul.f32 %v7377, %v7533
        %v7662 = vmul.f32 %v7379, %v7534
        %v7663 = vmul.f32 %v7190, %v7535
        %v7664 = vmul.f32 %v7192, %v7536
        %v7665 = vmul.f32 %v7383, %v7537
        %v7666 = vmul.f32 %v7385, %v7538
        %v7667 = vmul.f32 %v7194, %v7539
        %v7668 = vmul.f32 %v7196, %v7540
        %v7669 = vmul.f32 %v7387, %v7541
        %v7670 = vmul.f32 %v7389, %v7542
        %v7671 = vmul.f32 %v7200, %v7543
        %v7672 = vmul.f32 %v7202, %v7544
        %v7673 = vmul.f32 %v7393, %v7545
        %v7674 = vmul.f32 %v7395, %v7546
        %v7675 = vmul.f32 %v7204, %v7547
        %v7676 = vmul.f32 %v7206, %v7548
        %v7677 = vmul.f32 %v7397, %v7549
        %v7678 = vmul.f32 %v7399, %v7550
        %v7679 = vmul.f32 %v7210, %v7551
        %v7680 = vmul.f32 %v7212, %v7552
        %v7681 = vmul.f32 %v7403, %v7553
        %v7682 = vmul.f32 %v7405, %v7554
        %v7683 = vmul.f32 %v7214, %v7555
        %v7684 = vmul.f32 %v7216, %v7556
        %v7685 = vmul.f32 %v7407, %v7557
        %v7686 = vmul.f32 %v7409, %v7558
        %v7687 = vmul.f32 %v7220, %v7559
        %v7688 = vmul.f32 %v7222, %v7560
        %v7689 = vmul.f32 %v7413, %v7561
        %v7690 = vmul.f32 %v7415, %v7562
        %v7691 = vmul.f32 %v7224, %v7563
        %v7692 = vmul.f32 %v7226, %v7564
        %v7693 = vmul.f32 %v7417, %v7565
        %v7694 = vmul.f32 %v7419, %v7566
        %v7695 = vmul.f32 %v7230, %v7567
        %v7696 = vmul.f32 %v7232, %v7568
        %v7697 = vmul.f32 %v7423, %v7569
        %v7698 = vmul.f32 %v7425, %v7570
        %v7699 = vmul.f32 %v7234, %v7571
        %v7700 = vmul.f32 %v7236, %v7572
        %v7701 = vmul.f32 %v7427, %v7573
        %v7702 = vmul.f32 %v7429, %v7574
        %v7703 = vmul.f32 %v7240, %v7575
        %v7704 = vmul.f32 %v7242, %v7576
        %v7705 = vmul.f32 %v7433, %v7577
        %v7706 = vmul.f32 %v7435, %v7578
        %v7707 = vmul.f32 %v7244, %v7579
        %v7708 = vmul.f32 %v7246, %v7580
        %v7709 = vmul.f32 %v7437, %v7581
        %v7710 = vmul.f32 %v7439, %v7582
        %v7711 = vmul.f32 %v7250, %v7583
        %v7712 = vmul.f32 %v7252, %v7584
        %v7713 = vmul.f32 %v7443, %v7585
        %v7714 = vmul.f32 %v7445, %v7586
        %v7715 = vmul.f32 %v7254, %v7587
        %v7716 = vmul.f32 %v7256, %v7588
        %v7717 = vmul.f32 %v7447, %v7589
        %v7718 = vmul.f32 %v7449, %v7590
        %v7719 = vmul.f32 %v7260, %v7591
        %v7720 = vmul.f32 %v7262, %v7592
        %v7721 = vmul.f32 %v7453, %v7593
        %v7722 = vmul.f32 %v7455, %v7594
        %v7723 = vmul.f32 %v7264, %v7595
        %v7724 = vmul.f32 %v7266, %v7596
        %v7725 = vmul.f32 %v7457, %v7597
        %v7726 = vmul.f32 %v7459, %v7598
        %v7727 = vmul.f32 %v7270, %v7599
        %v7728 = vmul.f32 %v7272, %v7600
        %v7729 = vmul.f32 %v7463, %v7601
        %v7730 = vmul.f32 %v7465, %v7602
        %v7731 = vmul.f32 %v7274, %v7603
        %v7732 = vmul.f32 %v7276, %v7604
        %v7733 = vmul.f32 %v7467, %v7605
        %v7734 = vmul.f32 %v7469, %v7606
        %v7735 = vmul.f32 %v7280, %v7607
        %v7736 = vmul.f32 %v7282, %v7608
        %v7737 = vmul.f32 %v7473, %v7609
        %v7738 = vmul.f32 %v7475, %v7610
        %v7739 = vmul.f32 %v7284, %v7611
        %v7740 = vmul.f32 %v7286, %v7612
        %v7741 = vmul.f32 %v7477, %v7613
        %v7742 = vmul.f32 %v7479, %v7614
        %v7743 = vmul.f32 %v7290, %v7615
        %v7744 = vmul.f32 %v7292, %v7616
        %v7745 = vmul.f32 %v7483, %v7617
        %v7746 = vmul.f32 %v7485, %v7618
        %v7747 = vmul.f32 %v7294, %v7619
        %v7748 = vmul.f32 %v7296, %v7620
        %v7749 = vmul.f32 %v7487, %v7621
        %v7750 = vmul.f32 %v7489, %v7622
        %v7751 = vmul.f32 %v7300, %v7623
        %v7752 = vmul.f32 %v7302, %v7624
        %v7753 = vmul.f32 %v7493, %v7625
        %v7754 = vmul.f32 %v7495, %v7626
        %v7755 = vmul.f32 %v7304, %v7627
        %v7756 = vmul.f32 %v7306, %v7628
        %v7757 = vmul.f32 %v7497, %v7629
        %v7758 = vmul.f32 %v7499, %v7630
        %v7759 = vmul.f32 %v7310, %v7631
        %v7760 = vmul.f32 %v7312, %v7632
        %v7761 = vmul.f32 %v7503, %v7633
        %v7762 = vmul.f32 %v7505, %v7634
        %v7763 = vmul.f32 %v7314, %v7635
        %v7764 = vmul.f32 %v7316, %v7636
        %v7765 = vmul.f32 %v7507, %v7637
        %v7766 = vmul.f32 %v7509, %v7638
        %v7767 = vmul.f32 %v7639, 0.044715
        %v7768 = vmul.f32 %v7640, 0.044715
        %v7769 = vmul.f32 %v7641, 0.044715
        %v7770 = vmul.f32 %v7642, 0.044715
        %v7771 = vmul.f32 %v7643, 0.044715
        %v7772 = vmul.f32 %v7644, 0.044715
        %v7773 = vmul.f32 %v7645, 0.044715
        %v7774 = vmul.f32 %v7646, 0.044715
        %v7775 = vmul.f32 %v7647, 0.044715
        %v7776 = vmul.f32 %v7648, 0.044715
        %v7777 = vmul.f32 %v7649, 0.044715
        %v7778 = vmul.f32 %v7650, 0.044715
        %v7779 = vmul.f32 %v7651, 0.044715
        %v7780 = vmul.f32 %v7652, 0.044715
        %v7781 = vmul.f32 %v7653, 0.044715
        %v7782 = vmul.f32 %v7654, 0.044715
        %v7783 = vmul.f32 %v7655, 0.044715
        %v7784 = vmul.f32 %v7656, 0.044715
        %v7785 = vmul.f32 %v7657, 0.044715
        %v7786 = vmul.f32 %v7658, 0.044715
        %v7787 = vmul.f32 %v7659, 0.044715
        %v7788 = vmul.f32 %v7660, 0.044715
        %v7789 = vmul.f32 %v7661, 0.044715
        %v7790 = vmul.f32 %v7662, 0.044715
        %v7791 = vmul.f32 %v7663, 0.044715
        %v7792 = vmul.f32 %v7664, 0.044715
        %v7793 = vmul.f32 %v7665, 0.044715
        %v7794 = vmul.f32 %v7666, 0.044715
        %v7795 = vmul.f32 %v7667, 0.044715
        %v7796 = vmul.f32 %v7668, 0.044715
        %v7797 = vmul.f32 %v7669, 0.044715
        %v7798 = vmul.f32 %v7670, 0.044715
        %v7799 = vmul.f32 %v7671, 0.044715
        %v7800 = vmul.f32 %v7672, 0.044715
        %v7801 = vmul.f32 %v7673, 0.044715
        %v7802 = vmul.f32 %v7674, 0.044715
        %v7803 = vmul.f32 %v7675, 0.044715
        %v7804 = vmul.f32 %v7676, 0.044715
        %v7805 = vmul.f32 %v7677, 0.044715
        %v7806 = vmul.f32 %v7678, 0.044715
        %v7807 = vmul.f32 %v7679, 0.044715
        %v7808 = vmul.f32 %v7680, 0.044715
        %v7809 = vmul.f32 %v7681, 0.044715
        %v7810 = vmul.f32 %v7682, 0.044715
        %v7811 = vmul.f32 %v7683, 0.044715
        %v7812 = vmul.f32 %v7684, 0.044715
        %v7813 = vmul.f32 %v7685, 0.044715
        %v7814 = vmul.f32 %v7686, 0.044715
        %v7815 = vmul.f32 %v7687, 0.044715
        %v7816 = vmul.f32 %v7688, 0.044715
        %v7817 = vmul.f32 %v7689, 0.044715
        %v7818 = vmul.f32 %v7690, 0.044715
        %v7819 = vmul.f32 %v7691, 0.044715
        %v7820 = vmul.f32 %v7692, 0.044715
        %v7821 = vmul.f32 %v7693, 0.044715
        %v7822 = vmul.f32 %v7694, 0.044715
        %v7823 = vmul.f32 %v7695, 0.044715
        %v7824 = vmul.f32 %v7696, 0.044715
        %v7825 = vmul.f32 %v7697, 0.044715
        %v7826 = vmul.f32 %v7698, 0.044715
        %v7827 = vmul.f32 %v7699, 0.044715
        %v7828 = vmul.f32 %v7700, 0.044715
        %v7829 = vmul.f32 %v7701, 0.044715
        %v7830 = vmul.f32 %v7702, 0.044715
        %v7831 = vmul.f32 %v7703, 0.044715
        %v7832 = vmul.f32 %v7704, 0.044715
        %v7833 = vmul.f32 %v7705, 0.044715
        %v7834 = vmul.f32 %v7706, 0.044715
        %v7835 = vmul.f32 %v7707, 0.044715
        %v7836 = vmul.f32 %v7708, 0.044715
        %v7837 = vmul.f32 %v7709, 0.044715
        %v7838 = vmul.f32 %v7710, 0.044715
        %v7839 = vmul.f32 %v7711, 0.044715
        %v7840 = vmul.f32 %v7712, 0.044715
        %v7841 = vmul.f32 %v7713, 0.044715
        %v7842 = vmul.f32 %v7714, 0.044715
        %v7843 = vmul.f32 %v7715, 0.044715
        %v7844 = vmul.f32 %v7716, 0.044715
        %v7845 = vmul.f32 %v7717, 0.044715
        %v7846 = vmul.f32 %v7718, 0.044715
        %v7847 = vmul.f32 %v7719, 0.044715
        %v7848 = vmul.f32 %v7720, 0.044715
        %v7849 = vmul.f32 %v7721, 0.044715
        %v7850 = vmul.f32 %v7722, 0.044715
        %v7851 = vmul.f32 %v7723, 0.044715
        %v7852 = vmul.f32 %v7724, 0.044715
        %v7853 = vmul.f32 %v7725, 0.044715
        %v7854 = vmul.f32 %v7726, 0.044715
        %v7855 = vmul.f32 %v7727, 0.044715
        %v7856 = vmul.f32 %v7728, 0.044715
        %v7857 = vmul.f32 %v7729, 0.044715
        %v7858 = vmul.f32 %v7730, 0.044715
        %v7859 = vmul.f32 %v7731, 0.044715
        %v7860 = vmul.f32 %v7732, 0.044715
        %v7861 = vmul.f32 %v7733, 0.044715
        %v7862 = vmul.f32 %v7734, 0.044715
        %v7863 = vmul.f32 %v7735, 0.044715
        %v7864 = vmul.f32 %v7736, 0.044715
        %v7865 = vmul.f32 %v7737, 0.044715
        %v7866 = vmul.f32 %v7738, 0.044715
        %v7867 = vmul.f32 %v7739, 0.044715
        %v7868 = vmul.f32 %v7740, 0.044715
        %v7869 = vmul.f32 %v7741, 0.044715
        %v7870 = vmul.f32 %v7742, 0.044715
        %v7871 = vmul.f32 %v7743, 0.044715
        %v7872 = vmul.f32 %v7744, 0.044715
        %v7873 = vmul.f32 %v7745, 0.044715
        %v7874 = vmul.f32 %v7746, 0.044715
        %v7875 = vmul.f32 %v7747, 0.044715
        %v7876 = vmul.f32 %v7748, 0.044715
        %v7877 = vmul.f32 %v7749, 0.044715
        %v7878 = vmul.f32 %v7750, 0.044715
        %v7879 = vmul.f32 %v7751, 0.044715
        %v7880 = vmul.f32 %v7752, 0.044715
        %v7881 = vmul.f32 %v7753, 0.044715
        %v7882 = vmul.f32 %v7754, 0.044715
        %v7883 = vmul.f32 %v7755, 0.044715
        %v7884 = vmul.f32 %v7756, 0.044715
        %v7885 = vmul.f32 %v7757, 0.044715
        %v7886 = vmul.f32 %v7758, 0.044715
        %v7887 = vmul.f32 %v7759, 0.044715
        %v7888 = vmul.f32 %v7760, 0.044715
        %v7889 = vmul.f32 %v7761, 0.044715
        %v7890 = vmul.f32 %v7762, 0.044715
        %v7891 = vmul.f32 %v7763, 0.044715
        %v7892 = vmul.f32 %v7764, 0.044715
        %v7893 = vmul.f32 %v7765, 0.044715
        %v7894 = vmul.f32 %v7766, 0.044715
        %v7895 = vadd.f32 %v7160, %v7767
        %v7896 = vadd.f32 %v7162, %v7768
        %v7897 = vadd.f32 %v7353, %v7769
        %v7898 = vadd.f32 %v7355, %v7770
        %v7899 = vadd.f32 %v7164, %v7771
        %v7900 = vadd.f32 %v7166, %v7772
        %v7901 = vadd.f32 %v7357, %v7773
        %v7902 = vadd.f32 %v7359, %v7774
        %v7903 = vadd.f32 %v7170, %v7775
        %v7904 = vadd.f32 %v7172, %v7776
        %v7905 = vadd.f32 %v7363, %v7777
        %v7906 = vadd.f32 %v7365, %v7778
        %v7907 = vadd.f32 %v7174, %v7779
        %v7908 = vadd.f32 %v7176, %v7780
        %v7909 = vadd.f32 %v7367, %v7781
        %v7910 = vadd.f32 %v7369, %v7782
        %v7911 = vadd.f32 %v7180, %v7783
        %v7912 = vadd.f32 %v7182, %v7784
        %v7913 = vadd.f32 %v7373, %v7785
        %v7914 = vadd.f32 %v7375, %v7786
        %v7915 = vadd.f32 %v7184, %v7787
        %v7916 = vadd.f32 %v7186, %v7788
        %v7917 = vadd.f32 %v7377, %v7789
        %v7918 = vadd.f32 %v7379, %v7790
        %v7919 = vadd.f32 %v7190, %v7791
        %v7920 = vadd.f32 %v7192, %v7792
        %v7921 = vadd.f32 %v7383, %v7793
        %v7922 = vadd.f32 %v7385, %v7794
        %v7923 = vadd.f32 %v7194, %v7795
        %v7924 = vadd.f32 %v7196, %v7796
        %v7925 = vadd.f32 %v7387, %v7797
        %v7926 = vadd.f32 %v7389, %v7798
        %v7927 = vadd.f32 %v7200, %v7799
        %v7928 = vadd.f32 %v7202, %v7800
        %v7929 = vadd.f32 %v7393, %v7801
        %v7930 = vadd.f32 %v7395, %v7802
        %v7931 = vadd.f32 %v7204, %v7803
        %v7932 = vadd.f32 %v7206, %v7804
        %v7933 = vadd.f32 %v7397, %v7805
        %v7934 = vadd.f32 %v7399, %v7806
        %v7935 = vadd.f32 %v7210, %v7807
        %v7936 = vadd.f32 %v7212, %v7808
        %v7937 = vadd.f32 %v7403, %v7809
        %v7938 = vadd.f32 %v7405, %v7810
        %v7939 = vadd.f32 %v7214, %v7811
        %v7940 = vadd.f32 %v7216, %v7812
        %v7941 = vadd.f32 %v7407, %v7813
        %v7942 = vadd.f32 %v7409, %v7814
        %v7943 = vadd.f32 %v7220, %v7815
        %v7944 = vadd.f32 %v7222, %v7816
        %v7945 = vadd.f32 %v7413, %v7817
        %v7946 = vadd.f32 %v7415, %v7818
        %v7947 = vadd.f32 %v7224, %v7819
        %v7948 = vadd.f32 %v7226, %v7820
        %v7949 = vadd.f32 %v7417, %v7821
        %v7950 = vadd.f32 %v7419, %v7822
        %v7951 = vadd.f32 %v7230, %v7823
        %v7952 = vadd.f32 %v7232, %v7824
        %v7953 = vadd.f32 %v7423, %v7825
        %v7954 = vadd.f32 %v7425, %v7826
        %v7955 = vadd.f32 %v7234, %v7827
        %v7956 = vadd.f32 %v7236, %v7828
        %v7957 = vadd.f32 %v7427, %v7829
        %v7958 = vadd.f32 %v7429, %v7830
        %v7959 = vadd.f32 %v7240, %v7831
        %v7960 = vadd.f32 %v7242, %v7832
        %v7961 = vadd.f32 %v7433, %v7833
        %v7962 = vadd.f32 %v7435, %v7834
        %v7963 = vadd.f32 %v7244, %v7835
        %v7964 = vadd.f32 %v7246, %v7836
        %v7965 = vadd.f32 %v7437, %v7837
        %v7966 = vadd.f32 %v7439, %v7838
        %v7967 = vadd.f32 %v7250, %v7839
        %v7968 = vadd.f32 %v7252, %v7840
        %v7969 = vadd.f32 %v7443, %v7841
        %v7970 = vadd.f32 %v7445, %v7842
        %v7971 = vadd.f32 %v7254, %v7843
        %v7972 = vadd.f32 %v7256, %v7844
        %v7973 = vadd.f32 %v7447, %v7845
        %v7974 = vadd.f32 %v7449, %v7846
        %v7975 = vadd.f32 %v7260, %v7847
        %v7976 = vadd.f32 %v7262, %v7848
        %v7977 = vadd.f32 %v7453, %v7849
        %v7978 = vadd.f32 %v7455, %v7850
        %v7979 = vadd.f32 %v7264, %v7851
        %v7980 = vadd.f32 %v7266, %v7852
        %v7981 = vadd.f32 %v7457, %v7853
        %v7982 = vadd.f32 %v7459, %v7854
        %v7983 = vadd.f32 %v7270, %v7855
        %v7984 = vadd.f32 %v7272, %v7856
        %v7985 = vadd.f32 %v7463, %v7857
        %v7986 = vadd.f32 %v7465, %v7858
        %v7987 = vadd.f32 %v7274, %v7859
        %v7988 = vadd.f32 %v7276, %v7860
        %v7989 = vadd.f32 %v7467, %v7861
        %v7990 = vadd.f32 %v7469, %v7862
        %v7991 = vadd.f32 %v7280, %v7863
        %v7992 = vadd.f32 %v7282, %v7864
        %v7993 = vadd.f32 %v7473, %v7865
        %v7994 = vadd.f32 %v7475, %v7866
        %v7995 = vadd.f32 %v7284, %v7867
        %v7996 = vadd.f32 %v7286, %v7868
        %v7997 = vadd.f32 %v7477, %v7869
        %v7998 = vadd.f32 %v7479, %v7870
        %v7999 = vadd.f32 %v7290, %v7871
        %v8000 = vadd.f32 %v7292, %v7872
        %v8001 = vadd.f32 %v7483, %v7873
        %v8002 = vadd.f32 %v7485, %v7874
        %v8003 = vadd.f32 %v7294, %v7875
        %v8004 = vadd.f32 %v7296, %v7876
        %v8005 = vadd.f32 %v7487, %v7877
        %v8006 = vadd.f32 %v7489, %v7878
        %v8007 = vadd.f32 %v7300, %v7879
        %v8008 = vadd.f32 %v7302, %v7880
        %v8009 = vadd.f32 %v7493, %v7881
        %v8010 = vadd.f32 %v7495, %v7882
        %v8011 = vadd.f32 %v7304, %v7883
        %v8012 = vadd.f32 %v7306, %v7884
        %v8013 = vadd.f32 %v7497, %v7885
        %v8014 = vadd.f32 %v7499, %v7886
        %v8015 = vadd.f32 %v7310, %v7887
        %v8016 = vadd.f32 %v7312, %v7888
        %v8017 = vadd.f32 %v7503, %v7889
        %v8018 = vadd.f32 %v7505, %v7890
        %v8019 = vadd.f32 %v7314, %v7891
        %v8020 = vadd.f32 %v7316, %v7892
        %v8021 = vadd.f32 %v7507, %v7893
        %v8022 = vadd.f32 %v7509, %v7894
        %v8023 = vmul.f32 %v7895, 0.7978846
        %v8024 = vmul.f32 %v7896, 0.7978846
        %v8025 = vmul.f32 %v7897, 0.7978846
        %v8026 = vmul.f32 %v7898, 0.7978846
        %v8027 = vmul.f32 %v7899, 0.7978846
        %v8028 = vmul.f32 %v7900, 0.7978846
        %v8029 = vmul.f32 %v7901, 0.7978846
        %v8030 = vmul.f32 %v7902, 0.7978846
        %v8031 = vmul.f32 %v7903, 0.7978846
        %v8032 = vmul.f32 %v7904, 0.7978846
        %v8033 = vmul.f32 %v7905, 0.7978846
        %v8034 = vmul.f32 %v7906, 0.7978846
        %v8035 = vmul.f32 %v7907, 0.7978846
        %v8036 = vmul.f32 %v7908, 0.7978846
        %v8037 = vmul.f32 %v7909, 0.7978846
        %v8038 = vmul.f32 %v7910, 0.7978846
        %v8039 = vmul.f32 %v7911, 0.7978846
        %v8040 = vmul.f32 %v7912, 0.7978846
        %v8041 = vmul.f32 %v7913, 0.7978846
        %v8042 = vmul.f32 %v7914, 0.7978846
        %v8043 = vmul.f32 %v7915, 0.7978846
        %v8044 = vmul.f32 %v7916, 0.7978846
        %v8045 = vmul.f32 %v7917, 0.7978846
        %v8046 = vmul.f32 %v7918, 0.7978846
        %v8047 = vmul.f32 %v7919, 0.7978846
        %v8048 = vmul.f32 %v7920, 0.7978846
        %v8049 = vmul.f32 %v7921, 0.7978846
        %v8050 = vmul.f32 %v7922, 0.7978846
        %v8051 = vmul.f32 %v7923, 0.7978846
        %v8052 = vmul.f32 %v7924, 0.7978846
        %v8053 = vmul.f32 %v7925, 0.7978846
        %v8054 = vmul.f32 %v7926, 0.7978846
        %v8055 = vmul.f32 %v7927, 0.7978846
        %v8056 = vmul.f32 %v7928, 0.7978846
        %v8057 = vmul.f32 %v7929, 0.7978846
        %v8058 = vmul.f32 %v7930, 0.7978846
        %v8059 = vmul.f32 %v7931, 0.7978846
        %v8060 = vmul.f32 %v7932, 0.7978846
        %v8061 = vmul.f32 %v7933, 0.7978846
        %v8062 = vmul.f32 %v7934, 0.7978846
        %v8063 = vmul.f32 %v7935, 0.7978846
        %v8064 = vmul.f32 %v7936, 0.7978846
        %v8065 = vmul.f32 %v7937, 0.7978846
        %v8066 = vmul.f32 %v7938, 0.7978846
        %v8067 = vmul.f32 %v7939, 0.7978846
        %v8068 = vmul.f32 %v7940, 0.7978846
        %v8069 = vmul.f32 %v7941, 0.7978846
        %v8070 = vmul.f32 %v7942, 0.7978846
        %v8071 = vmul.f32 %v7943, 0.7978846
        %v8072 = vmul.f32 %v7944, 0.7978846
        %v8073 = vmul.f32 %v7945, 0.7978846
        %v8074 = vmul.f32 %v7946, 0.7978846
        %v8075 = vmul.f32 %v7947, 0.7978846
        %v8076 = vmul.f32 %v7948, 0.7978846
        %v8077 = vmul.f32 %v7949, 0.7978846
        %v8078 = vmul.f32 %v7950, 0.7978846
        %v8079 = vmul.f32 %v7951, 0.7978846
        %v8080 = vmul.f32 %v7952, 0.7978846
        %v8081 = vmul.f32 %v7953, 0.7978846
        %v8082 = vmul.f32 %v7954, 0.7978846
        %v8083 = vmul.f32 %v7955, 0.7978846
        %v8084 = vmul.f32 %v7956, 0.7978846
        %v8085 = vmul.f32 %v7957, 0.7978846
        %v8086 = vmul.f32 %v7958, 0.7978846
        %v8087 = vmul.f32 %v7959, 0.7978846
        %v8088 = vmul.f32 %v7960, 0.7978846
        %v8089 = vmul.f32 %v7961, 0.7978846
        %v8090 = vmul.f32 %v7962, 0.7978846
        %v8091 = vmul.f32 %v7963, 0.7978846
        %v8092 = vmul.f32 %v7964, 0.7978846
        %v8093 = vmul.f32 %v7965, 0.7978846
        %v8094 = vmul.f32 %v7966, 0.7978846
        %v8095 = vmul.f32 %v7967, 0.7978846
        %v8096 = vmul.f32 %v7968, 0.7978846
        %v8097 = vmul.f32 %v7969, 0.7978846
        %v8098 = vmul.f32 %v7970, 0.7978846
        %v8099 = vmul.f32 %v7971, 0.7978846
        %v8100 = vmul.f32 %v7972, 0.7978846
        %v8101 = vmul.f32 %v7973, 0.7978846
        %v8102 = vmul.f32 %v7974, 0.7978846
        %v8103 = vmul.f32 %v7975, 0.7978846
        %v8104 = vmul.f32 %v7976, 0.7978846
        %v8105 = vmul.f32 %v7977, 0.7978846
        %v8106 = vmul.f32 %v7978, 0.7978846
        %v8107 = vmul.f32 %v7979, 0.7978846
        %v8108 = vmul.f32 %v7980, 0.7978846
        %v8109 = vmul.f32 %v7981, 0.7978846
        %v8110 = vmul.f32 %v7982, 0.7978846
        %v8111 = vmul.f32 %v7983, 0.7978846
        %v8112 = vmul.f32 %v7984, 0.7978846
        %v8113 = vmul.f32 %v7985, 0.7978846
        %v8114 = vmul.f32 %v7986, 0.7978846
        %v8115 = vmul.f32 %v7987, 0.7978846
        %v8116 = vmul.f32 %v7988, 0.7978846
        %v8117 = vmul.f32 %v7989, 0.7978846
        %v8118 = vmul.f32 %v7990, 0.7978846
        %v8119 = vmul.f32 %v7991, 0.7978846
        %v8120 = vmul.f32 %v7992, 0.7978846
        %v8121 = vmul.f32 %v7993, 0.7978846
        %v8122 = vmul.f32 %v7994, 0.7978846
        %v8123 = vmul.f32 %v7995, 0.7978846
        %v8124 = vmul.f32 %v7996, 0.7978846
        %v8125 = vmul.f32 %v7997, 0.7978846
        %v8126 = vmul.f32 %v7998, 0.7978846
        %v8127 = vmul.f32 %v7999, 0.7978846
        %v8128 = vmul.f32 %v8000, 0.7978846
        %v8129 = vmul.f32 %v8001, 0.7978846
        %v8130 = vmul.f32 %v8002, 0.7978846
        %v8131 = vmul.f32 %v8003, 0.7978846
        %v8132 = vmul.f32 %v8004, 0.7978846
        %v8133 = vmul.f32 %v8005, 0.7978846
        %v8134 = vmul.f32 %v8006, 0.7978846
        %v8135 = vmul.f32 %v8007, 0.7978846
        %v8136 = vmul.f32 %v8008, 0.7978846
        %v8137 = vmul.f32 %v8009, 0.7978846
        %v8138 = vmul.f32 %v8010, 0.7978846
        %v8139 = vmul.f32 %v8011, 0.7978846
        %v8140 = vmul.f32 %v8012, 0.7978846
        %v8141 = vmul.f32 %v8013, 0.7978846
        %v8142 = vmul.f32 %v8014, 0.7978846
        %v8143 = vmul.f32 %v8015, 0.7978846
        %v8144 = vmul.f32 %v8016, 0.7978846
        %v8145 = vmul.f32 %v8017, 0.7978846
        %v8146 = vmul.f32 %v8018, 0.7978846
        %v8147 = vmul.f32 %v8019, 0.7978846
        %v8148 = vmul.f32 %v8020, 0.7978846
        %v8149 = vmul.f32 %v8021, 0.7978846
        %v8150 = vmul.f32 %v8022, 0.7978846
        %v8151 = vtanh.pop %v8023
        %v8152 = vtanh.pop %v8024
        %v8153 = vtanh.pop %v8025
        %v8154 = vtanh.pop %v8026
        %v8155 = vtanh.pop %v8027
        %v8156 = vtanh.pop %v8028
        %v8157 = vtanh.pop %v8029
        %v8158 = vtanh.pop %v8030
        %v8159 = vtanh.pop %v8031
        %v8160 = vtanh.pop %v8032
        %v8161 = vtanh.pop %v8033
        %v8162 = vtanh.pop %v8034
        %v8163 = vtanh.pop %v8035
        %v8164 = vtanh.pop %v8036
        %v8165 = vtanh.pop %v8037
        %v8166 = vtanh.pop %v8038
        %v8167 = vtanh.pop %v8039
        %v8168 = vtanh.pop %v8040
        %v8169 = vtanh.pop %v8041
        %v8170 = vtanh.pop %v8042
        %v8171 = vtanh.pop %v8043
        %v8172 = vtanh.pop %v8044
        %v8173 = vtanh.pop %v8045
        %v8174 = vtanh.pop %v8046
        %v8175 = vtanh.pop %v8047
        %v8176 = vtanh.pop %v8048
        %v8177 = vtanh.pop %v8049
        %v8178 = vtanh.pop %v8050
        %v8179 = vtanh.pop %v8051
        %v8180 = vtanh.pop %v8052
        %v8181 = vtanh.pop %v8053
        %v8182 = vtanh.pop %v8054
        %v8183 = vtanh.pop %v8055
        %v8184 = vtanh.pop %v8056
        %v8185 = vtanh.pop %v8057
        %v8186 = vtanh.pop %v8058
        %v8187 = vtanh.pop %v8059
        %v8188 = vtanh.pop %v8060
        %v8189 = vtanh.pop %v8061
        %v8190 = vtanh.pop %v8062
        %v8191 = vtanh.pop %v8063
        %v8192 = vtanh.pop %v8064
        %v8193 = vtanh.pop %v8065
        %v8194 = vtanh.pop %v8066
        %v8195 = vtanh.pop %v8067
        %v8196 = vtanh.pop %v8068
        %v8197 = vtanh.pop %v8069
        %v8198 = vtanh.pop %v8070
        %v8199 = vtanh.pop %v8071
        %v8200 = vtanh.pop %v8072
        %v8201 = vtanh.pop %v8073
        %v8202 = vtanh.pop %v8074
        %v8203 = vtanh.pop %v8075
        %v8204 = vtanh.pop %v8076
        %v8205 = vtanh.pop %v8077
        %v8206 = vtanh.pop %v8078
        %v8207 = vtanh.pop %v8079
        %v8208 = vtanh.pop %v8080
        %v8209 = vtanh.pop %v8081
        %v8210 = vtanh.pop %v8082
        %v8211 = vtanh.pop %v8083
        %v8212 = vtanh.pop %v8084
        %v8213 = vtanh.pop %v8085
        %v8214 = vtanh.pop %v8086
        %v8215 = vtanh.pop %v8087
        %v8216 = vtanh.pop %v8088
        %v8217 = vtanh.pop %v8089
        %v8218 = vtanh.pop %v8090
        %v8219 = vtanh.pop %v8091
        %v8220 = vtanh.pop %v8092
        %v8221 = vtanh.pop %v8093
        %v8222 = vtanh.pop %v8094
        %v8223 = vtanh.pop %v8095
        %v8224 = vtanh.pop %v8096
        %v8225 = vtanh.pop %v8097
        %v8226 = vtanh.pop %v8098
        %v8227 = vtanh.pop %v8099
        %v8228 = vtanh.pop %v8100
        %v8229 = vtanh.pop %v8101
        %v8230 = vtanh.pop %v8102
        %v8231 = vtanh.pop %v8103
        %v8232 = vtanh.pop %v8104
        %v8233 = vtanh.pop %v8105
        %v8234 = vtanh.pop %v8106
        %v8235 = vtanh.pop %v8107
        %v8236 = vtanh.pop %v8108
        %v8237 = vtanh.pop %v8109
        %v8238 = vtanh.pop %v8110
        %v8239 = vtanh.pop %v8111
        %v8240 = vtanh.pop %v8112
        %v8241 = vtanh.pop %v8113
        %v8242 = vtanh.pop %v8114
        %v8243 = vtanh.pop %v8115
        %v8244 = vtanh.pop %v8116
        %v8245 = vtanh.pop %v8117
        %v8246 = vtanh.pop %v8118
        %v8247 = vtanh.pop %v8119
        %v8248 = vtanh.pop %v8120
        %v8249 = vtanh.pop %v8121
        %v8250 = vtanh.pop %v8122
        %v8251 = vtanh.pop %v8123
        %v8252 = vtanh.pop %v8124
        %v8253 = vtanh.pop %v8125
        %v8254 = vtanh.pop %v8126
        %v8255 = vtanh.pop %v8127
        %v8256 = vtanh.pop %v8128
        %v8257 = vtanh.pop %v8129
        %v8258 = vtanh.pop %v8130
        %v8259 = vtanh.pop %v8131
        %v8260 = vtanh.pop %v8132
        %v8261 = vtanh.pop %v8133
        %v8262 = vtanh.pop %v8134
        %v8263 = vtanh.pop %v8135
        %v8264 = vtanh.pop %v8136
        %v8265 = vtanh.pop %v8137
        %v8266 = vtanh.pop %v8138
        %v8267 = vtanh.pop %v8139
        %v8268 = vtanh.pop %v8140
        %v8269 = vtanh.pop %v8141
        %v8270 = vtanh.pop %v8142
        %v8271 = vtanh.pop %v8143
        %v8272 = vtanh.pop %v8144
        %v8273 = vtanh.pop %v8145
        %v8274 = vtanh.pop %v8146
        %v8275 = vtanh.pop %v8147
        %v8276 = vtanh.pop %v8148
        %v8277 = vtanh.pop %v8149
        %v8278 = vtanh.pop %v8150
        %v8279 = vadd.f32 %v8151, 1.0
        %v8280 = vadd.f32 %v8152, 1.0
        %v8281 = vadd.f32 %v8153, 1.0
        %v8282 = vadd.f32 %v8154, 1.0
        %v8283 = vadd.f32 %v8155, 1.0
        %v8284 = vadd.f32 %v8156, 1.0
        %v8285 = vadd.f32 %v8157, 1.0
        %v8286 = vadd.f32 %v8158, 1.0
        %v8287 = vadd.f32 %v8159, 1.0
        %v8288 = vadd.f32 %v8160, 1.0
        %v8289 = vadd.f32 %v8161, 1.0
        %v8290 = vadd.f32 %v8162, 1.0
        %v8291 = vadd.f32 %v8163, 1.0
        %v8292 = vadd.f32 %v8164, 1.0
        %v8293 = vadd.f32 %v8165, 1.0
        %v8294 = vadd.f32 %v8166, 1.0
        %v8295 = vadd.f32 %v8167, 1.0
        %v8296 = vadd.f32 %v8168, 1.0
        %v8297 = vadd.f32 %v8169, 1.0
        %v8298 = vadd.f32 %v8170, 1.0
        %v8299 = vadd.f32 %v8171, 1.0
        %v8300 = vadd.f32 %v8172, 1.0
        %v8301 = vadd.f32 %v8173, 1.0
        %v8302 = vadd.f32 %v8174, 1.0
        %v8303 = vadd.f32 %v8175, 1.0
        %v8304 = vadd.f32 %v8176, 1.0
        %v8305 = vadd.f32 %v8177, 1.0
        %v8306 = vadd.f32 %v8178, 1.0
        %v8307 = vadd.f32 %v8179, 1.0
        %v8308 = vadd.f32 %v8180, 1.0
        %v8309 = vadd.f32 %v8181, 1.0
        %v8310 = vadd.f32 %v8182, 1.0
        %v8311 = vadd.f32 %v8183, 1.0
        %v8312 = vadd.f32 %v8184, 1.0
        %v8313 = vadd.f32 %v8185, 1.0
        %v8314 = vadd.f32 %v8186, 1.0
        %v8315 = vadd.f32 %v8187, 1.0
        %v8316 = vadd.f32 %v8188, 1.0
        %v8317 = vadd.f32 %v8189, 1.0
        %v8318 = vadd.f32 %v8190, 1.0
        %v8319 = vadd.f32 %v8191, 1.0
        %v8320 = vadd.f32 %v8192, 1.0
        %v8321 = vadd.f32 %v8193, 1.0
        %v8322 = vadd.f32 %v8194, 1.0
        %v8323 = vadd.f32 %v8195, 1.0
        %v8324 = vadd.f32 %v8196, 1.0
        %v8325 = vadd.f32 %v8197, 1.0
        %v8326 = vadd.f32 %v8198, 1.0
        %v8327 = vadd.f32 %v8199, 1.0
        %v8328 = vadd.f32 %v8200, 1.0
        %v8329 = vadd.f32 %v8201, 1.0
        %v8330 = vadd.f32 %v8202, 1.0
        %v8331 = vadd.f32 %v8203, 1.0
        %v8332 = vadd.f32 %v8204, 1.0
        %v8333 = vadd.f32 %v8205, 1.0
        %v8334 = vadd.f32 %v8206, 1.0
        %v8335 = vadd.f32 %v8207, 1.0
        %v8336 = vadd.f32 %v8208, 1.0
        %v8337 = vadd.f32 %v8209, 1.0
        %v8338 = vadd.f32 %v8210, 1.0
        %v8339 = vadd.f32 %v8211, 1.0
        %v8340 = vadd.f32 %v8212, 1.0
        %v8341 = vadd.f32 %v8213, 1.0
        %v8342 = vadd.f32 %v8214, 1.0
        %v8343 = vadd.f32 %v8215, 1.0
        %v8344 = vadd.f32 %v8216, 1.0
        %v8345 = vadd.f32 %v8217, 1.0
        %v8346 = vadd.f32 %v8218, 1.0
        %v8347 = vadd.f32 %v8219, 1.0
        %v8348 = vadd.f32 %v8220, 1.0
        %v8349 = vadd.f32 %v8221, 1.0
        %v8350 = vadd.f32 %v8222, 1.0
        %v8351 = vadd.f32 %v8223, 1.0
        %v8352 = vadd.f32 %v8224, 1.0
        %v8353 = vadd.f32 %v8225, 1.0
        %v8354 = vadd.f32 %v8226, 1.0
        %v8355 = vadd.f32 %v8227, 1.0
        %v8356 = vadd.f32 %v8228, 1.0
        %v8357 = vadd.f32 %v8229, 1.0
        %v8358 = vadd.f32 %v8230, 1.0
        %v8359 = vadd.f32 %v8231, 1.0
        %v8360 = vadd.f32 %v8232, 1.0
        %v8361 = vadd.f32 %v8233, 1.0
        %v8362 = vadd.f32 %v8234, 1.0
        %v8363 = vadd.f32 %v8235, 1.0
        %v8364 = vadd.f32 %v8236, 1.0
        %v8365 = vadd.f32 %v8237, 1.0
        %v8366 = vadd.f32 %v8238, 1.0
        %v8367 = vadd.f32 %v8239, 1.0
        %v8368 = vadd.f32 %v8240, 1.0
        %v8369 = vadd.f32 %v8241, 1.0
        %v8370 = vadd.f32 %v8242, 1.0
        %v8371 = vadd.f32 %v8243, 1.0
        %v8372 = vadd.f32 %v8244, 1.0
        %v8373 = vadd.f32 %v8245, 1.0
        %v8374 = vadd.f32 %v8246, 1.0
        %v8375 = vadd.f32 %v8247, 1.0
        %v8376 = vadd.f32 %v8248, 1.0
        %v8377 = vadd.f32 %v8249, 1.0
        %v8378 = vadd.f32 %v8250, 1.0
        %v8379 = vadd.f32 %v8251, 1.0
        %v8380 = vadd.f32 %v8252, 1.0
        %v8381 = vadd.f32 %v8253, 1.0
        %v8382 = vadd.f32 %v8254, 1.0
        %v8383 = vadd.f32 %v8255, 1.0
        %v8384 = vadd.f32 %v8256, 1.0
        %v8385 = vadd.f32 %v8257, 1.0
        %v8386 = vadd.f32 %v8258, 1.0
        %v8387 = vadd.f32 %v8259, 1.0
        %v8388 = vadd.f32 %v8260, 1.0
        %v8389 = vadd.f32 %v8261, 1.0
        %v8390 = vadd.f32 %v8262, 1.0
        %v8391 = vadd.f32 %v8263, 1.0
        %v8392 = vadd.f32 %v8264, 1.0
        %v8393 = vadd.f32 %v8265, 1.0
        %v8394 = vadd.f32 %v8266, 1.0
        %v8395 = vadd.f32 %v8267, 1.0
        %v8396 = vadd.f32 %v8268, 1.0
        %v8397 = vadd.f32 %v8269, 1.0
        %v8398 = vadd.f32 %v8270, 1.0
        %v8399 = vadd.f32 %v8271, 1.0
        %v8400 = vadd.f32 %v8272, 1.0
        %v8401 = vadd.f32 %v8273, 1.0
        %v8402 = vadd.f32 %v8274, 1.0
        %v8403 = vadd.f32 %v8275, 1.0
        %v8404 = vadd.f32 %v8276, 1.0
        %v8405 = vadd.f32 %v8277, 1.0
        %v8406 = vadd.f32 %v8278, 1.0
        %v8407 = vmul.f32 %v8279, 0.5
        %v8408 = vmul.f32 %v8280, 0.5
        %v8409 = vmul.f32 %v8281, 0.5
        %v8410 = vmul.f32 %v8282, 0.5
        %v8411 = vmul.f32 %v8283, 0.5
        %v8412 = vmul.f32 %v8284, 0.5
        %v8413 = vmul.f32 %v8285, 0.5
        %v8414 = vmul.f32 %v8286, 0.5
        %v8415 = vmul.f32 %v8287, 0.5
        %v8416 = vmul.f32 %v8288, 0.5
        %v8417 = vmul.f32 %v8289, 0.5
        %v8418 = vmul.f32 %v8290, 0.5
        %v8419 = vmul.f32 %v8291, 0.5
        %v8420 = vmul.f32 %v8292, 0.5
        %v8421 = vmul.f32 %v8293, 0.5
        %v8422 = vmul.f32 %v8294, 0.5
        %v8423 = vmul.f32 %v8295, 0.5
        %v8424 = vmul.f32 %v8296, 0.5
        %v8425 = vmul.f32 %v8297, 0.5
        %v8426 = vmul.f32 %v8298, 0.5
        %v8427 = vmul.f32 %v8299, 0.5
        %v8428 = vmul.f32 %v8300, 0.5
        %v8429 = vmul.f32 %v8301, 0.5
        %v8430 = vmul.f32 %v8302, 0.5
        %v8431 = vmul.f32 %v8303, 0.5
        %v8432 = vmul.f32 %v8304, 0.5
        %v8433 = vmul.f32 %v8305, 0.5
        %v8434 = vmul.f32 %v8306, 0.5
        %v8435 = vmul.f32 %v8307, 0.5
        %v8436 = vmul.f32 %v8308, 0.5
        %v8437 = vmul.f32 %v8309, 0.5
        %v8438 = vmul.f32 %v8310, 0.5
        %v8439 = vmul.f32 %v8311, 0.5
        %v8440 = vmul.f32 %v8312, 0.5
        %v8441 = vmul.f32 %v8313, 0.5
        %v8442 = vmul.f32 %v8314, 0.5
        %v8443 = vmul.f32 %v8315, 0.5
        %v8444 = vmul.f32 %v8316, 0.5
        %v8445 = vmul.f32 %v8317, 0.5
        %v8446 = vmul.f32 %v8318, 0.5
        %v8447 = vmul.f32 %v8319, 0.5
        %v8448 = vmul.f32 %v8320, 0.5
        %v8449 = vmul.f32 %v8321, 0.5
        %v8450 = vmul.f32 %v8322, 0.5
        %v8451 = vmul.f32 %v8323, 0.5
        %v8452 = vmul.f32 %v8324, 0.5
        %v8453 = vmul.f32 %v8325, 0.5
        %v8454 = vmul.f32 %v8326, 0.5
        %v8455 = vmul.f32 %v8327, 0.5
        %v8456 = vmul.f32 %v8328, 0.5
        %v8457 = vmul.f32 %v8329, 0.5
        %v8458 = vmul.f32 %v8330, 0.5
        %v8459 = vmul.f32 %v8331, 0.5
        %v8460 = vmul.f32 %v8332, 0.5
        %v8461 = vmul.f32 %v8333, 0.5
        %v8462 = vmul.f32 %v8334, 0.5
        %v8463 = vmul.f32 %v8335, 0.5
        %v8464 = vmul.f32 %v8336, 0.5
        %v8465 = vmul.f32 %v8337, 0.5
        %v8466 = vmul.f32 %v8338, 0.5
        %v8467 = vmul.f32 %v8339, 0.5
        %v8468 = vmul.f32 %v8340, 0.5
        %v8469 = vmul.f32 %v8341, 0.5
        %v8470 = vmul.f32 %v8342, 0.5
        %v8471 = vmul.f32 %v8343, 0.5
        %v8472 = vmul.f32 %v8344, 0.5
        %v8473 = vmul.f32 %v8345, 0.5
        %v8474 = vmul.f32 %v8346, 0.5
        %v8475 = vmul.f32 %v8347, 0.5
        %v8476 = vmul.f32 %v8348, 0.5
        %v8477 = vmul.f32 %v8349, 0.5
        %v8478 = vmul.f32 %v8350, 0.5
        %v8479 = vmul.f32 %v8351, 0.5
        %v8480 = vmul.f32 %v8352, 0.5
        %v8481 = vmul.f32 %v8353, 0.5
        %v8482 = vmul.f32 %v8354, 0.5
        %v8483 = vmul.f32 %v8355, 0.5
        %v8484 = vmul.f32 %v8356, 0.5
        %v8485 = vmul.f32 %v8357, 0.5
        %v8486 = vmul.f32 %v8358, 0.5
        %v8487 = vmul.f32 %v8359, 0.5
        %v8488 = vmul.f32 %v8360, 0.5
        %v8489 = vmul.f32 %v8361, 0.5
        %v8490 = vmul.f32 %v8362, 0.5
        %v8491 = vmul.f32 %v8363, 0.5
        %v8492 = vmul.f32 %v8364, 0.5
        %v8493 = vmul.f32 %v8365, 0.5
        %v8494 = vmul.f32 %v8366, 0.5
        %v8495 = vmul.f32 %v8367, 0.5
        %v8496 = vmul.f32 %v8368, 0.5
        %v8497 = vmul.f32 %v8369, 0.5
        %v8498 = vmul.f32 %v8370, 0.5
        %v8499 = vmul.f32 %v8371, 0.5
        %v8500 = vmul.f32 %v8372, 0.5
        %v8501 = vmul.f32 %v8373, 0.5
        %v8502 = vmul.f32 %v8374, 0.5
        %v8503 = vmul.f32 %v8375, 0.5
        %v8504 = vmul.f32 %v8376, 0.5
        %v8505 = vmul.f32 %v8377, 0.5
        %v8506 = vmul.f32 %v8378, 0.5
        %v8507 = vmul.f32 %v8379, 0.5
        %v8508 = vmul.f32 %v8380, 0.5
        %v8509 = vmul.f32 %v8381, 0.5
        %v8510 = vmul.f32 %v8382, 0.5
        %v8511 = vmul.f32 %v8383, 0.5
        %v8512 = vmul.f32 %v8384, 0.5
        %v8513 = vmul.f32 %v8385, 0.5
        %v8514 = vmul.f32 %v8386, 0.5
        %v8515 = vmul.f32 %v8387, 0.5
        %v8516 = vmul.f32 %v8388, 0.5
        %v8517 = vmul.f32 %v8389, 0.5
        %v8518 = vmul.f32 %v8390, 0.5
        %v8519 = vmul.f32 %v8391, 0.5
        %v8520 = vmul.f32 %v8392, 0.5
        %v8521 = vmul.f32 %v8393, 0.5
        %v8522 = vmul.f32 %v8394, 0.5
        %v8523 = vmul.f32 %v8395, 0.5
        %v8524 = vmul.f32 %v8396, 0.5
        %v8525 = vmul.f32 %v8397, 0.5
        %v8526 = vmul.f32 %v8398, 0.5
        %v8527 = vmul.f32 %v8399, 0.5
        %v8528 = vmul.f32 %v8400, 0.5
        %v8529 = vmul.f32 %v8401, 0.5
        %v8530 = vmul.f32 %v8402, 0.5
        %v8531 = vmul.f32 %v8403, 0.5
        %v8532 = vmul.f32 %v8404, 0.5
        %v8533 = vmul.f32 %v8405, 0.5
        %v8534 = vmul.f32 %v8406, 0.5
        %v8535 = vmul.f32 %v7160, %v8407
        %v8536 = vmul.f32 %v7162, %v8408
        %v8537 = vmul.f32 %v7353, %v8409
        %v8538 = vmul.f32 %v7355, %v8410
        %v8539 = vmul.f32 %v7164, %v8411
        %v8540 = vmul.f32 %v7166, %v8412
        %v8541 = vmul.f32 %v7357, %v8413
        %v8542 = vmul.f32 %v7359, %v8414
        %v8543 = vmul.f32 %v7170, %v8415
        %v8544 = vmul.f32 %v7172, %v8416
        %v8545 = vmul.f32 %v7363, %v8417
        %v8546 = vmul.f32 %v7365, %v8418
        %v8547 = vmul.f32 %v7174, %v8419
        %v8548 = vmul.f32 %v7176, %v8420
        %v8549 = vmul.f32 %v7367, %v8421
        %v8550 = vmul.f32 %v7369, %v8422
        %v8551 = vmul.f32 %v7180, %v8423
        %v8552 = vmul.f32 %v7182, %v8424
        %v8553 = vmul.f32 %v7373, %v8425
        %v8554 = vmul.f32 %v7375, %v8426
        %v8555 = vmul.f32 %v7184, %v8427
        %v8556 = vmul.f32 %v7186, %v8428
        %v8557 = vmul.f32 %v7377, %v8429
        %v8558 = vmul.f32 %v7379, %v8430
        %v8559 = vmul.f32 %v7190, %v8431
        %v8560 = vmul.f32 %v7192, %v8432
        %v8561 = vmul.f32 %v7383, %v8433
        %v8562 = vmul.f32 %v7385, %v8434
        %v8563 = vmul.f32 %v7194, %v8435
        %v8564 = vmul.f32 %v7196, %v8436
        %v8565 = vmul.f32 %v7387, %v8437
        %v8566 = vmul.f32 %v7389, %v8438
        %v8567 = vmul.f32 %v7200, %v8439
        %v8568 = vmul.f32 %v7202, %v8440
        %v8569 = vmul.f32 %v7393, %v8441
        %v8570 = vmul.f32 %v7395, %v8442
        %v8571 = vmul.f32 %v7204, %v8443
        %v8572 = vmul.f32 %v7206, %v8444
        %v8573 = vmul.f32 %v7397, %v8445
        %v8574 = vmul.f32 %v7399, %v8446
        %v8575 = vmul.f32 %v7210, %v8447
        %v8576 = vmul.f32 %v7212, %v8448
        %v8577 = vmul.f32 %v7403, %v8449
        %v8578 = vmul.f32 %v7405, %v8450
        %v8579 = vmul.f32 %v7214, %v8451
        %v8580 = vmul.f32 %v7216, %v8452
        %v8581 = vmul.f32 %v7407, %v8453
        %v8582 = vmul.f32 %v7409, %v8454
        %v8583 = vmul.f32 %v7220, %v8455
        %v8584 = vmul.f32 %v7222, %v8456
        %v8585 = vmul.f32 %v7413, %v8457
        %v8586 = vmul.f32 %v7415, %v8458
        %v8587 = vmul.f32 %v7224, %v8459
        %v8588 = vmul.f32 %v7226, %v8460
        %v8589 = vmul.f32 %v7417, %v8461
        %v8590 = vmul.f32 %v7419, %v8462
        %v8591 = vmul.f32 %v7230, %v8463
        %v8592 = vmul.f32 %v7232, %v8464
        %v8593 = vmul.f32 %v7423, %v8465
        %v8594 = vmul.f32 %v7425, %v8466
        %v8595 = vmul.f32 %v7234, %v8467
        %v8596 = vmul.f32 %v7236, %v8468
        %v8597 = vmul.f32 %v7427, %v8469
        %v8598 = vmul.f32 %v7429, %v8470
        %v8599 = vmul.f32 %v7240, %v8471
        %v8600 = vmul.f32 %v7242, %v8472
        %v8601 = vmul.f32 %v7433, %v8473
        %v8602 = vmul.f32 %v7435, %v8474
        %v8603 = vmul.f32 %v7244, %v8475
        %v8604 = vmul.f32 %v7246, %v8476
        %v8605 = vmul.f32 %v7437, %v8477
        %v8606 = vmul.f32 %v7439, %v8478
        %v8607 = vmul.f32 %v7250, %v8479
        %v8608 = vmul.f32 %v7252, %v8480
        %v8609 = vmul.f32 %v7443, %v8481
        %v8610 = vmul.f32 %v7445, %v8482
        %v8611 = vmul.f32 %v7254, %v8483
        %v8612 = vmul.f32 %v7256, %v8484
        %v8613 = vmul.f32 %v7447, %v8485
        %v8614 = vmul.f32 %v7449, %v8486
        %v8615 = vmul.f32 %v7260, %v8487
        %v8616 = vmul.f32 %v7262, %v8488
        %v8617 = vmul.f32 %v7453, %v8489
        %v8618 = vmul.f32 %v7455, %v8490
        %v8619 = vmul.f32 %v7264, %v8491
        %v8620 = vmul.f32 %v7266, %v8492
        %v8621 = vmul.f32 %v7457, %v8493
        %v8622 = vmul.f32 %v7459, %v8494
        %v8623 = vmul.f32 %v7270, %v8495
        %v8624 = vmul.f32 %v7272, %v8496
        %v8625 = vmul.f32 %v7463, %v8497
        %v8626 = vmul.f32 %v7465, %v8498
        %v8627 = vmul.f32 %v7274, %v8499
        %v8628 = vmul.f32 %v7276, %v8500
        %v8629 = vmul.f32 %v7467, %v8501
        %v8630 = vmul.f32 %v7469, %v8502
        %v8631 = vmul.f32 %v7280, %v8503
        %v8632 = vmul.f32 %v7282, %v8504
        %v8633 = vmul.f32 %v7473, %v8505
        %v8634 = vmul.f32 %v7475, %v8506
        %v8635 = vmul.f32 %v7284, %v8507
        %v8636 = vmul.f32 %v7286, %v8508
        %v8637 = vmul.f32 %v7477, %v8509
        %v8638 = vmul.f32 %v7479, %v8510
        %v8639 = vmul.f32 %v7290, %v8511
        %v8640 = vmul.f32 %v7292, %v8512
        %v8641 = vmul.f32 %v7483, %v8513
        %v8642 = vmul.f32 %v7485, %v8514
        %v8643 = vmul.f32 %v7294, %v8515
        %v8644 = vmul.f32 %v7296, %v8516
        %v8645 = vmul.f32 %v7487, %v8517
        %v8646 = vmul.f32 %v7489, %v8518
        %v8647 = vmul.f32 %v7300, %v8519
        %v8648 = vmul.f32 %v7302, %v8520
        %v8649 = vmul.f32 %v7493, %v8521
        %v8650 = vmul.f32 %v7495, %v8522
        %v8651 = vmul.f32 %v7304, %v8523
        %v8652 = vmul.f32 %v7306, %v8524
        %v8653 = vmul.f32 %v7497, %v8525
        %v8654 = vmul.f32 %v7499, %v8526
        %v8655 = vmul.f32 %v7310, %v8527
        %v8656 = vmul.f32 %v7312, %v8528
        %v8657 = vmul.f32 %v7503, %v8529
        %v8658 = vmul.f32 %v7505, %v8530
        %v8659 = vmul.f32 %v7314, %v8531
        %v8660 = vmul.f32 %v7316, %v8532
        %v8661 = vmul.f32 %v7507, %v8533
        %v8662 = vmul.f32 %v7509, %v8534
        %v8663 = vpack.c.bf16 %v8539, %v8535
        %v8664 = vpack.c.bf16 %v8540, %v8536
        %v8665 = vpack.c.bf16 %v8541, %v8537
        %v8666 = vpack.c.bf16 %v8542, %v8538
        %v8667 = vpack.c.bf16 %v8547, %v8543
        %v8668 = vpack.c.bf16 %v8548, %v8544
        %v8669 = vpack.c.bf16 %v8549, %v8545
        %v8670 = vpack.c.bf16 %v8550, %v8546
        %v8671 = vpack.c.bf16 %v8555, %v8551
        %v8672 = vpack.c.bf16 %v8556, %v8552
        %v8673 = vpack.c.bf16 %v8557, %v8553
        %v8674 = vpack.c.bf16 %v8558, %v8554
        %v8675 = vpack.c.bf16 %v8563, %v8559
        %v8676 = vpack.c.bf16 %v8564, %v8560
        %v8677 = vpack.c.bf16 %v8565, %v8561
        %v8678 = vpack.c.bf16 %v8566, %v8562
        %v8679 = vpack.c.bf16 %v8571, %v8567
        %v8680 = vpack.c.bf16 %v8572, %v8568
        %v8681 = vpack.c.bf16 %v8573, %v8569
        %v8682 = vpack.c.bf16 %v8574, %v8570
        %v8683 = vpack.c.bf16 %v8579, %v8575
        %v8684 = vpack.c.bf16 %v8580, %v8576
        %v8685 = vpack.c.bf16 %v8581, %v8577
        %v8686 = vpack.c.bf16 %v8582, %v8578
        %v8687 = vpack.c.bf16 %v8587, %v8583
        %v8688 = vpack.c.bf16 %v8588, %v8584
        %v8689 = vpack.c.bf16 %v8589, %v8585
        %v8690 = vpack.c.bf16 %v8590, %v8586
        %v8691 = vpack.c.bf16 %v8595, %v8591
        %v8692 = vpack.c.bf16 %v8596, %v8592
        %v8693 = vpack.c.bf16 %v8597, %v8593
        %v8694 = vpack.c.bf16 %v8598, %v8594
        %v8695 = vpack.c.bf16 %v8603, %v8599
        %v8696 = vpack.c.bf16 %v8604, %v8600
        %v8697 = vpack.c.bf16 %v8605, %v8601
        %v8698 = vpack.c.bf16 %v8606, %v8602
        %v8699 = vpack.c.bf16 %v8611, %v8607
        %v8700 = vpack.c.bf16 %v8612, %v8608
        %v8701 = vpack.c.bf16 %v8613, %v8609
        %v8702 = vpack.c.bf16 %v8614, %v8610
        %v8703 = vpack.c.bf16 %v8619, %v8615
        %v8704 = vpack.c.bf16 %v8620, %v8616
        %v8705 = vpack.c.bf16 %v8621, %v8617
        %v8706 = vpack.c.bf16 %v8622, %v8618
        %v8707 = vpack.c.bf16 %v8627, %v8623
        %v8708 = vpack.c.bf16 %v8628, %v8624
        %v8709 = vpack.c.bf16 %v8629, %v8625
        %v8710 = vpack.c.bf16 %v8630, %v8626
        %v8711 = vpack.c.bf16 %v8635, %v8631
        %v8712 = vpack.c.bf16 %v8636, %v8632
        %v8713 = vpack.c.bf16 %v8637, %v8633
        %v8714 = vpack.c.bf16 %v8638, %v8634
        %v8715 = vpack.c.bf16 %v8643, %v8639
        %v8716 = vpack.c.bf16 %v8644, %v8640
        %v8717 = vpack.c.bf16 %v8645, %v8641
        %v8718 = vpack.c.bf16 %v8646, %v8642
        %v8719 = vpack.c.bf16 %v8651, %v8647
        %v8720 = vpack.c.bf16 %v8652, %v8648
        %v8721 = vpack.c.bf16 %v8653, %v8649
        %v8722 = vpack.c.bf16 %v8654, %v8650
        %v8723 = vpack.c.bf16 %v8659, %v8655
        %v8724 = vpack.c.bf16 %v8660, %v8656
        %v8725 = vpack.c.bf16 %v8661, %v8657
        %v8726 = vpack.c.bf16 %v8662, %v8658
        %v8727 = vld [vmem:[%s6] sm:$0xf]
        %v8728 = vld [vmem:[%s6 + $0x4] sm:$0xf]
        %v8729 = vld [vmem:[%s6 + $0x8] sm:$0xf]
        %v8730 = vld [vmem:[%s6 + $0xc] sm:$0xf]
        %v8731 = vld [vmem:[%s6 + $0x10] sm:$0xf]
        %v8732 = vld [vmem:[%s6 + $0x14] sm:$0xf]
        %v8733 = vld [vmem:[%s6 + $0x18] sm:$0xf]
        %v8734 = vld [vmem:[%s6 + $0x1c] sm:$0xf]
        %v8735 = vld [vmem:[%s6 + $0x20] sm:$0xf]
        %v8736 = vld [vmem:[%s6 + $0x24] sm:$0xf]
        %v8737 = vld [vmem:[%s6 + $0x28] sm:$0xf]
        %v8738 = vld [vmem:[%s6 + $0x2c] sm:$0xf]
        %v8739 = vld [vmem:[%s6 + $0x30] sm:$0xf]
        %v8740 = vld [vmem:[%s6 + $0x34] sm:$0xf]
        %v8741 = vld [vmem:[%s6 + $0x38] sm:$0xf]
        %v8742 = vld [vmem:[%s6 + $0x3c] sm:$0xf]
        %v8743 = vld [vmem:[%s6 + $0x40] sm:$0xf]
        %v8744 = vld [vmem:[%s6 + $0x44] sm:$0xf]
        %v8745 = vld [vmem:[%s6 + $0x48] sm:$0xf]
        %v8746 = vld [vmem:[%s6 + $0x4c] sm:$0xf]
        %v8747 = vld [vmem:[%s6 + $0x50] sm:$0xf]
        %v8748 = vld [vmem:[%s6 + $0x54] sm:$0xf]
        %v8749 = vld [vmem:[%s6 + $0x58] sm:$0xf]
        %v8750 = vld [vmem:[%s6 + $0x5c] sm:$0xf]
        %v8751 = vld [vmem:[%s6 + $0x60] sm:$0xf]
        %v8752 = vld [vmem:[%s6 + $0x64] sm:$0xf]
        %v8753 = vld [vmem:[%s6 + $0x68] sm:$0xf]
        %v8754 = vld [vmem:[%s6 + $0x6c] sm:$0xf]
        %v8755 = vld [vmem:[%s6 + $0x70] sm:$0xf]
        %v8756 = vld [vmem:[%s6 + $0x74] sm:$0xf]
        %v8757 = vld [vmem:[%s6 + $0x78] sm:$0xf]
        %v8758 = vld [vmem:[%s6 + $0x7c] sm:$0xf]
        %v8759 = vld [vmem:[%s6 + $0x80] sm:$0xf]
        %v8760 = vld [vmem:[%s6 + $0x84] sm:$0xf]
        %v8761 = vld [vmem:[%s6 + $0x88] sm:$0xf]
        %v8762 = vld [vmem:[%s6 + $0x8c] sm:$0xf]
        %v8763 = vld [vmem:[%s6 + $0x90] sm:$0xf]
        %v8764 = vld [vmem:[%s6 + $0x94] sm:$0xf]
        %v8765 = vld [vmem:[%s6 + $0x98] sm:$0xf]
        %v8766 = vld [vmem:[%s6 + $0x9c] sm:$0xf]
        %v8767 = vld [vmem:[%s6 + $0xa0] sm:$0xf]
        %v8768 = vld [vmem:[%s6 + $0xa4] sm:$0xf]
        %v8769 = vld [vmem:[%s6 + $0xa8] sm:$0xf]
        %v8770 = vld [vmem:[%s6 + $0xac] sm:$0xf]
        %v8771 = vld [vmem:[%s6 + $0xb0] sm:$0xf]
        %v8772 = vld [vmem:[%s6 + $0xb4] sm:$0xf]
        %v8773 = vld [vmem:[%s6 + $0xb8] sm:$0xf]
        %v8774 = vld [vmem:[%s6 + $0xbc] sm:$0xf]
        %v8775 = vld [vmem:[%s6 + $0xc0] sm:$0xf]
        %v8776 = vld [vmem:[%s6 + $0xc4] sm:$0xf]
        %v8777 = vld [vmem:[%s6 + $0xc8] sm:$0xf]
        %v8778 = vld [vmem:[%s6 + $0xcc] sm:$0xf]
        %v8779 = vld [vmem:[%s6 + $0xd0] sm:$0xf]
        %v8780 = vld [vmem:[%s6 + $0xd4] sm:$0xf]
        %v8781 = vld [vmem:[%s6 + $0xd8] sm:$0xf]
        %v8782 = vld [vmem:[%s6 + $0xdc] sm:$0xf]
        %v8783 = vld [vmem:[%s6 + $0xe0] sm:$0xf]
        %v8784 = vld [vmem:[%s6 + $0xe4] sm:$0xf]
        %v8785 = vld [vmem:[%s6 + $0xe8] sm:$0xf]
        %v8786 = vld [vmem:[%s6 + $0xec] sm:$0xf]
        %v8787 = vld [vmem:[%s6 + $0xf0] sm:$0xf]
        %v8788 = vld [vmem:[%s6 + $0xf4] sm:$0xf]
        %v8789 = vld [vmem:[%s6 + $0xf8] sm:$0xf]
        %v8790 = vld [vmem:[%s6 + $0xfc] sm:$0xf]
        %v8855 = vunpack.c.l.b16 %v8727
        %v8856 = vunpack.c.l.b16 %v8728
        %v8857 = vunpack.c.l.b16 %v8729
        %v8858 = vunpack.c.l.b16 %v8730
        %v8859 = vunpack.c.l.b16 %v8731
        %v8860 = vunpack.c.l.b16 %v8732
        %v8861 = vunpack.c.l.b16 %v8733
        %v8862 = vunpack.c.l.b16 %v8734
        %v8863 = vunpack.c.l.b16 %v8735
        %v8864 = vunpack.c.l.b16 %v8736
        %v8865 = vunpack.c.l.b16 %v8737
        %v8866 = vunpack.c.l.b16 %v8738
        %v8867 = vunpack.c.l.b16 %v8739
        %v8868 = vunpack.c.l.b16 %v8740
        %v8869 = vunpack.c.l.b16 %v8741
        %v8870 = vunpack.c.l.b16 %v8742
        %v8871 = vunpack.c.l.b16 %v8743
        %v8872 = vunpack.c.l.b16 %v8744
        %v8873 = vunpack.c.l.b16 %v8745
        %v8874 = vunpack.c.l.b16 %v8746
        %v8875 = vunpack.c.l.b16 %v8747
        %v8876 = vunpack.c.l.b16 %v8748
        %v8877 = vunpack.c.l.b16 %v8749
        %v8878 = vunpack.c.l.b16 %v8750
        %v8879 = vunpack.c.l.b16 %v8751
        %v8880 = vunpack.c.l.b16 %v8752
        %v8881 = vunpack.c.l.b16 %v8753
        %v8882 = vunpack.c.l.b16 %v8754
        %v8883 = vunpack.c.l.b16 %v8755
        %v8884 = vunpack.c.l.b16 %v8756
        %v8885 = vunpack.c.l.b16 %v8757
        %v8886 = vunpack.c.l.b16 %v8758
        %v8887 = vunpack.c.l.b16 %v8759
        %v8888 = vunpack.c.l.b16 %v8760
        %v8889 = vunpack.c.l.b16 %v8761
        %v8890 = vunpack.c.l.b16 %v8762
        %v8891 = vunpack.c.l.b16 %v8763
        %v8892 = vunpack.c.l.b16 %v8764
        %v8893 = vunpack.c.l.b16 %v8765
        %v8894 = vunpack.c.l.b16 %v8766
        %v8895 = vunpack.c.l.b16 %v8767
        %v8896 = vunpack.c.l.b16 %v8768
        %v8897 = vunpack.c.l.b16 %v8769
        %v8898 = vunpack.c.l.b16 %v8770
        %v8899 = vunpack.c.l.b16 %v8771
        %v8900 = vunpack.c.l.b16 %v8772
        %v8901 = vunpack.c.l.b16 %v8773
        %v8902 = vunpack.c.l.b16 %v8774
        %v8903 = vunpack.c.l.b16 %v8775
        %v8904 = vunpack.c.l.b16 %v8776
        %v8905 = vunpack.c.l.b16 %v8777
        %v8906 = vunpack.c.l.b16 %v8778
        %v8907 = vunpack.c.l.b16 %v8779
        %v8908 = vunpack.c.l.b16 %v8780
        %v8909 = vunpack.c.l.b16 %v8781
        %v8910 = vunpack.c.l.b16 %v8782
        %v8911 = vunpack.c.l.b16 %v8783
        %v8912 = vunpack.c.l.b16 %v8784
        %v8913 = vunpack.c.l.b16 %v8785
        %v8914 = vunpack.c.l.b16 %v8786
        %v8915 = vunpack.c.l.b16 %v8787
        %v8916 = vunpack.c.l.b16 %v8788
        %v8917 = vunpack.c.l.b16 %v8789
        %v8918 = vunpack.c.l.b16 %v8790
        %v8919 = vpack.c.b16 %v8856, %v8855
        %v8920 = vpack.c.b16 %v8858, %v8857
        %v8921 = vpack.c.b16 %v8860, %v8859
        %v8922 = vpack.c.b16 %v8862, %v8861
        %v8923 = vpack.c.b16 %v8864, %v8863
        %v8924 = vpack.c.b16 %v8866, %v8865
        %v8925 = vpack.c.b16 %v8868, %v8867
        %v8926 = vpack.c.b16 %v8870, %v8869
        %v8927 = vpack.c.b16 %v8872, %v8871
        %v8928 = vpack.c.b16 %v8874, %v8873
        %v8929 = vpack.c.b16 %v8876, %v8875
        %v8930 = vpack.c.b16 %v8878, %v8877
        %v8931 = vpack.c.b16 %v8880, %v8879
        %v8932 = vpack.c.b16 %v8882, %v8881
        %v8933 = vpack.c.b16 %v8884, %v8883
        %v8934 = vpack.c.b16 %v8886, %v8885
        %v8935 = vpack.c.b16 %v8888, %v8887
        %v8936 = vpack.c.b16 %v8890, %v8889
        %v8937 = vpack.c.b16 %v8892, %v8891
        %v8938 = vpack.c.b16 %v8894, %v8893
        %v8939 = vpack.c.b16 %v8896, %v8895
        %v8940 = vpack.c.b16 %v8898, %v8897
        %v8941 = vpack.c.b16 %v8900, %v8899
        %v8942 = vpack.c.b16 %v8902, %v8901
        %v8943 = vpack.c.b16 %v8904, %v8903
        %v8944 = vpack.c.b16 %v8906, %v8905
        %v8945 = vpack.c.b16 %v8908, %v8907
        %v8946 = vpack.c.b16 %v8910, %v8909
        %v8947 = vpack.c.b16 %v8912, %v8911
        %v8948 = vpack.c.b16 %v8914, %v8913
        %v8949 = vpack.c.b16 %v8916, %v8915
        %v8950 = vpack.c.b16 %v8918, %v8917
        %8983 = vmatprep.subr.bf16.mxu0 0
        %8984 = vmatpush1.bf16.msra.mxu0 %v8926
        %8985 = vmatprep.subr.bf16.mxu0 0
        %8986 = vmatpush1.bf16.msra.mxu0 %v8925
        %8987 = vmatprep.subr.bf16.mxu0 0
        %8988 = vmatpush1.bf16.msra.mxu0 %v8924
        %8989 = vmatprep.subr.bf16.mxu0 0
        %8990 = vmatpush1.bf16.msra.mxu0 %v8923
        %8991 = vmatprep.subr.bf16.mxu0 0
        %8992 = vmatpush1.bf16.msra.mxu0 %v8922
        %8993 = vmatprep.subr.bf16.mxu0 0
        %8994 = vmatpush1.bf16.msra.mxu0 %v8921
        %8995 = vmatprep.subr.bf16.mxu0 0
        %8996 = vmatpush1.bf16.msra.mxu0 %v8920
        %8997 = vmatprep.subr.bf16.mxu0 0
        %8998 = vmatpush1.bf16.msra.mxu0 %v8919
        %8999 = vmatprep.subr.bf16.mxu0 0
        %9000 = vmatpush2.bf16.msra.mxu0 %v8934
        %9001 = vmatprep.subr.bf16.mxu0 0
        %9002 = vmatpush2.bf16.msra.mxu0 %v8933
        %9003 = vmatprep.subr.bf16.mxu0 0
        %9004 = vmatpush2.bf16.msra.mxu0 %v8932
        %9005 = vmatprep.subr.bf16.mxu0 0
        %9006 = vmatpush2.bf16.msra.mxu0 %v8931
        %9007 = vmatprep.subr.bf16.mxu0 0
        %9008 = vmatpush2.bf16.msra.mxu0 %v8930
        %9009 = vmatprep.subr.bf16.mxu0 0
        %9010 = vmatpush2.bf16.msra.mxu0 %v8929
        %9011 = vmatprep.subr.bf16.mxu0 0
        %9012 = vmatpush2.bf16.msra.mxu0 %v8928
        %9013 = vmatprep.subr.bf16.mxu0 0
        %9014 = vmatpush2.bf16.msra.mxu0 %v8927
        %9015 = vmatprep.mubr.bf16.mxu0 %v8664
        %9016 = vmatmul.mubr.bf16.gmra.mxu0 %v8663
        %v9017 = vpop.f32.mrf.mxu0
        %v9018 = vadd.f32 0.0, %v9017
        %v9019 = vpop.f32.mrf.mxu0
        %v9020 = vpop.f32.mrf.mxu0
        %v9021 = vadd.f32 0.0, %v9020
        %v9022 = vpop.f32.mrf.mxu0
        %9023 = vmatprep.mubr.bf16.mxu0 %v8668
        %9024 = vmatmul.mubr.bf16.gmra.mxu0 %v8667
        %v9025 = vpop.f32.mrf.mxu0
        %v9026 = vadd.f32 0.0, %v9025
        %v9027 = vpop.f32.mrf.mxu0
        %v9028 = vpop.f32.mrf.mxu0
        %v9029 = vadd.f32 0.0, %v9028
        %v9030 = vpop.f32.mrf.mxu0
        %9031 = vmatprep.mubr.bf16.mxu0 %v8672
        %9032 = vmatmul.mubr.bf16.gmra.mxu0 %v8671
        %v9033 = vpop.f32.mrf.mxu0
        %v9034 = vadd.f32 0.0, %v9033
        %v9035 = vpop.f32.mrf.mxu0
        %v9036 = vpop.f32.mrf.mxu0
        %v9037 = vadd.f32 0.0, %v9036
        %v9038 = vpop.f32.mrf.mxu0
        %9039 = vmatprep.mubr.bf16.mxu0 %v8676
        %9040 = vmatmul.mubr.bf16.gmra.mxu0 %v8675
        %v9041 = vpop.f32.mrf.mxu0
        %v9042 = vadd.f32 0.0, %v9041
        %v9043 = vpop.f32.mrf.mxu0
        %v9044 = vpop.f32.mrf.mxu0
        %v9045 = vadd.f32 0.0, %v9044
        %v9046 = vpop.f32.mrf.mxu0
        %9047 = vmatprep.mubr.bf16.mxu0 %v8680
        %9048 = vmatmul.mubr.bf16.gmra.mxu0 %v8679
        %v9049 = vpop.f32.mrf.mxu0
        %v9050 = vadd.f32 0.0, %v9049
        %v9051 = vpop.f32.mrf.mxu0
        %v9052 = vpop.f32.mrf.mxu0
        %v9053 = vadd.f32 0.0, %v9052
        %v9054 = vpop.f32.mrf.mxu0
        %9055 = vmatprep.mubr.bf16.mxu0 %v8684
        %9056 = vmatmul.mubr.bf16.gmra.mxu0 %v8683
        %v9057 = vpop.f32.mrf.mxu0
        %v9058 = vadd.f32 0.0, %v9057
        %v9059 = vpop.f32.mrf.mxu0
        %v9060 = vpop.f32.mrf.mxu0
        %v9061 = vadd.f32 0.0, %v9060
        %v9062 = vpop.f32.mrf.mxu0
        %9063 = vmatprep.mubr.bf16.mxu0 %v8688
        %9064 = vmatmul.mubr.bf16.gmra.mxu0 %v8687
        %v9065 = vpop.f32.mrf.mxu0
        %v9066 = vadd.f32 0.0, %v9065
        %v9067 = vpop.f32.mrf.mxu0
        %v9068 = vpop.f32.mrf.mxu0
        %v9069 = vadd.f32 0.0, %v9068
        %v9070 = vpop.f32.mrf.mxu0
        %9071 = vmatprep.mubr.bf16.mxu0 %v8692
        %9072 = vmatmul.mubr.bf16.gmra.mxu0 %v8691
        %v9073 = vpop.f32.mrf.mxu0
        %v9074 = vadd.f32 0.0, %v9073
        %v9075 = vpop.f32.mrf.mxu0
        %v9076 = vpop.f32.mrf.mxu0
        %v9077 = vadd.f32 0.0, %v9076
        %v9078 = vpop.f32.mrf.mxu0
        %9079 = vmatprep.mubr.bf16.mxu0 %v8696
        %9080 = vmatmul.mubr.bf16.gmra.mxu0 %v8695
        %v9081 = vpop.f32.mrf.mxu0
        %v9082 = vadd.f32 0.0, %v9081
        %v9083 = vpop.f32.mrf.mxu0
        %v9084 = vpop.f32.mrf.mxu0
        %v9085 = vadd.f32 0.0, %v9084
        %v9086 = vpop.f32.mrf.mxu0
        %9087 = vmatprep.mubr.bf16.mxu0 %v8700
        %9088 = vmatmul.mubr.bf16.gmra.mxu0 %v8699
        %v9089 = vpop.f32.mrf.mxu0
        %v9090 = vadd.f32 0.0, %v9089
        %v9091 = vpop.f32.mrf.mxu0
        %v9092 = vpop.f32.mrf.mxu0
        %v9093 = vadd.f32 0.0, %v9092
        %v9094 = vpop.f32.mrf.mxu0
        %9095 = vmatprep.mubr.bf16.mxu0 %v8704
        %9096 = vmatmul.mubr.bf16.gmra.mxu0 %v8703
        %v9097 = vpop.f32.mrf.mxu0
        %v9098 = vadd.f32 0.0, %v9097
        %v9099 = vpop.f32.mrf.mxu0
        %v9100 = vpop.f32.mrf.mxu0
        %v9101 = vadd.f32 0.0, %v9100
        %v9102 = vpop.f32.mrf.mxu0
        %9103 = vmatprep.mubr.bf16.mxu0 %v8708
        %9104 = vmatmul.mubr.bf16.gmra.mxu0 %v8707
        %v9105 = vpop.f32.mrf.mxu0
        %v9106 = vadd.f32 0.0, %v9105
        %v9107 = vpop.f32.mrf.mxu0
        %v9108 = vpop.f32.mrf.mxu0
        %v9109 = vadd.f32 0.0, %v9108
        %v9110 = vpop.f32.mrf.mxu0
        %9111 = vmatprep.mubr.bf16.mxu0 %v8712
        %9112 = vmatmul.mubr.bf16.gmra.mxu0 %v8711
        %v9113 = vpop.f32.mrf.mxu0
        %v9114 = vadd.f32 0.0, %v9113
        %v9115 = vpop.f32.mrf.mxu0
        %v9116 = vpop.f32.mrf.mxu0
        %v9117 = vadd.f32 0.0, %v9116
        %v9118 = vpop.f32.mrf.mxu0
        %9119 = vmatprep.mubr.bf16.mxu0 %v8716
        %9120 = vmatmul.mubr.bf16.gmra.mxu0 %v8715
        %v9121 = vpop.f32.mrf.mxu0
        %v9122 = vadd.f32 0.0, %v9121
        %v9123 = vpop.f32.mrf.mxu0
        %v9124 = vpop.f32.mrf.mxu0
        %v9125 = vadd.f32 0.0, %v9124
        %v9126 = vpop.f32.mrf.mxu0
        %9127 = vmatprep.mubr.bf16.mxu0 %v8720
        %9128 = vmatmul.mubr.bf16.gmra.mxu0 %v8719
        %v9129 = vpop.f32.mrf.mxu0
        %v9130 = vadd.f32 0.0, %v9129
        %v9131 = vpop.f32.mrf.mxu0
        %v9132 = vpop.f32.mrf.mxu0
        %v9133 = vadd.f32 0.0, %v9132
        %v9134 = vpop.f32.mrf.mxu0
        %9135 = vmatprep.mubr.bf16.mxu0 %v8724
        %9136 = vmatmul.mubr.bf16.gmra.mxu0 %v8723
        %v9137 = vpop.f32.mrf.mxu0
        %v9138 = vadd.f32 0.0, %v9137
        %v9139 = vpop.f32.mrf.mxu0
        %v9140 = vpop.f32.mrf.mxu0
        %v9141 = vadd.f32 0.0, %v9140
        %v9142 = vpop.f32.mrf.mxu0
        %9143 = vdwg.mxu0
        %9144 = vmatprep.subr.bf16.mxu0 0
        %9145 = vmatpush1.bf16.msra.mxu0 %v8942
        %9146 = vmatprep.subr.bf16.mxu0 0
        %9147 = vmatpush1.bf16.msra.mxu0 %v8941
        %9148 = vmatprep.subr.bf16.mxu0 0
        %9149 = vmatpush1.bf16.msra.mxu0 %v8940
        %9150 = vmatprep.subr.bf16.mxu0 0
        %9151 = vmatpush1.bf16.msra.mxu0 %v8939
        %9152 = vmatprep.subr.bf16.mxu0 0
        %9153 = vmatpush1.bf16.msra.mxu0 %v8938
        %9154 = vmatprep.subr.bf16.mxu0 0
        %9155 = vmatpush1.bf16.msra.mxu0 %v8937
        %9156 = vmatprep.subr.bf16.mxu0 0
        %9157 = vmatpush1.bf16.msra.mxu0 %v8936
        %9158 = vmatprep.subr.bf16.mxu0 0
        %9159 = vmatpush1.bf16.msra.mxu0 %v8935
        %9160 = vmatprep.subr.bf16.mxu0 0
        %9161 = vmatpush2.bf16.msra.mxu0 %v8950
        %9162 = vmatprep.subr.bf16.mxu0 0
        %9163 = vmatpush2.bf16.msra.mxu0 %v8949
        %9164 = vmatprep.subr.bf16.mxu0 0
        %9165 = vmatpush2.bf16.msra.mxu0 %v8948
        %9166 = vmatprep.subr.bf16.mxu0 0
        %9167 = vmatpush2.bf16.msra.mxu0 %v8947
        %9168 = vmatprep.subr.bf16.mxu0 0
        %9169 = vmatpush2.bf16.msra.mxu0 %v8946
        %9170 = vmatprep.subr.bf16.mxu0 0
        %9171 = vmatpush2.bf16.msra.mxu0 %v8945
        %9172 = vmatprep.subr.bf16.mxu0 0
        %9173 = vmatpush2.bf16.msra.mxu0 %v8944
        %9174 = vmatprep.subr.bf16.mxu0 0
        %9175 = vmatpush2.bf16.msra.mxu0 %v8943
        %9176 = vmatprep.mubr.bf16.mxu0 %v8666
        %9177 = vmatmul.mubr.bf16.gmra.mxu0 %v8665
        %v9178 = vpop.f32.mrf.mxu0
        %v9179 = vadd.f32 %v9018, %v9178
        %v9180 = vpop.f32.mrf.mxu0
        %v9181 = vpop.f32.mrf.mxu0
        %v9182 = vadd.f32 %v9021, %v9181
        %v9183 = vpop.f32.mrf.mxu0
        %9184 = vmatprep.mubr.bf16.mxu0 %v8670
        %9185 = vmatmul.mubr.bf16.gmra.mxu0 %v8669
        %v9186 = vpop.f32.mrf.mxu0
        %v9187 = vadd.f32 %v9026, %v9186
        %v9188 = vpop.f32.mrf.mxu0
        %v9189 = vpop.f32.mrf.mxu0
        %v9190 = vadd.f32 %v9029, %v9189
        %v9191 = vpop.f32.mrf.mxu0
        %9192 = vmatprep.mubr.bf16.mxu0 %v8674
        %9193 = vmatmul.mubr.bf16.gmra.mxu0 %v8673
        %v9194 = vpop.f32.mrf.mxu0
        %v9195 = vadd.f32 %v9034, %v9194
        %v9196 = vpop.f32.mrf.mxu0
        %v9197 = vpop.f32.mrf.mxu0
        %v9198 = vadd.f32 %v9037, %v9197
        %v9199 = vpop.f32.mrf.mxu0
        %9200 = vmatprep.mubr.bf16.mxu0 %v8678
        %9201 = vmatmul.mubr.bf16.gmra.mxu0 %v8677
        %v9202 = vpop.f32.mrf.mxu0
        %v9203 = vadd.f32 %v9042, %v9202
        %v9204 = vpop.f32.mrf.mxu0
        %v9205 = vpop.f32.mrf.mxu0
        %v9206 = vadd.f32 %v9045, %v9205
        %v9207 = vpop.f32.mrf.mxu0
        %9208 = vmatprep.mubr.bf16.mxu0 %v8682
        %9209 = vmatmul.mubr.bf16.gmra.mxu0 %v8681
        %v9210 = vpop.f32.mrf.mxu0
        %v9211 = vadd.f32 %v9050, %v9210
        %v9212 = vpop.f32.mrf.mxu0
        %v9213 = vpop.f32.mrf.mxu0
        %v9214 = vadd.f32 %v9053, %v9213
        %v9215 = vpop.f32.mrf.mxu0
        %9216 = vmatprep.mubr.bf16.mxu0 %v8686
        %9217 = vmatmul.mubr.bf16.gmra.mxu0 %v8685
        %v9218 = vpop.f32.mrf.mxu0
        %v9219 = vadd.f32 %v9058, %v9218
        %v9220 = vpop.f32.mrf.mxu0
        %v9221 = vpop.f32.mrf.mxu0
        %v9222 = vadd.f32 %v9061, %v9221
        %v9223 = vpop.f32.mrf.mxu0
        %9224 = vmatprep.mubr.bf16.mxu0 %v8690
        %9225 = vmatmul.mubr.bf16.gmra.mxu0 %v8689
        %v9226 = vpop.f32.mrf.mxu0
        %v9227 = vadd.f32 %v9066, %v9226
        %v9228 = vpop.f32.mrf.mxu0
        %v9229 = vpop.f32.mrf.mxu0
        %v9230 = vadd.f32 %v9069, %v9229
        %v9231 = vpop.f32.mrf.mxu0
        %9232 = vmatprep.mubr.bf16.mxu0 %v8694
        %9233 = vmatmul.mubr.bf16.gmra.mxu0 %v8693
        %v9234 = vpop.f32.mrf.mxu0
        %v9235 = vadd.f32 %v9074, %v9234
        %v9236 = vpop.f32.mrf.mxu0
        %v9237 = vpop.f32.mrf.mxu0
        %v9238 = vadd.f32 %v9077, %v9237
        %v9239 = vpop.f32.mrf.mxu0
        %9240 = vmatprep.mubr.bf16.mxu0 %v8698
        %9241 = vmatmul.mubr.bf16.gmra.mxu0 %v8697
        %v9242 = vpop.f32.mrf.mxu0
        %v9243 = vadd.f32 %v9082, %v9242
        %v9244 = vpop.f32.mrf.mxu0
        %v9245 = vpop.f32.mrf.mxu0
        %v9246 = vadd.f32 %v9085, %v9245
        %v9247 = vpop.f32.mrf.mxu0
        %9248 = vmatprep.mubr.bf16.mxu0 %v8702
        %9249 = vmatmul.mubr.bf16.gmra.mxu0 %v8701
        %v9250 = vpop.f32.mrf.mxu0
        %v9251 = vadd.f32 %v9090, %v9250
        %v9252 = vpop.f32.mrf.mxu0
        %v9253 = vpop.f32.mrf.mxu0
        %v9254 = vadd.f32 %v9093, %v9253
        %v9255 = vpop.f32.mrf.mxu0
        %9256 = vmatprep.mubr.bf16.mxu0 %v8706
        %9257 = vmatmul.mubr.bf16.gmra.mxu0 %v8705
        %v9258 = vpop.f32.mrf.mxu0
        %v9259 = vadd.f32 %v9098, %v9258
        %v9260 = vpop.f32.mrf.mxu0
        %v9261 = vpop.f32.mrf.mxu0
        %v9262 = vadd.f32 %v9101, %v9261
        %v9263 = vpop.f32.mrf.mxu0
        %9264 = vmatprep.mubr.bf16.mxu0 %v8710
        %9265 = vmatmul.mubr.bf16.gmra.mxu0 %v8709
        %v9266 = vpop.f32.mrf.mxu0
        %v9267 = vadd.f32 %v9106, %v9266
        %v9268 = vpop.f32.mrf.mxu0
        %v9269 = vpop.f32.mrf.mxu0
        %v9270 = vadd.f32 %v9109, %v9269
        %v9271 = vpop.f32.mrf.mxu0
        %9272 = vmatprep.mubr.bf16.mxu0 %v8714
        %9273 = vmatmul.mubr.bf16.gmra.mxu0 %v8713
        %v9274 = vpop.f32.mrf.mxu0
        %v9275 = vadd.f32 %v9114, %v9274
        %v9276 = vpop.f32.mrf.mxu0
        %v9277 = vpop.f32.mrf.mxu0
        %v9278 = vadd.f32 %v9117, %v9277
        %v9279 = vpop.f32.mrf.mxu0
        %9280 = vmatprep.mubr.bf16.mxu0 %v8718
        %9281 = vmatmul.mubr.bf16.gmra.mxu0 %v8717
        %v9282 = vpop.f32.mrf.mxu0
        %v9283 = vadd.f32 %v9122, %v9282
        %v9284 = vpop.f32.mrf.mxu0
        %v9285 = vpop.f32.mrf.mxu0
        %v9286 = vadd.f32 %v9125, %v9285
        %v9287 = vpop.f32.mrf.mxu0
        %9288 = vmatprep.mubr.bf16.mxu0 %v8722
        %9289 = vmatmul.mubr.bf16.gmra.mxu0 %v8721
        %v9290 = vpop.f32.mrf.mxu0
        %v9291 = vadd.f32 %v9130, %v9290
        %v9292 = vpop.f32.mrf.mxu0
        %v9293 = vpop.f32.mrf.mxu0
        %v9294 = vadd.f32 %v9133, %v9293
        %v9295 = vpop.f32.mrf.mxu0
        %9296 = vmatprep.mubr.bf16.mxu0 %v8726
        %9297 = vmatmul.mubr.bf16.gmra.mxu0 %v8725
        %v9298 = vpop.f32.mrf.mxu0
        %v9299 = vadd.f32 %v9138, %v9298
        %v9300 = vpop.f32.mrf.mxu0
        %v9301 = vpop.f32.mrf.mxu0
        %v9302 = vadd.f32 %v9141, %v9301
        %v9303 = vpop.f32.mrf.mxu0
        %9304 = vdwg.mxu0
        %9305 = vadd.xlane.f32.xlu0 %v9179
        %v9306 = vpop.xlane.xlu0 %9305
        %9307 = vadd.xlane.f32.xlu0 %v9182
        %v9308 = vpop.xlane.xlu0 %9307
        %9309 = vadd.xlane.f32.xlu0 %v9187
        %v9310 = vpop.xlane.xlu0 %9309
        %9311 = vadd.xlane.f32.xlu0 %v9190
        %v9312 = vpop.xlane.xlu0 %9311
        %9313 = vadd.xlane.f32.xlu0 %v9195
        %v9314 = vpop.xlane.xlu0 %9313
        %9315 = vadd.xlane.f32.xlu0 %v9198
        %v9316 = vpop.xlane.xlu0 %9315
        %9317 = vadd.xlane.f32.xlu0 %v9203
        %v9318 = vpop.xlane.xlu0 %9317
        %9319 = vadd.xlane.f32.xlu0 %v9206
        %v9320 = vpop.xlane.xlu0 %9319
        %9321 = vadd.xlane.f32.xlu0 %v9211
        %v9322 = vpop.xlane.xlu0 %9321
        %9323 = vadd.xlane.f32.xlu0 %v9214
        %v9324 = vpop.xlane.xlu0 %9323
        %9325 = vadd.xlane.f32.xlu0 %v9219
        %v9326 = vpop.xlane.xlu0 %9325
        %9327 = vadd.xlane.f32.xlu0 %v9222
        %v9328 = vpop.xlane.xlu0 %9327
        %9329 = vadd.xlane.f32.xlu0 %v9227
        %v9330 = vpop.xlane.xlu0 %9329
        %9331 = vadd.xlane.f32.xlu0 %v9230
        %v9332 = vpop.xlane.xlu0 %9331
        %9333 = vadd.xlane.f32.xlu0 %v9235
        %v9334 = vpop.xlane.xlu0 %9333
        %9335 = vadd.xlane.f32.xlu0 %v9238
        %v9336 = vpop.xlane.xlu0 %9335
        %9337 = vadd.xlane.f32.xlu0 %v9243
        %v9338 = vpop.xlane.xlu0 %9337
        %9339 = vadd.xlane.f32.xlu0 %v9246
        %v9340 = vpop.xlane.xlu0 %9339
        %9341 = vadd.xlane.f32.xlu0 %v9251
        %v9342 = vpop.xlane.xlu0 %9341
        %9343 = vadd.xlane.f32.xlu0 %v9254
        %v9344 = vpop.xlane.xlu0 %9343
        %9345 = vadd.xlane.f32.xlu0 %v9259
        %v9346 = vpop.xlane.xlu0 %9345
        %9347 = vadd.xlane.f32.xlu0 %v9262
        %v9348 = vpop.xlane.xlu0 %9347
        %9349 = vadd.xlane.f32.xlu0 %v9267
        %v9350 = vpop.xlane.xlu0 %9349
        %9351 = vadd.xlane.f32.xlu0 %v9270
        %v9352 = vpop.xlane.xlu0 %9351
        %9353 = vadd.xlane.f32.xlu0 %v9275
        %v9354 = vpop.xlane.xlu0 %9353
        %9355 = vadd.xlane.f32.xlu0 %v9278
        %v9356 = vpop.xlane.xlu0 %9355
        %9357 = vadd.xlane.f32.xlu0 %v9283
        %v9358 = vpop.xlane.xlu0 %9357
        %9359 = vadd.xlane.f32.xlu0 %v9286
        %v9360 = vpop.xlane.xlu0 %9359
        %9361 = vadd.xlane.f32.xlu0 %v9291
        %v9362 = vpop.xlane.xlu0 %9361
        %9363 = vadd.xlane.f32.xlu0 %v9294
        %v9364 = vpop.xlane.xlu0 %9363
        %9365 = vadd.xlane.f32.xlu0 %v9299
        %v9366 = vpop.xlane.xlu0 %9365
        %9367 = vadd.xlane.f32.xlu0 %v9302
        %v9368 = vpop.xlane.xlu0 %9367
        %v9369 = vmul.f32 %v9306, %v6557
        %v9370 = vmul.f32 %v9308, %v6557
        %v9371 = vmul.f32 %v9310, %v6557
        %v9372 = vmul.f32 %v9312, %v6557
        %v9373 = vmul.f32 %v9314, %v6557
        %v9374 = vmul.f32 %v9316, %v6557
        %v9375 = vmul.f32 %v9318, %v6557
        %v9376 = vmul.f32 %v9320, %v6557
        %v9377 = vmul.f32 %v9322, %v6557
        %v9378 = vmul.f32 %v9324, %v6557
        %v9379 = vmul.f32 %v9326, %v6557
        %v9380 = vmul.f32 %v9328, %v6557
        %v9381 = vmul.f32 %v9330, %v6557
        %v9382 = vmul.f32 %v9332, %v6557
        %v9383 = vmul.f32 %v9334, %v6557
        %v9384 = vmul.f32 %v9336, %v6557
        %v9385 = vmul.f32 %v9338, %v6557
        %v9386 = vmul.f32 %v9340, %v6557
        %v9387 = vmul.f32 %v9342, %v6557
        %v9388 = vmul.f32 %v9344, %v6557
        %v9389 = vmul.f32 %v9346, %v6557
        %v9390 = vmul.f32 %v9348, %v6557
        %v9391 = vmul.f32 %v9350, %v6557
        %v9392 = vmul.f32 %v9352, %v6557
        %v9393 = vmul.f32 %v9354, %v6557
        %v9394 = vmul.f32 %v9356, %v6557
        %v9395 = vmul.f32 %v9358, %v6557
        %v9396 = vmul.f32 %v9360, %v6557
        %v9397 = vmul.f32 %v9362, %v6557
        %v9398 = vmul.f32 %v9364, %v6557
        %v9399 = vmul.f32 %v9366, %v6557
        %v9400 = vmul.f32 %v9368, %v6557
        %v9401 = vsub.f32 %v9179, %v9369
        %v9402 = vsub.f32 %v9182, %v9370
        %v9403 = vsub.f32 %v9187, %v9371
        %v9404 = vsub.f32 %v9190, %v9372
        %v9405 = vsub.f32 %v9195, %v9373
        %v9406 = vsub.f32 %v9198, %v9374
        %v9407 = vsub.f32 %v9203, %v9375
        %v9408 = vsub.f32 %v9206, %v9376
        %v9409 = vsub.f32 %v9211, %v9377
        %v9410 = vsub.f32 %v9214, %v9378
        %v9411 = vsub.f32 %v9219, %v9379
        %v9412 = vsub.f32 %v9222, %v9380
        %v9413 = vsub.f32 %v9227, %v9381
        %v9414 = vsub.f32 %v9230, %v9382
        %v9415 = vsub.f32 %v9235, %v9383
        %v9416 = vsub.f32 %v9238, %v9384
        %v9417 = vsub.f32 %v9243, %v9385
        %v9418 = vsub.f32 %v9246, %v9386
        %v9419 = vsub.f32 %v9251, %v9387
        %v9420 = vsub.f32 %v9254, %v9388
        %v9421 = vsub.f32 %v9259, %v9389
        %v9422 = vsub.f32 %v9262, %v9390
        %v9423 = vsub.f32 %v9267, %v9391
        %v9424 = vsub.f32 %v9270, %v9392
        %v9425 = vsub.f32 %v9275, %v9393
        %v9426 = vsub.f32 %v9278, %v9394
        %v9427 = vsub.f32 %v9283, %v9395
        %v9428 = vsub.f32 %v9286, %v9396
        %v9429 = vsub.f32 %v9291, %v9397
        %v9430 = vsub.f32 %v9294, %v9398
        %v9431 = vsub.f32 %v9299, %v9399
        %v9432 = vsub.f32 %v9302, %v9400
        %v9433 = vmul.f32 %v9401, %v9401
        %v9434 = vmul.f32 %v9402, %v9402
        %v9435 = vmul.f32 %v9403, %v9403
        %v9436 = vmul.f32 %v9404, %v9404
        %v9437 = vmul.f32 %v9405, %v9405
        %v9438 = vmul.f32 %v9406, %v9406
        %v9439 = vmul.f32 %v9407, %v9407
        %v9440 = vmul.f32 %v9408, %v9408
        %v9441 = vmul.f32 %v9409, %v9409
        %v9442 = vmul.f32 %v9410, %v9410
        %v9443 = vmul.f32 %v9411, %v9411
        %v9444 = vmul.f32 %v9412, %v9412
        %v9445 = vmul.f32 %v9413, %v9413
        %v9446 = vmul.f32 %v9414, %v9414
        %v9447 = vmul.f32 %v9415, %v9415
        %v9448 = vmul.f32 %v9416, %v9416
        %v9449 = vmul.f32 %v9417, %v9417
        %v9450 = vmul.f32 %v9418, %v9418
        %v9451 = vmul.f32 %v9419, %v9419
        %v9452 = vmul.f32 %v9420, %v9420
        %v9453 = vmul.f32 %v9421, %v9421
        %v9454 = vmul.f32 %v9422, %v9422
        %v9455 = vmul.f32 %v9423, %v9423
        %v9456 = vmul.f32 %v9424, %v9424
        %v9457 = vmul.f32 %v9425, %v9425
        %v9458 = vmul.f32 %v9426, %v9426
        %v9459 = vmul.f32 %v9427, %v9427
        %v9460 = vmul.f32 %v9428, %v9428
        %v9461 = vmul.f32 %v9429, %v9429
        %v9462 = vmul.f32 %v9430, %v9430
        %v9463 = vmul.f32 %v9431, %v9431
        %v9464 = vmul.f32 %v9432, %v9432
        %9465 = vadd.xlane.f32.xlu0 %v9433
        %v9466 = vpop.xlane.xlu0 %9465
        %9467 = vadd.xlane.f32.xlu0 %v9434
        %v9468 = vpop.xlane.xlu0 %9467
        %9469 = vadd.xlane.f32.xlu0 %v9435
        %v9470 = vpop.xlane.xlu0 %9469
        %9471 = vadd.xlane.f32.xlu0 %v9436
        %v9472 = vpop.xlane.xlu0 %9471
        %9473 = vadd.xlane.f32.xlu0 %v9437
        %v9474 = vpop.xlane.xlu0 %9473
        %9475 = vadd.xlane.f32.xlu0 %v9438
        %v9476 = vpop.xlane.xlu0 %9475
        %9477 = vadd.xlane.f32.xlu0 %v9439
        %v9478 = vpop.xlane.xlu0 %9477
        %9479 = vadd.xlane.f32.xlu0 %v9440
        %v9480 = vpop.xlane.xlu0 %9479
        %9481 = vadd.xlane.f32.xlu0 %v9441
        %v9482 = vpop.xlane.xlu0 %9481
        %9483 = vadd.xlane.f32.xlu0 %v9442
        %v9484 = vpop.xlane.xlu0 %9483
        %9485 = vadd.xlane.f32.xlu0 %v9443
        %v9486 = vpop.xlane.xlu0 %9485
        %9487 = vadd.xlane.f32.xlu0 %v9444
        %v9488 = vpop.xlane.xlu0 %9487
        %9489 = vadd.xlane.f32.xlu0 %v9445
        %v9490 = vpop.xlane.xlu0 %9489
        %9491 = vadd.xlane.f32.xlu0 %v9446
        %v9492 = vpop.xlane.xlu0 %9491
        %9493 = vadd.xlane.f32.xlu0 %v9447
        %v9494 = vpop.xlane.xlu0 %9493
        %9495 = vadd.xlane.f32.xlu0 %v9448
        %v9496 = vpop.xlane.xlu0 %9495
        %9497 = vadd.xlane.f32.xlu0 %v9449
        %v9498 = vpop.xlane.xlu0 %9497
        %9499 = vadd.xlane.f32.xlu0 %v9450
        %v9500 = vpop.xlane.xlu0 %9499
        %9501 = vadd.xlane.f32.xlu0 %v9451
        %v9502 = vpop.xlane.xlu0 %9501
        %9503 = vadd.xlane.f32.xlu0 %v9452
        %v9504 = vpop.xlane.xlu0 %9503
        %9505 = vadd.xlane.f32.xlu0 %v9453
        %v9506 = vpop.xlane.xlu0 %9505
        %9507 = vadd.xlane.f32.xlu0 %v9454
        %v9508 = vpop.xlane.xlu0 %9507
        %9509 = vadd.xlane.f32.xlu0 %v9455
        %v9510 = vpop.xlane.xlu0 %9509
        %9511 = vadd.xlane.f32.xlu0 %v9456
        %v9512 = vpop.xlane.xlu0 %9511
        %9513 = vadd.xlane.f32.xlu0 %v9457
        %v9514 = vpop.xlane.xlu0 %9513
        %9515 = vadd.xlane.f32.xlu0 %v9458
        %v9516 = vpop.xlane.xlu0 %9515
        %9517 = vadd.xlane.f32.xlu0 %v9459
        %v9518 = vpop.xlane.xlu0 %9517
        %9519 = vadd.xlane.f32.xlu0 %v9460
        %v9520 = vpop.xlane.xlu0 %9519
        %9521 = vadd.xlane.f32.xlu0 %v9461
        %v9522 = vpop.xlane.xlu0 %9521
        %9523 = vadd.xlane.f32.xlu0 %v9462
        %v9524 = vpop.xlane.xlu0 %9523
        %9525 = vadd.xlane.f32.xlu0 %v9463
        %v9526 = vpop.xlane.xlu0 %9525
        %9527 = vadd.xlane.f32.xlu0 %v9464
        %v9528 = vpop.xlane.xlu0 %9527
        %v9529 = vmul.f32 %v9466, %v6557
        %v9530 = vmul.f32 %v9468, %v6557
        %v9531 = vmul.f32 %v9470, %v6557
        %v9532 = vmul.f32 %v9472, %v6557
        %v9533 = vmul.f32 %v9474, %v6557
        %v9534 = vmul.f32 %v9476, %v6557
        %v9535 = vmul.f32 %v9478, %v6557
        %v9536 = vmul.f32 %v9480, %v6557
        %v9537 = vmul.f32 %v9482, %v6557
        %v9538 = vmul.f32 %v9484, %v6557
        %v9539 = vmul.f32 %v9486, %v6557
        %v9540 = vmul.f32 %v9488, %v6557
        %v9541 = vmul.f32 %v9490, %v6557
        %v9542 = vmul.f32 %v9492, %v6557
        %v9543 = vmul.f32 %v9494, %v6557
        %v9544 = vmul.f32 %v9496, %v6557
        %v9545 = vmul.f32 %v9498, %v6557
        %v9546 = vmul.f32 %v9500, %v6557
        %v9547 = vmul.f32 %v9502, %v6557
        %v9548 = vmul.f32 %v9504, %v6557
        %v9549 = vmul.f32 %v9506, %v6557
        %v9550 = vmul.f32 %v9508, %v6557
        %v9551 = vmul.f32 %v9510, %v6557
        %v9552 = vmul.f32 %v9512, %v6557
        %v9553 = vmul.f32 %v9514, %v6557
        %v9554 = vmul.f32 %v9516, %v6557
        %v9555 = vmul.f32 %v9518, %v6557
        %v9556 = vmul.f32 %v9520, %v6557
        %v9557 = vmul.f32 %v9522, %v6557
        %v9558 = vmul.f32 %v9524, %v6557
        %v9559 = vmul.f32 %v9526, %v6557
        %v9560 = vmul.f32 %v9528, %v6557
        %v9561 = vadd.f32 %v9529, 1e-05
        %v9562 = vadd.f32 %v9530, 1e-05
        %v9563 = vadd.f32 %v9531, 1e-05
        %v9564 = vadd.f32 %v9532, 1e-05
        %v9565 = vadd.f32 %v9533, 1e-05
        %v9566 = vadd.f32 %v9534, 1e-05
        %v9567 = vadd.f32 %v9535, 1e-05
        %v9568 = vadd.f32 %v9536, 1e-05
        %v9569 = vadd.f32 %v9537, 1e-05
        %v9570 = vadd.f32 %v9538, 1e-05
        %v9571 = vadd.f32 %v9539, 1e-05
        %v9572 = vadd.f32 %v9540, 1e-05
        %v9573 = vadd.f32 %v9541, 1e-05
        %v9574 = vadd.f32 %v9542, 1e-05
        %v9575 = vadd.f32 %v9543, 1e-05
        %v9576 = vadd.f32 %v9544, 1e-05
        %v9577 = vadd.f32 %v9545, 1e-05
        %v9578 = vadd.f32 %v9546, 1e-05
        %v9579 = vadd.f32 %v9547, 1e-05
        %v9580 = vadd.f32 %v9548, 1e-05
        %v9581 = vadd.f32 %v9549, 1e-05
        %v9582 = vadd.f32 %v9550, 1e-05
        %v9583 = vadd.f32 %v9551, 1e-05
        %v9584 = vadd.f32 %v9552, 1e-05
        %v9585 = vadd.f32 %v9553, 1e-05
        %v9586 = vadd.f32 %v9554, 1e-05
        %v9587 = vadd.f32 %v9555, 1e-05
        %v9588 = vadd.f32 %v9556, 1e-05
        %v9589 = vadd.f32 %v9557, 1e-05
        %v9590 = vadd.f32 %v9558, 1e-05
        %v9591 = vadd.f32 %v9559, 1e-05
        %v9592 = vadd.f32 %v9560, 1e-05
        %v9593 = vrsqrt.pop %v9561
        %v9594 = vrsqrt.pop %v9562
        %v9595 = vrsqrt.pop %v9563
        %v9596 = vrsqrt.pop %v9564
        %v9597 = vrsqrt.pop %v9565
        %v9598 = vrsqrt.pop %v9566
        %v9599 = vrsqrt.pop %v9567
        %v9600 = vrsqrt.pop %v9568
        %v9601 = vrsqrt.pop %v9569
        %v9602 = vrsqrt.pop %v9570
        %v9603 = vrsqrt.pop %v9571
        %v9604 = vrsqrt.pop %v9572
        %v9605 = vrsqrt.pop %v9573
        %v9606 = vrsqrt.pop %v9574
        %v9607 = vrsqrt.pop %v9575
        %v9608 = vrsqrt.pop %v9576
        %v9609 = vrsqrt.pop %v9577
        %v9610 = vrsqrt.pop %v9578
        %v9611 = vrsqrt.pop %v9579
        %v9612 = vrsqrt.pop %v9580
        %v9613 = vrsqrt.pop %v9581
        %v9614 = vrsqrt.pop %v9582
        %v9615 = vrsqrt.pop %v9583
        %v9616 = vrsqrt.pop %v9584
        %v9617 = vrsqrt.pop %v9585
        %v9618 = vrsqrt.pop %v9586
        %v9619 = vrsqrt.pop %v9587
        %v9620 = vrsqrt.pop %v9588
        %v9621 = vrsqrt.pop %v9589
        %v9622 = vrsqrt.pop %v9590
        %v9623 = vrsqrt.pop %v9591
        %v9624 = vrsqrt.pop %v9592
        %v9625 = vmul.f32 %v9401, %v9593
        %v9626 = vmul.f32 %v9402, %v9594
        %v9627 = vmul.f32 %v9403, %v9595
        %v9628 = vmul.f32 %v9404, %v9596
        %v9629 = vmul.f32 %v9405, %v9597
        %v9630 = vmul.f32 %v9406, %v9598
        %v9631 = vmul.f32 %v9407, %v9599
        %v9632 = vmul.f32 %v9408, %v9600
        %v9633 = vmul.f32 %v9409, %v9601
        %v9634 = vmul.f32 %v9410, %v9602
        %v9635 = vmul.f32 %v9411, %v9603
        %v9636 = vmul.f32 %v9412, %v9604
        %v9637 = vmul.f32 %v9413, %v9605
        %v9638 = vmul.f32 %v9414, %v9606
        %v9639 = vmul.f32 %v9415, %v9607
        %v9640 = vmul.f32 %v9416, %v9608
        %v9641 = vmul.f32 %v9417, %v9609
        %v9642 = vmul.f32 %v9418, %v9610
        %v9643 = vmul.f32 %v9419, %v9611
        %v9644 = vmul.f32 %v9420, %v9612
        %v9645 = vmul.f32 %v9421, %v9613
        %v9646 = vmul.f32 %v9422, %v9614
        %v9647 = vmul.f32 %v9423, %v9615
        %v9648 = vmul.f32 %v9424, %v9616
        %v9649 = vmul.f32 %v9425, %v9617
        %v9650 = vmul.f32 %v9426, %v9618
        %v9651 = vmul.f32 %v9427, %v9619
        %v9652 = vmul.f32 %v9428, %v9620
        %v9653 = vmul.f32 %v9429, %v9621
        %v9654 = vmul.f32 %v9430, %v9622
        %v9655 = vmul.f32 %v9431, %v9623
        %v9656 = vmul.f32 %v9432, %v9624
        %v9657 = vld [vmem:[%s7] sm:$0x1]
        %v9659 = vlaneseq
        %v9660 = vshrl.u32 %v9659, 7
        %v9661 = vsub.s32 0, %v9660
        %v9662 = vrot.slane %v9657, %v9661
        %v9664 = vmul.f32 %v9625, %v9662
        %v9665 = vmul.f32 %v9626, %v9662
        %v9666 = vmul.f32 %v9627, %v9662
        %v9667 = vmul.f32 %v9628, %v9662
        %v9668 = vmul.f32 %v9629, %v9662
        %v9669 = vmul.f32 %v9630, %v9662
        %v9670 = vmul.f32 %v9631, %v9662
        %v9671 = vmul.f32 %v9632, %v9662
        %v9672 = vmul.f32 %v9633, %v9662
        %v9673 = vmul.f32 %v9634, %v9662
        %v9674 = vmul.f32 %v9635, %v9662
        %v9675 = vmul.f32 %v9636, %v9662
        %v9676 = vmul.f32 %v9637, %v9662
        %v9677 = vmul.f32 %v9638, %v9662
        %v9678 = vmul.f32 %v9639, %v9662
        %v9679 = vmul.f32 %v9640, %v9662
        %v9680 = vmul.f32 %v9641, %v9662
        %v9681 = vmul.f32 %v9642, %v9662
        %v9682 = vmul.f32 %v9643, %v9662
        %v9683 = vmul.f32 %v9644, %v9662
        %v9684 = vmul.f32 %v9645, %v9662
        %v9685 = vmul.f32 %v9646, %v9662
        %v9686 = vmul.f32 %v9647, %v9662
        %v9687 = vmul.f32 %v9648, %v9662
        %v9688 = vmul.f32 %v9649, %v9662
        %v9689 = vmul.f32 %v9650, %v9662
        %v9690 = vmul.f32 %v9651, %v9662
        %v9691 = vmul.f32 %v9652, %v9662
        %v9692 = vmul.f32 %v9653, %v9662
        %v9693 = vmul.f32 %v9654, %v9662
        %v9694 = vmul.f32 %v9655, %v9662
        %v9695 = vmul.f32 %v9656, %v9662
        %v9696 = vadd.f32 %v6885, %v9664
        %v9697 = vadd.f32 %v6886, %v9665
        %v9698 = vadd.f32 %v6887, %v9666
        %v9699 = vadd.f32 %v6888, %v9667
        %v9700 = vadd.f32 %v6889, %v9668
        %v9701 = vadd.f32 %v6890, %v9669
        %v9702 = vadd.f32 %v6891, %v9670
        %v9703 = vadd.f32 %v6892, %v9671
        %v9704 = vadd.f32 %v6893, %v9672
        %v9705 = vadd.f32 %v6894, %v9673
        %v9706 = vadd.f32 %v6895, %v9674
        %v9707 = vadd.f32 %v6896, %v9675
        %v9708 = vadd.f32 %v6897, %v9676
        %v9709 = vadd.f32 %v6898, %v9677
        %v9710 = vadd.f32 %v6899, %v9678
        %v9711 = vadd.f32 %v6900, %v9679
        %v9712 = vadd.f32 %v6901, %v9680
        %v9713 = vadd.f32 %v6902, %v9681
        %v9714 = vadd.f32 %v6903, %v9682
        %v9715 = vadd.f32 %v6904, %v9683
        %v9716 = vadd.f32 %v6905, %v9684
        %v9717 = vadd.f32 %v6906, %v9685
        %v9718 = vadd.f32 %v6907, %v9686
        %v9719 = vadd.f32 %v6908, %v9687
        %v9720 = vadd.f32 %v6909, %v9688
        %v9721 = vadd.f32 %v6910, %v9689
        %v9722 = vadd.f32 %v6911, %v9690
        %v9723 = vadd.f32 %v6912, %v9691
        %v9724 = vadd.f32 %v6913, %v9692
        %v9725 = vadd.f32 %v6914, %v9693
        %v9726 = vadd.f32 %v6915, %v9694
        %v9727 = vadd.f32 %v6916, %v9695
        %9728 = vst [vmem:[%s690] sm:$0xff] %v9696
        %9729 = vst [vmem:[%s690 + $0x8] sm:$0xff] %v9697
        %9730 = vst [vmem:[%s690 + $0x10] sm:$0xff] %v9698
        %9731 = vst [vmem:[%s690 + $0x18] sm:$0xff] %v9699
        %9732 = vst [vmem:[%s690 + $0x20] sm:$0xff] %v9700
        %9733 = vst [vmem:[%s690 + $0x28] sm:$0xff] %v9701
        %9734 = vst [vmem:[%s690 + $0x30] sm:$0xff] %v9702
        %9735 = vst [vmem:[%s690 + $0x38] sm:$0xff] %v9703
        %9736 = vst [vmem:[%s690 + $0x40] sm:$0xff] %v9704
        %9737 = vst [vmem:[%s690 + $0x48] sm:$0xff] %v9705
        %9738 = vst [vmem:[%s690 + $0x50] sm:$0xff] %v9706
        %9739 = vst [vmem:[%s690 + $0x58] sm:$0xff] %v9707
        %9740 = vst [vmem:[%s690 + $0x60] sm:$0xff] %v9708
        %9741 = vst [vmem:[%s690 + $0x68] sm:$0xff] %v9709
        %9742 = vst [vmem:[%s690 + $0x70] sm:$0xff] %v9710
        %9743 = vst [vmem:[%s690 + $0x78] sm:$0xff] %v9711
        %9744 = vst [vmem:[%s690 + $0x80] sm:$0xff] %v9712
        %9745 = vst [vmem:[%s690 + $0x88] sm:$0xff] %v9713
        %9746 = vst [vmem:[%s690 + $0x90] sm:$0xff] %v9714
        %9747 = vst [vmem:[%s690 + $0x98] sm:$0xff] %v9715
        %9748 = vst [vmem:[%s690 + $0xa0] sm:$0xff] %v9716
        %9749 = vst [vmem:[%s690 + $0xa8] sm:$0xff] %v9717
        %9750 = vst [vmem:[%s690 + $0xb0] sm:$0xff] %v9718
        %9751 = vst [vmem:[%s690 + $0xb8] sm:$0xff] %v9719
        %9752 = vst [vmem:[%s690 + $0xc0] sm:$0xff] %v9720
        %9753 = vst [vmem:[%s690 + $0xc8] sm:$0xff] %v9721
        %9754 = vst [vmem:[%s690 + $0xd0] sm:$0xff] %v9722
        %9755 = vst [vmem:[%s690 + $0xd8] sm:$0xff] %v9723
        %9756 = vst [vmem:[%s690 + $0xe0] sm:$0xff] %v9724
        %9757 = vst [vmem:[%s690 + $0xe8] sm:$0xff] %v9725
        %9758 = vst [vmem:[%s690 + $0xf0] sm:$0xff] %v9726
        %9759 = vst [vmem:[%s690 + $0xf8] sm:$0xff] %v9727
        %s9760 = sand.u32 %s239, 1
        %s9761 = scalar_lea.sflag [#allocation5], %s9760
        %s9762 = sand.u32 %s239, 1
        %s9763 = smul.addr %s9762, 256
        %s9764 = scalar_lea.vmem [#allocation4], %s9763
        // Predicated region
        $region132: #{parallel_s2vit_block.1} parent=122 // pred_check
          %p9765 = pneg %p249
        $region133: #{parallel_s2vit_block.1} parent=122 // pred_check_branch
          %9767 = sbr.rel (%p9765) target = $region135
        $region134: #{parallel_s2vit_block.1} parent=122 // pred_region
          %s9768 = smul.u32 32, %s28
          %s9770 = ssub.s32 4096, 4096
          %9771 = vsyncadd %s9761, %s9770
          %s9772 = smul.addr %s9768, 4
          %s9773 = sadd.s32 %s29, %s9772
          %s9774 = smul.addr %s27, 128
          %s9775 = sadd.s32 %s9773, %s9774
          %s9776 = smul.addr %s9775, 128
          %s9777 = scalar_lea.hbm %s8, %s9776
          %s9778 = sshll.u32 %s9764, 4
          %s9779 = int_to_ptr.vmem [resolvable:$true] %s9778
          %9784 = dma.vmem_to_hbm [thread:$0]  %s9779, 4096, %s9777, %s9761, 128, 512, 8
        $region135: #{parallel_s2vit_block.1} parent=122 // pred_fallthru
          _
      $region123: #{parallel_s2vit_block.1} parent=5 // pred_fallthru
        _
      %p9785 = scmp.le.s32.totalorder 2, %s17
      // Predicated region
      $region136: #{parallel_s2vit_block.1} parent=5 // pred_check
        %p9786 = pneg %p9785
      $region137: #{parallel_s2vit_block.1} parent=5 // pred_check_branch
        %9788 = sbr.rel (%p9786) target = $region139
      $region138: #{parallel_s2vit_block.1} parent=5 // pred_region
        %s9789 = ssub.s32 %s17, 2
        // Predicated region
        $region140: #{parallel_s2vit_block.1} parent=138 // pred_check
          %p9790 = pneg %p255
        $region141: #{parallel_s2vit_block.1} parent=138 // pred_check_branch
          %9792 = sbr.rel (%p9790) target = $region143
        $region142: #{parallel_s2vit_block.1} parent=138 // pred_region
          %s9793 = sand.u32 %s240, 1
          %s9794 = scalar_lea.sflag [#allocation5], %s9793
          %s9795 = sand.u32 %s240, 1
          %s9796 = smul.addr %s9795, 256
          %s9797 = scalar_lea.vmem [#allocation4], %s9796
          %9798 = dma.done %s9794, 4096
        $region143: #{parallel_s2vit_block.1} parent=138 // pred_fallthru
          _
      $region139: #{parallel_s2vit_block.1} parent=5 // pred_fallthru
        _
    $region6: #{parallel_s2vit_block.1} parent=1 // loop_footer
      %s21 = sadd.s32 1, %s17
    $region7: #{parallel_s2vit_block.1} parent=1 // loop_footer_branch
      %16 = sbr.rel target = $region3
    $region8: #{parallel_s2vit_block.1} parent=1 // loop_exit
      _
    %9799 = vsyncpa [#allocation5], 1
    %s9800 = scalar_lea.sflag [#allocation5], 1
    %9801 = vsyncpa %s9800, 1

</llo_original>
